<compile_context>
chip_gen: v7x
topology: tpu7x:2x2x1
jax: 0.10.0
libtpu: 0.0.40
codegen_flags: <defaults>
</compile_context>

<pallas_src>
import functools

import jax
import jax.numpy as jnp
from jax.experimental import pallas as pl
from jax.experimental.pallas import tpu as pltpu

LN_EPS = 1e-6                          # timm LayerNorm2d default eps
_RESIDENT_W_BYTES = 8 * 1024 * 1024    # keep a (K,N) weight VMEM-resident below this


def _vmem_limit_bytes():
    # Generation-aware budget (~96 MiB on v5e/v6e, ~48 MiB on v7x).
    try:
        return int(pltpu.get_tpu_info().vmem_capacity_bytes) * 3 // 4
    except Exception:
        return 64 * 1024 * 1024


_VMEM_LIMIT = _vmem_limit_bytes()


def _params(dims):
    return pltpu.CompilerParams(dimension_semantics=dims,
                                vmem_limit_bytes=_VMEM_LIMIT)


def _act(y, act):
    if act == "none":
        return y
    if act == "silu":
        return y * jax.nn.sigmoid(y)
    raise ValueError(act)


def _ln(y, g, b):
    # Single-pass LayerNorm statistics over the channel (lane) axis:
    # var = E[y^2] - mu^2 (clamped).  y is f32; g/b are f32 (1, N).
    mu = jnp.mean(y, axis=-1, keepdims=True)
    ms = jnp.mean(y * y, axis=-1, keepdims=True)
    var = jnp.maximum(ms - mu * mu, 0.0)
    return (y - mu) * jax.lax.rsqrt(var + LN_EPS) * g + b


def _pick_lane_tile(n, candidates=(512, 256, 128)):
    for c in candidates:
        if n % c == 0:
            return c
    return n                                   # full dim is always legal


def _pick_row_tile(m, target=512):
    """Row (sublane-axis) tile: full dim when small, else a multiple-of-8
    divisor <= target, else `target` (last block handled by Pallas masking)."""
    if m <= target:
        return m
    for d in range(target - target % 8, 7, -8):
        if m % d == 0:
            return d
    return target


# --------------- 1x1 conv (x @ W) + LayerNorm2d + optional SiLU --------------
def _mm_ln_kernel(x_ref, w_ref, g_ref, b_ref, o_ref, *, act):
    y = jnp.dot(x_ref[...], w_ref[...], preferred_element_type=jnp.float32)
    o_ref[...] = _act(_ln(y, g_ref[...], b_ref[...]), act).astype(o_ref.dtype)


def _mm_ln_pos_kernel(x_ref, pos_ref, w_ref, g_ref, b_ref, o_ref, *, act):
    xv = x_ref[0] + pos_ref[...]                      # fused pos-emb add
    y = jnp.dot(xv, w_ref[...], preferred_element_type=jnp.float32)
    o_ref[0] = _act(_ln(y, g_ref[...], b_ref[...]), act).astype(o_ref.dtype)


def _mm_ln_ktiled_kernel(x_ref, w_ref, g_ref, b_ref, o_ref, acc_ref, *, act):
    k = pl.program_id(1)

    @pl.when(k == 0)
    def _():
        acc_ref[...] = jnp.zeros_like(acc_ref)

    acc_ref[...] += jnp.dot(x_ref[...], w_ref[...],
                            preferred_element_type=jnp.float32)

    @pl.when(k == pl.num_programs(1) - 1)
    def _():
        o_ref[...] = _act(_ln(acc_ref[...], g_ref[...], b_ref[...]),
                          act).astype(o_ref.dtype)


def matmul_ln(x, w, gamma, beta, act="none", pos=None):
    """act(LayerNorm2d(x @ w)); x: (B, T, K), w: (K, N) -> (B, T, N).

    Weight stays VMEM-resident (constant block index -> DMA'd once) when it
    fits; otherwise K-tiled with an f32 accumulator.  Without a fused pos-emb,
    (B, T) is flattened into one M axis for full MXU row tiles.
    """
    B, T, K = x.shape
    N = w.shape[1]
    cdt = x.dtype
    w = w.astype(cdt)
    g = gamma.reshape(1, N).astype(jnp.float32)
    b = beta.reshape(1, N).astype(jnp.float32)
    resident = K * N * w.dtype.itemsize <= _RESIDENT_W_BYTES

    if pos is not None and not resident:
        # Rare fallback: pre-add pos in XLA, then use the generic path.
        x = x + pos.reshape(1, T, K).astype(cdt)
        pos = None

    if pos is not None:
        # 3-D path (per-image T tiles) so the pos-emb block index is just `t`.
        tt = _pick_row_tile(T)
        return pl.pallas_call(
            functools.partial(_mm_ln_pos_kernel, act=act),
            out_shape=jax.ShapeDtypeStruct((B, T, N), cdt),
            grid=(B, pl.cdiv(T, tt)),
            in_specs=[
                pl.BlockSpec((1, tt, K), lambda bi, t: (bi, t, 0)),
                pl.BlockSpec((tt, K), lambda bi, t: (t, 0)),
                pl.BlockSpec((K, N), lambda bi, t: (0, 0)),     # resident weight
                pl.BlockSpec((1, N), lambda bi, t: (0, 0)),
                pl.BlockSpec((1, N), lambda bi, t: (0, 0)),
            ],
            out_specs=pl.BlockSpec((1, tt, N), lambda bi, t: (bi, t, 0)),
            compiler_params=_params(("parallel", "parallel")),
        )(x, pos.reshape(T, K).astype(cdt), w, g, b)

    M = B * T
    x2 = x.reshape(M, K)
    tm = _pick_row_tile(M)
    nm = pl.cdiv(M, tm)
    if resident:
        out = pl.pallas_call(
            functools.partial(_mm_ln_kernel, act=act),
            out_shape=jax.ShapeDtypeStruct((M, N), cdt),
            grid=(nm,),
            in_specs=[
                pl.BlockSpec((tm, K), lambda m: (m, 0)),
                pl.BlockSpec((K, N), lambda m: (0, 0)),         # resident weight
                pl.BlockSpec((1, N), lambda m: (0, 0)),
                pl.BlockSpec((1, N), lambda m: (0, 0)),
            ],
            out_specs=pl.BlockSpec((tm, N), lambda m: (m, 0)),
            compiler_params=_params(("parallel",)),
        )(x2, w, g, b)
    else:
        tk = _pick_lane_tile(K)
        out = pl.pallas_call(
            functools.partial(_mm_ln_ktiled_kernel, act=act),
            out_shape=jax.ShapeDtypeStruct((M, N), cdt),
            grid=(nm, K // tk),
            in_specs=[
                pl.BlockSpec((tm, tk), lambda m, k: (m, k)),
                pl.BlockSpec((tk, N), lambda m, k: (k, 0)),
                pl.BlockSpec((1, N), lambda m, k: (0, 0)),
                pl.BlockSpec((1, N), lambda m, k: (0, 0)),
            ],
            out_specs=pl.BlockSpec((tm, N), lambda m, k: (m, 0)),
            scratch_shapes=[pltpu.VMEM((tm, N), jnp.float32)],
            compiler_params=_params(("parallel", "arbitrary")),
        )(x2, w, g, b)
    return out.reshape(B, T, N)


# -------- conv3 (1x1) with fused SE scale, LN3, (projected) shortcut, SiLU ---
def _conv3_kernel(*refs, has_down, has_pos):
    it = iter(refs)
    h_ref = next(it)                                # (1, T, K) conv2 output
    se_ref = next(it)                               # (1, 1, K) per-image SE gate
    sc_ref = next(it)                               # (1, T, Cin) block input (shortcut)
    pos_ref = next(it) if has_pos else None         # (T, Cin)
    w3_ref, g3_ref, b3_ref = next(it), next(it), next(it)
    if has_down:
        wd_ref, gd_ref, bd_ref = next(it), next(it), next(it)
    o_ref = next(it)

    hs = h_ref[0] * se_ref[0]
    y = _ln(jnp.dot(hs, w3_ref[...], preferred_element_type=jnp.float32),
            g3_ref[...], b3_ref[...])
    sc = sc_ref[0]
    if has_pos:
        sc = sc + pos_ref[...]                      # fused pos-emb on the shortcut path
    if has_down:
        s = _ln(jnp.dot(sc, wd_ref[...], preferred_element_type=jnp.float32),
                gd_ref[...], bd_ref[...])
    else:
        s = sc.astype(jnp.float32)
    o_ref[0] = _act(y + s, "silu").astype(o_ref.dtype)


def conv3_block(h, se, x_in, p, pos=None):
    """silu(LN3((h * se) @ W3) + shortcut(x_in)); shortcut (identity or
    conv1x1+LN projection) is computed in-kernel, never materialised in HBM.
    Per-image grid (SE gate is per image); all weights are VMEM-resident."""
    B, T, K = h.shape
    Cin = x_in.shape[-1]
    N = p["conv3_w"].shape[1]
    cdt = h.dtype
    has_down = "down_w" in p
    has_pos = pos is not None

    args = [h, se.reshape(B, 1, K).astype(cdt), x_in.astype(cdt)]
    in_specs = [
        pl.BlockSpec((1, T, K), lambda bi: (bi, 0, 0)),
        pl.BlockSpec((1, 1, K), lambda bi: (bi, 0, 0)),
        pl.BlockSpec((1, T, Cin), lambda bi: (bi, 0, 0)),
    ]
    if has_pos:
        args.append(pos.reshape(T, Cin).astype(cdt))
        in_specs.append(pl.BlockSpec((T, Cin), lambda bi: (0, 0)))
    args += [p["conv3_w"].astype(cdt),
             p["norm3_g"].reshape(1, N).astype(jnp.float32),
             p["norm3_b"].reshape(1, N).astype(jnp.float32)]
    in_specs += [pl.BlockSpec((K, N), lambda bi: (0, 0)),
                 pl.BlockSpec((1, N), lambda bi: (0, 0)),
                 pl.BlockSpec((1, N), lambda bi: (0, 0))]
    if has_down:
        args += [p["down_w"].astype(cdt),
                 p["down_norm_g"].reshape(1, N).astype(jnp.float32),
                 p["down_norm_b"].reshape(1, N).astype(jnp.float32)]
        in_specs += [pl.BlockSpec((Cin, N), lambda bi: (0, 0)),
                     pl.BlockSpec((1, N), lambda bi: (0, 0)),
                     pl.BlockSpec((1, N), lambda bi: (0, 0))]

    return pl.pallas_call(
        functools.partial(_conv3_kernel, has_down=has_down, has_pos=has_pos),
        out_shape=jax.ShapeDtypeStruct((B, T, N), cdt),
        grid=(B,),
        in_specs=in_specs,
        out_specs=pl.BlockSpec((1, T, N), lambda bi: (bi, 0, 0)),
        compiler_params=_params(("parallel",)),
    )(*args)


# ---------- depthwise 3x3 conv (stride 1, pad 1) + LayerNorm2d + SiLU --------
def _dwconv_ln_kernel(x_ref, w_ref, g_ref, b_ref, o_ref, pad_ref, *, H, W):
    C = x_ref.shape[-1]
    # Zero only the 4 halo border strips (not the whole padded image); the
    # interior is fully overwritten every step.
    zr = jnp.zeros((1, W + 2, C), pad_ref.dtype)
    zc = jnp.zeros((H + 2, 1, C), pad_ref.dtype)
    pad_ref[pl.ds(0, 1), :, :] = zr
    pad_ref[pl.ds(H + 1, 1), :, :] = zr
    pad_ref[:, pl.ds(0, 1), :] = zc
    pad_ref[:, pl.ds(W + 1, 1), :] = zc
    pad_ref[pl.ds(1, H), pl.ds(1, W), :] = x_ref[0]

    wv = w_ref[...].astype(jnp.float32)              # (3, 3, C)
    acc = jnp.zeros((H, W, C), jnp.float32)
    # TODO(synk): the dw in {1,2} taps are sublane-offset loads; pltpu.roll on
    # the XLU could take them off the load/VALU slots.
    for dh in range(3):
        for dw in range(3):
            acc = acc + (pad_ref[pl.ds(dh, H), pl.ds(dw, W), :].astype(jnp.float32)
                         * wv[dh:dh + 1, dw:dw + 1, :])

    y = _ln(acc, g_ref[...], b_ref[...])
    o_ref[0] = _act(y, "silu").astype(o_ref.dtype)


def dwconv_ln(x, w, gamma, beta):
    # x: (B, H, W, C) channels-last; w: (3, 3, C) (groups == C depthwise).
    # TODO(synk): one whole image per grid step; for very large anyres grids on
    # v7x (64 MiB VMEM) this should be strip-tiled with a 2-row halo.
    B, H, W, C = x.shape
    return pl.pallas_call(
        functools.partial(_dwconv_ln_kernel, H=H, W=W),
        out_shape=jax.ShapeDtypeStruct((B, H, W, C), x.dtype),
        grid=(B,),
        in_specs=[
            pl.BlockSpec((1, H, W, C), lambda b: (b, 0, 0, 0)),
            pl.BlockSpec((3, 3, C), lambda b: (0, 0, 0)),
            pl.BlockSpec((1, C), lambda b: (0, 0)),
            pl.BlockSpec((1, C), lambda b: (0, 0)),
        ],
        out_specs=pl.BlockSpec((1, H, W, C), lambda b: (b, 0, 0, 0)),
        scratch_shapes=[pltpu.VMEM((H + 2, W + 2, C), x.dtype)],   # halo in act dtype
        compiler_params=_params(("parallel",)),
    )(x, w.astype(x.dtype), gamma.reshape(1, C).astype(jnp.float32),
      beta.reshape(1, C).astype(jnp.float32))


# -------------------- readout Linear (+bias) + optional SiLU -----------------
def _lin_kernel(x_ref, w_ref, b_ref, o_ref, *, act):
    y = jnp.dot(x_ref[...], w_ref[...], preferred_element_type=jnp.float32)
    o_ref[...] = _act(y + b_ref[...], act).astype(o_ref.dtype)


def _lin_tiled_kernel(x_ref, w_ref, b_ref, o_ref, acc_ref, *, act):
    k = pl.program_id(2)

    @pl.when(k == 0)
    def _():
        acc_ref[...] = jnp.zeros_like(acc_ref)

    acc_ref[...] += jnp.dot(x_ref[...], w_ref[...],
                            preferred_element_type=jnp.float32)

    @pl.when(k == pl.num_programs(2) - 1)
    def _():
        o_ref[...] = _act(acc_ref[...] + b_ref[...], act).astype(o_ref.dtype)


def linear3(x, w, b, act="none"):
    # x: (B, T, K), w: (K, N), b: (N,).  (B, T) is flattened to M so the
    # readout weight streams ~M/tm (not B) times; VMEM-resident when it fits.
    B, T, K = x.shape
    N = w.shape[1]
    cdt = x.dtype
    M = B * T
    x2 = x.reshape(M, K)
    w = w.astype(cdt)
    b2 = b.reshape(1, N).astype(jnp.float32)
    tm = _pick_row_tile(M)
    nm = pl.cdiv(M, tm)

    if K * N * w.dtype.itemsize <= _RESIDENT_W_BYTES:
        out = pl.pallas_call(
            functools.partial(_lin_kernel, act=act),
            out_shape=jax.ShapeDtypeStruct((M, N), cdt),
            grid=(nm,),
            in_specs=[pl.BlockSpec((tm, K), lambda m: (m, 0)),
                      pl.BlockSpec((K, N), lambda m: (0, 0)),    # resident weight
                      pl.BlockSpec((1, N), lambda m: (0, 0))],
            out_specs=pl.BlockSpec((tm, N), lambda m: (m, 0)),
            compiler_params=_params(("parallel",)),
        )(x2, w, b2)
    else:
        tk = _pick_lane_tile(K)
        tn = _pick_lane_tile(N)
        out = pl.pallas_call(
            functools.partial(_lin_tiled_kernel, act=act),
            out_shape=jax.ShapeDtypeStruct((M, N), cdt),
            grid=(nm, N // tn, K // tk),
            in_specs=[pl.BlockSpec((tm, tk), lambda m, j, k: (m, k)),
                      pl.BlockSpec((tk, tn), lambda m, j, k: (k, j)),
                      pl.BlockSpec((1, tn), lambda m, j, k: (0, j))],
            out_specs=pl.BlockSpec((tm, tn), lambda m, j, k: (m, j)),
            scratch_shapes=[pltpu.VMEM((tm, tn), jnp.float32)],
            compiler_params=_params(("parallel", "parallel", "arbitrary")),
        )(x2, w, b2)
    return out.reshape(B, T, N)


# ================================ model pieces ===============================
def init_bottleneck(key, in_chs, out_chs, dtype=jnp.float32):
    mid = out_chs                       # bottle_ratio = 1.0
    rd = int(round(in_chs * 0.25))      # se_ratio = 0.25 of in_chs (timm regnet)
    ks = jax.random.split(key, 6)
    p = {
        "conv1_w": 0.02 * jax.random.normal(ks[0], (in_chs, mid), dtype),
        "norm1_g": jnp.ones((mid,), dtype), "norm1_b": jnp.zeros((mid,), dtype),
        "conv2_w": 0.02 * jax.random.normal(ks[1], (3, 3, mid), dtype),
        "norm2_g": jnp.ones((mid,), dtype), "norm2_b": jnp.zeros((mid,), dtype),
        "se_fc1_w": 0.02 * jax.random.normal(ks[2], (mid, rd), dtype),
        "se_fc1_b": jnp.zeros((rd,), dtype),
        "se_fc2_w": 0.02 * jax.random.normal(ks[3], (rd, mid), dtype),
        "se_fc2_b": jnp.zeros((mid,), dtype),
        "conv3_w": 0.02 * jax.random.normal(ks[4], (mid, out_chs), dtype),
        "norm3_g": jnp.ones((out_chs,), dtype), "norm3_b": jnp.zeros((out_chs,), dtype),
    }
    if in_chs != out_chs:               # projected shortcut: conv1x1 + LN, no act
        p["down_w"] = 0.02 * jax.random.normal(ks[5], (in_chs, out_chs), dtype)
        p["down_norm_g"] = jnp.ones((out_chs,), dtype)
        p["down_norm_b"] = jnp.zeros((out_chs,), dtype)
    return p


def _se_gate(h_img, p):
    # Squeeze-Excitation on (B, C): tiny, stays in XLA (a pallas_call here is
    # pure dispatch overhead).  SE's internal act is SiLU (act_layer=nn.SiLU).
    pooled = jnp.mean(h_img.astype(jnp.float32), axis=(1, 2))           # (B, mid)
    z = pooled @ p["se_fc1_w"].astype(jnp.float32) + p["se_fc1_b"].astype(jnp.float32)
    z = z * jax.nn.sigmoid(z)                                           # SiLU
    z = z @ p["se_fc2_w"].astype(jnp.float32) + p["se_fc2_b"].astype(jnp.float32)
    return jax.nn.sigmoid(z)                                            # (B, mid)


def bottleneck_forward(x, p, pos=None):
    # x: (B, H, W, Cin) channels-last in compute dtype; pos: (1, T, Cin) or None.
    B, H, W, Cin = x.shape
    T = H * W
    x3 = x.reshape(B, T, Cin)

    # conv1 (1x1) + LN + SiLU (+ fused pos-emb add on the first block)
    h = matmul_ln(x3, p["conv1_w"], p["norm1_g"], p["norm1_b"],
                  act="silu", pos=pos)
    mid = h.shape[-1]

    # conv2 (3x3 depthwise) + LN + SiLU
    h_img = dwconv_ln(h.reshape(B, H, W, mid), p["conv2_w"],
                      p["norm2_g"], p["norm2_b"])

    # Squeeze-Excitation gate
    se = _se_gate(h_img, p)

    # conv3 (1x1) with fused SE scale + LN3 + (projected) shortcut + SiLU
    y = conv3_block(h_img.reshape(B, T, mid), se, x3, p, pos=pos)
    return y.reshape(B, H, W, -1)


def adaptive_avg_pool(x, q):
    B, H, W, C = x.shape
    # TODO(synk): only the divisible case (uniform windows) is implemented; it
    # matches torch AdaptiveAvgPool2d exactly when H % q == 0.
    assert H % q == 0 and W % q == 0
    f = H // q
    pooled = x.astype(jnp.float32).reshape(B, q, f, q, f, C).mean(axis=(2, 4))
    return pooled.astype(x.dtype)


def init_params(key, num_input_tokens, enc, hid, out_hid, depth=3,
                dtype=jnp.float32):
    keys = jax.random.split(key, 3 + 2 * depth)
    return {
        "pos_emb": 0.02 * jax.random.normal(keys[0], (1, num_input_tokens, enc), dtype),
        "s1": [init_bottleneck(keys[1 + i], enc if i == 0 else hid, hid, dtype)
               for i in range(depth)],
        "s2": [init_bottleneck(keys[1 + depth + i], hid, hid, dtype)
               for i in range(depth)],
        "readout_w1": 0.02 * jax.random.normal(keys[1 + 2 * depth], (hid, out_hid), dtype),
        "readout_b1": jnp.zeros((out_hid,), dtype),
        "readout_w2": 0.02 * jax.random.normal(keys[2 + 2 * depth], (out_hid, out_hid), dtype),
        "readout_b2": jnp.zeros((out_hid,), dtype),
    }


def hcx_cabstractor_forward(params, x, num_queries, compute_dtype=jnp.bfloat16):
    # TODO(synk): prenorm (default False) and the adaptive-num-query
    # multi-resolution branch are not implemented.
    B, L, D = x.shape
    hw = int(L ** 0.5)
    x = x.astype(compute_dtype)
    pos = params.get("pos_emb")             # fused into the first block's kernels
    x_img = x.reshape(B, hw, hw, D)         # 'b (h w) d' -> NHWC

    for i, blk in enumerate(params["s1"]):  # net[0]: RegStage s1
        x_img = bottleneck_forward(x_img, blk, pos=pos if i == 0 else None)
    q = int(num_queries ** 0.5)
    x_img = adaptive_avg_pool(x_img, q)     # net[1]: AdaptiveAvgPool2d((q, q))
    for blk in params["s2"]:                # net[2]: RegStage s2
        x_img = bottleneck_forward(x_img, blk)

    B2, H2, W2, C = x_img.shape             # 'b d h w' -> 'b (h w) d'
    h = x_img.reshape(B2, H2 * W2, C)
    h = linear3(h, params["readout_w1"], params["readout_b1"], act="silu")
    h = linear3(h, params["readout_w2"], params["readout_b2"], act="none")
    return h


if __name__ == "__main__":
    B = 2
    num_input_tokens = 16       # L (perfect square) -> 4x4 spatial grid
    encoder_hidden_size = 32
    hidden_size = 48
    output_hidden_size = 64
    num_queries = 4             # -> 2x2 pooled grid

    key = jax.random.PRNGKey(0)
    kp, kx = jax.random.split(key)
    params = init_params(kp, num_input_tokens, encoder_hidden_size,
                         hidden_size, output_hidden_size)
    x = jax.random.normal(kx, (B, num_input_tokens, encoder_hidden_size),
                          jnp.float32)

    fwd = jax.jit(lambda p, xx: hcx_cabstractor_forward(
        p, xx, num_queries, compute_dtype=jnp.bfloat16))
    out = jax.block_until_ready(fwd(params, x))

    assert out.shape == (B, num_queries, output_hidden_size), out.shape
    assert bool(jnp.all(jnp.isfinite(out.astype(jnp.float32))))
    print("KERNEL_OK")
</pallas_src>

<mosaic_0001>
module attributes {stable_mosaic.version = 11 : i64} {
  func.func @_mm_ln_pos_kernel(%arg0: i32, %arg1: i32, %arg2: memref<1x16x32xbf16, #tpu.memory_space<vmem>>, %arg3: memref<16x32xbf16, #tpu.memory_space<vmem>>, %arg4: memref<32x48xbf16, #tpu.memory_space<vmem>>, %arg5: memref<1x48xf32, #tpu.memory_space<vmem>>, %arg6: memref<1x48xf32, #tpu.memory_space<vmem>>, %arg7: memref<1x16x48xbf16, #tpu.memory_space<vmem>>) attributes {dimension_semantics = [#tpu.dimension_semantics<parallel>, #tpu.dimension_semantics<parallel>], iteration_bounds = array<i64: 2, 1>, scalar_prefetch = 0 : i64, scratch_operands = 0 : i64, tpu.core_type = #tpu.core_type<tc>, window_params = [{transform_indices = @transform_0, window_bounds = array<i64: 1, 16, 32>}, {transform_indices = @transform_1, window_bounds = array<i64: 16, 32>}, {pipeline_mode = #tpu.pipeline_mode<synchronous>, transform_indices = @transform_2, window_bounds = array<i64: 32, 48>}, {pipeline_mode = #tpu.pipeline_mode<synchronous>, transform_indices = @transform_3, window_bounds = array<i64: 1, 48>}, {pipeline_mode = #tpu.pipeline_mode<synchronous>, transform_indices = @transform_4, window_bounds = array<i64: 1, 48>}, {transform_indices = @transform_5, window_bounds = array<i64: 1, 16, 48>}]} {
    %c0 = arith.constant 0 : index
    %c0_0 = arith.constant 0 : index
    %c0_1 = arith.constant 0 : index
    %0 = vector.load %arg2[%c0, %c0_0, %c0_1] : memref<1x16x32xbf16, #tpu.memory_space<vmem>>, vector<1x16x32xbf16>
    %1 = vector.shape_cast %0 : vector<1x16x32xbf16> to vector<16x32xbf16>
    %c0_2 = arith.constant 0 : index
    %c0_3 = arith.constant 0 : index
    %2 = vector.load %arg3[%c0_2, %c0_3] : memref<16x32xbf16, #tpu.memory_space<vmem>>, vector<16x32xbf16>
    %3 = arith.addf %1, %2 : vector<16x32xbf16>
    %c0_4 = arith.constant 0 : index
    %c0_5 = arith.constant 0 : index
    %4 = vector.load %arg4[%c0_4, %c0_5] : memref<32x48xbf16, #tpu.memory_space<vmem>>, vector<32x48xbf16>
    %cst = arith.constant dense<0.000000e+00> : vector<16x48xf32>
    %5 = tpu.matmul %3, %4, %cst {dimension_numbers = #tpu.dot_dimension_numbers<[1], [0], [0], [1], [0, 0, 1, 1], [], []>} : vector<16x32xbf16>, vector<32x48xbf16>, vector<16x48xf32> -> vector<16x48xf32>
    %c0_6 = arith.constant 0 : index
    %c0_7 = arith.constant 0 : index
    %6 = vector.load %arg5[%c0_6, %c0_7] : memref<1x48xf32, #tpu.memory_space<vmem>>, vector<1x48xf32>
    %c0_8 = arith.constant 0 : index
    %c0_9 = arith.constant 0 : index
    %7 = vector.load %arg6[%c0_8, %c0_9] : memref<1x48xf32, #tpu.memory_space<vmem>>, vector<1x48xf32>
    %cst_10 = arith.constant dense<0.000000e+00> : vector<16xf32>
    %8 = vector.multi_reduction <add>, %5, %cst_10 [1] : vector<16x48xf32> to vector<16xf32>
    %9 = vector.shape_cast %8 : vector<16xf32> to vector<16x1xf32>
    %cst_11 = arith.constant 4.800000e+01 : f32
    %10 = vector.broadcast %cst_11 : f32 to vector<16x1xf32>
    %11 = arith.divf %9, %10 : vector<16x1xf32>
    %12 = arith.mulf %5, %5 : vector<16x48xf32>
    %cst_12 = arith.constant dense<0.000000e+00> : vector<16xf32>
    %13 = vector.multi_reduction <add>, %12, %cst_12 [1] : vector<16x48xf32> to vector<16xf32>
    %14 = vector.shape_cast %13 : vector<16xf32> to vector<16x1xf32>
    %cst_13 = arith.constant 4.800000e+01 : f32
    %15 = vector.broadcast %cst_13 : f32 to vector<16x1xf32>
    %16 = arith.divf %14, %15 : vector<16x1xf32>
    %17 = arith.mulf %11, %11 : vector<16x1xf32>
    %18 = arith.subf %16, %17 : vector<16x1xf32>
    %cst_14 = arith.constant 0.000000e+00 : f32
    %19 = vector.broadcast %cst_14 : f32 to vector<16x1xf32>
    %20 = arith.maximumf %18, %19 : vector<16x1xf32>
    %21 = vector.broadcast %11 : vector<16x1xf32> to vector<16x48xf32>
    %22 = arith.subf %5, %21 : vector<16x48xf32>
    %cst_15 = arith.constant 9.99999997E-7 : f32
    %23 = vector.broadcast %cst_15 : f32 to vector<16x1xf32>
    %24 = arith.addf %20, %23 : vector<16x1xf32>
    %25 = math.rsqrt %24 : vector<16x1xf32>
    %26 = vector.broadcast %25 : vector<16x1xf32> to vector<16x48xf32>
    %27 = arith.mulf %22, %26 : vector<16x48xf32>
    %28 = vector.broadcast %6 : vector<1x48xf32> to vector<16x48xf32>
    %29 = arith.mulf %27, %28 : vector<16x48xf32>
    %30 = vector.broadcast %7 : vector<1x48xf32> to vector<16x48xf32>
    %31 = arith.addf %29, %30 : vector<16x48xf32>
    %32 = arith.negf %31 : vector<16x48xf32>
    %33 = math.exp %32 : vector<16x48xf32>
    %cst_16 = arith.constant 1.000000e+00 : f32
    %34 = vector.broadcast %cst_16 : f32 to vector<16x48xf32>
    %35 = arith.addf %34, %33 : vector<16x48xf32>
    %36 = arith.divf %34, %35 : vector<16x48xf32>
    %37 = arith.mulf %31, %36 : vector<16x48xf32>
    %38 = arith.truncf %37 : vector<16x48xf32> to vector<16x48xbf16>
    %c0_17 = arith.constant 0 : index
    %c0_18 = arith.constant 0 : index
    %c0_19 = arith.constant 0 : index
    %39 = vector.load %arg7[%c0_17, %c0_18, %c0_19] : memref<1x16x48xbf16, #tpu.memory_space<vmem>>, vector<1x16x48xbf16>
    %40 = vector.shape_cast %39 : vector<1x16x48xbf16> to vector<16x48xbf16>
    %41 = vector.shape_cast %38 : vector<16x48xbf16> to vector<1x16x48xbf16>
    tpu.vector_store %arg7[%c0_17, %c0_18, %c0_19], %41 {strides = array<i32>} : memref<1x16x48xbf16, #tpu.memory_space<vmem>>, vector<1x16x48xbf16>,
    return
  }
  func.func @transform_0(%arg0: i32, %arg1: i32) -> (i32, i32, i32) {
    %c0_i32 = arith.constant 0 : i32
    %c0_i32_0 = arith.constant 0 : i32
    return %arg0, %arg1, %c0_i32 : i32, i32, i32
  }
  func.func @transform_1(%arg0: i32, %arg1: i32) -> (i32, i32) {
    %c0_i32 = arith.constant 0 : i32
    %c0_i32_0 = arith.constant 0 : i32
    return %arg1, %c0_i32 : i32, i32
  }
  func.func @transform_2(%arg0: i32, %arg1: i32) -> (i32, i32) {
    %c0_i32 = arith.constant 0 : i32
    %c0_i32_0 = arith.constant 0 : i32
    %c0_i32_1 = arith.constant 0 : i32
    return %c0_i32, %c0_i32_0 : i32, i32
  }
  func.func @transform_3(%arg0: i32, %arg1: i32) -> (i32, i32) {
    %c0_i32 = arith.constant 0 : i32
    %c0_i32_0 = arith.constant 0 : i32
    %c0_i32_1 = arith.constant 0 : i32
    return %c0_i32, %c0_i32_0 : i32, i32
  }
  func.func @transform_4(%arg0: i32, %arg1: i32) -> (i32, i32) {
    %c0_i32 = arith.constant 0 : i32
    %c0_i32_0 = arith.constant 0 : i32
    %c0_i32_1 = arith.constant 0 : i32
    return %c0_i32, %c0_i32_0 : i32, i32
  }
  func.func @transform_5(%arg0: i32, %arg1: i32) -> (i32, i32, i32) {
    %c0_i32 = arith.constant 0 : i32
    %c0_i32_0 = arith.constant 0 : i32
    return %arg0, %arg1, %c0_i32 : i32, i32, i32
  }
}

module attributes {stable_mosaic.version = 11 : i64} {
  func.func @_dwconv_ln_kernel(%arg0: i32, %arg1: memref<1x4x4x48xbf16, #tpu.memory_space<vmem>>, %arg2: memref<3x3x48xbf16, #tpu.memory_space<vmem>>, %arg3: memref<1x48xf32, #tpu.memory_space<vmem>>, %arg4: memref<1x48xf32, #tpu.memory_space<vmem>>, %arg5: memref<1x4x4x48xbf16, #tpu.memory_space<vmem>>, %arg6: memref<6x6x48xbf16, #tpu.memory_space<vmem>>) attributes {dimension_semantics = [#tpu.dimension_semantics<parallel>], iteration_bounds = array<i64: 2>, scalar_prefetch = 0 : i64, scratch_operands = 1 : i64, tpu.core_type = #tpu.core_type<tc>, window_params = [{transform_indices = @transform_0, window_bounds = array<i64: 1, 4, 4, 48>}, {pipeline_mode = #tpu.pipeline_mode<synchronous>, transform_indices = @transform_1, window_bounds = array<i64: 3, 3, 48>}, {pipeline_mode = #tpu.pipeline_mode<synchronous>, transform_indices = @transform_2, window_bounds = array<i64: 1, 48>}, {pipeline_mode = #tpu.pipeline_mode<synchronous>, transform_indices = @transform_3, window_bounds = array<i64: 1, 48>}, {transform_indices = @transform_4, window_bounds = array<i64: 1, 4, 4, 48>}]} {
    %cst = arith.constant 0.000000e+00 : bf16
    %0 = vector.broadcast %cst : bf16 to vector<1x6x48xbf16>
    %cst_0 = arith.constant 0.000000e+00 : bf16
    %1 = vector.broadcast %cst_0 : bf16 to vector<6x1x48xbf16>
    %c0 = arith.constant 0 : index
    %c0_1 = arith.constant 0 : index
    %c0_2 = arith.constant 0 : index
    %2 = vector.load %arg6[%c0, %c0_1, %c0_2] : memref<6x6x48xbf16, #tpu.memory_space<vmem>>, vector<1x6x48xbf16>
    tpu.vector_store %arg6[%c0, %c0_1, %c0_2], %0 {strides = array<i32>} : memref<6x6x48xbf16, #tpu.memory_space<vmem>>, vector<1x6x48xbf16>,
    %c5 = arith.constant 5 : index
    %c0_3 = arith.constant 0 : index
    %c0_4 = arith.constant 0 : index
    %3 = vector.load %arg6[%c5, %c0_3, %c0_4] : memref<6x6x48xbf16, #tpu.memory_space<vmem>>, vector<1x6x48xbf16>
    tpu.vector_store %arg6[%c5, %c0_3, %c0_4], %0 {strides = array<i32>} : memref<6x6x48xbf16, #tpu.memory_space<vmem>>, vector<1x6x48xbf16>,
    %c0_5 = arith.constant 0 : index
    %c0_6 = arith.constant 0 : index
    %c0_7 = arith.constant 0 : index
    %4 = vector.load %arg6[%c0_5, %c0_6, %c0_7] : memref<6x6x48xbf16, #tpu.memory_space<vmem>>, vector<6x1x48xbf16>
    tpu.vector_store %arg6[%c0_5, %c0_6, %c0_7], %1 {strides = array<i32>} : memref<6x6x48xbf16, #tpu.memory_space<vmem>>, vector<6x1x48xbf16>,
    %c0_8 = arith.constant 0 : index
    %c5_9 = arith.constant 5 : index
    %c0_10 = arith.constant 0 : index
    %5 = vector.load %arg6[%c0_8, %c5_9, %c0_10] : memref<6x6x48xbf16, #tpu.memory_space<vmem>>, vector<6x1x48xbf16>
    tpu.vector_store %arg6[%c0_8, %c5_9, %c0_10], %1 {strides = array<i32>} : memref<6x6x48xbf16, #tpu.memory_space<vmem>>, vector<6x1x48xbf16>,
    %c0_11 = arith.constant 0 : index
    %c0_12 = arith.constant 0 : index
    %c0_13 = arith.constant 0 : index
    %c0_14 = arith.constant 0 : index
    %6 = vector.load %arg1[%c0_11, %c0_12, %c0_13, %c0_14] : memref<1x4x4x48xbf16, #tpu.memory_space<vmem>>, vector<1x4x4x48xbf16>
    %7 = vector.shape_cast %6 : vector<1x4x4x48xbf16> to vector<4x4x48xbf16>
    %c1 = arith.constant 1 : index
    %c1_15 = arith.constant 1 : index
    %c0_16 = arith.constant 0 : index
    %8 = vector.load %arg6[%c1, %c1_15, %c0_16] : memref<6x6x48xbf16, #tpu.memory_space<vmem>>, vector<4x4x48xbf16>
    tpu.vector_store %arg6[%c1, %c1_15, %c0_16], %7 {strides = array<i32>} : memref<6x6x48xbf16, #tpu.memory_space<vmem>>, vector<4x4x48xbf16>,
    %c0_17 = arith.constant 0 : index
    %c0_18 = arith.constant 0 : index
    %c0_19 = arith.constant 0 : index
    %9 = vector.load %arg2[%c0_17, %c0_18, %c0_19] : memref<3x3x48xbf16, #tpu.memory_space<vmem>>, vector<3x3x48xbf16>
    %10 = arith.extf %9 : vector<3x3x48xbf16> to vector<3x3x48xf32>
    %cst_20 = arith.constant 0.000000e+00 : f32
    %11 = vector.broadcast %cst_20 : f32 to vector<4x4x48xf32>
    %c0_21 = arith.constant 0 : index
    %c0_22 = arith.constant 0 : index
    %c0_23 = arith.constant 0 : index
    %12 = vector.load %arg6[%c0_21, %c0_22, %c0_23] : memref<6x6x48xbf16, #tpu.memory_space<vmem>>, vector<4x4x48xbf16>
    %13 = arith.extf %12 : vector<4x4x48xbf16> to vector<4x4x48xf32>
    %14 = vector.extract_strided_slice %10 {offsets = [0, 0, 0], sizes = [1, 1, 48], strides = [1, 1, 1]} : vector<3x3x48xf32> to vector<1x1x48xf32>
    %15 = vector.broadcast %14 : vector<1x1x48xf32> to vector<4x4x48xf32>
    %16 = arith.mulf %13, %15 : vector<4x4x48xf32>
    %17 = arith.addf %11, %16 : vector<4x4x48xf32>
    %c0_24 = arith.constant 0 : index
    %c1_25 = arith.constant 1 : index
    %c0_26 = arith.constant 0 : index
    %18 = vector.load %arg6[%c0_24, %c1_25, %c0_26] : memref<6x6x48xbf16, #tpu.memory_space<vmem>>, vector<4x4x48xbf16>
    %19 = arith.extf %18 : vector<4x4x48xbf16> to vector<4x4x48xf32>
    %20 = vector.extract_strided_slice %10 {offsets = [0, 1, 0], sizes = [1, 1, 48], strides = [1, 1, 1]} : vector<3x3x48xf32> to vector<1x1x48xf32>
    %21 = vector.broadcast %20 : vector<1x1x48xf32> to vector<4x4x48xf32>
    %22 = arith.mulf %19, %21 : vector<4x4x48xf32>
    %23 = arith.addf %17, %22 : vector<4x4x48xf32>
    %c0_27 = arith.constant 0 : index
    %c2 = arith.constant 2 : index
    %c0_28 = arith.constant 0 : index
    %24 = vector.load %arg6[%c0_27, %c2, %c0_28] : memref<6x6x48xbf16, #tpu.memory_space<vmem>>, vector<4x4x48xbf16>
    %25 = arith.extf %24 : vector<4x4x48xbf16> to vector<4x4x48xf32>
    %26 = vector.extract_strided_slice %10 {offsets = [0, 2, 0], sizes = [1, 1, 48], strides = [1, 1, 1]} : vector<3x3x48xf32> to vector<1x1x48xf32>
    %27 = vector.broadcast %26 : vector<1x1x48xf32> to vector<4x4x48xf32>
    %28 = arith.mulf %25, %27 : vector<4x4x48xf32>
    %29 = arith.addf %23, %28 : vector<4x4x48xf32>
    %c1_29 = arith.constant 1 : index
    %c0_30 = arith.constant 0 : index
    %c0_31 = arith.constant 0 : index
    %30 = vector.load %arg6[%c1_29, %c0_30, %c0_31] : memref<6x6x48xbf16, #tpu.memory_space<vmem>>, vector<4x4x48xbf16>
    %31 = arith.extf %30 : vector<4x4x48xbf16> to vector<4x4x48xf32>
    %32 = vector.extract_strided_slice %10 {offsets = [1, 0, 0], sizes = [1, 1, 48], strides = [1, 1, 1]} : vector<3x3x48xf32> to vector<1x1x48xf32>
    %33 = vector.broadcast %32 : vector<1x1x48xf32> to vector<4x4x48xf32>
    %34 = arith.mulf %31, %33 : vector<4x4x48xf32>
    %35 = arith.addf %29, %34 : vector<4x4x48xf32>
    %c1_32 = arith.constant 1 : index
    %c1_33 = arith.constant 1 : index
    %c0_34 = arith.constant 0 : index
    %36 = vector.load %arg6[%c1_32, %c1_33, %c0_34] : memref<6x6x48xbf16, #tpu.memory_space<vmem>>, vector<4x4x48xbf16>
    %37 = arith.extf %36 : vector<4x4x48xbf16> to vector<4x4x48xf32>
    %38 = vector.extract_strided_slice %10 {offsets = [1, 1, 0], sizes = [1, 1, 48], strides = [1, 1, 1]} : vector<3x3x48xf32> to vector<1x1x48xf32>
    %39 = vector.broadcast %38 : vector<1x1x48xf32> to vector<4x4x48xf32>
    %40 = arith.mulf %37, %39 : vector<4x4x48xf32>
    %41 = arith.addf %35, %40 : vector<4x4x48xf32>
    %c1_35 = arith.constant 1 : index
    %c2_36 = arith.constant 2 : index
    %c0_37 = arith.constant 0 : index
    %42 = vector.load %arg6[%c1_35, %c2_36, %c0_37] : memref<6x6x48xbf16, #tpu.memory_space<vmem>>, vector<4x4x48xbf16>
    %43 = arith.extf %42 : vector<4x4x48xbf16> to vector<4x4x48xf32>
    %44 = vector.extract_strided_slice %10 {offsets = [1, 2, 0], sizes = [1, 1, 48], strides = [1, 1, 1]} : vector<3x3x48xf32> to vector<1x1x48xf32>
    %45 = vector.broadcast %44 : vector<1x1x48xf32> to vector<4x4x48xf32>
    %46 = arith.mulf %43, %45 : vector<4x4x48xf32>
    %47 = arith.addf %41, %46 : vector<4x4x48xf32>
    %c2_38 = arith.constant 2 : index
    %c0_39 = arith.constant 0 : index
    %c0_40 = arith.constant 0 : index
    %48 = vector.load %arg6[%c2_38, %c0_39, %c0_40] : memref<6x6x48xbf16, #tpu.memory_space<vmem>>, vector<4x4x48xbf16>
    %49 = arith.extf %48 : vector<4x4x48xbf16> to vector<4x4x48xf32>
    %50 = vector.extract_strided_slice %10 {offsets = [2, 0, 0], sizes = [1, 1, 48], strides = [1, 1, 1]} : vector<3x3x48xf32> to vector<1x1x48xf32>
    %51 = vector.broadcast %50 : vector<1x1x48xf32> to vector<4x4x48xf32>
    %52 = arith.mulf %49, %51 : vector<4x4x48xf32>
    %53 = arith.addf %47, %52 : vector<4x4x48xf32>
    %c2_41 = arith.constant 2 : index
    %c1_42 = arith.constant 1 : index
    %c0_43 = arith.constant 0 : index
    %54 = vector.load %arg6[%c2_41, %c1_42, %c0_43] : memref<6x6x48xbf16, #tpu.memory_space<vmem>>, vector<4x4x48xbf16>
    %55 = arith.extf %54 : vector<4x4x48xbf16> to vector<4x4x48xf32>
    %56 = vector.extract_strided_slice %10 {offsets = [2, 1, 0], sizes = [1, 1, 48], strides = [1, 1, 1]} : vector<3x3x48xf32> to vector<1x1x48xf32>
    %57 = vector.broadcast %56 : vector<1x1x48xf32> to vector<4x4x48xf32>
    %58 = arith.mulf %55, %57 : vector<4x4x48xf32>
    %59 = arith.addf %53, %58 : vector<4x4x48xf32>
    %c2_44 = arith.constant 2 : index
    %c2_45 = arith.constant 2 : index
    %c0_46 = arith.constant 0 : index
    %60 = vector.load %arg6[%c2_44, %c2_45, %c0_46] : memref<6x6x48xbf16, #tpu.memory_space<vmem>>, vector<4x4x48xbf16>
    %61 = arith.extf %60 : vector<4x4x48xbf16> to vector<4x4x48xf32>
    %62 = vector.extract_strided_slice %10 {offsets = [2, 2, 0], sizes = [1, 1, 48], strides = [1, 1, 1]} : vector<3x3x48xf32> to vector<1x1x48xf32>
    %63 = vector.broadcast %62 : vector<1x1x48xf32> to vector<4x4x48xf32>
    %64 = arith.mulf %61, %63 : vector<4x4x48xf32>
    %65 = arith.addf %59, %64 : vector<4x4x48xf32>
    %c0_47 = arith.constant 0 : index
    %c0_48 = arith.constant 0 : index
    %66 = vector.load %arg3[%c0_47, %c0_48] : memref<1x48xf32, #tpu.memory_space<vmem>>, vector<1x48xf32>
    %c0_49 = arith.constant 0 : index
    %c0_50 = arith.constant 0 : index
    %67 = vector.load %arg4[%c0_49, %c0_50] : memref<1x48xf32, #tpu.memory_space<vmem>>, vector<1x48xf32>
    %cst_51 = arith.constant dense<0.000000e+00> : vector<4x4xf32>
    %68 = vector.multi_reduction <add>, %65, %cst_51 [2] : vector<4x4x48xf32> to vector<4x4xf32>
    %69 = vector.shape_cast %68 : vector<4x4xf32> to vector<4x4x1xf32>
    %cst_52 = arith.constant 4.800000e+01 : f32
    %70 = vector.broadcast %cst_52 : f32 to vector<4x4x1xf32>
    %71 = arith.divf %69, %70 : vector<4x4x1xf32>
    %72 = arith.mulf %65, %65 : vector<4x4x48xf32>
    %cst_53 = arith.constant dense<0.000000e+00> : vector<4x4xf32>
    %73 = vector.multi_reduction <add>, %72, %cst_53 [2] : vector<4x4x48xf32> to vector<4x4xf32>
    %74 = vector.shape_cast %73 : vector<4x4xf32> to vector<4x4x1xf32>
    %cst_54 = arith.constant 4.800000e+01 : f32
    %75 = vector.broadcast %cst_54 : f32 to vector<4x4x1xf32>
    %76 = arith.divf %74, %75 : vector<4x4x1xf32>
    %77 = arith.mulf %71, %71 : vector<4x4x1xf32>
    %78 = arith.subf %76, %77 : vector<4x4x1xf32>
    %cst_55 = arith.constant 0.000000e+00 : f32
    %79 = vector.broadcast %cst_55 : f32 to vector<4x4x1xf32>
    %80 = arith.maximumf %78, %79 : vector<4x4x1xf32>
    %81 = vector.broadcast %71 : vector<4x4x1xf32> to vector<4x4x48xf32>
    %82 = arith.subf %65, %81 : vector<4x4x48xf32>
    %cst_56 = arith.constant 9.99999997E-7 : f32
    %83 = vector.broadcast %cst_56 : f32 to vector<4x4x1xf32>
    %84 = arith.addf %80, %83 : vector<4x4x1xf32>
    %85 = math.rsqrt %84 : vector<4x4x1xf32>
    %86 = vector.broadcast %85 : vector<4x4x1xf32> to vector<4x4x48xf32>
    %87 = arith.mulf %82, %86 : vector<4x4x48xf32>
    %88 = vector.shape_cast %66 : vector<1x48xf32> to vector<1x1x48xf32>
    %89 = vector.broadcast %88 : vector<1x1x48xf32> to vector<4x4x48xf32>
    %90 = arith.mulf %87, %89 : vector<4x4x48xf32>
    %91 = vector.shape_cast %67 : vector<1x48xf32> to vector<1x1x48xf32>
    %92 = vector.broadcast %91 : vector<1x1x48xf32> to vector<4x4x48xf32>
    %93 = arith.addf %90, %92 : vector<4x4x48xf32>
    %94 = arith.negf %93 : vector<4x4x48xf32>
    %95 = math.exp %94 : vector<4x4x48xf32>
    %cst_57 = arith.constant 1.000000e+00 : f32
    %96 = vector.broadcast %cst_57 : f32 to vector<4x4x48xf32>
    %97 = arith.addf %96, %95 : vector<4x4x48xf32>
    %98 = arith.divf %96, %97 : vector<4x4x48xf32>
    %99 = arith.mulf %93, %98 : vector<4x4x48xf32>
    %100 = arith.truncf %99 : vector<4x4x48xf32> to vector<4x4x48xbf16>
    %c0_58 = arith.constant 0 : index
    %c0_59 = arith.constant 0 : index
    %c0_60 = arith.constant 0 : index
    %c0_61 = arith.constant 0 : index
    %101 = vector.load %arg5[%c0_58, %c0_59, %c0_60, %c0_61] : memref<1x4x4x48xbf16, #tpu.memory_space<vmem>>, vector<1x4x4x48xbf16>
    %102 = vector.shape_cast %101 : vector<1x4x4x48xbf16> to vector<4x4x48xbf16>
    %103 = vector.shape_cast %100 : vector<4x4x48xbf16> to vector<1x4x4x48xbf16>
    tpu.vector_store %arg5[%c0_58, %c0_59, %c0_60, %c0_61], %103 {strides = array<i32>} : memref<1x4x4x48xbf16, #tpu.memory_space<vmem>>, vector<1x4x4x48xbf16>,
    return
  }
  func.func @transform_0(%arg0: i32) -> (i32, i32, i32, i32) {
    %c0_i32 = arith.constant 0 : i32
    %c0_i32_0 = arith.constant 0 : i32
    %c0_i32_1 = arith.constant 0 : i32
    %c0_i32_2 = arith.constant 0 : i32
    return %arg0, %c0_i32, %c0_i32_0, %c0_i32_1 : i32, i32, i32, i32
  }
  func.func @transform_1(%arg0: i32) -> (i32, i32, i32) {
    %c0_i32 = arith.constant 0 : i32
    %c0_i32_0 = arith.constant 0 : i32
    %c0_i32_1 = arith.constant 0 : i32
    %c0_i32_2 = arith.constant 0 : i32
    return %c0_i32, %c0_i32_0, %c0_i32_1 : i32, i32, i32
  }
  func.func @transform_2(%arg0: i32) -> (i32, i32) {
    %c0_i32 = arith.constant 0 : i32
    %c0_i32_0 = arith.constant 0 : i32
    %c0_i32_1 = arith.constant 0 : i32
    return %c0_i32, %c0_i32_0 : i32, i32
  }
  func.func @transform_3(%arg0: i32) -> (i32, i32) {
    %c0_i32 = arith.constant 0 : i32
    %c0_i32_0 = arith.constant 0 : i32
    %c0_i32_1 = arith.constant 0 : i32
    return %c0_i32, %c0_i32_0 : i32, i32
  }
  func.func @transform_4(%arg0: i32) -> (i32, i32, i32, i32) {
    %c0_i32 = arith.constant 0 : i32
    %c0_i32_0 = arith.constant 0 : i32
    %c0_i32_1 = arith.constant 0 : i32
    %c0_i32_2 = arith.constant 0 : i32
    return %arg0, %c0_i32, %c0_i32_0, %c0_i32_1 : i32, i32, i32, i32
  }
}

module attributes {stable_mosaic.version = 11 : i64} {
  func.func @_conv3_kernel(%arg0: i32, %arg1: memref<1x16x48xbf16, #tpu.memory_space<vmem>>, %arg2: memref<1x1x48xbf16, #tpu.memory_space<vmem>>, %arg3: memref<1x16x32xbf16, #tpu.memory_space<vmem>>, %arg4: memref<16x32xbf16, #tpu.memory_space<vmem>>, %arg5: memref<48x48xbf16, #tpu.memory_space<vmem>>, %arg6: memref<1x48xf32, #tpu.memory_space<vmem>>, %arg7: memref<1x48xf32, #tpu.memory_space<vmem>>, %arg8: memref<32x48xbf16, #tpu.memory_space<vmem>>, %arg9: memref<1x48xf32, #tpu.memory_space<vmem>>, %arg10: memref<1x48xf32, #tpu.memory_space<vmem>>, %arg11: memref<1x16x48xbf16, #tpu.memory_space<vmem>>) attributes {dimension_semantics = [#tpu.dimension_semantics<parallel>], iteration_bounds = array<i64: 2>, scalar_prefetch = 0 : i64, scratch_operands = 0 : i64, tpu.core_type = #tpu.core_type<tc>, window_params = [{transform_indices = @transform_0, window_bounds = array<i64: 1, 16, 48>}, {transform_indices = @transform_1, window_bounds = array<i64: 1, 1, 48>}, {transform_indices = @transform_2, window_bounds = array<i64: 1, 16, 32>}, {pipeline_mode = #tpu.pipeline_mode<synchronous>, transform_indices = @transform_3, window_bounds = array<i64: 16, 32>}, {pipeline_mode = #tpu.pipeline_mode<synchronous>, transform_indices = @transform_4, window_bounds = array<i64: 48, 48>}, {pipeline_mode = #tpu.pipeline_mode<synchronous>, transform_indices = @transform_5, window_bounds = array<i64: 1, 48>}, {pipeline_mode = #tpu.pipeline_mode<synchronous>, transform_indices = @transform_6, window_bounds = array<i64: 1, 48>}, {pipeline_mode = #tpu.pipeline_mode<synchronous>, transform_indices = @transform_7, window_bounds = array<i64: 32, 48>}, {pipeline_mode = #tpu.pipeline_mode<synchronous>, transform_indices = @transform_8, window_bounds = array<i64: 1, 48>}, {pipeline_mode = #tpu.pipeline_mode<synchronous>, transform_indices = @transform_9, window_bounds = array<i64: 1, 48>}, {transform_indices = @transform_10, window_bounds = array<i64: 1, 16, 48>}]} {
    %c0 = arith.constant 0 : index
    %c0_0 = arith.constant 0 : index
    %c0_1 = arith.constant 0 : index
    %0 = vector.load %arg1[%c0, %c0_0, %c0_1] : memref<1x16x48xbf16, #tpu.memory_space<vmem>>, vector<1x16x48xbf16>
    %1 = vector.shape_cast %0 : vector<1x16x48xbf16> to vector<16x48xbf16>
    %c0_2 = arith.constant 0 : index
    %c0_3 = arith.constant 0 : index
    %c0_4 = arith.constant 0 : index
    %2 = vector.load %arg2[%c0_2, %c0_3, %c0_4] : memref<1x1x48xbf16, #tpu.memory_space<vmem>>, vector<1x1x48xbf16>
    %3 = vector.shape_cast %2 : vector<1x1x48xbf16> to vector<1x48xbf16>
    %4 = vector.broadcast %3 : vector<1x48xbf16> to vector<16x48xbf16>
    %5 = arith.mulf %1, %4 : vector<16x48xbf16>
    %c0_5 = arith.constant 0 : index
    %c0_6 = arith.constant 0 : index
    %6 = vector.load %arg5[%c0_5, %c0_6] : memref<48x48xbf16, #tpu.memory_space<vmem>>, vector<48x48xbf16>
    %cst = arith.constant dense<0.000000e+00> : vector<16x48xf32>
    %7 = tpu.matmul %5, %6, %cst {dimension_numbers = #tpu.dot_dimension_numbers<[1], [0], [0], [1], [0, 0, 1, 1], [], []>} : vector<16x48xbf16>, vector<48x48xbf16>, vector<16x48xf32> -> vector<16x48xf32>
    %c0_7 = arith.constant 0 : index
    %c0_8 = arith.constant 0 : index
    %8 = vector.load %arg6[%c0_7, %c0_8] : memref<1x48xf32, #tpu.memory_space<vmem>>, vector<1x48xf32>
    %c0_9 = arith.constant 0 : index
    %c0_10 = arith.constant 0 : index
    %9 = vector.load %arg7[%c0_9, %c0_10] : memref<1x48xf32, #tpu.memory_space<vmem>>, vector<1x48xf32>
    %cst_11 = arith.constant dense<0.000000e+00> : vector<16xf32>
    %10 = vector.multi_reduction <add>, %7, %cst_11 [1] : vector<16x48xf32> to vector<16xf32>
    %11 = vector.shape_cast %10 : vector<16xf32> to vector<16x1xf32>
    %cst_12 = arith.constant 4.800000e+01 : f32
    %12 = vector.broadcast %cst_12 : f32 to vector<16x1xf32>
    %13 = arith.divf %11, %12 : vector<16x1xf32>
    %14 = arith.mulf %7, %7 : vector<16x48xf32>
    %cst_13 = arith.constant dense<0.000000e+00> : vector<16xf32>
    %15 = vector.multi_reduction <add>, %14, %cst_13 [1] : vector<16x48xf32> to vector<16xf32>
    %16 = vector.shape_cast %15 : vector<16xf32> to vector<16x1xf32>
    %cst_14 = arith.constant 4.800000e+01 : f32
    %17 = vector.broadcast %cst_14 : f32 to vector<16x1xf32>
    %18 = arith.divf %16, %17 : vector<16x1xf32>
    %19 = arith.mulf %13, %13 : vector<16x1xf32>
    %20 = arith.subf %18, %19 : vector<16x1xf32>
    %cst_15 = arith.constant 0.000000e+00 : f32
    %21 = vector.broadcast %cst_15 : f32 to vector<16x1xf32>
    %22 = arith.maximumf %20, %21 : vector<16x1xf32>
    %23 = vector.broadcast %13 : vector<16x1xf32> to vector<16x48xf32>
    %24 = arith.subf %7, %23 : vector<16x48xf32>
    %cst_16 = arith.constant 9.99999997E-7 : f32
    %25 = vector.broadcast %cst_16 : f32 to vector<16x1xf32>
    %26 = arith.addf %22, %25 : vector<16x1xf32>
    %27 = math.rsqrt %26 : vector<16x1xf32>
    %28 = vector.broadcast %27 : vector<16x1xf32> to vector<16x48xf32>
    %29 = arith.mulf %24, %28 : vector<16x48xf32>
    %30 = vector.broadcast %8 : vector<1x48xf32> to vector<16x48xf32>
    %31 = arith.mulf %29, %30 : vector<16x48xf32>
    %32 = vector.broadcast %9 : vector<1x48xf32> to vector<16x48xf32>
    %33 = arith.addf %31, %32 : vector<16x48xf32>
    %c0_17 = arith.constant 0 : index
    %c0_18 = arith.constant 0 : index
    %c0_19 = arith.constant 0 : index
    %34 = vector.load %arg3[%c0_17, %c0_18, %c0_19] : memref<1x16x32xbf16, #tpu.memory_space<vmem>>, vector<1x16x32xbf16>
    %35 = vector.shape_cast %34 : vector<1x16x32xbf16> to vector<16x32xbf16>
    %c0_20 = arith.constant 0 : index
    %c0_21 = arith.constant 0 : index
    %36 = vector.load %arg4[%c0_20, %c0_21] : memref<16x32xbf16, #tpu.memory_space<vmem>>, vector<16x32xbf16>
    %37 = arith.addf %35, %36 : vector<16x32xbf16>
    %c0_22 = arith.constant 0 : index
    %c0_23 = arith.constant 0 : index
    %38 = vector.load %arg8[%c0_22, %c0_23] : memref<32x48xbf16, #tpu.memory_space<vmem>>, vector<32x48xbf16>
    %cst_24 = arith.constant dense<0.000000e+00> : vector<16x48xf32>
    %39 = tpu.matmul %37, %38, %cst_24 {dimension_numbers = #tpu.dot_dimension_numbers<[1], [0], [0], [1], [0, 0, 1, 1], [], []>} : vector<16x32xbf16>, vector<32x48xbf16>, vector<16x48xf32> -> vector<16x48xf32>
    %c0_25 = arith.constant 0 : index
    %c0_26 = arith.constant 0 : index
    %40 = vector.load %arg9[%c0_25, %c0_26] : memref<1x48xf32, #tpu.memory_space<vmem>>, vector<1x48xf32>
    %c0_27 = arith.constant 0 : index
    %c0_28 = arith.constant 0 : index
    %41 = vector.load %arg10[%c0_27, %c0_28] : memref<1x48xf32, #tpu.memory_space<vmem>>, vector<1x48xf32>
    %cst_29 = arith.constant dense<0.000000e+00> : vector<16xf32>
    %42 = vector.multi_reduction <add>, %39, %cst_29 [1] : vector<16x48xf32> to vector<16xf32>
    %43 = vector.shape_cast %42 : vector<16xf32> to vector<16x1xf32>
    %cst_30 = arith.constant 4.800000e+01 : f32
    %44 = vector.broadcast %cst_30 : f32 to vector<16x1xf32>
    %45 = arith.divf %43, %44 : vector<16x1xf32>
    %46 = arith.mulf %39, %39 : vector<16x48xf32>
    %cst_31 = arith.constant dense<0.000000e+00> : vector<16xf32>
    %47 = vector.multi_reduction <add>, %46, %cst_31 [1] : vector<16x48xf32> to vector<16xf32>
    %48 = vector.shape_cast %47 : vector<16xf32> to vector<16x1xf32>
    %cst_32 = arith.constant 4.800000e+01 : f32
    %49 = vector.broadcast %cst_32 : f32 to vector<16x1xf32>
    %50 = arith.divf %48, %49 : vector<16x1xf32>
    %51 = arith.mulf %45, %45 : vector<16x1xf32>
    %52 = arith.subf %50, %51 : vector<16x1xf32>
    %cst_33 = arith.constant 0.000000e+00 : f32
    %53 = vector.broadcast %cst_33 : f32 to vector<16x1xf32>
    %54 = arith.maximumf %52, %53 : vector<16x1xf32>
    %55 = vector.broadcast %45 : vector<16x1xf32> to vector<16x48xf32>
    %56 = arith.subf %39, %55 : vector<16x48xf32>
    %cst_34 = arith.constant 9.99999997E-7 : f32
    %57 = vector.broadcast %cst_34 : f32 to vector<16x1xf32>
    %58 = arith.addf %54, %57 : vector<16x1xf32>
    %59 = math.rsqrt %58 : vector<16x1xf32>
    %60 = vector.broadcast %59 : vector<16x1xf32> to vector<16x48xf32>
    %61 = arith.mulf %56, %60 : vector<16x48xf32>
    %62 = vector.broadcast %40 : vector<1x48xf32> to vector<16x48xf32>
    %63 = arith.mulf %61, %62 : vector<16x48xf32>
    %64 = vector.broadcast %41 : vector<1x48xf32> to vector<16x48xf32>
    %65 = arith.addf %63, %64 : vector<16x48xf32>
    %66 = arith.addf %33, %65 : vector<16x48xf32>
    %67 = arith.negf %66 : vector<16x48xf32>
    %68 = math.exp %67 : vector<16x48xf32>
    %cst_35 = arith.constant 1.000000e+00 : f32
    %69 = vector.broadcast %cst_35 : f32 to vector<16x48xf32>
    %70 = arith.addf %69, %68 : vector<16x48xf32>
    %71 = arith.divf %69, %70 : vector<16x48xf32>
    %72 = arith.mulf %66, %71 : vector<16x48xf32>
    %73 = arith.truncf %72 : vector<16x48xf32> to vector<16x48xbf16>
    %c0_36 = arith.constant 0 : index
    %c0_37 = arith.constant 0 : index
    %c0_38 = arith.constant 0 : index
    %74 = vector.load %arg11[%c0_36, %c0_37, %c0_38] : memref<1x16x48xbf16, #tpu.memory_space<vmem>>, vector<1x16x48xbf16>
    %75 = vector.shape_cast %74 : vector<1x16x48xbf16> to vector<16x48xbf16>
    %76 = vector.shape_cast %73 : vector<16x48xbf16> to vector<1x16x48xbf16>
    tpu.vector_store %arg11[%c0_36, %c0_37, %c0_38], %76 {strides = array<i32>} : memref<1x16x48xbf16, #tpu.memory_space<vmem>>, vector<1x16x48xbf16>,
    return
  }
  func.func @transform_0(%arg0: i32) -> (i32, i32, i32) {
    %c0_i32 = arith.constant 0 : i32
    %c0_i32_0 = arith.constant 0 : i32
    %c0_i32_1 = arith.constant 0 : i32
    return %arg0, %c0_i32, %c0_i32_0 : i32, i32, i32
  }
  func.func @transform_1(%arg0: i32) -> (i32, i32, i32) {
    %c0_i32 = arith.constant 0 : i32
    %c0_i32_0 = arith.constant 0 : i32
    %c0_i32_1 = arith.constant 0 : i32
    return %arg0, %c0_i32, %c0_i32_0 : i32, i32, i32
  }
  func.func @transform_2(%arg0: i32) -> (i32, i32, i32) {
    %c0_i32 = arith.constant 0 : i32
    %c0_i32_0 = arith.constant 0 : i32
    %c0_i32_1 = arith.constant 0 : i32
    return %arg0, %c0_i32, %c0_i32_0 : i32, i32, i32
  }
  func.func @transform_3(%arg0: i32) -> (i32, i32) {
    %c0_i32 = arith.constant 0 : i32
    %c0_i32_0 = arith.constant 0 : i32
    %c0_i32_1 = arith.constant 0 : i32
    return %c0_i32, %c0_i32_0 : i32, i32
  }
  func.func @transform_4(%arg0: i32) -> (i32, i32) {
    %c0_i32 = arith.constant 0 : i32
    %c0_i32_0 = arith.constant 0 : i32
    %c0_i32_1 = arith.constant 0 : i32
    return %c0_i32, %c0_i32_0 : i32, i32
  }
  func.func @transform_5(%arg0: i32) -> (i32, i32) {
    %c0_i32 = arith.constant 0 : i32
    %c0_i32_0 = arith.constant 0 : i32
    %c0_i32_1 = arith.constant 0 : i32
    return %c0_i32, %c0_i32_0 : i32, i32
  }
  func.func @transform_6(%arg0: i32) -> (i32, i32) {
    %c0_i32 = arith.constant 0 : i32
    %c0_i32_0 = arith.constant 0 : i32
    %c0_i32_1 = arith.constant 0 : i32
    return %c0_i32, %c0_i32_0 : i32, i32
  }
  func.func @transform_7(%arg0: i32) -> (i32, i32) {
    %c0_i32 = arith.constant 0 : i32
    %c0_i32_0 = arith.constant 0 : i32
    %c0_i32_1 = arith.constant 0 : i32
    return %c0_i32, %c0_i32_0 : i32, i32
  }
  func.func @transform_8(%arg0: i32) -> (i32, i32) {
    %c0_i32 = arith.constant 0 : i32
    %c0_i32_0 = arith.constant 0 : i32
    %c0_i32_1 = arith.constant 0 : i32
    return %c0_i32, %c0_i32_0 : i32, i32
  }
  func.func @transform_9(%arg0: i32) -> (i32, i32) {
    %c0_i32 = arith.constant 0 : i32
    %c0_i32_0 = arith.constant 0 : i32
    %c0_i32_1 = arith.constant 0 : i32
    return %c0_i32, %c0_i32_0 : i32, i32
  }
  func.func @transform_10(%arg0: i32) -> (i32, i32, i32) {
    %c0_i32 = arith.constant 0 : i32
    %c0_i32_0 = arith.constant 0 : i32
    %c0_i32_1 = arith.constant 0 : i32
    return %arg0, %c0_i32, %c0_i32_0 : i32, i32, i32
  }
}

module attributes {stable_mosaic.version = 11 : i64} {
  func.func @_mm_ln_kernel(%arg0: i32, %arg1: memref<32x48xbf16, #tpu.memory_space<vmem>>, %arg2: memref<48x48xbf16, #tpu.memory_space<vmem>>, %arg3: memref<1x48xf32, #tpu.memory_space<vmem>>, %arg4: memref<1x48xf32, #tpu.memory_space<vmem>>, %arg5: memref<32x48xbf16, #tpu.memory_space<vmem>>) attributes {dimension_semantics = [#tpu.dimension_semantics<parallel>], iteration_bounds = array<i64: 1>, scalar_prefetch = 0 : i64, scratch_operands = 0 : i64, tpu.core_type = #tpu.core_type<tc>, window_params = [{transform_indices = @transform_0, window_bounds = array<i64: 32, 48>}, {pipeline_mode = #tpu.pipeline_mode<synchronous>, transform_indices = @transform_1, window_bounds = array<i64: 48, 48>}, {pipeline_mode = #tpu.pipeline_mode<synchronous>, transform_indices = @transform_2, window_bounds = array<i64: 1, 48>}, {pipeline_mode = #tpu.pipeline_mode<synchronous>, transform_indices = @transform_3, window_bounds = array<i64: 1, 48>}, {transform_indices = @transform_4, window_bounds = array<i64: 32, 48>}]} {
    %c0 = arith.constant 0 : index
    %c0_0 = arith.constant 0 : index
    %0 = vector.load %arg1[%c0, %c0_0] : memref<32x48xbf16, #tpu.memory_space<vmem>>, vector<32x48xbf16>
    %c0_1 = arith.constant 0 : index
    %c0_2 = arith.constant 0 : index
    %1 = vector.load %arg2[%c0_1, %c0_2] : memref<48x48xbf16, #tpu.memory_space<vmem>>, vector<48x48xbf16>
    %cst = arith.constant dense<0.000000e+00> : vector<32x48xf32>
    %2 = tpu.matmul %0, %1, %cst {dimension_numbers = #tpu.dot_dimension_numbers<[1], [0], [0], [1], [0, 0, 1, 1], [], []>} : vector<32x48xbf16>, vector<48x48xbf16>, vector<32x48xf32> -> vector<32x48xf32>
    %c0_3 = arith.constant 0 : index
    %c0_4 = arith.constant 0 : index
    %3 = vector.load %arg3[%c0_3, %c0_4] : memref<1x48xf32, #tpu.memory_space<vmem>>, vector<1x48xf32>
    %c0_5 = arith.constant 0 : index
    %c0_6 = arith.constant 0 : index
    %4 = vector.load %arg4[%c0_5, %c0_6] : memref<1x48xf32, #tpu.memory_space<vmem>>, vector<1x48xf32>
    %cst_7 = arith.constant dense<0.000000e+00> : vector<32xf32>
    %5 = vector.multi_reduction <add>, %2, %cst_7 [1] : vector<32x48xf32> to vector<32xf32>
    %6 = vector.shape_cast %5 : vector<32xf32> to vector<32x1xf32>
    %cst_8 = arith.constant 4.800000e+01 : f32
    %7 = vector.broadcast %cst_8 : f32 to vector<32x1xf32>
    %8 = arith.divf %6, %7 : vector<32x1xf32>
    %9 = arith.mulf %2, %2 : vector<32x48xf32>
    %cst_9 = arith.constant dense<0.000000e+00> : vector<32xf32>
    %10 = vector.multi_reduction <add>, %9, %cst_9 [1] : vector<32x48xf32> to vector<32xf32>
    %11 = vector.shape_cast %10 : vector<32xf32> to vector<32x1xf32>
    %cst_10 = arith.constant 4.800000e+01 : f32
    %12 = vector.broadcast %cst_10 : f32 to vector<32x1xf32>
    %13 = arith.divf %11, %12 : vector<32x1xf32>
    %14 = arith.mulf %8, %8 : vector<32x1xf32>
    %15 = arith.subf %13, %14 : vector<32x1xf32>
    %cst_11 = arith.constant 0.000000e+00 : f32
    %16 = vector.broadcast %cst_11 : f32 to vector<32x1xf32>
    %17 = arith.maximumf %15, %16 : vector<32x1xf32>
    %18 = vector.broadcast %8 : vector<32x1xf32> to vector<32x48xf32>
    %19 = arith.subf %2, %18 : vector<32x48xf32>
    %cst_12 = arith.constant 9.99999997E-7 : f32
    %20 = vector.broadcast %cst_12 : f32 to vector<32x1xf32>
    %21 = arith.addf %17, %20 : vector<32x1xf32>
    %22 = math.rsqrt %21 : vector<32x1xf32>
    %23 = vector.broadcast %22 : vector<32x1xf32> to vector<32x48xf32>
    %24 = arith.mulf %19, %23 : vector<32x48xf32>
    %25 = vector.broadcast %3 : vector<1x48xf32> to vector<32x48xf32>
    %26 = arith.mulf %24, %25 : vector<32x48xf32>
    %27 = vector.broadcast %4 : vector<1x48xf32> to vector<32x48xf32>
    %28 = arith.addf %26, %27 : vector<32x48xf32>
    %29 = arith.negf %28 : vector<32x48xf32>
    %30 = math.exp %29 : vector<32x48xf32>
    %cst_13 = arith.constant 1.000000e+00 : f32
    %31 = vector.broadcast %cst_13 : f32 to vector<32x48xf32>
    %32 = arith.addf %31, %30 : vector<32x48xf32>
    %33 = arith.divf %31, %32 : vector<32x48xf32>
    %34 = arith.mulf %28, %33 : vector<32x48xf32>
    %35 = arith.truncf %34 : vector<32x48xf32> to vector<32x48xbf16>
    %c0_14 = arith.constant 0 : index
    %c0_15 = arith.constant 0 : index
    %36 = vector.load %arg5[%c0_14, %c0_15] : memref<32x48xbf16, #tpu.memory_space<vmem>>, vector<32x48xbf16>
    tpu.vector_store %arg5[%c0_14, %c0_15], %35 {strides = array<i32>} : memref<32x48xbf16, #tpu.memory_space<vmem>>, vector<32x48xbf16>,
    return
  }
  func.func @transform_0(%arg0: i32) -> (i32, i32) {
    %c0_i32 = arith.constant 0 : i32
    %c0_i32_0 = arith.constant 0 : i32
    return %arg0, %c0_i32 : i32, i32
  }
  func.func @transform_1(%arg0: i32) -> (i32, i32) {
    %c0_i32 = arith.constant 0 : i32
    %c0_i32_0 = arith.constant 0 : i32
    %c0_i32_1 = arith.constant 0 : i32
    return %c0_i32, %c0_i32_0 : i32, i32
  }
  func.func @transform_2(%arg0: i32) -> (i32, i32) {
    %c0_i32 = arith.constant 0 : i32
    %c0_i32_0 = arith.constant 0 : i32
    %c0_i32_1 = arith.constant 0 : i32
    return %c0_i32, %c0_i32_0 : i32, i32
  }
  func.func @transform_3(%arg0: i32) -> (i32, i32) {
    %c0_i32 = arith.constant 0 : i32
    %c0_i32_0 = arith.constant 0 : i32
    %c0_i32_1 = arith.constant 0 : i32
    return %c0_i32, %c0_i32_0 : i32, i32
  }
  func.func @transform_4(%arg0: i32) -> (i32, i32) {
    %c0_i32 = arith.constant 0 : i32
    %c0_i32_0 = arith.constant 0 : i32
    return %arg0, %c0_i32 : i32, i32
  }
}

module attributes {stable_mosaic.version = 11 : i64} {
  func.func @_conv3_kernel(%arg0: i32, %arg1: memref<1x16x48xbf16, #tpu.memory_space<vmem>>, %arg2: memref<1x1x48xbf16, #tpu.memory_space<vmem>>, %arg3: memref<1x16x48xbf16, #tpu.memory_space<vmem>>, %arg4: memref<48x48xbf16, #tpu.memory_space<vmem>>, %arg5: memref<1x48xf32, #tpu.memory_space<vmem>>, %arg6: memref<1x48xf32, #tpu.memory_space<vmem>>, %arg7: memref<1x16x48xbf16, #tpu.memory_space<vmem>>) attributes {dimension_semantics = [#tpu.dimension_semantics<parallel>], iteration_bounds = array<i64: 2>, scalar_prefetch = 0 : i64, scratch_operands = 0 : i64, tpu.core_type = #tpu.core_type<tc>, window_params = [{transform_indices = @transform_0, window_bounds = array<i64: 1, 16, 48>}, {transform_indices = @transform_1, window_bounds = array<i64: 1, 1, 48>}, {transform_indices = @transform_2, window_bounds = array<i64: 1, 16, 48>}, {pipeline_mode = #tpu.pipeline_mode<synchronous>, transform_indices = @transform_3, window_bounds = array<i64: 48, 48>}, {pipeline_mode = #tpu.pipeline_mode<synchronous>, transform_indices = @transform_4, window_bounds = array<i64: 1, 48>}, {pipeline_mode = #tpu.pipeline_mode<synchronous>, transform_indices = @transform_5, window_bounds = array<i64: 1, 48>}, {transform_indices = @transform_6, window_bounds = array<i64: 1, 16, 48>}]} {
    %c0 = arith.constant 0 : index
    %c0_0 = arith.constant 0 : index
    %c0_1 = arith.constant 0 : index
    %0 = vector.load %arg1[%c0, %c0_0, %c0_1] : memref<1x16x48xbf16, #tpu.memory_space<vmem>>, vector<1x16x48xbf16>
    %1 = vector.shape_cast %0 : vector<1x16x48xbf16> to vector<16x48xbf16>
    %c0_2 = arith.constant 0 : index
    %c0_3 = arith.constant 0 : index
    %c0_4 = arith.constant 0 : index
    %2 = vector.load %arg2[%c0_2, %c0_3, %c0_4] : memref<1x1x48xbf16, #tpu.memory_space<vmem>>, vector<1x1x48xbf16>
    %3 = vector.shape_cast %2 : vector<1x1x48xbf16> to vector<1x48xbf16>
    %4 = vector.broadcast %3 : vector<1x48xbf16> to vector<16x48xbf16>
    %5 = arith.mulf %1, %4 : vector<16x48xbf16>
    %c0_5 = arith.constant 0 : index
    %c0_6 = arith.constant 0 : index
    %6 = vector.load %arg4[%c0_5, %c0_6] : memref<48x48xbf16, #tpu.memory_space<vmem>>, vector<48x48xbf16>
    %cst = arith.constant dense<0.000000e+00> : vector<16x48xf32>
    %7 = tpu.matmul %5, %6, %cst {dimension_numbers = #tpu.dot_dimension_numbers<[1], [0], [0], [1], [0, 0, 1, 1], [], []>} : vector<16x48xbf16>, vector<48x48xbf16>, vector<16x48xf32> -> vector<16x48xf32>
    %c0_7 = arith.constant 0 : index
    %c0_8 = arith.constant 0 : index
    %8 = vector.load %arg5[%c0_7, %c0_8] : memref<1x48xf32, #tpu.memory_space<vmem>>, vector<1x48xf32>
    %c0_9 = arith.constant 0 : index
    %c0_10 = arith.constant 0 : index
    %9 = vector.load %arg6[%c0_9, %c0_10] : memref<1x48xf32, #tpu.memory_space<vmem>>, vector<1x48xf32>
    %cst_11 = arith.constant dense<0.000000e+00> : vector<16xf32>
    %10 = vector.multi_reduction <add>, %7, %cst_11 [1] : vector<16x48xf32> to vector<16xf32>
    %11 = vector.shape_cast %10 : vector<16xf32> to vector<16x1xf32>
    %cst_12 = arith.constant 4.800000e+01 : f32
    %12 = vector.broadcast %cst_12 : f32 to vector<16x1xf32>
    %13 = arith.divf %11, %12 : vector<16x1xf32>
    %14 = arith.mulf %7, %7 : vector<16x48xf32>
    %cst_13 = arith.constant dense<0.000000e+00> : vector<16xf32>
    %15 = vector.multi_reduction <add>, %14, %cst_13 [1] : vector<16x48xf32> to vector<16xf32>
    %16 = vector.shape_cast %15 : vector<16xf32> to vector<16x1xf32>
    %cst_14 = arith.constant 4.800000e+01 : f32
    %17 = vector.broadcast %cst_14 : f32 to vector<16x1xf32>
    %18 = arith.divf %16, %17 : vector<16x1xf32>
    %19 = arith.mulf %13, %13 : vector<16x1xf32>
    %20 = arith.subf %18, %19 : vector<16x1xf32>
    %cst_15 = arith.constant 0.000000e+00 : f32
    %21 = vector.broadcast %cst_15 : f32 to vector<16x1xf32>
    %22 = arith.maximumf %20, %21 : vector<16x1xf32>
    %23 = vector.broadcast %13 : vector<16x1xf32> to vector<16x48xf32>
    %24 = arith.subf %7, %23 : vector<16x48xf32>
    %cst_16 = arith.constant 9.99999997E-7 : f32
    %25 = vector.broadcast %cst_16 : f32 to vector<16x1xf32>
    %26 = arith.addf %22, %25 : vector<16x1xf32>
    %27 = math.rsqrt %26 : vector<16x1xf32>
    %28 = vector.broadcast %27 : vector<16x1xf32> to vector<16x48xf32>
    %29 = arith.mulf %24, %28 : vector<16x48xf32>
    %30 = vector.broadcast %8 : vector<1x48xf32> to vector<16x48xf32>
    %31 = arith.mulf %29, %30 : vector<16x48xf32>
    %32 = vector.broadcast %9 : vector<1x48xf32> to vector<16x48xf32>
    %33 = arith.addf %31, %32 : vector<16x48xf32>
    %c0_17 = arith.constant 0 : index
    %c0_18 = arith.constant 0 : index
    %c0_19 = arith.constant 0 : index
    %34 = vector.load %arg3[%c0_17, %c0_18, %c0_19] : memref<1x16x48xbf16, #tpu.memory_space<vmem>>, vector<1x16x48xbf16>
    %35 = vector.shape_cast %34 : vector<1x16x48xbf16> to vector<16x48xbf16>
    %36 = arith.extf %35 : vector<16x48xbf16> to vector<16x48xf32>
    %37 = arith.addf %33, %36 : vector<16x48xf32>
    %38 = arith.negf %37 : vector<16x48xf32>
    %39 = math.exp %38 : vector<16x48xf32>
    %cst_20 = arith.constant 1.000000e+00 : f32
    %40 = vector.broadcast %cst_20 : f32 to vector<16x48xf32>
    %41 = arith.addf %40, %39 : vector<16x48xf32>
    %42 = arith.divf %40, %41 : vector<16x48xf32>
    %43 = arith.mulf %37, %42 : vector<16x48xf32>
    %44 = arith.truncf %43 : vector<16x48xf32> to vector<16x48xbf16>
    %c0_21 = arith.constant 0 : index
    %c0_22 = arith.constant 0 : index
    %c0_23 = arith.constant 0 : index
    %45 = vector.load %arg7[%c0_21, %c0_22, %c0_23] : memref<1x16x48xbf16, #tpu.memory_space<vmem>>, vector<1x16x48xbf16>
    %46 = vector.shape_cast %45 : vector<1x16x48xbf16> to vector<16x48xbf16>
    %47 = vector.shape_cast %44 : vector<16x48xbf16> to vector<1x16x48xbf16>
    tpu.vector_store %arg7[%c0_21, %c0_22, %c0_23], %47 {strides = array<i32>} : memref<1x16x48xbf16, #tpu.memory_space<vmem>>, vector<1x16x48xbf16>,
    return
  }
  func.func @transform_0(%arg0: i32) -> (i32, i32, i32) {
    %c0_i32 = arith.constant 0 : i32
    %c0_i32_0 = arith.constant 0 : i32
    %c0_i32_1 = arith.constant 0 : i32
    return %arg0, %c0_i32, %c0_i32_0 : i32, i32, i32
  }
  func.func @transform_1(%arg0: i32) -> (i32, i32, i32) {
    %c0_i32 = arith.constant 0 : i32
    %c0_i32_0 = arith.constant 0 : i32
    %c0_i32_1 = arith.constant 0 : i32
    return %arg0, %c0_i32, %c0_i32_0 : i32, i32, i32
  }
  func.func @transform_2(%arg0: i32) -> (i32, i32, i32) {
    %c0_i32 = arith.constant 0 : i32
    %c0_i32_0 = arith.constant 0 : i32
    %c0_i32_1 = arith.constant 0 : i32
    return %arg0, %c0_i32, %c0_i32_0 : i32, i32, i32
  }
  func.func @transform_3(%arg0: i32) -> (i32, i32) {
    %c0_i32 = arith.constant 0 : i32
    %c0_i32_0 = arith.constant 0 : i32
    %c0_i32_1 = arith.constant 0 : i32
    return %c0_i32, %c0_i32_0 : i32, i32
  }
  func.func @transform_4(%arg0: i32) -> (i32, i32) {
    %c0_i32 = arith.constant 0 : i32
    %c0_i32_0 = arith.constant 0 : i32
    %c0_i32_1 = arith.constant 0 : i32
    return %c0_i32, %c0_i32_0 : i32, i32
  }
  func.func @transform_5(%arg0: i32) -> (i32, i32) {
    %c0_i32 = arith.constant 0 : i32
    %c0_i32_0 = arith.constant 0 : i32
    %c0_i32_1 = arith.constant 0 : i32
    return %c0_i32, %c0_i32_0 : i32, i32
  }
  func.func @transform_6(%arg0: i32) -> (i32, i32, i32) {
    %c0_i32 = arith.constant 0 : i32
    %c0_i32_0 = arith.constant 0 : i32
    %c0_i32_1 = arith.constant 0 : i32
    return %arg0, %c0_i32, %c0_i32_0 : i32, i32, i32
  }
}

module attributes {stable_mosaic.version = 11 : i64} {
  func.func @_dwconv_ln_kernel(%arg0: i32, %arg1: memref<1x2x2x48xbf16, #tpu.memory_space<vmem>>, %arg2: memref<3x3x48xbf16, #tpu.memory_space<vmem>>, %arg3: memref<1x48xf32, #tpu.memory_space<vmem>>, %arg4: memref<1x48xf32, #tpu.memory_space<vmem>>, %arg5: memref<1x2x2x48xbf16, #tpu.memory_space<vmem>>, %arg6: memref<4x4x48xbf16, #tpu.memory_space<vmem>>) attributes {dimension_semantics = [#tpu.dimension_semantics<parallel>], iteration_bounds = array<i64: 2>, scalar_prefetch = 0 : i64, scratch_operands = 1 : i64, tpu.core_type = #tpu.core_type<tc>, window_params = [{transform_indices = @transform_0, window_bounds = array<i64: 1, 2, 2, 48>}, {pipeline_mode = #tpu.pipeline_mode<synchronous>, transform_indices = @transform_1, window_bounds = array<i64: 3, 3, 48>}, {pipeline_mode = #tpu.pipeline_mode<synchronous>, transform_indices = @transform_2, window_bounds = array<i64: 1, 48>}, {pipeline_mode = #tpu.pipeline_mode<synchronous>, transform_indices = @transform_3, window_bounds = array<i64: 1, 48>}, {transform_indices = @transform_4, window_bounds = array<i64: 1, 2, 2, 48>}]} {
    %cst = arith.constant 0.000000e+00 : bf16
    %0 = vector.broadcast %cst : bf16 to vector<1x4x48xbf16>
    %cst_0 = arith.constant 0.000000e+00 : bf16
    %1 = vector.broadcast %cst_0 : bf16 to vector<4x1x48xbf16>
    %c0 = arith.constant 0 : index
    %c0_1 = arith.constant 0 : index
    %c0_2 = arith.constant 0 : index
    %2 = vector.load %arg6[%c0, %c0_1, %c0_2] : memref<4x4x48xbf16, #tpu.memory_space<vmem>>, vector<1x4x48xbf16>
    tpu.vector_store %arg6[%c0, %c0_1, %c0_2], %0 {strides = array<i32>} : memref<4x4x48xbf16, #tpu.memory_space<vmem>>, vector<1x4x48xbf16>,
    %c3 = arith.constant 3 : index
    %c0_3 = arith.constant 0 : index
    %c0_4 = arith.constant 0 : index
    %3 = vector.load %arg6[%c3, %c0_3, %c0_4] : memref<4x4x48xbf16, #tpu.memory_space<vmem>>, vector<1x4x48xbf16>
    tpu.vector_store %arg6[%c3, %c0_3, %c0_4], %0 {strides = array<i32>} : memref<4x4x48xbf16, #tpu.memory_space<vmem>>, vector<1x4x48xbf16>,
    %c0_5 = arith.constant 0 : index
    %c0_6 = arith.constant 0 : index
    %c0_7 = arith.constant 0 : index
    %4 = vector.load %arg6[%c0_5, %c0_6, %c0_7] : memref<4x4x48xbf16, #tpu.memory_space<vmem>>, vector<4x1x48xbf16>
    tpu.vector_store %arg6[%c0_5, %c0_6, %c0_7], %1 {strides = array<i32>} : memref<4x4x48xbf16, #tpu.memory_space<vmem>>, vector<4x1x48xbf16>,
    %c0_8 = arith.constant 0 : index
    %c3_9 = arith.constant 3 : index
    %c0_10 = arith.constant 0 : index
    %5 = vector.load %arg6[%c0_8, %c3_9, %c0_10] : memref<4x4x48xbf16, #tpu.memory_space<vmem>>, vector<4x1x48xbf16>
    tpu.vector_store %arg6[%c0_8, %c3_9, %c0_10], %1 {strides = array<i32>} : memref<4x4x48xbf16, #tpu.memory_space<vmem>>, vector<4x1x48xbf16>,
    %c0_11 = arith.constant 0 : index
    %c0_12 = arith.constant 0 : index
    %c0_13 = arith.constant 0 : index
    %c0_14 = arith.constant 0 : index
    %6 = vector.load %arg1[%c0_11, %c0_12, %c0_13, %c0_14] : memref<1x2x2x48xbf16, #tpu.memory_space<vmem>>, vector<1x2x2x48xbf16>
    %7 = vector.shape_cast %6 : vector<1x2x2x48xbf16> to vector<2x2x48xbf16>
    %c1 = arith.constant 1 : index
    %c1_15 = arith.constant 1 : index
    %c0_16 = arith.constant 0 : index
    %8 = vector.load %arg6[%c1, %c1_15, %c0_16] : memref<4x4x48xbf16, #tpu.memory_space<vmem>>, vector<2x2x48xbf16>
    tpu.vector_store %arg6[%c1, %c1_15, %c0_16], %7 {strides = array<i32>} : memref<4x4x48xbf16, #tpu.memory_space<vmem>>, vector<2x2x48xbf16>,
    %c0_17 = arith.constant 0 : index
    %c0_18 = arith.constant 0 : index
    %c0_19 = arith.constant 0 : index
    %9 = vector.load %arg2[%c0_17, %c0_18, %c0_19] : memref<3x3x48xbf16, #tpu.memory_space<vmem>>, vector<3x3x48xbf16>
    %10 = arith.extf %9 : vector<3x3x48xbf16> to vector<3x3x48xf32>
    %cst_20 = arith.constant 0.000000e+00 : f32
    %11 = vector.broadcast %cst_20 : f32 to vector<2x2x48xf32>
    %c0_21 = arith.constant 0 : index
    %c0_22 = arith.constant 0 : index
    %c0_23 = arith.constant 0 : index
    %12 = vector.load %arg6[%c0_21, %c0_22, %c0_23] : memref<4x4x48xbf16, #tpu.memory_space<vmem>>, vector<2x2x48xbf16>
    %13 = arith.extf %12 : vector<2x2x48xbf16> to vector<2x2x48xf32>
    %14 = vector.extract_strided_slice %10 {offsets = [0, 0, 0], sizes = [1, 1, 48], strides = [1, 1, 1]} : vector<3x3x48xf32> to vector<1x1x48xf32>
    %15 = vector.broadcast %14 : vector<1x1x48xf32> to vector<2x2x48xf32>
    %16 = arith.mulf %13, %15 : vector<2x2x48xf32>
    %17 = arith.addf %11, %16 : vector<2x2x48xf32>
    %c0_24 = arith.constant 0 : index
    %c1_25 = arith.constant 1 : index
    %c0_26 = arith.constant 0 : index
    %18 = vector.load %arg6[%c0_24, %c1_25, %c0_26] : memref<4x4x48xbf16, #tpu.memory_space<vmem>>, vector<2x2x48xbf16>
    %19 = arith.extf %18 : vector<2x2x48xbf16> to vector<2x2x48xf32>
    %20 = vector.extract_strided_slice %10 {offsets = [0, 1, 0], sizes = [1, 1, 48], strides = [1, 1, 1]} : vector<3x3x48xf32> to vector<1x1x48xf32>
    %21 = vector.broadcast %20 : vector<1x1x48xf32> to vector<2x2x48xf32>
    %22 = arith.mulf %19, %21 : vector<2x2x48xf32>
    %23 = arith.addf %17, %22 : vector<2x2x48xf32>
    %c0_27 = arith.constant 0 : index
    %c2 = arith.constant 2 : index
    %c0_28 = arith.constant 0 : index
    %24 = vector.load %arg6[%c0_27, %c2, %c0_28] : memref<4x4x48xbf16, #tpu.memory_space<vmem>>, vector<2x2x48xbf16>
    %25 = arith.extf %24 : vector<2x2x48xbf16> to vector<2x2x48xf32>
    %26 = vector.extract_strided_slice %10 {offsets = [0, 2, 0], sizes = [1, 1, 48], strides = [1, 1, 1]} : vector<3x3x48xf32> to vector<1x1x48xf32>
    %27 = vector.broadcast %26 : vector<1x1x48xf32> to vector<2x2x48xf32>
    %28 = arith.mulf %25, %27 : vector<2x2x48xf32>
    %29 = arith.addf %23, %28 : vector<2x2x48xf32>
    %c1_29 = arith.constant 1 : index
    %c0_30 = arith.constant 0 : index
    %c0_31 = arith.constant 0 : index
    %30 = vector.load %arg6[%c1_29, %c0_30, %c0_31] : memref<4x4x48xbf16, #tpu.memory_space<vmem>>, vector<2x2x48xbf16>
    %31 = arith.extf %30 : vector<2x2x48xbf16> to vector<2x2x48xf32>
    %32 = vector.extract_strided_slice %10 {offsets = [1, 0, 0], sizes = [1, 1, 48], strides = [1, 1, 1]} : vector<3x3x48xf32> to vector<1x1x48xf32>
    %33 = vector.broadcast %32 : vector<1x1x48xf32> to vector<2x2x48xf32>
    %34 = arith.mulf %31, %33 : vector<2x2x48xf32>
    %35 = arith.addf %29, %34 : vector<2x2x48xf32>
    %c1_32 = arith.constant 1 : index
    %c1_33 = arith.constant 1 : index
    %c0_34 = arith.constant 0 : index
    %36 = vector.load %arg6[%c1_32, %c1_33, %c0_34] : memref<4x4x48xbf16, #tpu.memory_space<vmem>>, vector<2x2x48xbf16>
    %37 = arith.extf %36 : vector<2x2x48xbf16> to vector<2x2x48xf32>
    %38 = vector.extract_strided_slice %10 {offsets = [1, 1, 0], sizes = [1, 1, 48], strides = [1, 1, 1]} : vector<3x3x48xf32> to vector<1x1x48xf32>
    %39 = vector.broadcast %38 : vector<1x1x48xf32> to vector<2x2x48xf32>
    %40 = arith.mulf %37, %39 : vector<2x2x48xf32>
    %41 = arith.addf %35, %40 : vector<2x2x48xf32>
    %c1_35 = arith.constant 1 : index
    %c2_36 = arith.constant 2 : index
    %c0_37 = arith.constant 0 : index
    %42 = vector.load %arg6[%c1_35, %c2_36, %c0_37] : memref<4x4x48xbf16, #tpu.memory_space<vmem>>, vector<2x2x48xbf16>
    %43 = arith.extf %42 : vector<2x2x48xbf16> to vector<2x2x48xf32>
    %44 = vector.extract_strided_slice %10 {offsets = [1, 2, 0], sizes = [1, 1, 48], strides = [1, 1, 1]} : vector<3x3x48xf32> to vector<1x1x48xf32>
    %45 = vector.broadcast %44 : vector<1x1x48xf32> to vector<2x2x48xf32>
    %46 = arith.mulf %43, %45 : vector<2x2x48xf32>
    %47 = arith.addf %41, %46 : vector<2x2x48xf32>
    %c2_38 = arith.constant 2 : index
    %c0_39 = arith.constant 0 : index
    %c0_40 = arith.constant 0 : index
    %48 = vector.load %arg6[%c2_38, %c0_39, %c0_40] : memref<4x4x48xbf16, #tpu.memory_space<vmem>>, vector<2x2x48xbf16>
    %49 = arith.extf %48 : vector<2x2x48xbf16> to vector<2x2x48xf32>
    %50 = vector.extract_strided_slice %10 {offsets = [2, 0, 0], sizes = [1, 1, 48], strides = [1, 1, 1]} : vector<3x3x48xf32> to vector<1x1x48xf32>
    %51 = vector.broadcast %50 : vector<1x1x48xf32> to vector<2x2x48xf32>
    %52 = arith.mulf %49, %51 : vector<2x2x48xf32>
    %53 = arith.addf %47, %52 : vector<2x2x48xf32>
    %c2_41 = arith.constant 2 : index
    %c1_42 = arith.constant 1 : index
    %c0_43 = arith.constant 0 : index
    %54 = vector.load %arg6[%c2_41, %c1_42, %c0_43] : memref<4x4x48xbf16, #tpu.memory_space<vmem>>, vector<2x2x48xbf16>
    %55 = arith.extf %54 : vector<2x2x48xbf16> to vector<2x2x48xf32>
    %56 = vector.extract_strided_slice %10 {offsets = [2, 1, 0], sizes = [1, 1, 48], strides = [1, 1, 1]} : vector<3x3x48xf32> to vector<1x1x48xf32>
    %57 = vector.broadcast %56 : vector<1x1x48xf32> to vector<2x2x48xf32>
    %58 = arith.mulf %55, %57 : vector<2x2x48xf32>
    %59 = arith.addf %53, %58 : vector<2x2x48xf32>
    %c2_44 = arith.constant 2 : index
    %c2_45 = arith.constant 2 : index
    %c0_46 = arith.constant 0 : index
    %60 = vector.load %arg6[%c2_44, %c2_45, %c0_46] : memref<4x4x48xbf16, #tpu.memory_space<vmem>>, vector<2x2x48xbf16>
    %61 = arith.extf %60 : vector<2x2x48xbf16> to vector<2x2x48xf32>
    %62 = vector.extract_strided_slice %10 {offsets = [2, 2, 0], sizes = [1, 1, 48], strides = [1, 1, 1]} : vector<3x3x48xf32> to vector<1x1x48xf32>
    %63 = vector.broadcast %62 : vector<1x1x48xf32> to vector<2x2x48xf32>
    %64 = arith.mulf %61, %63 : vector<2x2x48xf32>
    %65 = arith.addf %59, %64 : vector<2x2x48xf32>
    %c0_47 = arith.constant 0 : index
    %c0_48 = arith.constant 0 : index
    %66 = vector.load %arg3[%c0_47, %c0_48] : memref<1x48xf32, #tpu.memory_space<vmem>>, vector<1x48xf32>
    %c0_49 = arith.constant 0 : index
    %c0_50 = arith.constant 0 : index
    %67 = vector.load %arg4[%c0_49, %c0_50] : memref<1x48xf32, #tpu.memory_space<vmem>>, vector<1x48xf32>
    %cst_51 = arith.constant dense<0.000000e+00> : vector<2x2xf32>
    %68 = vector.multi_reduction <add>, %65, %cst_51 [2] : vector<2x2x48xf32> to vector<2x2xf32>
    %69 = vector.shape_cast %68 : vector<2x2xf32> to vector<2x2x1xf32>
    %cst_52 = arith.constant 4.800000e+01 : f32
    %70 = vector.broadcast %cst_52 : f32 to vector<2x2x1xf32>
    %71 = arith.divf %69, %70 : vector<2x2x1xf32>
    %72 = arith.mulf %65, %65 : vector<2x2x48xf32>
    %cst_53 = arith.constant dense<0.000000e+00> : vector<2x2xf32>
    %73 = vector.multi_reduction <add>, %72, %cst_53 [2] : vector<2x2x48xf32> to vector<2x2xf32>
    %74 = vector.shape_cast %73 : vector<2x2xf32> to vector<2x2x1xf32>
    %cst_54 = arith.constant 4.800000e+01 : f32
    %75 = vector.broadcast %cst_54 : f32 to vector<2x2x1xf32>
    %76 = arith.divf %74, %75 : vector<2x2x1xf32>
    %77 = arith.mulf %71, %71 : vector<2x2x1xf32>
    %78 = arith.subf %76, %77 : vector<2x2x1xf32>
    %cst_55 = arith.constant 0.000000e+00 : f32
    %79 = vector.broadcast %cst_55 : f32 to vector<2x2x1xf32>
    %80 = arith.maximumf %78, %79 : vector<2x2x1xf32>
    %81 = vector.broadcast %71 : vector<2x2x1xf32> to vector<2x2x48xf32>
    %82 = arith.subf %65, %81 : vector<2x2x48xf32>
    %cst_56 = arith.constant 9.99999997E-7 : f32
    %83 = vector.broadcast %cst_56 : f32 to vector<2x2x1xf32>
    %84 = arith.addf %80, %83 : vector<2x2x1xf32>
    %85 = math.rsqrt %84 : vector<2x2x1xf32>
    %86 = vector.broadcast %85 : vector<2x2x1xf32> to vector<2x2x48xf32>
    %87 = arith.mulf %82, %86 : vector<2x2x48xf32>
    %88 = vector.shape_cast %66 : vector<1x48xf32> to vector<1x1x48xf32>
    %89 = vector.broadcast %88 : vector<1x1x48xf32> to vector<2x2x48xf32>
    %90 = arith.mulf %87, %89 : vector<2x2x48xf32>
    %91 = vector.shape_cast %67 : vector<1x48xf32> to vector<1x1x48xf32>
    %92 = vector.broadcast %91 : vector<1x1x48xf32> to vector<2x2x48xf32>
    %93 = arith.addf %90, %92 : vector<2x2x48xf32>
    %94 = arith.negf %93 : vector<2x2x48xf32>
    %95 = math.exp %94 : vector<2x2x48xf32>
    %cst_57 = arith.constant 1.000000e+00 : f32
    %96 = vector.broadcast %cst_57 : f32 to vector<2x2x48xf32>
    %97 = arith.addf %96, %95 : vector<2x2x48xf32>
    %98 = arith.divf %96, %97 : vector<2x2x48xf32>
    %99 = arith.mulf %93, %98 : vector<2x2x48xf32>
    %100 = arith.truncf %99 : vector<2x2x48xf32> to vector<2x2x48xbf16>
    %c0_58 = arith.constant 0 : index
    %c0_59 = arith.constant 0 : index
    %c0_60 = arith.constant 0 : index
    %c0_61 = arith.constant 0 : index
    %101 = vector.load %arg5[%c0_58, %c0_59, %c0_60, %c0_61] : memref<1x2x2x48xbf16, #tpu.memory_space<vmem>>, vector<1x2x2x48xbf16>
    %102 = vector.shape_cast %101 : vector<1x2x2x48xbf16> to vector<2x2x48xbf16>
    %103 = vector.shape_cast %100 : vector<2x2x48xbf16> to vector<1x2x2x48xbf16>
    tpu.vector_store %arg5[%c0_58, %c0_59, %c0_60, %c0_61], %103 {strides = array<i32>} : memref<1x2x2x48xbf16, #tpu.memory_space<vmem>>, vector<1x2x2x48xbf16>,
    return
  }
  func.func @transform_0(%arg0: i32) -> (i32, i32, i32, i32) {
    %c0_i32 = arith.constant 0 : i32
    %c0_i32_0 = arith.constant 0 : i32
    %c0_i32_1 = arith.constant 0 : i32
    %c0_i32_2 = arith.constant 0 : i32
    return %arg0, %c0_i32, %c0_i32_0, %c0_i32_1 : i32, i32, i32, i32
  }
  func.func @transform_1(%arg0: i32) -> (i32, i32, i32) {
    %c0_i32 = arith.constant 0 : i32
    %c0_i32_0 = arith.constant 0 : i32
    %c0_i32_1 = arith.constant 0 : i32
    %c0_i32_2 = arith.constant 0 : i32
    return %c0_i32, %c0_i32_0, %c0_i32_1 : i32, i32, i32
  }
  func.func @transform_2(%arg0: i32) -> (i32, i32) {
    %c0_i32 = arith.constant 0 : i32
    %c0_i32_0 = arith.constant 0 : i32
    %c0_i32_1 = arith.constant 0 : i32
    return %c0_i32, %c0_i32_0 : i32, i32
  }
  func.func @transform_3(%arg0: i32) -> (i32, i32) {
    %c0_i32 = arith.constant 0 : i32
    %c0_i32_0 = arith.constant 0 : i32
    %c0_i32_1 = arith.constant 0 : i32
    return %c0_i32, %c0_i32_0 : i32, i32
  }
  func.func @transform_4(%arg0: i32) -> (i32, i32, i32, i32) {
    %c0_i32 = arith.constant 0 : i32
    %c0_i32_0 = arith.constant 0 : i32
    %c0_i32_1 = arith.constant 0 : i32
    %c0_i32_2 = arith.constant 0 : i32
    return %arg0, %c0_i32, %c0_i32_0, %c0_i32_1 : i32, i32, i32, i32
  }
}

module attributes {stable_mosaic.version = 11 : i64} {
  func.func @_mm_ln_kernel(%arg0: i32, %arg1: memref<8x48xbf16, #tpu.memory_space<vmem>>, %arg2: memref<48x48xbf16, #tpu.memory_space<vmem>>, %arg3: memref<1x48xf32, #tpu.memory_space<vmem>>, %arg4: memref<1x48xf32, #tpu.memory_space<vmem>>, %arg5: memref<8x48xbf16, #tpu.memory_space<vmem>>) attributes {dimension_semantics = [#tpu.dimension_semantics<parallel>], iteration_bounds = array<i64: 1>, scalar_prefetch = 0 : i64, scratch_operands = 0 : i64, tpu.core_type = #tpu.core_type<tc>, window_params = [{transform_indices = @transform_0, window_bounds = array<i64: 8, 48>}, {pipeline_mode = #tpu.pipeline_mode<synchronous>, transform_indices = @transform_1, window_bounds = array<i64: 48, 48>}, {pipeline_mode = #tpu.pipeline_mode<synchronous>, transform_indices = @transform_2, window_bounds = array<i64: 1, 48>}, {pipeline_mode = #tpu.pipeline_mode<synchronous>, transform_indices = @transform_3, window_bounds = array<i64: 1, 48>}, {transform_indices = @transform_4, window_bounds = array<i64: 8, 48>}]} {
    %c0 = arith.constant 0 : index
    %c0_0 = arith.constant 0 : index
    %0 = vector.load %arg1[%c0, %c0_0] : memref<8x48xbf16, #tpu.memory_space<vmem>>, vector<8x48xbf16>
    %c0_1 = arith.constant 0 : index
    %c0_2 = arith.constant 0 : index
    %1 = vector.load %arg2[%c0_1, %c0_2] : memref<48x48xbf16, #tpu.memory_space<vmem>>, vector<48x48xbf16>
    %cst = arith.constant dense<0.000000e+00> : vector<8x48xf32>
    %2 = tpu.matmul %0, %1, %cst {dimension_numbers = #tpu.dot_dimension_numbers<[1], [0], [0], [1], [0, 0, 1, 1], [], []>} : vector<8x48xbf16>, vector<48x48xbf16>, vector<8x48xf32> -> vector<8x48xf32>
    %c0_3 = arith.constant 0 : index
    %c0_4 = arith.constant 0 : index
    %3 = vector.load %arg3[%c0_3, %c0_4] : memref<1x48xf32, #tpu.memory_space<vmem>>, vector<1x48xf32>
    %c0_5 = arith.constant 0 : index
    %c0_6 = arith.constant 0 : index
    %4 = vector.load %arg4[%c0_5, %c0_6] : memref<1x48xf32, #tpu.memory_space<vmem>>, vector<1x48xf32>
    %cst_7 = arith.constant dense<0.000000e+00> : vector<8xf32>
    %5 = vector.multi_reduction <add>, %2, %cst_7 [1] : vector<8x48xf32> to vector<8xf32>
    %6 = vector.shape_cast %5 : vector<8xf32> to vector<8x1xf32>
    %cst_8 = arith.constant 4.800000e+01 : f32
    %7 = vector.broadcast %cst_8 : f32 to vector<8x1xf32>
    %8 = arith.divf %6, %7 : vector<8x1xf32>
    %9 = arith.mulf %2, %2 : vector<8x48xf32>
    %cst_9 = arith.constant dense<0.000000e+00> : vector<8xf32>
    %10 = vector.multi_reduction <add>, %9, %cst_9 [1] : vector<8x48xf32> to vector<8xf32>
    %11 = vector.shape_cast %10 : vector<8xf32> to vector<8x1xf32>
    %cst_10 = arith.constant 4.800000e+01 : f32
    %12 = vector.broadcast %cst_10 : f32 to vector<8x1xf32>
    %13 = arith.divf %11, %12 : vector<8x1xf32>
    %14 = arith.mulf %8, %8 : vector<8x1xf32>
    %15 = arith.subf %13, %14 : vector<8x1xf32>
    %cst_11 = arith.constant 0.000000e+00 : f32
    %16 = vector.broadcast %cst_11 : f32 to vector<8x1xf32>
    %17 = arith.maximumf %15, %16 : vector<8x1xf32>
    %18 = vector.broadcast %8 : vector<8x1xf32> to vector<8x48xf32>
    %19 = arith.subf %2, %18 : vector<8x48xf32>
    %cst_12 = arith.constant 9.99999997E-7 : f32
    %20 = vector.broadcast %cst_12 : f32 to vector<8x1xf32>
    %21 = arith.addf %17, %20 : vector<8x1xf32>
    %22 = math.rsqrt %21 : vector<8x1xf32>
    %23 = vector.broadcast %22 : vector<8x1xf32> to vector<8x48xf32>
    %24 = arith.mulf %19, %23 : vector<8x48xf32>
    %25 = vector.broadcast %3 : vector<1x48xf32> to vector<8x48xf32>
    %26 = arith.mulf %24, %25 : vector<8x48xf32>
    %27 = vector.broadcast %4 : vector<1x48xf32> to vector<8x48xf32>
    %28 = arith.addf %26, %27 : vector<8x48xf32>
    %29 = arith.negf %28 : vector<8x48xf32>
    %30 = math.exp %29 : vector<8x48xf32>
    %cst_13 = arith.constant 1.000000e+00 : f32
    %31 = vector.broadcast %cst_13 : f32 to vector<8x48xf32>
    %32 = arith.addf %31, %30 : vector<8x48xf32>
    %33 = arith.divf %31, %32 : vector<8x48xf32>
    %34 = arith.mulf %28, %33 : vector<8x48xf32>
    %35 = arith.truncf %34 : vector<8x48xf32> to vector<8x48xbf16>
    %c0_14 = arith.constant 0 : index
    %c0_15 = arith.constant 0 : index
    %36 = vector.load %arg5[%c0_14, %c0_15] : memref<8x48xbf16, #tpu.memory_space<vmem>>, vector<8x48xbf16>
    tpu.vector_store %arg5[%c0_14, %c0_15], %35 {strides = array<i32>} : memref<8x48xbf16, #tpu.memory_space<vmem>>, vector<8x48xbf16>,
    return
  }
  func.func @transform_0(%arg0: i32) -> (i32, i32) {
    %c0_i32 = arith.constant 0 : i32
    %c0_i32_0 = arith.constant 0 : i32
    return %arg0, %c0_i32 : i32, i32
  }
  func.func @transform_1(%arg0: i32) -> (i32, i32) {
    %c0_i32 = arith.constant 0 : i32
    %c0_i32_0 = arith.constant 0 : i32
    %c0_i32_1 = arith.constant 0 : i32
    return %c0_i32, %c0_i32_0 : i32, i32
  }
  func.func @transform_2(%arg0: i32) -> (i32, i32) {
    %c0_i32 = arith.constant 0 : i32
    %c0_i32_0 = arith.constant 0 : i32
    %c0_i32_1 = arith.constant 0 : i32
    return %c0_i32, %c0_i32_0 : i32, i32
  }
  func.func @transform_3(%arg0: i32) -> (i32, i32) {
    %c0_i32 = arith.constant 0 : i32
    %c0_i32_0 = arith.constant 0 : i32
    %c0_i32_1 = arith.constant 0 : i32
    return %c0_i32, %c0_i32_0 : i32, i32
  }
  func.func @transform_4(%arg0: i32) -> (i32, i32) {
    %c0_i32 = arith.constant 0 : i32
    %c0_i32_0 = arith.constant 0 : i32
    return %arg0, %c0_i32 : i32, i32
  }
}

module attributes {stable_mosaic.version = 11 : i64} {
  func.func @_conv3_kernel(%arg0: i32, %arg1: memref<1x4x48xbf16, #tpu.memory_space<vmem>>, %arg2: memref<1x1x48xbf16, #tpu.memory_space<vmem>>, %arg3: memref<1x4x48xbf16, #tpu.memory_space<vmem>>, %arg4: memref<48x48xbf16, #tpu.memory_space<vmem>>, %arg5: memref<1x48xf32, #tpu.memory_space<vmem>>, %arg6: memref<1x48xf32, #tpu.memory_space<vmem>>, %arg7: memref<1x4x48xbf16, #tpu.memory_space<vmem>>) attributes {dimension_semantics = [#tpu.dimension_semantics<parallel>], iteration_bounds = array<i64: 2>, scalar_prefetch = 0 : i64, scratch_operands = 0 : i64, tpu.core_type = #tpu.core_type<tc>, window_params = [{transform_indices = @transform_0, window_bounds = array<i64: 1, 4, 48>}, {transform_indices = @transform_1, window_bounds = array<i64: 1, 1, 48>}, {transform_indices = @transform_2, window_bounds = array<i64: 1, 4, 48>}, {pipeline_mode = #tpu.pipeline_mode<synchronous>, transform_indices = @transform_3, window_bounds = array<i64: 48, 48>}, {pipeline_mode = #tpu.pipeline_mode<synchronous>, transform_indices = @transform_4, window_bounds = array<i64: 1, 48>}, {pipeline_mode = #tpu.pipeline_mode<synchronous>, transform_indices = @transform_5, window_bounds = array<i64: 1, 48>}, {transform_indices = @transform_6, window_bounds = array<i64: 1, 4, 48>}]} {
    %c0 = arith.constant 0 : index
    %c0_0 = arith.constant 0 : index
    %c0_1 = arith.constant 0 : index
    %0 = vector.load %arg1[%c0, %c0_0, %c0_1] : memref<1x4x48xbf16, #tpu.memory_space<vmem>>, vector<1x4x48xbf16>
    %1 = vector.shape_cast %0 : vector<1x4x48xbf16> to vector<4x48xbf16>
    %c0_2 = arith.constant 0 : index
    %c0_3 = arith.constant 0 : index
    %c0_4 = arith.constant 0 : index
    %2 = vector.load %arg2[%c0_2, %c0_3, %c0_4] : memref<1x1x48xbf16, #tpu.memory_space<vmem>>, vector<1x1x48xbf16>
    %3 = vector.shape_cast %2 : vector<1x1x48xbf16> to vector<1x48xbf16>
    %4 = vector.broadcast %3 : vector<1x48xbf16> to vector<4x48xbf16>
    %5 = arith.mulf %1, %4 : vector<4x48xbf16>
    %c0_5 = arith.constant 0 : index
    %c0_6 = arith.constant 0 : index
    %6 = vector.load %arg4[%c0_5, %c0_6] : memref<48x48xbf16, #tpu.memory_space<vmem>>, vector<48x48xbf16>
    %cst = arith.constant dense<0.000000e+00> : vector<4x48xf32>
    %7 = tpu.matmul %5, %6, %cst {dimension_numbers = #tpu.dot_dimension_numbers<[1], [0], [0], [1], [0, 0, 1, 1], [], []>} : vector<4x48xbf16>, vector<48x48xbf16>, vector<4x48xf32> -> vector<4x48xf32>
    %c0_7 = arith.constant 0 : index
    %c0_8 = arith.constant 0 : index
    %8 = vector.load %arg5[%c0_7, %c0_8] : memref<1x48xf32, #tpu.memory_space<vmem>>, vector<1x48xf32>
    %c0_9 = arith.constant 0 : index
    %c0_10 = arith.constant 0 : index
    %9 = vector.load %arg6[%c0_9, %c0_10] : memref<1x48xf32, #tpu.memory_space<vmem>>, vector<1x48xf32>
    %cst_11 = arith.constant dense<0.000000e+00> : vector<4xf32>
    %10 = vector.multi_reduction <add>, %7, %cst_11 [1] : vector<4x48xf32> to vector<4xf32>
    %11 = vector.shape_cast %10 : vector<4xf32> to vector<4x1xf32>
    %cst_12 = arith.constant 4.800000e+01 : f32
    %12 = vector.broadcast %cst_12 : f32 to vector<4x1xf32>
    %13 = arith.divf %11, %12 : vector<4x1xf32>
    %14 = arith.mulf %7, %7 : vector<4x48xf32>
    %cst_13 = arith.constant dense<0.000000e+00> : vector<4xf32>
    %15 = vector.multi_reduction <add>, %14, %cst_13 [1] : vector<4x48xf32> to vector<4xf32>
    %16 = vector.shape_cast %15 : vector<4xf32> to vector<4x1xf32>
    %cst_14 = arith.constant 4.800000e+01 : f32
    %17 = vector.broadcast %cst_14 : f32 to vector<4x1xf32>
    %18 = arith.divf %16, %17 : vector<4x1xf32>
    %19 = arith.mulf %13, %13 : vector<4x1xf32>
    %20 = arith.subf %18, %19 : vector<4x1xf32>
    %cst_15 = arith.constant 0.000000e+00 : f32
    %21 = vector.broadcast %cst_15 : f32 to vector<4x1xf32>
    %22 = arith.maximumf %20, %21 : vector<4x1xf32>
    %23 = vector.broadcast %13 : vector<4x1xf32> to vector<4x48xf32>
    %24 = arith.subf %7, %23 : vector<4x48xf32>
    %cst_16 = arith.constant 9.99999997E-7 : f32
    %25 = vector.broadcast %cst_16 : f32 to vector<4x1xf32>
    %26 = arith.addf %22, %25 : vector<4x1xf32>
    %27 = math.rsqrt %26 : vector<4x1xf32>
    %28 = vector.broadcast %27 : vector<4x1xf32> to vector<4x48xf32>
    %29 = arith.mulf %24, %28 : vector<4x48xf32>
    %30 = vector.broadcast %8 : vector<1x48xf32> to vector<4x48xf32>
    %31 = arith.mulf %29, %30 : vector<4x48xf32>
    %32 = vector.broadcast %9 : vector<1x48xf32> to vector<4x48xf32>
    %33 = arith.addf %31, %32 : vector<4x48xf32>
    %c0_17 = arith.constant 0 : index
    %c0_18 = arith.constant 0 : index
    %c0_19 = arith.constant 0 : index
    %34 = vector.load %arg3[%c0_17, %c0_18, %c0_19] : memref<1x4x48xbf16, #tpu.memory_space<vmem>>, vector<1x4x48xbf16>
    %35 = vector.shape_cast %34 : vector<1x4x48xbf16> to vector<4x48xbf16>
    %36 = arith.extf %35 : vector<4x48xbf16> to vector<4x48xf32>
    %37 = arith.addf %33, %36 : vector<4x48xf32>
    %38 = arith.negf %37 : vector<4x48xf32>
    %39 = math.exp %38 : vector<4x48xf32>
    %cst_20 = arith.constant 1.000000e+00 : f32
    %40 = vector.broadcast %cst_20 : f32 to vector<4x48xf32>
    %41 = arith.addf %40, %39 : vector<4x48xf32>
    %42 = arith.divf %40, %41 : vector<4x48xf32>
    %43 = arith.mulf %37, %42 : vector<4x48xf32>
    %44 = arith.truncf %43 : vector<4x48xf32> to vector<4x48xbf16>
    %c0_21 = arith.constant 0 : index
    %c0_22 = arith.constant 0 : index
    %c0_23 = arith.constant 0 : index
    %45 = vector.load %arg7[%c0_21, %c0_22, %c0_23] : memref<1x4x48xbf16, #tpu.memory_space<vmem>>, vector<1x4x48xbf16>
    %46 = vector.shape_cast %45 : vector<1x4x48xbf16> to vector<4x48xbf16>
    %47 = vector.shape_cast %44 : vector<4x48xbf16> to vector<1x4x48xbf16>
    tpu.vector_store %arg7[%c0_21, %c0_22, %c0_23], %47 {strides = array<i32>} : memref<1x4x48xbf16, #tpu.memory_space<vmem>>, vector<1x4x48xbf16>,
    return
  }
  func.func @transform_0(%arg0: i32) -> (i32, i32, i32) {
    %c0_i32 = arith.constant 0 : i32
    %c0_i32_0 = arith.constant 0 : i32
    %c0_i32_1 = arith.constant 0 : i32
    return %arg0, %c0_i32, %c0_i32_0 : i32, i32, i32
  }
  func.func @transform_1(%arg0: i32) -> (i32, i32, i32) {
    %c0_i32 = arith.constant 0 : i32
    %c0_i32_0 = arith.constant 0 : i32
    %c0_i32_1 = arith.constant 0 : i32
    return %arg0, %c0_i32, %c0_i32_0 : i32, i32, i32
  }
  func.func @transform_2(%arg0: i32) -> (i32, i32, i32) {
    %c0_i32 = arith.constant 0 : i32
    %c0_i32_0 = arith.constant 0 : i32
    %c0_i32_1 = arith.constant 0 : i32
    return %arg0, %c0_i32, %c0_i32_0 : i32, i32, i32
  }
  func.func @transform_3(%arg0: i32) -> (i32, i32) {
    %c0_i32 = arith.constant 0 : i32
    %c0_i32_0 = arith.constant 0 : i32
    %c0_i32_1 = arith.constant 0 : i32
    return %c0_i32, %c0_i32_0 : i32, i32
  }
  func.func @transform_4(%arg0: i32) -> (i32, i32) {
    %c0_i32 = arith.constant 0 : i32
    %c0_i32_0 = arith.constant 0 : i32
    %c0_i32_1 = arith.constant 0 : i32
    return %c0_i32, %c0_i32_0 : i32, i32
  }
  func.func @transform_5(%arg0: i32) -> (i32, i32) {
    %c0_i32 = arith.constant 0 : i32
    %c0_i32_0 = arith.constant 0 : i32
    %c0_i32_1 = arith.constant 0 : i32
    return %c0_i32, %c0_i32_0 : i32, i32
  }
  func.func @transform_6(%arg0: i32) -> (i32, i32, i32) {
    %c0_i32 = arith.constant 0 : i32
    %c0_i32_0 = arith.constant 0 : i32
    %c0_i32_1 = arith.constant 0 : i32
    return %arg0, %c0_i32, %c0_i32_0 : i32, i32, i32
  }
}

module attributes {stable_mosaic.version = 11 : i64} {
  func.func @_lin_kernel(%arg0: i32, %arg1: memref<8x48xbf16, #tpu.memory_space<vmem>>, %arg2: memref<48x64xbf16, #tpu.memory_space<vmem>>, %arg3: memref<1x64xf32, #tpu.memory_space<vmem>>, %arg4: memref<8x64xbf16, #tpu.memory_space<vmem>>) attributes {dimension_semantics = [#tpu.dimension_semantics<parallel>], iteration_bounds = array<i64: 1>, scalar_prefetch = 0 : i64, scratch_operands = 0 : i64, tpu.core_type = #tpu.core_type<tc>, window_params = [{transform_indices = @transform_0, window_bounds = array<i64: 8, 48>}, {pipeline_mode = #tpu.pipeline_mode<synchronous>, transform_indices = @transform_1, window_bounds = array<i64: 48, 64>}, {pipeline_mode = #tpu.pipeline_mode<synchronous>, transform_indices = @transform_2, window_bounds = array<i64: 1, 64>}, {transform_indices = @transform_3, window_bounds = array<i64: 8, 64>}]} {
    %c0 = arith.constant 0 : index
    %c0_0 = arith.constant 0 : index
    %0 = vector.load %arg1[%c0, %c0_0] : memref<8x48xbf16, #tpu.memory_space<vmem>>, vector<8x48xbf16>
    %c0_1 = arith.constant 0 : index
    %c0_2 = arith.constant 0 : index
    %1 = vector.load %arg2[%c0_1, %c0_2] : memref<48x64xbf16, #tpu.memory_space<vmem>>, vector<48x64xbf16>
    %cst = arith.constant dense<0.000000e+00> : vector<8x64xf32>
    %2 = tpu.matmul %0, %1, %cst {dimension_numbers = #tpu.dot_dimension_numbers<[1], [0], [0], [1], [0, 0, 1, 1], [], []>} : vector<8x48xbf16>, vector<48x64xbf16>, vector<8x64xf32> -> vector<8x64xf32>
    %c0_3 = arith.constant 0 : index
    %c0_4 = arith.constant 0 : index
    %3 = vector.load %arg3[%c0_3, %c0_4] : memref<1x64xf32, #tpu.memory_space<vmem>>, vector<1x64xf32>
    %4 = vector.broadcast %3 : vector<1x64xf32> to vector<8x64xf32>
    %5 = arith.addf %2, %4 : vector<8x64xf32>
    %6 = arith.negf %5 : vector<8x64xf32>
    %7 = math.exp %6 : vector<8x64xf32>
    %cst_5 = arith.constant 1.000000e+00 : f32
    %8 = vector.broadcast %cst_5 : f32 to vector<8x64xf32>
    %9 = arith.addf %8, %7 : vector<8x64xf32>
    %10 = arith.divf %8, %9 : vector<8x64xf32>
    %11 = arith.mulf %5, %10 : vector<8x64xf32>
    %12 = arith.truncf %11 : vector<8x64xf32> to vector<8x64xbf16>
    %c0_6 = arith.constant 0 : index
    %c0_7 = arith.constant 0 : index
    %13 = vector.load %arg4[%c0_6, %c0_7] : memref<8x64xbf16, #tpu.memory_space<vmem>>, vector<8x64xbf16>
    tpu.vector_store %arg4[%c0_6, %c0_7], %12 {strides = array<i32>} : memref<8x64xbf16, #tpu.memory_space<vmem>>, vector<8x64xbf16>,
    return
  }
  func.func @transform_0(%arg0: i32) -> (i32, i32) {
    %c0_i32 = arith.constant 0 : i32
    %c0_i32_0 = arith.constant 0 : i32
    return %arg0, %c0_i32 : i32, i32
  }
  func.func @transform_1(%arg0: i32) -> (i32, i32) {
    %c0_i32 = arith.constant 0 : i32
    %c0_i32_0 = arith.constant 0 : i32
    %c0_i32_1 = arith.constant 0 : i32
    return %c0_i32, %c0_i32_0 : i32, i32
  }
  func.func @transform_2(%arg0: i32) -> (i32, i32) {
    %c0_i32 = arith.constant 0 : i32
    %c0_i32_0 = arith.constant 0 : i32
    %c0_i32_1 = arith.constant 0 : i32
    return %c0_i32, %c0_i32_0 : i32, i32
  }
  func.func @transform_3(%arg0: i32) -> (i32, i32) {
    %c0_i32 = arith.constant 0 : i32
    %c0_i32_0 = arith.constant 0 : i32
    return %arg0, %c0_i32 : i32, i32
  }
}

module attributes {stable_mosaic.version = 11 : i64} {
  func.func @_lin_kernel(%arg0: i32, %arg1: memref<8x64xbf16, #tpu.memory_space<vmem>>, %arg2: memref<64x64xbf16, #tpu.memory_space<vmem>>, %arg3: memref<1x64xf32, #tpu.memory_space<vmem>>, %arg4: memref<8x64xbf16, #tpu.memory_space<vmem>>) attributes {dimension_semantics = [#tpu.dimension_semantics<parallel>], iteration_bounds = array<i64: 1>, scalar_prefetch = 0 : i64, scratch_operands = 0 : i64, tpu.core_type = #tpu.core_type<tc>, window_params = [{transform_indices = @transform_0, window_bounds = array<i64: 8, 64>}, {pipeline_mode = #tpu.pipeline_mode<synchronous>, transform_indices = @transform_1, window_bounds = array<i64: 64, 64>}, {pipeline_mode = #tpu.pipeline_mode<synchronous>, transform_indices = @transform_2, window_bounds = array<i64: 1, 64>}, {transform_indices = @transform_3, window_bounds = array<i64: 8, 64>}]} {
    %c0 = arith.constant 0 : index
    %c0_0 = arith.constant 0 : index
    %0 = vector.load %arg1[%c0, %c0_0] : memref<8x64xbf16, #tpu.memory_space<vmem>>, vector<8x64xbf16>
    %c0_1 = arith.constant 0 : index
    %c0_2 = arith.constant 0 : index
    %1 = vector.load %arg2[%c0_1, %c0_2] : memref<64x64xbf16, #tpu.memory_space<vmem>>, vector<64x64xbf16>
    %cst = arith.constant dense<0.000000e+00> : vector<8x64xf32>
    %2 = tpu.matmul %0, %1, %cst {dimension_numbers = #tpu.dot_dimension_numbers<[1], [0], [0], [1], [0, 0, 1, 1], [], []>} : vector<8x64xbf16>, vector<64x64xbf16>, vector<8x64xf32> -> vector<8x64xf32>
    %c0_3 = arith.constant 0 : index
    %c0_4 = arith.constant 0 : index
    %3 = vector.load %arg3[%c0_3, %c0_4] : memref<1x64xf32, #tpu.memory_space<vmem>>, vector<1x64xf32>
    %4 = vector.broadcast %3 : vector<1x64xf32> to vector<8x64xf32>
    %5 = arith.addf %2, %4 : vector<8x64xf32>
    %6 = arith.truncf %5 : vector<8x64xf32> to vector<8x64xbf16>
    %c0_5 = arith.constant 0 : index
    %c0_6 = arith.constant 0 : index
    %7 = vector.load %arg4[%c0_5, %c0_6] : memref<8x64xbf16, #tpu.memory_space<vmem>>, vector<8x64xbf16>
    tpu.vector_store %arg4[%c0_5, %c0_6], %6 {strides = array<i32>} : memref<8x64xbf16, #tpu.memory_space<vmem>>, vector<8x64xbf16>,
    return
  }
  func.func @transform_0(%arg0: i32) -> (i32, i32) {
    %c0_i32 = arith.constant 0 : i32
    %c0_i32_0 = arith.constant 0 : i32
    return %arg0, %c0_i32 : i32, i32
  }
  func.func @transform_1(%arg0: i32) -> (i32, i32) {
    %c0_i32 = arith.constant 0 : i32
    %c0_i32_0 = arith.constant 0 : i32
    %c0_i32_1 = arith.constant 0 : i32
    return %c0_i32, %c0_i32_0 : i32, i32
  }
  func.func @transform_2(%arg0: i32) -> (i32, i32) {
    %c0_i32 = arith.constant 0 : i32
    %c0_i32_0 = arith.constant 0 : i32
    %c0_i32_1 = arith.constant 0 : i32
    return %c0_i32, %c0_i32_0 : i32, i32
  }
  func.func @transform_3(%arg0: i32) -> (i32, i32) {
    %c0_i32 = arith.constant 0 : i32
    %c0_i32_0 = arith.constant 0 : i32
    return %arg0, %c0_i32 : i32, i32
  }
}

</mosaic_0001>

<llo_original>
// kernel: _lambda_.20
$region0: #{_lambda_.20}
  #allocation0 [shape = 'u32[]', space=smem, size = 0x4, offset = 0x4, fixed_abs, tag = 'smem constant byte address 0x4 - core index']
  #allocation1 [shape = 'u32[144,128]{1,0:T(1,128)}', space=vmem, size = 0x12000, scoped, tag = 'internal scratch']
  %s0 = inlined_call_operand.hbm [shape: bf16[2,16,32], index: 0, kind: input, shape index: {}]
  %s1 = inlined_call_operand.hbm [shape: bf16[16,32], index: 1, kind: input, shape index: {}]
  %s2 = inlined_call_operand.hbm [shape: bf16[32,48], index: 2, kind: input, shape index: {}]
  %s3 = inlined_call_operand.hbm [shape: f32[1,48], index: 3, kind: input, shape index: {}]
  %s4 = inlined_call_operand.hbm [shape: f32[1,48], index: 4, kind: input, shape index: {}]
  %s5 = inlined_call_operand.hbm [shape: bf16[2,16,48], index: 5, kind: output, shape index: {}]
  %s6 = sld [smem:[#allocation0]]
  $region73: #{_lambda_.20} parent=0
    _
  %s8 = ssub.s32 1, %s6
  %s9 = scalar_select 0, %s8, %s6
  $region1: #{_lambda_.20} parent=0
    #allocation2 [shape = 'u8[8192]{0}', space=vmem, size = 0x2000, scoped, tag = 'input window, operand 0']
    #allocation3 [shape = 's32[2]{0}', space=sflag, size = 0x8, scoped, tag = 'scoped memory for _lambda_.20']
    #allocation4 [shape = 's32[2]{0}', space=sflag, size = 0x8, scoped, tag = 'scoped memory for _lambda_.20']
    #allocation5 [shape = 'u8[4096]{0}', space=vmem, size = 0x1000, scoped, tag = 'input window, operand 1, single buffered']
    #allocation6 [shape = 's32[1]{0}', space=sflag, size = 0x4, scoped, tag = 'scoped memory for _lambda_.20']
    #allocation7 [shape = 'u8[8192]{0}', space=vmem, size = 0x2000, scoped, tag = 'input window, operand 2, single buffered']
    #allocation8 [shape = 'u8[512]{0}', space=vmem, size = 0x400, scoped, tag = 'input window, operand 3, single buffered']
    #allocation9 [shape = 's32[1]{0}', space=sflag, size = 0x4, scoped, tag = 'scoped memory for _lambda_.20']
    #allocation10 [shape = 'u8[512]{0}', space=vmem, size = 0x400, scoped, tag = 'input window, operand 4, single buffered']
    #allocation11 [shape = 'u8[8192]{0}', space=vmem, size = 0x2000, scoped, tag = 'output window, operand 0']
    %10 = vsyncpa [#allocation3], 0
    %s11 = scalar_lea.sflag [#allocation3], 1
    %12 = vsyncpa %s11, 0
    %13 = vsyncpa [#allocation6], 0
    %14 = vsyncpa [#allocation9], 0
    %15 = vsyncpa [#allocation4], 0
    %s16 = scalar_lea.sflag [#allocation4], 1
    %17 = vsyncpa %s16, 0
    loop: start=0, step=1, limit=4
    $region2: #{_lambda_.20} parent=1 // loop_pre_header
      _
    $region3: #{_lambda_.20} parent=1 // loop_header
      %s19 = sphi 0, %s23
      %p20 = scmp.ge.s32.totalorder %s19, 4
      %s26 = sphi 0, %s38
      %s27 = sphi 0, %s34
      %s28 = sphi 0, %s26
      %s29 = sphi 0, %s27
      %s30 = sphi 0, %s28
      %s31 = sphi 0, %s29
      %s43 = sphi 0, %s45
      %s46 = sphi 0, %s43
      %s47 = sphi 0, %s46
      %s63 = sphi 0, %s47
      %s69 = sphi 0, %s71
      %s72 = sphi 0, %s69
      %s73 = sphi 0, %s72
      %s89 = sphi 0, %s73
      %s93 = sphi 0, %s93
      %s95 = sphi 0, %s93
      %s96 = sphi 0, %s95
      %s110 = sphi 0, %s96
      %s114 = sphi 0, %s114
      %s116 = sphi 0, %s114
      %s117 = sphi 0, %s116
      %s131 = sphi 0, %s117
      %s135 = sphi 0, %s135
      %s137 = sphi 0, %s135
      %s138 = sphi 0, %s137
      %s152 = sphi 0, %s138
      %s160 = sphi 0, %s162
      %s163 = sphi 0, %s160
      %s164 = sphi 0, %s163
      %s180 = sphi 0, %s164
    $region4: #{_lambda_.20} parent=1 // loop_header_branch
      %22 = sbr.rel (%p20) target = $region8
    $region5: #{_lambda_.20} parent=1 // loop_body
      %s24 = ssub.s32 %s19, 1
      %s25 = ssub.s32 %s19, 2
      %s32 = sadd.s32 1, %s27
      %p33 = scmp.ge.s32.totalorder %s32, 1
      %s34 = scalar_select %p33, 0, %s32
      %s35 = sadd.s32 1, %s26
      %s36 = scalar_select %p33, %s35, %s26
      %p37 = scmp.ge.s32.totalorder %s36, 2
      %s38 = scalar_select %p37, 0, %s36
      %s39 = ssub.s32 %s26, %s38
      %s40 = ssub.s32 %s27, %s34
      %s41 = sor.u32 %s39, %s40
      %p42 = scmp.eq.s32.totalorder %s41, 0
      %s44 = sadd.s32 %s43, 1
      %s45 = scalar_select %p42, %s43, %s44
      %p48 = pneg %p42
      %p49 = scmp.eq.s32.totalorder %s19, 1
      %p50 = por %p48, %p49
      %p51 = scmp.ne.s32.totalorder %s43, %s46
      %p52 = scmp.eq.s32.totalorder %s19, 0
      %p53 = por %p51, %p52
      %p54 = scmp.ne.s32.totalorder %s43, %s46
      %p55 = scmp.eq.s32.totalorder %s24, 1
      %p56 = por %p54, %p55
      %p57 = scmp.ne.s32.totalorder %s46, %s47
      %p58 = scmp.eq.s32.totalorder %s24, 0
      %p59 = por %p57, %p58
      %p60 = scmp.ne.s32.totalorder %s46, %s47
      %p61 = scmp.eq.s32.totalorder %s25, 1
      %p62 = por %p60, %p61
      %p64 = scmp.ne.s32.totalorder %s47, %s63
      %p65 = scmp.eq.s32.totalorder %s25, 0
      %p66 = por %p64, %p65
      %s67 = ssub.s32 %s27, %s34
      %p68 = scmp.eq.s32.totalorder %s67, 0
      %s70 = sadd.s32 %s69, 1
      %s71 = scalar_select %p68, %s69, %s70
      %p74 = pneg %p68
      %p75 = scmp.eq.s32.totalorder %s19, 1
      %p76 = por %p74, %p75
      %p77 = scmp.ne.s32.totalorder %s69, %s72
      %p78 = scmp.eq.s32.totalorder %s19, 0
      %p79 = por %p77, %p78
      %p80 = scmp.ne.s32.totalorder %s69, %s72
      %p81 = scmp.eq.s32.totalorder %s24, 1
      %p82 = por %p80, %p81
      %p83 = scmp.ne.s32.totalorder %s72, %s73
      %p84 = scmp.eq.s32.totalorder %s24, 0
      %p85 = por %p83, %p84
      %p86 = scmp.ne.s32.totalorder %s72, %s73
      %p87 = scmp.eq.s32.totalorder %s25, 1
      %p88 = por %p86, %p87
      %p90 = scmp.ne.s32.totalorder %s73, %s89
      %p91 = scmp.eq.s32.totalorder %s25, 0
      %p92 = por %p90, %p91
      %s94 = sadd.s32 %s93, 1
      %p97 = scmp.eq.s32.totalorder %s19, 1
      %p98 = scmp.ne.s32.totalorder %s93, %s95
      %p99 = scmp.eq.s32.totalorder %s19, 0
      %p100 = por %p98, %p99
      %p101 = scmp.ne.s32.totalorder %s93, %s95
      %p102 = scmp.eq.s32.totalorder %s24, 1
      %p103 = por %p101, %p102
      %p104 = scmp.ne.s32.totalorder %s95, %s96
      %p105 = scmp.eq.s32.totalorder %s24, 0
      %p106 = por %p104, %p105
      %p107 = scmp.ne.s32.totalorder %s95, %s96
      %p108 = scmp.eq.s32.totalorder %s25, 1
      %p109 = por %p107, %p108
      %p111 = scmp.ne.s32.totalorder %s96, %s110
      %p112 = scmp.eq.s32.totalorder %s25, 0
      %p113 = por %p111, %p112
      %s115 = sadd.s32 %s114, 1
      %p118 = scmp.eq.s32.totalorder %s19, 1
      %p119 = scmp.ne.s32.totalorder %s114, %s116
      %p120 = scmp.eq.s32.totalorder %s19, 0
      %p121 = por %p119, %p120
      %p122 = scmp.ne.s32.totalorder %s114, %s116
      %p123 = scmp.eq.s32.totalorder %s24, 1
      %p124 = por %p122, %p123
      %p125 = scmp.ne.s32.totalorder %s116, %s117
      %p126 = scmp.eq.s32.totalorder %s24, 0
      %p127 = por %p125, %p126
      %p128 = scmp.ne.s32.totalorder %s116, %s117
      %p129 = scmp.eq.s32.totalorder %s25, 1
      %p130 = por %p128, %p129
      %p132 = scmp.ne.s32.totalorder %s117, %s131
      %p133 = scmp.eq.s32.totalorder %s25, 0
      %p134 = por %p132, %p133
      %s136 = sadd.s32 %s135, 1
      %p139 = scmp.eq.s32.totalorder %s19, 1
      %p140 = scmp.ne.s32.totalorder %s135, %s137
      %p141 = scmp.eq.s32.totalorder %s19, 0
      %p142 = por %p140, %p141
      %p143 = scmp.ne.s32.totalorder %s135, %s137
      %p144 = scmp.eq.s32.totalorder %s24, 1
      %p145 = por %p143, %p144
      %p146 = scmp.ne.s32.totalorder %s137, %s138
      %p147 = scmp.eq.s32.totalorder %s24, 0
      %p148 = por %p146, %p147
      %p149 = scmp.ne.s32.totalorder %s137, %s138
      %p150 = scmp.eq.s32.totalorder %s25, 1
      %p151 = por %p149, %p150
      %p153 = scmp.ne.s32.totalorder %s138, %s152
      %p154 = scmp.eq.s32.totalorder %s25, 0
      %p155 = por %p153, %p154
      %s156 = ssub.s32 %s26, %s38
      %s157 = ssub.s32 %s27, %s34
      %s158 = sor.u32 %s156, %s157
      %p159 = scmp.eq.s32.totalorder %s158, 0
      %s161 = sadd.s32 %s160, 1
      %s162 = scalar_select %p159, %s160, %s161
      %p165 = pneg %p159
      %p166 = scmp.eq.s32.totalorder %s19, 1
      %p167 = por %p165, %p166
      %p168 = scmp.ne.s32.totalorder %s160, %s163
      %p169 = scmp.eq.s32.totalorder %s19, 0
      %p170 = por %p168, %p169
      %p171 = scmp.ne.s32.totalorder %s160, %s163
      %p172 = scmp.eq.s32.totalorder %s24, 1
      %p173 = por %p171, %p172
      %p174 = scmp.ne.s32.totalorder %s163, %s164
      %p175 = scmp.eq.s32.totalorder %s24, 0
      %p176 = por %p174, %p175
      %p177 = scmp.ne.s32.totalorder %s163, %s164
      %p178 = scmp.eq.s32.totalorder %s25, 1
      %p179 = por %p177, %p178
      %p181 = scmp.ne.s32.totalorder %s164, %s180
      %p182 = scmp.eq.s32.totalorder %s25, 0
      %p183 = por %p181, %p182
      %p184 = scmp.le.s32.totalorder 1, %s19
      %p185 = scmp.lt.s32.totalorder %s19, 3
      %p186 = pnand %p184, %p185
      %p187 = pneg %p186
      // Predicated region
      $region9: #{_lambda_.20} parent=5 // pred_check
        _
      $region10: #{_lambda_.20} parent=5 // pred_check_branch
        %189 = sbr.rel (%p186) target = $region12
      $region11: #{_lambda_.20} parent=5 // pred_region
        %s190 = ssub.s32 %s19, 1
        // Predicated region
        $region13: #{_lambda_.20} parent=11 // pred_check
          %p191 = pneg %p85
        $region14: #{_lambda_.20} parent=11 // pred_check_branch
          %193 = sbr.rel (%p191) target = $region16
        $region15: #{_lambda_.20} parent=11 // pred_region
          %s194 = smul.u32 2, %s29
          %s196 = ssub.s32 128, 128
          %197 = vsyncadd [#allocation6], %s196
          %s198 = smul.addr %s194, 64
          %s199 = scalar_lea.hbm %s1, %s198
          %s200 = sshll.u32 [#allocation5], 4
          %s201 = int_to_ptr.vmem [resolvable:$true] %s200
          %206 = dma.hbm_to_vmem [thread:$0]  %s199, 128, %s201, [#allocation6], 64, 64, 4
        $region16: #{_lambda_.20} parent=11 // pred_fallthru
          _
        // Predicated region
        $region17: #{_lambda_.20} parent=11 // pred_check
          %p207 = pneg %p106
        $region18: #{_lambda_.20} parent=11 // pred_check_branch
          %209 = sbr.rel (%p207) target = $region20
        $region19: #{_lambda_.20} parent=11 // pred_region
          %s211 = ssub.s32 256, 256
          %212 = vsyncadd [#allocation6], %s211
          %s213 = sshll.u32 [#allocation7], 4
          %s214 = int_to_ptr.vmem [resolvable:$true] %s213
          %219 = dma.hbm_to_vmem [thread:$0]  %s2, 256, %s214, [#allocation6], 64, 64, 4
        $region20: #{_lambda_.20} parent=11 // pred_fallthru
          _
        // Predicated region
        $region21: #{_lambda_.20} parent=11 // pred_check
          %p220 = pneg %p127
        $region22: #{_lambda_.20} parent=11 // pred_check_branch
          %222 = sbr.rel (%p220) target = $region24
        $region23: #{_lambda_.20} parent=11 // pred_region
          %s224 = ssub.s32 16, 16
          %225 = vsyncadd [#allocation9], %s224
          %s227 = sshll.u32 [#allocation8], 4
          %s228 = int_to_ptr.vmem [resolvable:$true] %s227
          %230 = dma.hbm_to_vmem [thread:$0]  %s3, 16, %s228, [#allocation9]
        $region24: #{_lambda_.20} parent=11 // pred_fallthru
          _
        // Predicated region
        $region25: #{_lambda_.20} parent=11 // pred_check
          %p231 = pneg %p148
        $region26: #{_lambda_.20} parent=11 // pred_check_branch
          %233 = sbr.rel (%p231) target = $region28
        $region27: #{_lambda_.20} parent=11 // pred_region
          %s235 = ssub.s32 16, 16
          %236 = vsyncadd [#allocation9], %s235
          %s238 = sshll.u32 [#allocation10], 4
          %s239 = int_to_ptr.vmem [resolvable:$true] %s238
          %241 = dma.hbm_to_vmem [thread:$0]  %s4, 16, %s239, [#allocation9]
        $region28: #{_lambda_.20} parent=11 // pred_fallthru
          _
      $region12: #{_lambda_.20} parent=5 // pred_fallthru
        _
      %p242 = scmp.lt.s32.totalorder %s19, 2
      // Predicated region
      $region29: #{_lambda_.20} parent=5 // pred_check
        %p243 = pneg %p242
      $region30: #{_lambda_.20} parent=5 // pred_check_branch
        %245 = sbr.rel (%p243) target = $region32
      $region31: #{_lambda_.20} parent=5 // pred_region
        // Predicated region
        $region33: #{_lambda_.20} parent=31 // pred_check
          %p246 = pneg %p53
        $region34: #{_lambda_.20} parent=31 // pred_check_branch
          %248 = sbr.rel (%p246) target = $region36
        $region35: #{_lambda_.20} parent=31 // pred_region
          %s249 = sand.u32 %s43, 1
          %s250 = scalar_lea.sflag [#allocation3], %s249
          %s251 = sand.u32 %s43, 1
          %s252 = smul.addr %s251, 8
          %s253 = scalar_lea.vmem [#allocation2], %s252
          %s254 = smul.u32 2, %s27
          %s256 = ssub.s32 128, 128
          %257 = vsyncadd %s250, %s256
          %s258 = smul.addr %s26, 2
          %s259 = sadd.s32 %s254, %s258
          %s260 = smul.addr %s259, 64
          %s261 = scalar_lea.hbm %s0, %s260
          %s262 = sshll.u32 %s253, 4
          %s263 = int_to_ptr.vmem [resolvable:$true] %s262
          %268 = dma.hbm_to_vmem [thread:$0]  %s261, 128, %s263, %s250, 64, 64, 4
        $region36: #{_lambda_.20} parent=31 // pred_fallthru
          _
      $region32: #{_lambda_.20} parent=5 // pred_fallthru
        _
      %p269 = scmp.le.s32.totalorder 1, %s19
      %p270 = scmp.lt.s32.totalorder %s19, 3
      %p271 = pnand %p269, %p270
      %p272 = pneg %p271
      // Predicated region
      $region37: #{_lambda_.20} parent=5 // pred_check
        _
      $region38: #{_lambda_.20} parent=5 // pred_check_branch
        %274 = sbr.rel (%p271) target = $region40
      $region39: #{_lambda_.20} parent=5 // pred_region
        %s275 = ssub.s32 %s19, 1
        %s276 = sand.u32 %s46, 1
        %s277 = scalar_lea.sflag [#allocation3], %s276
        %s278 = sand.u32 %s46, 1
        %s279 = smul.addr %s278, 8
        %s280 = scalar_lea.vmem [#allocation2], %s279
        // Predicated region
        $region41: #{_lambda_.20} parent=39 // pred_check
          %p281 = pneg %p59
        $region42: #{_lambda_.20} parent=39 // pred_check_branch
          %283 = sbr.rel (%p281) target = $region44
        $region43: #{_lambda_.20} parent=39 // pred_region
          %284 = dma.done %s277, 128
        $region44: #{_lambda_.20} parent=39 // pred_fallthru
          _
        // Predicated region
        $region45: #{_lambda_.20} parent=39 // pred_check
          %p285 = pneg %p85
        $region46: #{_lambda_.20} parent=39 // pred_check_branch
          %287 = sbr.rel (%p285) target = $region48
        $region47: #{_lambda_.20} parent=39 // pred_region
          %288 = dma.done [#allocation6], 128
        $region48: #{_lambda_.20} parent=39 // pred_fallthru
          _
        // Predicated region
        $region49: #{_lambda_.20} parent=39 // pred_check
          %p289 = pneg %p106
        $region50: #{_lambda_.20} parent=39 // pred_check_branch
          %291 = sbr.rel (%p289) target = $region52
        $region51: #{_lambda_.20} parent=39 // pred_region
          %292 = dma.done [#allocation6], 256
        $region52: #{_lambda_.20} parent=39 // pred_fallthru
          _
        // Predicated region
        $region53: #{_lambda_.20} parent=39 // pred_check
          %p293 = pneg %p127
        $region54: #{_lambda_.20} parent=39 // pred_check_branch
          %295 = sbr.rel (%p293) target = $region56
        $region55: #{_lambda_.20} parent=39 // pred_region
          %296 = dma.done [#allocation9], 16
        $region56: #{_lambda_.20} parent=39 // pred_fallthru
          _
        // Predicated region
        $region57: #{_lambda_.20} parent=39 // pred_check
          %p297 = pneg %p148
        $region58: #{_lambda_.20} parent=39 // pred_check_branch
          %299 = sbr.rel (%p297) target = $region60
        $region59: #{_lambda_.20} parent=39 // pred_region
          %300 = dma.done [#allocation9], 16
        $region60: #{_lambda_.20} parent=39 // pred_fallthru
          _
        %s301 = sand.u32 %s46, 1
        %s302 = scalar_lea.sflag [#allocation3], %s301
        %s303 = sand.u32 %s46, 1
        %s304 = smul.addr %s303, 8
        %s305 = scalar_lea.vmem [#allocation2], %s304
        %p306 = pneg %p59
        %p307 = pneg %p56
        %p308 = pneg %p85
        %p309 = pneg %p82
        %p310 = pneg %p106
        %p311 = pneg %p103
        %p312 = pneg %p127
        %p313 = pneg %p124
        %p314 = pneg %p148
        %p315 = pneg %p145
        %p316 = pneg %p176
        %p317 = pneg %p173
        %s318 = sand.u32 %s163, 1
        %s319 = scalar_lea.sflag [#allocation4], %s318
        %s320 = sand.u32 %s163, 1
        %s321 = smul.addr %s320, 8
        %s322 = scalar_lea.vmem [#allocation11], %s321
        %s323 = smul.u32 2, %s29
        %s324 = smul.u32 2, %s29
        %s325 = smul.u32 2, %s29
        %v327 = vld [vmem:[%s280] sm:$0xf]
        %v328 = vld [vmem:[%s280 + $0x4] sm:$0xf]
        %v329 = vld [vmem:[#allocation5] sm:$0xf]
        %v330 = vld [vmem:[#allocation5 + $0x4] sm:$0xf]
        %v331 = vadd.bf16 %v327, %v329
        %v332 = vadd.bf16 %v328, %v330
        %v333 = vld [vmem:[#allocation7] sm:$0xf]
        %v334 = vld [vmem:[#allocation7 + $0x4] sm:$0xf]
        %v335 = vld [vmem:[#allocation7 + $0x8] sm:$0xf]
        %v336 = vld [vmem:[#allocation7 + $0xc] sm:$0xf]
        %v339 = vunpack.c.l.b16 %v331
        %v340 = vunpack.c.l.b16 %v332
        %v341 = vpack.c.b16 %v340, %v339
        %v346 = vunpack.c.l.b16 %v333
        %v347 = vunpack.c.l.b16 %v334
        %v348 = vunpack.c.l.b16 %v335
        %v349 = vunpack.c.l.b16 %v336
        %v350 = vpack.c.b16 %v347, %v346
        %v351 = vpack.c.b16 %v349, %v348
        %vm354 = vcmask 261120
        %v356 = vsel %vm354, %v341, 0
        %358 = vmatprep.subr.bf16.mxu0 0
        %359 = vmatpush1.bf16.msra.mxu0 %v350
        %360 = vmatprep.subr.bf16.mxu0 0
        %361 = vmatpush1.bf16.msra.mxu0 %v351
        %362 = vmatprep.subr.bf16.mxu0 0
        %363 = vmatpush1.bf16.msra.mxu0 0
        %364 = vmatprep.subr.bf16.mxu0 0
        %365 = vmatpush1.bf16.msra.mxu0 0
        %366 = vmatprep.subr.bf16.mxu0 0
        %367 = vmatpush1.bf16.msra.mxu0 0
        %368 = vmatprep.subr.bf16.mxu0 0
        %369 = vmatpush1.bf16.msra.mxu0 0
        %370 = vmatprep.subr.bf16.mxu0 0
        %371 = vmatpush1.bf16.msra.mxu0 0
        %372 = vmatprep.subr.bf16.mxu0 0
        %373 = vmatpush1.bf16.msra.mxu0 0
        %374 = vmatprep.subr.bf16.mxu0 0
        %375 = vmatpush1.bf16.msra.mxu0 0
        %376 = vmatprep.subr.bf16.mxu0 0
        %377 = vmatpush1.bf16.msra.mxu0 0
        %378 = vmatprep.subr.bf16.mxu0 0
        %379 = vmatpush1.bf16.msra.mxu0 0
        %380 = vmatprep.subr.bf16.mxu0 0
        %381 = vmatpush1.bf16.msra.mxu0 0
        %382 = vmatprep.subr.bf16.mxu0 0
        %383 = vmatpush1.bf16.msra.mxu0 0
        %384 = vmatprep.subr.bf16.mxu0 0
        %385 = vmatpush1.bf16.msra.mxu0 0
        %386 = vmatprep.subr.bf16.mxu0 0
        %387 = vmatpush1.bf16.msra.mxu0 0
        %388 = vmatprep.subr.bf16.mxu0 0
        %389 = vmatpush1.bf16.msra.mxu0 0
        %390 = vmatprep.mubr.bf16.mxu0 0
        %391 = vmatmul.mubr.bf16.gmra.mrb[0].mxu0 %v356
        %v392 = vpop.f32.mrb[0].mxu0
        %v393 = vadd.f32 0.0, %v392
        %v394 = vpop.f32.mrb[0].mxu0
        %v395 = vpop.f32.mrb[0].mxu0
        %v396 = vadd.f32 0.0, %v395
        %v397 = vpop.f32.mrb[0].mxu0
        %398 = vdwg.mxu0
        %v399 = vld [vmem:[#allocation8] sm:$0x1]
        %v400 = vld [vmem:[#allocation10] sm:$0x1]
        %vm401 = vcmask 392192
        %v402 = vsel %vm401, %v393, 0.0
        %403 = vadd.xlane.f32.xlu0 %v402
        %v404 = vpop.xlane.xlu0 %403
        %v405 = vsel %vm401, %v396, 0.0
        %406 = vadd.xlane.f32.xlu0 %v405
        %v407 = vpop.xlane.xlu0 %406
        %v408 = vrcp.pop 48.0
        %v409 = vmul.f32 %v404, %v408
        %v410 = vmul.f32 %v407, %v408
        %v411 = vmul.f32 %v393, %v393
        %v412 = vmul.f32 %v396, %v396
        %v413 = vsel %vm401, %v411, 0.0
        %414 = vadd.xlane.f32.xlu0 %v413
        %v415 = vpop.xlane.xlu0 %414
        %v416 = vsel %vm401, %v412, 0.0
        %417 = vadd.xlane.f32.xlu0 %v416
        %v418 = vpop.xlane.xlu0 %417
        %v419 = vmul.f32 %v415, %v408
        %v420 = vmul.f32 %v418, %v408
        %v421 = vmul.f32 %v409, %v409
        %v422 = vmul.f32 %v410, %v410
        %v423 = vsub.f32 %v419, %v421
        %v424 = vsub.f32 %v420, %v422
        %v425 = vmax.f32 %v423, 0.0
        %v426 = vmax.f32 %v424, 0.0
        %v427 = vsub.f32 %v393, %v409
        %v428 = vsub.f32 %v396, %v410
        %v429 = vadd.f32 %v425, 1e-06
        %v430 = vadd.f32 %v426, 1e-06
        %v431 = vrsqrt.pop %v429
        %v432 = vrsqrt.pop %v430
        %v433 = vmul.f32 %v427, %v431
        %v434 = vmul.f32 %v428, %v432
        %v436 = vlaneseq
        %v437 = vshrl.u32 %v436, 7
        %v438 = vsub.s32 0, %v437
        %v439 = vrot.slane %v399, %v438
        %v441 = vmul.f32 %v433, %v439
        %v442 = vmul.f32 %v434, %v439
        %v444 = vlaneseq
        %v445 = vshrl.u32 %v444, 7
        %v446 = vsub.s32 0, %v445
        %v447 = vrot.slane %v400, %v446
        %v449 = vadd.f32 %v441, %v447
        %v450 = vadd.f32 %v442, %v447
        %v451 = vxor.u32 %v449, 2147483648
        %v452 = vxor.u32 %v450, 2147483648
        %v453 = vmul.f32 %v451, 1.442695
        %v454 = vpow.pop %v453
        %v455 = vmul.f32 %v452, 1.442695
        %v456 = vpow.pop %v455
        %v457 = vadd.f32 %v454, 1.0
        %v458 = vadd.f32 %v456, 1.0
        %v459 = vrcp.pop %v457
        %v460 = vmul.f32 1.0, %v459
        %v461 = vrcp.pop %v458
        %v462 = vmul.f32 1.0, %v461
        %v463 = vmul.f32 %v449, %v460
        %v464 = vmul.f32 %v450, %v462
        %v465 = vpack.c.bf16 %v464, %v463
        %v467 = vunpack.c.l.b16 %v465
        %v468 = vunpack.c.h.b16 %v465
        %v469 = vpack.c.b16 %v467, %v467
        %v470 = vpack.c.b16 %v468, %v468
        %vm473 = vcmask 388096
        %474 = vst.msk [vmem:[%s322] sm:$0xf] %vm473, %v469
        %475 = vst.msk [vmem:[%s322 + $0x4] sm:$0xf] %vm473, %v470
        %s476 = sand.u32 %s163, 1
        %s477 = scalar_lea.sflag [#allocation4], %s476
        %s478 = sand.u32 %s163, 1
        %s479 = smul.addr %s478, 8
        %s480 = scalar_lea.vmem [#allocation11], %s479
        // Predicated region
        $region61: #{_lambda_.20} parent=39 // pred_check
          %p481 = pneg %p173
        $region62: #{_lambda_.20} parent=39 // pred_check_branch
          %483 = sbr.rel (%p481) target = $region64
        $region63: #{_lambda_.20} parent=39 // pred_region
          %s484 = smul.u32 2, %s29
          %s486 = ssub.s32 128, 128
          %487 = vsyncadd %s477, %s486
          %s488 = smul.addr %s28, 2
          %s489 = sadd.s32 %s484, %s488
          %s490 = smul.addr %s489, 64
          %s491 = scalar_lea.hbm %s5, %s490
          %s492 = sshll.u32 %s480, 4
          %s493 = int_to_ptr.vmem [resolvable:$true] %s492
          %498 = dma.vmem_to_hbm [thread:$0]  %s493, 128, %s491, %s477, 64, 64, 4
        $region64: #{_lambda_.20} parent=39 // pred_fallthru
          _
      $region40: #{_lambda_.20} parent=5 // pred_fallthru
        _
      %p499 = scmp.le.s32.totalorder 2, %s19
      // Predicated region
      $region65: #{_lambda_.20} parent=5 // pred_check
        %p500 = pneg %p499
      $region66: #{_lambda_.20} parent=5 // pred_check_branch
        %502 = sbr.rel (%p500) target = $region68
      $region67: #{_lambda_.20} parent=5 // pred_region
        %s503 = ssub.s32 %s19, 2
        // Predicated region
        $region69: #{_lambda_.20} parent=67 // pred_check
          %p504 = pneg %p179
        $region70: #{_lambda_.20} parent=67 // pred_check_branch
          %506 = sbr.rel (%p504) target = $region72
        $region71: #{_lambda_.20} parent=67 // pred_region
          %s507 = sand.u32 %s164, 1
          %s508 = scalar_lea.sflag [#allocation4], %s507
          %s509 = sand.u32 %s164, 1
          %s510 = smul.addr %s509, 8
          %s511 = scalar_lea.vmem [#allocation11], %s510
          %512 = dma.done %s508, 128
        $region72: #{_lambda_.20} parent=67 // pred_fallthru
          _
      $region68: #{_lambda_.20} parent=5 // pred_fallthru
        _
    $region6: #{_lambda_.20} parent=1 // loop_footer
      %s23 = sadd.s32 1, %s19
    $region7: #{_lambda_.20} parent=1 // loop_footer_branch
      %18 = sbr.rel target = $region3
    $region8: #{_lambda_.20} parent=1 // loop_exit
      _
    %513 = vsyncpa [#allocation3], 1
    %s514 = scalar_lea.sflag [#allocation3], 1
    %515 = vsyncpa %s514, 1
    %516 = vsyncpa [#allocation6], 1
    %517 = vsyncpa [#allocation9], 1
    %518 = vsyncpa [#allocation4], 1
    %s519 = scalar_lea.sflag [#allocation4], 1
    %520 = vsyncpa %s519, 1

// kernel: _lambda_.21
$region0: #{_lambda_.21}
  #allocation0 [shape = 'u32[]', space=smem, size = 0x4, offset = 0x4, fixed_abs, tag = 'smem constant byte address 0x4 - core index']
  #allocation1 [shape = 'u32[144,128]{1,0:T(1,128)}', space=vmem, size = 0x12000, scoped, tag = 'internal scratch']
  #allocation2 [shape = 'bf16[6,6,48]{2,1,0:T(8,128)(2,1)}', space=vmem, size = 0x3000, scoped, tag = 'scratch operand']
  %s0 = inlined_call_operand.hbm [shape: bf16[2,4,4,48], index: 0, kind: input, shape index: {}]
  %s1 = inlined_call_operand.hbm [shape: bf16[3,3,48], index: 1, kind: input, shape index: {}]
  %s2 = inlined_call_operand.hbm [shape: f32[1,48], index: 2, kind: input, shape index: {}]
  %s3 = inlined_call_operand.hbm [shape: f32[1,48], index: 3, kind: input, shape index: {}]
  %s4 = inlined_call_operand.hbm [shape: bf16[2,4,4,48], index: 4, kind: output, shape index: {}]
  %s5 = sld [smem:[#allocation0]]
  $region65: #{_lambda_.21} parent=0
    _
  %s7 = ssub.s32 1, %s5
  %s8 = scalar_select 0, %s7, %s5
  $region1: #{_lambda_.21} parent=0
    #allocation3 [shape = 'u8[8192]{0}', space=vmem, size = 0x2000, scoped, tag = 'input window, operand 0']
    #allocation4 [shape = 's32[2]{0}', space=sflag, size = 0x8, scoped, tag = 'scoped memory for _lambda_.21']
    #allocation5 [shape = 's32[2]{0}', space=sflag, size = 0x8, scoped, tag = 'scoped memory for _lambda_.21']
    #allocation6 [shape = 'u8[3072]{0}', space=vmem, size = 0xc00, scoped, tag = 'input window, operand 1, single buffered']
    #allocation7 [shape = 's32[1]{0}', space=sflag, size = 0x4, scoped, tag = 'scoped memory for _lambda_.21']
    #allocation8 [shape = 'u8[512]{0}', space=vmem, size = 0x400, scoped, tag = 'input window, operand 2, single buffered']
    #allocation9 [shape = 'u8[512]{0}', space=vmem, size = 0x400, scoped, tag = 'input window, operand 3, single buffered']
    #allocation10 [shape = 's32[1]{0}', space=sflag, size = 0x4, scoped, tag = 'scoped memory for _lambda_.21']
    #allocation11 [shape = 'u8[8192]{0}', space=vmem, size = 0x2000, scoped, tag = 'output window, operand 0']
    %9 = vsyncpa [#allocation4], 0
    %s10 = scalar_lea.sflag [#allocation4], 1
    %11 = vsyncpa %s10, 0
    %12 = vsyncpa [#allocation7], 0
    %13 = vsyncpa [#allocation10], 0
    %14 = vsyncpa [#allocation5], 0
    %s15 = scalar_lea.sflag [#allocation5], 1
    %16 = vsyncpa %s15, 0
    loop: start=0, step=1, limit=4
    $region2: #{_lambda_.21} parent=1 // loop_pre_header
      _
    $region3: #{_lambda_.21} parent=1 // loop_header
      %s18 = sphi 0, %s22
      %p19 = scmp.ge.s32.totalorder %s18, 4
      %s28 = sphi 0, %s30
      %s31 = sphi 0, %s28
      %s32 = sphi 0, %s31
      %s48 = sphi 0, %s32
      %s52 = sphi 0, %s52
      %s54 = sphi 0, %s52
      %s55 = sphi 0, %s54
      %s69 = sphi 0, %s55
      %s73 = sphi 0, %s73
      %s75 = sphi 0, %s73
      %s76 = sphi 0, %s75
      %s90 = sphi 0, %s76
      %s94 = sphi 0, %s94
      %s96 = sphi 0, %s94
      %s97 = sphi 0, %s96
      %s111 = sphi 0, %s97
      %s117 = sphi 0, %s119
      %s120 = sphi 0, %s117
      %s121 = sphi 0, %s120
      %s137 = sphi 0, %s121
    $region4: #{_lambda_.21} parent=1 // loop_header_branch
      %21 = sbr.rel (%p19) target = $region8
    $region5: #{_lambda_.21} parent=1 // loop_body
      %s23 = ssub.s32 %s18, 1
      %s24 = ssub.s32 %s18, 2
      %s25 = sadd.s32 %s18, 1
      %s26 = ssub.s32 %s18, %s25
      %p27 = scmp.eq.s32.totalorder %s26, 0
      %s29 = sadd.s32 %s28, 1
      %s30 = scalar_select %p27, %s28, %s29
      %p33 = pneg %p27
      %p34 = scmp.eq.s32.totalorder %s18, 1
      %p35 = por %p33, %p34
      %p36 = scmp.ne.s32.totalorder %s28, %s31
      %p37 = scmp.eq.s32.totalorder %s18, 0
      %p38 = por %p36, %p37
      %p39 = scmp.ne.s32.totalorder %s28, %s31
      %p40 = scmp.eq.s32.totalorder %s23, 1
      %p41 = por %p39, %p40
      %p42 = scmp.ne.s32.totalorder %s31, %s32
      %p43 = scmp.eq.s32.totalorder %s23, 0
      %p44 = por %p42, %p43
      %p45 = scmp.ne.s32.totalorder %s31, %s32
      %p46 = scmp.eq.s32.totalorder %s24, 1
      %p47 = por %p45, %p46
      %p49 = scmp.ne.s32.totalorder %s32, %s48
      %p50 = scmp.eq.s32.totalorder %s24, 0
      %p51 = por %p49, %p50
      %s53 = sadd.s32 %s52, 1
      %p56 = scmp.eq.s32.totalorder %s18, 1
      %p57 = scmp.ne.s32.totalorder %s52, %s54
      %p58 = scmp.eq.s32.totalorder %s18, 0
      %p59 = por %p57, %p58
      %p60 = scmp.ne.s32.totalorder %s52, %s54
      %p61 = scmp.eq.s32.totalorder %s23, 1
      %p62 = por %p60, %p61
      %p63 = scmp.ne.s32.totalorder %s54, %s55
      %p64 = scmp.eq.s32.totalorder %s23, 0
      %p65 = por %p63, %p64
      %p66 = scmp.ne.s32.totalorder %s54, %s55
      %p67 = scmp.eq.s32.totalorder %s24, 1
      %p68 = por %p66, %p67
      %p70 = scmp.ne.s32.totalorder %s55, %s69
      %p71 = scmp.eq.s32.totalorder %s24, 0
      %p72 = por %p70, %p71
      %s74 = sadd.s32 %s73, 1
      %p77 = scmp.eq.s32.totalorder %s18, 1
      %p78 = scmp.ne.s32.totalorder %s73, %s75
      %p79 = scmp.eq.s32.totalorder %s18, 0
      %p80 = por %p78, %p79
      %p81 = scmp.ne.s32.totalorder %s73, %s75
      %p82 = scmp.eq.s32.totalorder %s23, 1
      %p83 = por %p81, %p82
      %p84 = scmp.ne.s32.totalorder %s75, %s76
      %p85 = scmp.eq.s32.totalorder %s23, 0
      %p86 = por %p84, %p85
      %p87 = scmp.ne.s32.totalorder %s75, %s76
      %p88 = scmp.eq.s32.totalorder %s24, 1
      %p89 = por %p87, %p88
      %p91 = scmp.ne.s32.totalorder %s76, %s90
      %p92 = scmp.eq.s32.totalorder %s24, 0
      %p93 = por %p91, %p92
      %s95 = sadd.s32 %s94, 1
      %p98 = scmp.eq.s32.totalorder %s18, 1
      %p99 = scmp.ne.s32.totalorder %s94, %s96
      %p100 = scmp.eq.s32.totalorder %s18, 0
      %p101 = por %p99, %p100
      %p102 = scmp.ne.s32.totalorder %s94, %s96
      %p103 = scmp.eq.s32.totalorder %s23, 1
      %p104 = por %p102, %p103
      %p105 = scmp.ne.s32.totalorder %s96, %s97
      %p106 = scmp.eq.s32.totalorder %s23, 0
      %p107 = por %p105, %p106
      %p108 = scmp.ne.s32.totalorder %s96, %s97
      %p109 = scmp.eq.s32.totalorder %s24, 1
      %p110 = por %p108, %p109
      %p112 = scmp.ne.s32.totalorder %s97, %s111
      %p113 = scmp.eq.s32.totalorder %s24, 0
      %p114 = por %p112, %p113
      %s115 = ssub.s32 %s18, %s25
      %p116 = scmp.eq.s32.totalorder %s115, 0
      %s118 = sadd.s32 %s117, 1
      %s119 = scalar_select %p116, %s117, %s118
      %p122 = pneg %p116
      %p123 = scmp.eq.s32.totalorder %s18, 1
      %p124 = por %p122, %p123
      %p125 = scmp.ne.s32.totalorder %s117, %s120
      %p126 = scmp.eq.s32.totalorder %s18, 0
      %p127 = por %p125, %p126
      %p128 = scmp.ne.s32.totalorder %s117, %s120
      %p129 = scmp.eq.s32.totalorder %s23, 1
      %p130 = por %p128, %p129
      %p131 = scmp.ne.s32.totalorder %s120, %s121
      %p132 = scmp.eq.s32.totalorder %s23, 0
      %p133 = por %p131, %p132
      %p134 = scmp.ne.s32.totalorder %s120, %s121
      %p135 = scmp.eq.s32.totalorder %s24, 1
      %p136 = por %p134, %p135
      %p138 = scmp.ne.s32.totalorder %s121, %s137
      %p139 = scmp.eq.s32.totalorder %s24, 0
      %p140 = por %p138, %p139
      %p141 = scmp.le.s32.totalorder 1, %s18
      %p142 = scmp.lt.s32.totalorder %s18, 3
      %p143 = pnand %p141, %p142
      %p144 = pneg %p143
      // Predicated region
      $region9: #{_lambda_.21} parent=5 // pred_check
        _
      $region10: #{_lambda_.21} parent=5 // pred_check_branch
        %146 = sbr.rel (%p143) target = $region12
      $region11: #{_lambda_.21} parent=5 // pred_region
        %s147 = ssub.s32 %s18, 1
        // Predicated region
        $region13: #{_lambda_.21} parent=11 // pred_check
          %p148 = pneg %p65
        $region14: #{_lambda_.21} parent=11 // pred_check_branch
          %150 = sbr.rel (%p148) target = $region16
        $region15: #{_lambda_.21} parent=11 // pred_region
          %s152 = ssub.s32 96, 96
          %153 = vsyncadd [#allocation7], %s152
          %s154 = sshll.u32 [#allocation6], 4
          %s155 = int_to_ptr.vmem [resolvable:$true] %s154
          %160 = dma.hbm_to_vmem [thread:$0]  %s1, 96, %s155, [#allocation7], 32, 32, 2
        $region16: #{_lambda_.21} parent=11 // pred_fallthru
          _
        // Predicated region
        $region17: #{_lambda_.21} parent=11 // pred_check
          %p161 = pneg %p86
        $region18: #{_lambda_.21} parent=11 // pred_check_branch
          %163 = sbr.rel (%p161) target = $region20
        $region19: #{_lambda_.21} parent=11 // pred_region
          %s165 = ssub.s32 16, 16
          %166 = vsyncadd [#allocation7], %s165
          %s168 = sshll.u32 [#allocation8], 4
          %s169 = int_to_ptr.vmem [resolvable:$true] %s168
          %171 = dma.hbm_to_vmem [thread:$0]  %s2, 16, %s169, [#allocation7]
        $region20: #{_lambda_.21} parent=11 // pred_fallthru
          _
        // Predicated region
        $region21: #{_lambda_.21} parent=11 // pred_check
          %p172 = pneg %p107
        $region22: #{_lambda_.21} parent=11 // pred_check_branch
          %174 = sbr.rel (%p172) target = $region24
        $region23: #{_lambda_.21} parent=11 // pred_region
          %s176 = ssub.s32 16, 16
          %177 = vsyncadd [#allocation10], %s176
          %s179 = sshll.u32 [#allocation9], 4
          %s180 = int_to_ptr.vmem [resolvable:$true] %s179
          %182 = dma.hbm_to_vmem [thread:$0]  %s3, 16, %s180, [#allocation10]
        $region24: #{_lambda_.21} parent=11 // pred_fallthru
          _
      $region12: #{_lambda_.21} parent=5 // pred_fallthru
        _
      %p183 = scmp.lt.s32.totalorder %s18, 2
      // Predicated region
      $region25: #{_lambda_.21} parent=5 // pred_check
        %p184 = pneg %p183
      $region26: #{_lambda_.21} parent=5 // pred_check_branch
        %186 = sbr.rel (%p184) target = $region28
      $region27: #{_lambda_.21} parent=5 // pred_region
        // Predicated region
        $region29: #{_lambda_.21} parent=27 // pred_check
          %p187 = pneg %p38
        $region30: #{_lambda_.21} parent=27 // pred_check_branch
          %189 = sbr.rel (%p187) target = $region32
        $region31: #{_lambda_.21} parent=27 // pred_region
          %s190 = sand.u32 %s28, 1
          %s191 = scalar_lea.sflag [#allocation4], %s190
          %s192 = sand.u32 %s28, 1
          %s193 = smul.addr %s192, 8
          %s194 = scalar_lea.vmem [#allocation3], %s193
          %s196 = ssub.s32 128, 128
          %197 = vsyncadd %s191, %s196
          %s198 = smul.addr %s18, 4
          %s199 = smul.addr %s198, 32
          %s200 = scalar_lea.hbm %s0, %s199
          %s201 = sshll.u32 %s194, 4
          %s202 = int_to_ptr.vmem [resolvable:$true] %s201
          %207 = dma.hbm_to_vmem [thread:$0]  %s200, 128, %s202, %s191, 32, 32, 2
        $region32: #{_lambda_.21} parent=27 // pred_fallthru
          _
      $region28: #{_lambda_.21} parent=5 // pred_fallthru
        _
      %p208 = scmp.le.s32.totalorder 1, %s18
      %p209 = scmp.lt.s32.totalorder %s18, 3
      %p210 = pnand %p208, %p209
      %p211 = pneg %p210
      // Predicated region
      $region33: #{_lambda_.21} parent=5 // pred_check
        _
      $region34: #{_lambda_.21} parent=5 // pred_check_branch
        %213 = sbr.rel (%p210) target = $region36
      $region35: #{_lambda_.21} parent=5 // pred_region
        %s214 = ssub.s32 %s18, 1
        %s215 = sand.u32 %s31, 1
        %s216 = scalar_lea.sflag [#allocation4], %s215
        %s217 = sand.u32 %s31, 1
        %s218 = smul.addr %s217, 8
        %s219 = scalar_lea.vmem [#allocation3], %s218
        // Predicated region
        $region37: #{_lambda_.21} parent=35 // pred_check
          %p220 = pneg %p44
        $region38: #{_lambda_.21} parent=35 // pred_check_branch
          %222 = sbr.rel (%p220) target = $region40
        $region39: #{_lambda_.21} parent=35 // pred_region
          %223 = dma.done %s216, 128
        $region40: #{_lambda_.21} parent=35 // pred_fallthru
          _
        // Predicated region
        $region41: #{_lambda_.21} parent=35 // pred_check
          %p224 = pneg %p65
        $region42: #{_lambda_.21} parent=35 // pred_check_branch
          %226 = sbr.rel (%p224) target = $region44
        $region43: #{_lambda_.21} parent=35 // pred_region
          %227 = dma.done [#allocation7], 96
        $region44: #{_lambda_.21} parent=35 // pred_fallthru
          _
        // Predicated region
        $region45: #{_lambda_.21} parent=35 // pred_check
          %p228 = pneg %p86
        $region46: #{_lambda_.21} parent=35 // pred_check_branch
          %230 = sbr.rel (%p228) target = $region48
        $region47: #{_lambda_.21} parent=35 // pred_region
          %231 = dma.done [#allocation7], 16
        $region48: #{_lambda_.21} parent=35 // pred_fallthru
          _
        // Predicated region
        $region49: #{_lambda_.21} parent=35 // pred_check
          %p232 = pneg %p107
        $region50: #{_lambda_.21} parent=35 // pred_check_branch
          %234 = sbr.rel (%p232) target = $region52
        $region51: #{_lambda_.21} parent=35 // pred_region
          %235 = dma.done [#allocation10], 16
        $region52: #{_lambda_.21} parent=35 // pred_fallthru
          _
        %s236 = sand.u32 %s31, 1
        %s237 = scalar_lea.sflag [#allocation4], %s236
        %s238 = sand.u32 %s31, 1
        %s239 = smul.addr %s238, 8
        %s240 = scalar_lea.vmem [#allocation3], %s239
        %p241 = pneg %p44
        %p242 = pneg %p41
        %p243 = pneg %p65
        %p244 = pneg %p62
        %p245 = pneg %p86
        %p246 = pneg %p83
        %p247 = pneg %p107
        %p248 = pneg %p104
        %p249 = pneg %p133
        %p250 = pneg %p130
        %s251 = sand.u32 %s120, 1
        %s252 = scalar_lea.sflag [#allocation5], %s251
        %s253 = sand.u32 %s120, 1
        %s254 = smul.addr %s253, 8
        %s255 = scalar_lea.vmem [#allocation11], %s254
        %vm257 = vcmask 387072
        %258 = vst.msk [vmem:[#allocation2] sm:$0x7] %vm257, 0
        %s259 = scalar_lea.vmem [#allocation2], 20
        %260 = vst.msk [vmem:[%s259] sm:$0x7] %vm257, 0
        %vm261 = vcmask 385024
        %vm262 = vsmask.f32 256
        %vm263 = vmand %vm261, %vm262
        %v264 = vld [vmem:[#allocation2] sm:$0x1]
        %v265 = vsel %vm263, 0, %v264
        %266 = vst [vmem:[#allocation2] sm:$0x1] %v265
        %v267 = vld [vmem:[#allocation2 + $0x4] sm:$0x1]
        %v268 = vsel %vm263, 0, %v267
        %269 = vst [vmem:[#allocation2 + $0x4] sm:$0x1] %v268
        %v270 = vld [vmem:[#allocation2 + $0x8] sm:$0x1]
        %v271 = vsel %vm263, 0, %v270
        %272 = vst [vmem:[#allocation2 + $0x8] sm:$0x1] %v271
        %v273 = vld [vmem:[#allocation2 + $0xc] sm:$0x1]
        %v274 = vsel %vm263, 0, %v273
        %275 = vst [vmem:[#allocation2 + $0xc] sm:$0x1] %v274
        %v276 = vld [vmem:[#allocation2 + $0x10] sm:$0x1]
        %v277 = vsel %vm263, 0, %v276
        %278 = vst [vmem:[#allocation2 + $0x10] sm:$0x1] %v277
        %v279 = vld [vmem:[#allocation2 + $0x14] sm:$0x1]
        %v280 = vsel %vm263, 0, %v279
        %281 = vst [vmem:[#allocation2 + $0x14] sm:$0x1] %v280
        %vm282 = vcmask 387074
        %vm283 = vsmask.f32 7946
        %vm284 = vmand %vm282, %vm283
        %v285 = vld [vmem:[#allocation2] sm:$0x4]
        %v286 = vsel %vm284, 0, %v285
        %287 = vst [vmem:[#allocation2] sm:$0x4] %v286
        %v288 = vld [vmem:[#allocation2 + $0x4] sm:$0x4]
        %v289 = vsel %vm284, 0, %v288
        %290 = vst [vmem:[#allocation2 + $0x4] sm:$0x4] %v289
        %v291 = vld [vmem:[#allocation2 + $0x8] sm:$0x4]
        %v292 = vsel %vm284, 0, %v291
        %293 = vst [vmem:[#allocation2 + $0x8] sm:$0x4] %v292
        %v294 = vld [vmem:[#allocation2 + $0xc] sm:$0x4]
        %v295 = vsel %vm284, 0, %v294
        %296 = vst [vmem:[#allocation2 + $0xc] sm:$0x4] %v295
        %v297 = vld [vmem:[#allocation2 + $0x10] sm:$0x4]
        %v298 = vsel %vm284, 0, %v297
        %299 = vst [vmem:[#allocation2 + $0x10] sm:$0x4] %v298
        %v300 = vld [vmem:[#allocation2 + $0x14] sm:$0x4]
        %v301 = vsel %vm284, 0, %v300
        %302 = vst [vmem:[#allocation2 + $0x14] sm:$0x4] %v301
        %v303 = vld [vmem:[%s219] sm:$0x3]
        %v304 = vld [vmem:[%s219 + $0x2] sm:$0x3]
        %v305 = vld [vmem:[%s219 + $0x4] sm:$0x3]
        %v306 = vld [vmem:[%s219 + $0x6] sm:$0x3]
        %v312 = vunpack.c.l.s4 1983009808
        %v313 = vunpack.c.0.s8 %v312
        %v314 = vlaneseq
        %v315 = vshrl.u32 %v314, 7
        %v316 = vsub.s32 %v313, %v315
        %v317 = vrot.slane %v303, %v316
        %v319 = vunpack.c.l.s4 1983009808
        %v320 = vunpack.c.0.s8 %v319
        %v321 = vlaneseq
        %v322 = vshrl.u32 %v321, 7
        %v323 = vsub.s32 %v320, %v322
        %v324 = vrot.slane %v304, %v323
        %v326 = vunpack.c.l.s4 1983009808
        %v327 = vunpack.c.0.s8 %v326
        %v328 = vlaneseq
        %v329 = vshrl.u32 %v328, 7
        %v330 = vsub.s32 %v327, %v329
        %v331 = vrot.slane %v305, %v330
        %v333 = vunpack.c.l.s4 1983009808
        %v334 = vunpack.c.0.s8 %v333
        %v335 = vlaneseq
        %v336 = vshrl.u32 %v335, 7
        %v337 = vsub.s32 %v334, %v336
        %v338 = vrot.slane %v306, %v337
        %v340 = vshrl.u32 %v317, 16
        %v342 = vrot.slane %v340, 7
        %v343 = vshll.u32 %v317, 16
        %v345 = vor.u32 %v342, %v343
        %v347 = vshrl.u32 %v324, 16
        %v349 = vrot.slane %v347, 7
        %v350 = vshll.u32 %v324, 16
        %v352 = vor.u32 %v349, %v350
        %v354 = vshrl.u32 %v331, 16
        %v356 = vrot.slane %v354, 7
        %v357 = vshll.u32 %v331, 16
        %v359 = vor.u32 %v356, %v357
        %v361 = vshrl.u32 %v338, 16
        %v363 = vrot.slane %v361, 7
        %v364 = vshll.u32 %v338, 16
        %v366 = vor.u32 %v363, %v364
        %s371 = scalar_lea.vmem [#allocation2], 4
        %vm372 = vcmask 387072
        %vm373 = vsmask.f32 2306
        %vm374 = vmand %vm372, %vm373
        %v375 = vld [vmem:[%s371] sm:$0x7]
        %v376 = vsel %vm374, %v345, %v375
        %377 = vst [vmem:[%s371] sm:$0x7] %v376
        %v378 = vld [vmem:[%s371 + $0x4] sm:$0x7]
        %v379 = vsel %vm374, %v352, %v378
        %380 = vst [vmem:[%s371 + $0x4] sm:$0x7] %v379
        %v381 = vld [vmem:[%s371 + $0x8] sm:$0x7]
        %v382 = vsel %vm374, %v359, %v381
        %383 = vst [vmem:[%s371 + $0x8] sm:$0x7] %v382
        %v384 = vld [vmem:[%s371 + $0xc] sm:$0x7]
        %v385 = vsel %vm374, %v366, %v384
        %386 = vst [vmem:[%s371 + $0xc] sm:$0x7] %v385
        %v387 = vld [vmem:[#allocation6] sm:$0x3]
        %v388 = vld [vmem:[#allocation6 + $0x2] sm:$0x3]
        %v389 = vld [vmem:[#allocation6 + $0x4] sm:$0x3]
        %v390 = vunpack.c.l.bf16 %v387
        %v391 = vunpack.c.l.bf16 %v388
        %v392 = vunpack.c.l.bf16 %v389
        %v393 = vld [vmem:[#allocation2] sm:$0x3]
        %v394 = vld [vmem:[#allocation2 + $0x4] sm:$0x3]
        %v395 = vld [vmem:[#allocation2 + $0x8] sm:$0x3]
        %v396 = vld [vmem:[#allocation2 + $0xc] sm:$0x3]
        %v397 = vunpack.c.l.bf16 %v393
        %v398 = vunpack.c.l.bf16 %v394
        %v399 = vunpack.c.l.bf16 %v395
        %v400 = vunpack.c.l.bf16 %v396
        %v401 = vlaneseq
        %v402 = vshrl.u32 %v401, 7
        %v403 = vsub.s32 0, %v402
        %v404 = vrot.slane %v390, %v403
        %v405 = vmul.f32 %v397, %v404
        %v406 = vmul.f32 %v398, %v404
        %v407 = vmul.f32 %v399, %v404
        %v408 = vmul.f32 %v400, %v404
        %v409 = vadd.f32 %v405, 0.0
        %v410 = vadd.f32 %v406, 0.0
        %v411 = vadd.f32 %v407, 0.0
        %v412 = vadd.f32 %v408, 0.0
        %v413 = vld [vmem:[#allocation2] sm:$0x7]
        %v414 = vld [vmem:[#allocation2 + $0x4] sm:$0x7]
        %v415 = vld [vmem:[#allocation2 + $0x8] sm:$0x7]
        %v416 = vld [vmem:[#allocation2 + $0xc] sm:$0x7]
        %v417 = vunpack.c.l.bf16 %v413
        %v418 = vunpack.c.l.bf16 %v414
        %v419 = vunpack.c.l.bf16 %v415
        %v420 = vunpack.c.l.bf16 %v416
        %v421 = vlaneseq
        %v422 = vshrl.u32 %v421, 7
        %v423 = vsub.s32 1, %v422
        %v424 = vrot.slane %v390, %v423
        %v425 = vmul.f32 %v417, %v424
        %v426 = vmul.f32 %v418, %v424
        %v427 = vmul.f32 %v419, %v424
        %v428 = vmul.f32 %v420, %v424
        %v433 = vrot.slane %v425, 1
        %v434 = vrot.slane %v426, 1
        %v435 = vrot.slane %v427, 1
        %v436 = vrot.slane %v428, 1
        %v441 = vadd.f32 %v409, %v433
        %v442 = vadd.f32 %v410, %v434
        %v443 = vadd.f32 %v411, %v435
        %v444 = vadd.f32 %v412, %v436
        %v445 = vld [vmem:[#allocation2] sm:$0x6]
        %v446 = vld [vmem:[#allocation2 + $0x4] sm:$0x6]
        %v447 = vld [vmem:[#allocation2 + $0x8] sm:$0x6]
        %v448 = vld [vmem:[#allocation2 + $0xc] sm:$0x6]
        %v449 = vunpack.c.l.bf16 %v445
        %v450 = vunpack.c.l.bf16 %v446
        %v451 = vunpack.c.l.bf16 %v447
        %v452 = vunpack.c.l.bf16 %v448
        %v453 = vlaneseq
        %v454 = vshrl.u32 %v453, 7
        %v455 = vsub.s32 2, %v454
        %v456 = vrot.slane %v390, %v455
        %v457 = vmul.f32 %v449, %v456
        %v458 = vmul.f32 %v450, %v456
        %v459 = vmul.f32 %v451, %v456
        %v460 = vmul.f32 %v452, %v456
        %v465 = vrot.slane %v457, 2
        %v466 = vrot.slane %v458, 2
        %v467 = vrot.slane %v459, 2
        %v468 = vrot.slane %v460, 2
        %v473 = vadd.f32 %v441, %v465
        %v474 = vadd.f32 %v442, %v466
        %v475 = vadd.f32 %v443, %v467
        %v476 = vadd.f32 %v444, %v468
        %v477 = vld [vmem:[%s371] sm:$0x3]
        %v478 = vld [vmem:[%s371 + $0x4] sm:$0x3]
        %v479 = vld [vmem:[%s371 + $0x8] sm:$0x3]
        %v480 = vld [vmem:[%s371 + $0xc] sm:$0x3]
        %v481 = vunpack.c.l.bf16 %v477
        %v482 = vunpack.c.l.bf16 %v478
        %v483 = vunpack.c.l.bf16 %v479
        %v484 = vunpack.c.l.bf16 %v480
        %v485 = vlaneseq
        %v486 = vshrl.u32 %v485, 7
        %v487 = vsub.s32 0, %v486
        %v488 = vrot.slane %v391, %v487
        %v489 = vmul.f32 %v481, %v488
        %v490 = vmul.f32 %v482, %v488
        %v491 = vmul.f32 %v483, %v488
        %v492 = vmul.f32 %v484, %v488
        %v493 = vadd.f32 %v473, %v489
        %v494 = vadd.f32 %v474, %v490
        %v495 = vadd.f32 %v475, %v491
        %v496 = vadd.f32 %v476, %v492
        %v497 = vld [vmem:[%s371] sm:$0x7]
        %v498 = vld [vmem:[%s371 + $0x4] sm:$0x7]
        %v499 = vld [vmem:[%s371 + $0x8] sm:$0x7]
        %v500 = vld [vmem:[%s371 + $0xc] sm:$0x7]
        %v501 = vunpack.c.l.bf16 %v497
        %v502 = vunpack.c.l.bf16 %v498
        %v503 = vunpack.c.l.bf16 %v499
        %v504 = vunpack.c.l.bf16 %v500
        %v505 = vlaneseq
        %v506 = vshrl.u32 %v505, 7
        %v507 = vsub.s32 1, %v506
        %v508 = vrot.slane %v391, %v507
        %v509 = vmul.f32 %v501, %v508
        %v510 = vmul.f32 %v502, %v508
        %v511 = vmul.f32 %v503, %v508
        %v512 = vmul.f32 %v504, %v508
        %v517 = vrot.slane %v509, 1
        %v518 = vrot.slane %v510, 1
        %v519 = vrot.slane %v511, 1
        %v520 = vrot.slane %v512, 1
        %v525 = vadd.f32 %v493, %v517
        %v526 = vadd.f32 %v494, %v518
        %v527 = vadd.f32 %v495, %v519
        %v528 = vadd.f32 %v496, %v520
        %v529 = vld [vmem:[%s371] sm:$0x6]
        %v530 = vld [vmem:[%s371 + $0x4] sm:$0x6]
        %v531 = vld [vmem:[%s371 + $0x8] sm:$0x6]
        %v532 = vld [vmem:[%s371 + $0xc] sm:$0x6]
        %v533 = vunpack.c.l.bf16 %v529
        %v534 = vunpack.c.l.bf16 %v530
        %v535 = vunpack.c.l.bf16 %v531
        %v536 = vunpack.c.l.bf16 %v532
        %v537 = vlaneseq
        %v538 = vshrl.u32 %v537, 7
        %v539 = vsub.s32 2, %v538
        %v540 = vrot.slane %v391, %v539
        %v541 = vmul.f32 %v533, %v540
        %v542 = vmul.f32 %v534, %v540
        %v543 = vmul.f32 %v535, %v540
        %v544 = vmul.f32 %v536, %v540
        %v549 = vrot.slane %v541, 2
        %v550 = vrot.slane %v542, 2
        %v551 = vrot.slane %v543, 2
        %v552 = vrot.slane %v544, 2
        %v557 = vadd.f32 %v525, %v549
        %v558 = vadd.f32 %v526, %v550
        %v559 = vadd.f32 %v527, %v551
        %v560 = vadd.f32 %v528, %v552
        %s561 = scalar_lea.vmem [#allocation2], 8
        %v562 = vld [vmem:[%s561] sm:$0x3]
        %v563 = vld [vmem:[%s561 + $0x4] sm:$0x3]
        %v564 = vld [vmem:[%s561 + $0x8] sm:$0x3]
        %v565 = vld [vmem:[%s561 + $0xc] sm:$0x3]
        %v566 = vunpack.c.l.bf16 %v562
        %v567 = vunpack.c.l.bf16 %v563
        %v568 = vunpack.c.l.bf16 %v564
        %v569 = vunpack.c.l.bf16 %v565
        %v570 = vlaneseq
        %v571 = vshrl.u32 %v570, 7
        %v572 = vsub.s32 0, %v571
        %v573 = vrot.slane %v392, %v572
        %v574 = vmul.f32 %v566, %v573
        %v575 = vmul.f32 %v567, %v573
        %v576 = vmul.f32 %v568, %v573
        %v577 = vmul.f32 %v569, %v573
        %v578 = vadd.f32 %v557, %v574
        %v579 = vadd.f32 %v558, %v575
        %v580 = vadd.f32 %v559, %v576
        %v581 = vadd.f32 %v560, %v577
        %v582 = vld [vmem:[%s561] sm:$0x7]
        %v583 = vld [vmem:[%s561 + $0x4] sm:$0x7]
        %v584 = vld [vmem:[%s561 + $0x8] sm:$0x7]
        %v585 = vld [vmem:[%s561 + $0xc] sm:$0x7]
        %v586 = vunpack.c.l.bf16 %v582
        %v587 = vunpack.c.l.bf16 %v583
        %v588 = vunpack.c.l.bf16 %v584
        %v589 = vunpack.c.l.bf16 %v585
        %v590 = vlaneseq
        %v591 = vshrl.u32 %v590, 7
        %v592 = vsub.s32 1, %v591
        %v593 = vrot.slane %v392, %v592
        %v594 = vmul.f32 %v586, %v593
        %v595 = vmul.f32 %v587, %v593
        %v596 = vmul.f32 %v588, %v593
        %v597 = vmul.f32 %v589, %v593
        %v602 = vrot.slane %v594, 1
        %v603 = vrot.slane %v595, 1
        %v604 = vrot.slane %v596, 1
        %v605 = vrot.slane %v597, 1
        %v610 = vadd.f32 %v578, %v602
        %v611 = vadd.f32 %v579, %v603
        %v612 = vadd.f32 %v580, %v604
        %v613 = vadd.f32 %v581, %v605
        %v614 = vld [vmem:[%s561] sm:$0x6]
        %v615 = vld [vmem:[%s561 + $0x4] sm:$0x6]
        %v616 = vld [vmem:[%s561 + $0x8] sm:$0x6]
        %v617 = vld [vmem:[%s561 + $0xc] sm:$0x6]
        %v618 = vunpack.c.l.bf16 %v614
        %v619 = vunpack.c.l.bf16 %v615
        %v620 = vunpack.c.l.bf16 %v616
        %v621 = vunpack.c.l.bf16 %v617
        %v622 = vlaneseq
        %v623 = vshrl.u32 %v622, 7
        %v624 = vsub.s32 2, %v623
        %v625 = vrot.slane %v392, %v624
        %v626 = vmul.f32 %v618, %v625
        %v627 = vmul.f32 %v619, %v625
        %v628 = vmul.f32 %v620, %v625
        %v629 = vmul.f32 %v621, %v625
        %v634 = vrot.slane %v626, 2
        %v635 = vrot.slane %v627, 2
        %v636 = vrot.slane %v628, 2
        %v637 = vrot.slane %v629, 2
        %v642 = vadd.f32 %v610, %v634
        %v643 = vadd.f32 %v611, %v635
        %v644 = vadd.f32 %v612, %v636
        %v645 = vadd.f32 %v613, %v637
        %v646 = vld [vmem:[#allocation8] sm:$0x1]
        %v647 = vld [vmem:[#allocation9] sm:$0x1]
        %vm648 = vcmask 388096
        %v649 = vsel %vm648, %v642, 0.0
        %650 = vadd.xlane.f32.xlu0 %v649
        %v651 = vpop.xlane.xlu0 %650
        %v652 = vsel %vm648, %v643, 0.0
        %653 = vadd.xlane.f32.xlu0 %v652
        %v654 = vpop.xlane.xlu0 %653
        %v655 = vsel %vm648, %v644, 0.0
        %656 = vadd.xlane.f32.xlu0 %v655
        %v657 = vpop.xlane.xlu0 %656
        %v658 = vsel %vm648, %v645, 0.0
        %659 = vadd.xlane.f32.xlu0 %v658
        %v660 = vpop.xlane.xlu0 %659
        %v661 = vrcp.pop 48.0
        %v662 = vmul.f32 %v651, %v661
        %v663 = vmul.f32 %v654, %v661
        %v664 = vmul.f32 %v657, %v661
        %v665 = vmul.f32 %v660, %v661
        %v666 = vmul.f32 %v642, %v642
        %v667 = vmul.f32 %v643, %v643
        %v668 = vmul.f32 %v644, %v644
        %v669 = vmul.f32 %v645, %v645
        %v670 = vsel %vm648, %v666, 0.0
        %671 = vadd.xlane.f32.xlu0 %v670
        %v672 = vpop.xlane.xlu0 %671
        %v673 = vsel %vm648, %v667, 0.0
        %674 = vadd.xlane.f32.xlu0 %v673
        %v675 = vpop.xlane.xlu0 %674
        %v676 = vsel %vm648, %v668, 0.0
        %677 = vadd.xlane.f32.xlu0 %v676
        %v678 = vpop.xlane.xlu0 %677
        %v679 = vsel %vm648, %v669, 0.0
        %680 = vadd.xlane.f32.xlu0 %v679
        %v681 = vpop.xlane.xlu0 %680
        %v682 = vmul.f32 %v672, %v661
        %v683 = vmul.f32 %v675, %v661
        %v684 = vmul.f32 %v678, %v661
        %v685 = vmul.f32 %v681, %v661
        %v686 = vmul.f32 %v662, %v662
        %v687 = vmul.f32 %v663, %v663
        %v688 = vmul.f32 %v664, %v664
        %v689 = vmul.f32 %v665, %v665
        %v690 = vsub.f32 %v682, %v686
        %v691 = vsub.f32 %v683, %v687
        %v692 = vsub.f32 %v684, %v688
        %v693 = vsub.f32 %v685, %v689
        %v694 = vmax.f32 %v690, 0.0
        %v695 = vmax.f32 %v691, 0.0
        %v696 = vmax.f32 %v692, 0.0
        %v697 = vmax.f32 %v693, 0.0
        %v698 = vsub.f32 %v642, %v662
        %v699 = vsub.f32 %v643, %v663
        %v700 = vsub.f32 %v644, %v664
        %v701 = vsub.f32 %v645, %v665
        %v702 = vadd.f32 %v694, 1e-06
        %v703 = vadd.f32 %v695, 1e-06
        %v704 = vadd.f32 %v696, 1e-06
        %v705 = vadd.f32 %v697, 1e-06
        %v706 = vrsqrt.pop %v702
        %v707 = vrsqrt.pop %v703
        %v708 = vrsqrt.pop %v704
        %v709 = vrsqrt.pop %v705
        %v710 = vmul.f32 %v698, %v706
        %v711 = vmul.f32 %v699, %v707
        %v712 = vmul.f32 %v700, %v708
        %v713 = vmul.f32 %v701, %v709
        %v715 = vlaneseq
        %v716 = vshrl.u32 %v715, 7
        %v717 = vsub.s32 0, %v716
        %v718 = vrot.slane %v646, %v717
        %v720 = vmul.f32 %v710, %v718
        %v721 = vmul.f32 %v711, %v718
        %v722 = vmul.f32 %v712, %v718
        %v723 = vmul.f32 %v713, %v718
        %v725 = vlaneseq
        %v726 = vshrl.u32 %v725, 7
        %v727 = vsub.s32 0, %v726
        %v728 = vrot.slane %v647, %v727
        %v730 = vadd.f32 %v720, %v728
        %v731 = vadd.f32 %v721, %v728
        %v732 = vadd.f32 %v722, %v728
        %v733 = vadd.f32 %v723, %v728
        %v734 = vxor.u32 %v730, 2147483648
        %v735 = vxor.u32 %v731, 2147483648
        %v736 = vxor.u32 %v732, 2147483648
        %v737 = vxor.u32 %v733, 2147483648
        %v738 = vmul.f32 %v734, 1.442695
        %v739 = vpow.pop %v738
        %v740 = vmul.f32 %v735, 1.442695
        %v741 = vpow.pop %v740
        %v742 = vmul.f32 %v736, 1.442695
        %v743 = vpow.pop %v742
        %v744 = vmul.f32 %v737, 1.442695
        %v745 = vpow.pop %v744
        %v746 = vadd.f32 %v739, 1.0
        %v747 = vadd.f32 %v741, 1.0
        %v748 = vadd.f32 %v743, 1.0
        %v749 = vadd.f32 %v745, 1.0
        %v750 = vrcp.pop %v746
        %v751 = vmul.f32 1.0, %v750
        %v752 = vrcp.pop %v747
        %v753 = vmul.f32 1.0, %v752
        %v754 = vrcp.pop %v748
        %v755 = vmul.f32 1.0, %v754
        %v756 = vrcp.pop %v749
        %v757 = vmul.f32 1.0, %v756
        %v758 = vmul.f32 %v730, %v751
        %v759 = vmul.f32 %v731, %v753
        %v760 = vmul.f32 %v732, %v755
        %v761 = vmul.f32 %v733, %v757
        %v762 = vpack.c.bf16 %v758, %v758
        %v763 = vpack.c.bf16 %v759, %v759
        %v764 = vpack.c.bf16 %v760, %v760
        %v765 = vpack.c.bf16 %v761, %v761
        %vm766 = vcmask 386048
        %767 = vst.msk [vmem:[%s255] sm:$0x3] %vm766, %v762
        %768 = vst.msk [vmem:[%s255 + $0x2] sm:$0x3] %vm766, %v763
        %769 = vst.msk [vmem:[%s255 + $0x4] sm:$0x3] %vm766, %v764
        %770 = vst.msk [vmem:[%s255 + $0x6] sm:$0x3] %vm766, %v765
        %s771 = sand.u32 %s120, 1
        %s772 = scalar_lea.sflag [#allocation5], %s771
        %s773 = sand.u32 %s120, 1
        %s774 = smul.addr %s773, 8
        %s775 = scalar_lea.vmem [#allocation11], %s774
        // Predicated region
        $region53: #{_lambda_.21} parent=35 // pred_check
          %p776 = pneg %p130
        $region54: #{_lambda_.21} parent=35 // pred_check_branch
          %778 = sbr.rel (%p776) target = $region56
        $region55: #{_lambda_.21} parent=35 // pred_region
          %s780 = ssub.s32 128, 128
          %781 = vsyncadd %s772, %s780
          %s782 = smul.addr %s23, 4
          %s783 = smul.addr %s782, 32
          %s784 = scalar_lea.hbm %s4, %s783
          %s785 = sshll.u32 %s775, 4
          %s786 = int_to_ptr.vmem [resolvable:$true] %s785
          %791 = dma.vmem_to_hbm [thread:$0]  %s786, 128, %s784, %s772, 32, 32, 2
        $region56: #{_lambda_.21} parent=35 // pred_fallthru
          _
      $region36: #{_lambda_.21} parent=5 // pred_fallthru
        _
      %p792 = scmp.le.s32.totalorder 2, %s18
      // Predicated region
      $region57: #{_lambda_.21} parent=5 // pred_check
        %p793 = pneg %p792
      $region58: #{_lambda_.21} parent=5 // pred_check_branch
        %795 = sbr.rel (%p793) target = $region60
      $region59: #{_lambda_.21} parent=5 // pred_region
        %s796 = ssub.s32 %s18, 2
        // Predicated region
        $region61: #{_lambda_.21} parent=59 // pred_check
          %p797 = pneg %p136
        $region62: #{_lambda_.21} parent=59 // pred_check_branch
          %799 = sbr.rel (%p797) target = $region64
        $region63: #{_lambda_.21} parent=59 // pred_region
          %s800 = sand.u32 %s121, 1
          %s801 = scalar_lea.sflag [#allocation5], %s800
          %s802 = sand.u32 %s121, 1
          %s803 = smul.addr %s802, 8
          %s804 = scalar_lea.vmem [#allocation11], %s803
          %805 = dma.done %s801, 128
        $region64: #{_lambda_.21} parent=59 // pred_fallthru
          _
      $region60: #{_lambda_.21} parent=5 // pred_fallthru
        _
    $region6: #{_lambda_.21} parent=1 // loop_footer
      %s22 = sadd.s32 1, %s18
    $region7: #{_lambda_.21} parent=1 // loop_footer_branch
      %17 = sbr.rel target = $region3
    $region8: #{_lambda_.21} parent=1 // loop_exit
      _
    %806 = vsyncpa [#allocation4], 1
    %s807 = scalar_lea.sflag [#allocation4], 1
    %808 = vsyncpa %s807, 1
    %809 = vsyncpa [#allocation7], 1
    %810 = vsyncpa [#allocation10], 1
    %811 = vsyncpa [#allocation5], 1
    %s812 = scalar_lea.sflag [#allocation5], 1
    %813 = vsyncpa %s812, 1

// kernel: _lambda_.23
$region0: #{_lambda_.23}
  #allocation0 [shape = 'u32[]', space=smem, size = 0x4, offset = 0x4, fixed_abs, tag = 'smem constant byte address 0x4 - core index']
  #allocation1 [shape = 'u32[144,128]{1,0:T(1,128)}', space=vmem, size = 0x12000, scoped, tag = 'internal scratch']
  %s0 = inlined_call_operand.hbm [shape: bf16[32,48], index: 0, kind: input, shape index: {}]
  %s1 = inlined_call_operand.hbm [shape: bf16[48,48], index: 1, kind: input, shape index: {}]
  %s2 = inlined_call_operand.hbm [shape: f32[1,48], index: 2, kind: input, shape index: {}]
  %s3 = inlined_call_operand.hbm [shape: f32[1,48], index: 3, kind: input, shape index: {}]
  %s4 = inlined_call_operand.hbm [shape: bf16[32,48], index: 4, kind: output, shape index: {}]
  %s5 = sld [smem:[#allocation0]]
  $region42: #{_lambda_.23} parent=0
    _
  %s7 = ssub.s32 1, %s5
  %s8 = scalar_select 0, %s7, %s5
  $region1: #{_lambda_.23} parent=0
    #allocation2 [shape = 'u8[8192]{0}', space=vmem, size = 0x2000, scoped, tag = 'input window, operand 0, single buffered']
    #allocation3 [shape = 's32[1]{0}', space=sflag, size = 0x4, scoped, tag = 'scoped memory for _lambda_.23']
    #allocation4 [shape = 's32[1]{0}', space=sflag, size = 0x4, scoped, tag = 'scoped memory for _lambda_.23']
    #allocation5 [shape = 'u8[12288]{0}', space=vmem, size = 0x3000, scoped, tag = 'input window, operand 1, single buffered']
    #allocation6 [shape = 's32[1]{0}', space=sflag, size = 0x4, scoped, tag = 'scoped memory for _lambda_.23']
    #allocation7 [shape = 'u8[512]{0}', space=vmem, size = 0x400, scoped, tag = 'input window, operand 2, single buffered']
    #allocation8 [shape = 'u8[512]{0}', space=vmem, size = 0x400, scoped, tag = 'input window, operand 3, single buffered']
    #allocation9 [shape = 's32[1]{0}', space=sflag, size = 0x4, scoped, tag = 'scoped memory for _lambda_.23']
    #allocation10 [shape = 'u8[8192]{0}', space=vmem, size = 0x2000, scoped, tag = 'output window, operand 0, single buffered']
    %9 = vsyncpa [#allocation3], 0
    %10 = vsyncpa [#allocation6], 0
    %11 = vsyncpa [#allocation9], 0
    %12 = vsyncpa [#allocation4], 0
    // Predicated region
    $region2: #{_lambda_.23} parent=1 // pred_check
      _
    $region3: #{_lambda_.23} parent=1 // pred_check_branch
      %14 = sbr.rel (0) target = $region5
    $region4: #{_lambda_.23} parent=1 // pred_region
      %s16 = ssub.s32 256, 256
      %17 = vsyncadd [#allocation3], %s16
      %s18 = sshll.u32 [#allocation2], 4
      %s19 = int_to_ptr.vmem [resolvable:$true] %s18
      %24 = dma.hbm_to_vmem [thread:$0]  %s0, 256, %s19, [#allocation3], 64, 64, 4
    $region5: #{_lambda_.23} parent=1 // pred_fallthru
      _
    // Predicated region
    $region6: #{_lambda_.23} parent=1 // pred_check
      _
    $region7: #{_lambda_.23} parent=1 // pred_check_branch
      %26 = sbr.rel (0) target = $region9
    $region8: #{_lambda_.23} parent=1 // pred_region
      %s28 = ssub.s32 384, 384
      %29 = vsyncadd [#allocation6], %s28
      %s30 = sshll.u32 [#allocation5], 4
      %s31 = int_to_ptr.vmem [resolvable:$true] %s30
      %36 = dma.hbm_to_vmem [thread:$0]  %s1, 384, %s31, [#allocation6], 64, 64, 4
    $region9: #{_lambda_.23} parent=1 // pred_fallthru
      _
    // Predicated region
    $region10: #{_lambda_.23} parent=1 // pred_check
      _
    $region11: #{_lambda_.23} parent=1 // pred_check_branch
      %38 = sbr.rel (0) target = $region13
    $region12: #{_lambda_.23} parent=1 // pred_region
      %s40 = ssub.s32 16, 16
      %41 = vsyncadd [#allocation6], %s40
      %s43 = sshll.u32 [#allocation7], 4
      %s44 = int_to_ptr.vmem [resolvable:$true] %s43
      %46 = dma.hbm_to_vmem [thread:$0]  %s2, 16, %s44, [#allocation6]
    $region13: #{_lambda_.23} parent=1 // pred_fallthru
      _
    // Predicated region
    $region14: #{_lambda_.23} parent=1 // pred_check
      _
    $region15: #{_lambda_.23} parent=1 // pred_check_branch
      %48 = sbr.rel (0) target = $region17
    $region16: #{_lambda_.23} parent=1 // pred_region
      %s50 = ssub.s32 16, 16
      %51 = vsyncadd [#allocation9], %s50
      %s53 = sshll.u32 [#allocation8], 4
      %s54 = int_to_ptr.vmem [resolvable:$true] %s53
      %56 = dma.hbm_to_vmem [thread:$0]  %s3, 16, %s54, [#allocation9]
    $region17: #{_lambda_.23} parent=1 // pred_fallthru
      _
    // Predicated region
    $region18: #{_lambda_.23} parent=1 // pred_check
      _
    $region19: #{_lambda_.23} parent=1 // pred_check_branch
      %58 = sbr.rel (0) target = $region21
    $region20: #{_lambda_.23} parent=1 // pred_region
      %59 = dma.done [#allocation3], 256
    $region21: #{_lambda_.23} parent=1 // pred_fallthru
      _
    // Predicated region
    $region22: #{_lambda_.23} parent=1 // pred_check
      _
    $region23: #{_lambda_.23} parent=1 // pred_check_branch
      %61 = sbr.rel (0) target = $region25
    $region24: #{_lambda_.23} parent=1 // pred_region
      %62 = dma.done [#allocation6], 384
    $region25: #{_lambda_.23} parent=1 // pred_fallthru
      _
    // Predicated region
    $region26: #{_lambda_.23} parent=1 // pred_check
      _
    $region27: #{_lambda_.23} parent=1 // pred_check_branch
      %64 = sbr.rel (0) target = $region29
    $region28: #{_lambda_.23} parent=1 // pred_region
      %65 = dma.done [#allocation6], 16
    $region29: #{_lambda_.23} parent=1 // pred_fallthru
      _
    // Predicated region
    $region30: #{_lambda_.23} parent=1 // pred_check
      _
    $region31: #{_lambda_.23} parent=1 // pred_check_branch
      %67 = sbr.rel (0) target = $region33
    $region32: #{_lambda_.23} parent=1 // pred_region
      %68 = dma.done [#allocation9], 16
    $region33: #{_lambda_.23} parent=1 // pred_fallthru
      _
    %v70 = vld [vmem:[#allocation2] sm:$0xf]
    %v71 = vld [vmem:[#allocation2 + $0x4] sm:$0xf]
    %v72 = vld [vmem:[#allocation2 + $0x8] sm:$0xf]
    %v73 = vld [vmem:[#allocation2 + $0xc] sm:$0xf]
    %v74 = vld [vmem:[#allocation5] sm:$0xf]
    %v75 = vld [vmem:[#allocation5 + $0x4] sm:$0xf]
    %v76 = vld [vmem:[#allocation5 + $0x8] sm:$0xf]
    %v77 = vld [vmem:[#allocation5 + $0xc] sm:$0xf]
    %v78 = vld [vmem:[#allocation5 + $0x10] sm:$0xf]
    %v79 = vld [vmem:[#allocation5 + $0x14] sm:$0xf]
    %v84 = vunpack.c.l.b16 %v70
    %v85 = vunpack.c.l.b16 %v71
    %v86 = vunpack.c.l.b16 %v72
    %v87 = vunpack.c.l.b16 %v73
    %v88 = vpack.c.b16 %v85, %v84
    %v89 = vpack.c.b16 %v87, %v86
    %v96 = vunpack.c.l.b16 %v74
    %v97 = vunpack.c.l.b16 %v75
    %v98 = vunpack.c.l.b16 %v76
    %v99 = vunpack.c.l.b16 %v77
    %v100 = vunpack.c.l.b16 %v78
    %v101 = vunpack.c.l.b16 %v79
    %v102 = vpack.c.b16 %v97, %v96
    %v103 = vpack.c.b16 %v99, %v98
    %v104 = vpack.c.b16 %v101, %v100
    %vm108 = vcmask 392192
    %v110 = vsel %vm108, %v88, 0
    %v113 = vsel %vm108, %v89, 0
    %115 = vmatprep.subr.bf16.mxu0 0
    %116 = vmatpush1.bf16.msra.mxu0 %v102
    %117 = vmatprep.subr.bf16.mxu0 0
    %118 = vmatpush1.bf16.msra.mxu0 %v103
    %119 = vmatprep.subr.bf16.mxu0 0
    %120 = vmatpush1.bf16.msra.mxu0 %v104
    %121 = vmatprep.subr.bf16.mxu0 0
    %122 = vmatpush1.bf16.msra.mxu0 0
    %123 = vmatprep.subr.bf16.mxu0 0
    %124 = vmatpush1.bf16.msra.mxu0 0
    %125 = vmatprep.subr.bf16.mxu0 0
    %126 = vmatpush1.bf16.msra.mxu0 0
    %127 = vmatprep.subr.bf16.mxu0 0
    %128 = vmatpush1.bf16.msra.mxu0 0
    %129 = vmatprep.subr.bf16.mxu0 0
    %130 = vmatpush1.bf16.msra.mxu0 0
    %131 = vmatprep.subr.bf16.mxu0 0
    %132 = vmatpush1.bf16.msra.mxu0 0
    %133 = vmatprep.subr.bf16.mxu0 0
    %134 = vmatpush1.bf16.msra.mxu0 0
    %135 = vmatprep.subr.bf16.mxu0 0
    %136 = vmatpush1.bf16.msra.mxu0 0
    %137 = vmatprep.subr.bf16.mxu0 0
    %138 = vmatpush1.bf16.msra.mxu0 0
    %139 = vmatprep.subr.bf16.mxu0 0
    %140 = vmatpush1.bf16.msra.mxu0 0
    %141 = vmatprep.subr.bf16.mxu0 0
    %142 = vmatpush1.bf16.msra.mxu0 0
    %143 = vmatprep.subr.bf16.mxu0 0
    %144 = vmatpush1.bf16.msra.mxu0 0
    %145 = vmatprep.subr.bf16.mxu0 0
    %146 = vmatpush1.bf16.msra.mxu0 0
    %147 = vmatprep.mubr.bf16.mxu0 0
    %148 = vmatmul.mubr.bf16.gmra.mrb[0].mxu0 %v110
    %v149 = vpop.f32.mrb[0].mxu0
    %v150 = vadd.f32 0.0, %v149
    %v151 = vpop.f32.mrb[0].mxu0
    %v152 = vpop.f32.mrb[0].mxu0
    %v153 = vadd.f32 0.0, %v152
    %v154 = vpop.f32.mrb[0].mxu0
    %155 = vmatprep.mubr.bf16.mxu0 0
    %156 = vmatmul.mubr.bf16.gmra.mrb[0].mxu0 %v113
    %v157 = vpop.f32.mrb[0].mxu0
    %v158 = vadd.f32 0.0, %v157
    %v159 = vpop.f32.mrb[0].mxu0
    %v160 = vpop.f32.mrb[0].mxu0
    %v161 = vadd.f32 0.0, %v160
    %v162 = vpop.f32.mrb[0].mxu0
    %163 = vdwg.mxu0
    %v164 = vld [vmem:[#allocation7] sm:$0x1]
    %v165 = vld [vmem:[#allocation8] sm:$0x1]
    %v166 = vsel %vm108, %v150, 0.0
    %167 = vadd.xlane.f32.xlu0 %v166
    %v168 = vpop.xlane.xlu0 %167
    %v169 = vsel %vm108, %v153, 0.0
    %170 = vadd.xlane.f32.xlu0 %v169
    %v171 = vpop.xlane.xlu0 %170
    %v172 = vsel %vm108, %v158, 0.0
    %173 = vadd.xlane.f32.xlu0 %v172
    %v174 = vpop.xlane.xlu0 %173
    %v175 = vsel %vm108, %v161, 0.0
    %176 = vadd.xlane.f32.xlu0 %v175
    %v177 = vpop.xlane.xlu0 %176
    %v178 = vrcp.pop 48.0
    %v179 = vmul.f32 %v168, %v178
    %v180 = vmul.f32 %v171, %v178
    %v181 = vmul.f32 %v174, %v178
    %v182 = vmul.f32 %v177, %v178
    %v183 = vmul.f32 %v150, %v150
    %v184 = vmul.f32 %v153, %v153
    %v185 = vmul.f32 %v158, %v158
    %v186 = vmul.f32 %v161, %v161
    %v187 = vsel %vm108, %v183, 0.0
    %188 = vadd.xlane.f32.xlu0 %v187
    %v189 = vpop.xlane.xlu0 %188
    %v190 = vsel %vm108, %v184, 0.0
    %191 = vadd.xlane.f32.xlu0 %v190
    %v192 = vpop.xlane.xlu0 %191
    %v193 = vsel %vm108, %v185, 0.0
    %194 = vadd.xlane.f32.xlu0 %v193
    %v195 = vpop.xlane.xlu0 %194
    %v196 = vsel %vm108, %v186, 0.0
    %197 = vadd.xlane.f32.xlu0 %v196
    %v198 = vpop.xlane.xlu0 %197
    %v199 = vmul.f32 %v189, %v178
    %v200 = vmul.f32 %v192, %v178
    %v201 = vmul.f32 %v195, %v178
    %v202 = vmul.f32 %v198, %v178
    %v203 = vmul.f32 %v179, %v179
    %v204 = vmul.f32 %v180, %v180
    %v205 = vmul.f32 %v181, %v181
    %v206 = vmul.f32 %v182, %v182
    %v207 = vsub.f32 %v199, %v203
    %v208 = vsub.f32 %v200, %v204
    %v209 = vsub.f32 %v201, %v205
    %v210 = vsub.f32 %v202, %v206
    %v211 = vmax.f32 %v207, 0.0
    %v212 = vmax.f32 %v208, 0.0
    %v213 = vmax.f32 %v209, 0.0
    %v214 = vmax.f32 %v210, 0.0
    %v215 = vsub.f32 %v150, %v179
    %v216 = vsub.f32 %v153, %v180
    %v217 = vsub.f32 %v158, %v181
    %v218 = vsub.f32 %v161, %v182
    %v219 = vadd.f32 %v211, 1e-06
    %v220 = vadd.f32 %v212, 1e-06
    %v221 = vadd.f32 %v213, 1e-06
    %v222 = vadd.f32 %v214, 1e-06
    %v223 = vrsqrt.pop %v219
    %v224 = vrsqrt.pop %v220
    %v225 = vrsqrt.pop %v221
    %v226 = vrsqrt.pop %v222
    %v227 = vmul.f32 %v215, %v223
    %v228 = vmul.f32 %v216, %v224
    %v229 = vmul.f32 %v217, %v225
    %v230 = vmul.f32 %v218, %v226
    %v232 = vlaneseq
    %v233 = vshrl.u32 %v232, 7
    %v234 = vsub.s32 0, %v233
    %v235 = vrot.slane %v164, %v234
    %v237 = vmul.f32 %v227, %v235
    %v238 = vmul.f32 %v228, %v235
    %v239 = vmul.f32 %v229, %v235
    %v240 = vmul.f32 %v230, %v235
    %v242 = vlaneseq
    %v243 = vshrl.u32 %v242, 7
    %v244 = vsub.s32 0, %v243
    %v245 = vrot.slane %v165, %v244
    %v247 = vadd.f32 %v237, %v245
    %v248 = vadd.f32 %v238, %v245
    %v249 = vadd.f32 %v239, %v245
    %v250 = vadd.f32 %v240, %v245
    %v251 = vxor.u32 %v247, 2147483648
    %v252 = vxor.u32 %v248, 2147483648
    %v253 = vxor.u32 %v249, 2147483648
    %v254 = vxor.u32 %v250, 2147483648
    %v255 = vmul.f32 %v251, 1.442695
    %v256 = vpow.pop %v255
    %v257 = vmul.f32 %v252, 1.442695
    %v258 = vpow.pop %v257
    %v259 = vmul.f32 %v253, 1.442695
    %v260 = vpow.pop %v259
    %v261 = vmul.f32 %v254, 1.442695
    %v262 = vpow.pop %v261
    %v263 = vadd.f32 %v256, 1.0
    %v264 = vadd.f32 %v258, 1.0
    %v265 = vadd.f32 %v260, 1.0
    %v266 = vadd.f32 %v262, 1.0
    %v267 = vrcp.pop %v263
    %v268 = vmul.f32 1.0, %v267
    %v269 = vrcp.pop %v264
    %v270 = vmul.f32 1.0, %v269
    %v271 = vrcp.pop %v265
    %v272 = vmul.f32 1.0, %v271
    %v273 = vrcp.pop %v266
    %v274 = vmul.f32 1.0, %v273
    %v275 = vmul.f32 %v247, %v268
    %v276 = vmul.f32 %v248, %v270
    %v277 = vmul.f32 %v249, %v272
    %v278 = vmul.f32 %v250, %v274
    %v279 = vpack.c.bf16 %v276, %v275
    %v280 = vpack.c.bf16 %v278, %v277
    %v283 = vunpack.c.l.b16 %v279
    %v284 = vunpack.c.h.b16 %v279
    %v285 = vunpack.c.l.b16 %v280
    %v286 = vunpack.c.h.b16 %v280
    %v287 = vpack.c.b16 %v283, %v283
    %v288 = vpack.c.b16 %v284, %v284
    %v289 = vpack.c.b16 %v285, %v285
    %v290 = vpack.c.b16 %v286, %v286
    %vm295 = vcmask 388096
    %296 = vst.msk [vmem:[#allocation10] sm:$0xf] %vm295, %v287
    %297 = vst.msk [vmem:[#allocation10 + $0x4] sm:$0xf] %vm295, %v288
    %298 = vst.msk [vmem:[#allocation10 + $0x8] sm:$0xf] %vm295, %v289
    %299 = vst.msk [vmem:[#allocation10 + $0xc] sm:$0xf] %vm295, %v290
    // Predicated region
    $region34: #{_lambda_.23} parent=1 // pred_check
      _
    $region35: #{_lambda_.23} parent=1 // pred_check_branch
      %301 = sbr.rel (0) target = $region37
    $region36: #{_lambda_.23} parent=1 // pred_region
      %s303 = ssub.s32 256, 256
      %304 = vsyncadd [#allocation4], %s303
      %s305 = sshll.u32 [#allocation10], 4
      %s306 = int_to_ptr.vmem [resolvable:$true] %s305
      %311 = dma.vmem_to_hbm [thread:$0]  %s306, 256, %s4, [#allocation4], 64, 64, 4
    $region37: #{_lambda_.23} parent=1 // pred_fallthru
      _
    // Predicated region
    $region38: #{_lambda_.23} parent=1 // pred_check
      _
    $region39: #{_lambda_.23} parent=1 // pred_check_branch
      %313 = sbr.rel (0) target = $region41
    $region40: #{_lambda_.23} parent=1 // pred_region
      %314 = dma.done [#allocation4], 256
    $region41: #{_lambda_.23} parent=1 // pred_fallthru
      _
    %315 = vsyncpa [#allocation3], 1
    %316 = vsyncpa [#allocation6], 1
    %317 = vsyncpa [#allocation9], 1
    %318 = vsyncpa [#allocation4], 1

// kernel: _lambda_.22
$region0: #{_lambda_.22}
  #allocation0 [shape = 'u32[]', space=smem, size = 0x4, offset = 0x4, fixed_abs, tag = 'smem constant byte address 0x4 - core index']
  #allocation1 [shape = 'u32[144,128]{1,0:T(1,128)}', space=vmem, size = 0x12000, scoped, tag = 'internal scratch']
  %s0 = inlined_call_operand.hbm [shape: bf16[2,16,48], index: 0, kind: input, shape index: {}]
  %s1 = inlined_call_operand.hbm [shape: bf16[2,1,48], index: 1, kind: input, shape index: {}]
  %s2 = inlined_call_operand.hbm [shape: bf16[2,16,32], index: 2, kind: input, shape index: {}]
  %s3 = inlined_call_operand.hbm [shape: bf16[16,32], index: 3, kind: input, shape index: {}]
  %s4 = inlined_call_operand.hbm [shape: bf16[48,48], index: 4, kind: input, shape index: {}]
  %s5 = inlined_call_operand.hbm [shape: f32[1,48], index: 5, kind: input, shape index: {}]
  %s6 = inlined_call_operand.hbm [shape: f32[1,48], index: 6, kind: input, shape index: {}]
  %s7 = inlined_call_operand.hbm [shape: bf16[32,48], index: 7, kind: input, shape index: {}]
  %s8 = inlined_call_operand.hbm [shape: f32[1,48], index: 8, kind: input, shape index: {}]
  %s9 = inlined_call_operand.hbm [shape: f32[1,48], index: 9, kind: input, shape index: {}]
  %s10 = inlined_call_operand.hbm [shape: bf16[2,16,48], index: 10, kind: output, shape index: {}]
  %s11 = sld [smem:[#allocation0]]
  $region113: #{_lambda_.22} parent=0
    _
  %s13 = ssub.s32 1, %s11
  %s14 = scalar_select 0, %s13, %s11
  $region1: #{_lambda_.22} parent=0
    #allocation2 [shape = 'u8[8192]{0}', space=vmem, size = 0x2000, scoped, tag = 'input window, operand 0']
    #allocation3 [shape = 's32[2]{0}', space=sflag, size = 0x8, scoped, tag = 'scoped memory for _lambda_.22']
    #allocation4 [shape = 's32[2]{0}', space=sflag, size = 0x8, scoped, tag = 'scoped memory for _lambda_.22']
    #allocation5 [shape = 'u8[1024]{0}', space=vmem, size = 0x400, scoped, tag = 'input window, operand 1']
    #allocation6 [shape = 's32[2]{0}', space=sflag, size = 0x8, scoped, tag = 'scoped memory for _lambda_.22']
    #allocation7 [shape = 'u8[8192]{0}', space=vmem, size = 0x2000, scoped, tag = 'input window, operand 2']
    #allocation8 [shape = 'u8[4096]{0}', space=vmem, size = 0x1000, scoped, tag = 'input window, operand 3, single buffered']
    #allocation9 [shape = 's32[1]{0}', space=sflag, size = 0x4, scoped, tag = 'scoped memory for _lambda_.22']
    #allocation10 [shape = 'u8[12288]{0}', space=vmem, size = 0x3000, scoped, tag = 'input window, operand 4, single buffered']
    #allocation11 [shape = 'u8[512]{0}', space=vmem, size = 0x400, scoped, tag = 'input window, operand 5, single buffered']
    #allocation12 [shape = 's32[1]{0}', space=sflag, size = 0x4, scoped, tag = 'scoped memory for _lambda_.22']
    #allocation13 [shape = 'u8[512]{0}', space=vmem, size = 0x400, scoped, tag = 'input window, operand 6, single buffered']
    #allocation14 [shape = 'u8[8192]{0}', space=vmem, size = 0x2000, scoped, tag = 'input window, operand 7, single buffered']
    #allocation15 [shape = 's32[1]{0}', space=sflag, size = 0x4, scoped, tag = 'scoped memory for _lambda_.22']
    #allocation16 [shape = 'u8[512]{0}', space=vmem, size = 0x400, scoped, tag = 'input window, operand 8, single buffered']
    #allocation17 [shape = 'u8[512]{0}', space=vmem, size = 0x400, scoped, tag = 'input window, operand 9, single buffered']
    #allocation18 [shape = 's32[1]{0}', space=sflag, size = 0x4, scoped, tag = 'scoped memory for _lambda_.22']
    #allocation19 [shape = 'u8[8192]{0}', space=vmem, size = 0x2000, scoped, tag = 'output window, operand 0']
    %15 = vsyncpa [#allocation3], 0
    %s16 = scalar_lea.sflag [#allocation3], 1
    %17 = vsyncpa %s16, 0
    %18 = vsyncpa [#allocation6], 0
    %s19 = scalar_lea.sflag [#allocation6], 1
    %20 = vsyncpa %s19, 0
    %21 = vsyncpa [#allocation9], 0
    %22 = vsyncpa [#allocation12], 0
    %23 = vsyncpa [#allocation15], 0
    %24 = vsyncpa [#allocation18], 0
    %25 = vsyncpa [#allocation4], 0
    %s26 = scalar_lea.sflag [#allocation4], 1
    %27 = vsyncpa %s26, 0
    loop: start=0, step=1, limit=4
    $region2: #{_lambda_.22} parent=1 // loop_pre_header
      _
    $region3: #{_lambda_.22} parent=1 // loop_header
      %s29 = sphi 0, %s33
      %p30 = scmp.ge.s32.totalorder %s29, 4
      %s39 = sphi 0, %s41
      %s42 = sphi 0, %s39
      %s43 = sphi 0, %s42
      %s59 = sphi 0, %s43
      %s65 = sphi 0, %s67
      %s68 = sphi 0, %s65
      %s69 = sphi 0, %s68
      %s85 = sphi 0, %s69
      %s91 = sphi 0, %s93
      %s94 = sphi 0, %s91
      %s95 = sphi 0, %s94
      %s111 = sphi 0, %s95
      %s115 = sphi 0, %s115
      %s117 = sphi 0, %s115
      %s118 = sphi 0, %s117
      %s132 = sphi 0, %s118
      %s136 = sphi 0, %s136
      %s138 = sphi 0, %s136
      %s139 = sphi 0, %s138
      %s153 = sphi 0, %s139
      %s157 = sphi 0, %s157
      %s159 = sphi 0, %s157
      %s160 = sphi 0, %s159
      %s174 = sphi 0, %s160
      %s178 = sphi 0, %s178
      %s180 = sphi 0, %s178
      %s181 = sphi 0, %s180
      %s195 = sphi 0, %s181
      %s199 = sphi 0, %s199
      %s201 = sphi 0, %s199
      %s202 = sphi 0, %s201
      %s216 = sphi 0, %s202
      %s220 = sphi 0, %s220
      %s222 = sphi 0, %s220
      %s223 = sphi 0, %s222
      %s237 = sphi 0, %s223
      %s241 = sphi 0, %s241
      %s243 = sphi 0, %s241
      %s244 = sphi 0, %s243
      %s258 = sphi 0, %s244
      %s264 = sphi 0, %s266
      %s267 = sphi 0, %s264
      %s268 = sphi 0, %s267
      %s284 = sphi 0, %s268
    $region4: #{_lambda_.22} parent=1 // loop_header_branch
      %32 = sbr.rel (%p30) target = $region8
    $region5: #{_lambda_.22} parent=1 // loop_body
      %s34 = ssub.s32 %s29, 1
      %s35 = ssub.s32 %s29, 2
      %s36 = sadd.s32 %s29, 1
      %s37 = ssub.s32 %s29, %s36
      %p38 = scmp.eq.s32.totalorder %s37, 0
      %s40 = sadd.s32 %s39, 1
      %s41 = scalar_select %p38, %s39, %s40
      %p44 = pneg %p38
      %p45 = scmp.eq.s32.totalorder %s29, 1
      %p46 = por %p44, %p45
      %p47 = scmp.ne.s32.totalorder %s39, %s42
      %p48 = scmp.eq.s32.totalorder %s29, 0
      %p49 = por %p47, %p48
      %p50 = scmp.ne.s32.totalorder %s39, %s42
      %p51 = scmp.eq.s32.totalorder %s34, 1
      %p52 = por %p50, %p51
      %p53 = scmp.ne.s32.totalorder %s42, %s43
      %p54 = scmp.eq.s32.totalorder %s34, 0
      %p55 = por %p53, %p54
      %p56 = scmp.ne.s32.totalorder %s42, %s43
      %p57 = scmp.eq.s32.totalorder %s35, 1
      %p58 = por %p56, %p57
      %p60 = scmp.ne.s32.totalorder %s43, %s59
      %p61 = scmp.eq.s32.totalorder %s35, 0
      %p62 = por %p60, %p61
      %s63 = ssub.s32 %s29, %s36
      %p64 = scmp.eq.s32.totalorder %s63, 0
      %s66 = sadd.s32 %s65, 1
      %s67 = scalar_select %p64, %s65, %s66
      %p70 = pneg %p64
      %p71 = scmp.eq.s32.totalorder %s29, 1
      %p72 = por %p70, %p71
      %p73 = scmp.ne.s32.totalorder %s65, %s68
      %p74 = scmp.eq.s32.totalorder %s29, 0
      %p75 = por %p73, %p74
      %p76 = scmp.ne.s32.totalorder %s65, %s68
      %p77 = scmp.eq.s32.totalorder %s34, 1
      %p78 = por %p76, %p77
      %p79 = scmp.ne.s32.totalorder %s68, %s69
      %p80 = scmp.eq.s32.totalorder %s34, 0
      %p81 = por %p79, %p80
      %p82 = scmp.ne.s32.totalorder %s68, %s69
      %p83 = scmp.eq.s32.totalorder %s35, 1
      %p84 = por %p82, %p83
      %p86 = scmp.ne.s32.totalorder %s69, %s85
      %p87 = scmp.eq.s32.totalorder %s35, 0
      %p88 = por %p86, %p87
      %s89 = ssub.s32 %s29, %s36
      %p90 = scmp.eq.s32.totalorder %s89, 0
      %s92 = sadd.s32 %s91, 1
      %s93 = scalar_select %p90, %s91, %s92
      %p96 = pneg %p90
      %p97 = scmp.eq.s32.totalorder %s29, 1
      %p98 = por %p96, %p97
      %p99 = scmp.ne.s32.totalorder %s91, %s94
      %p100 = scmp.eq.s32.totalorder %s29, 0
      %p101 = por %p99, %p100
      %p102 = scmp.ne.s32.totalorder %s91, %s94
      %p103 = scmp.eq.s32.totalorder %s34, 1
      %p104 = por %p102, %p103
      %p105 = scmp.ne.s32.totalorder %s94, %s95
      %p106 = scmp.eq.s32.totalorder %s34, 0
      %p107 = por %p105, %p106
      %p108 = scmp.ne.s32.totalorder %s94, %s95
      %p109 = scmp.eq.s32.totalorder %s35, 1
      %p110 = por %p108, %p109
      %p112 = scmp.ne.s32.totalorder %s95, %s111
      %p113 = scmp.eq.s32.totalorder %s35, 0
      %p114 = por %p112, %p113
      %s116 = sadd.s32 %s115, 1
      %p119 = scmp.eq.s32.totalorder %s29, 1
      %p120 = scmp.ne.s32.totalorder %s115, %s117
      %p121 = scmp.eq.s32.totalorder %s29, 0
      %p122 = por %p120, %p121
      %p123 = scmp.ne.s32.totalorder %s115, %s117
      %p124 = scmp.eq.s32.totalorder %s34, 1
      %p125 = por %p123, %p124
      %p126 = scmp.ne.s32.totalorder %s117, %s118
      %p127 = scmp.eq.s32.totalorder %s34, 0
      %p128 = por %p126, %p127
      %p129 = scmp.ne.s32.totalorder %s117, %s118
      %p130 = scmp.eq.s32.totalorder %s35, 1
      %p131 = por %p129, %p130
      %p133 = scmp.ne.s32.totalorder %s118, %s132
      %p134 = scmp.eq.s32.totalorder %s35, 0
      %p135 = por %p133, %p134
      %s137 = sadd.s32 %s136, 1
      %p140 = scmp.eq.s32.totalorder %s29, 1
      %p141 = scmp.ne.s32.totalorder %s136, %s138
      %p142 = scmp.eq.s32.totalorder %s29, 0
      %p143 = por %p141, %p142
      %p144 = scmp.ne.s32.totalorder %s136, %s138
      %p145 = scmp.eq.s32.totalorder %s34, 1
      %p146 = por %p144, %p145
      %p147 = scmp.ne.s32.totalorder %s138, %s139
      %p148 = scmp.eq.s32.totalorder %s34, 0
      %p149 = por %p147, %p148
      %p150 = scmp.ne.s32.totalorder %s138, %s139
      %p151 = scmp.eq.s32.totalorder %s35, 1
      %p152 = por %p150, %p151
      %p154 = scmp.ne.s32.totalorder %s139, %s153
      %p155 = scmp.eq.s32.totalorder %s35, 0
      %p156 = por %p154, %p155
      %s158 = sadd.s32 %s157, 1
      %p161 = scmp.eq.s32.totalorder %s29, 1
      %p162 = scmp.ne.s32.totalorder %s157, %s159
      %p163 = scmp.eq.s32.totalorder %s29, 0
      %p164 = por %p162, %p163
      %p165 = scmp.ne.s32.totalorder %s157, %s159
      %p166 = scmp.eq.s32.totalorder %s34, 1
      %p167 = por %p165, %p166
      %p168 = scmp.ne.s32.totalorder %s159, %s160
      %p169 = scmp.eq.s32.totalorder %s34, 0
      %p170 = por %p168, %p169
      %p171 = scmp.ne.s32.totalorder %s159, %s160
      %p172 = scmp.eq.s32.totalorder %s35, 1
      %p173 = por %p171, %p172
      %p175 = scmp.ne.s32.totalorder %s160, %s174
      %p176 = scmp.eq.s32.totalorder %s35, 0
      %p177 = por %p175, %p176
      %s179 = sadd.s32 %s178, 1
      %p182 = scmp.eq.s32.totalorder %s29, 1
      %p183 = scmp.ne.s32.totalorder %s178, %s180
      %p184 = scmp.eq.s32.totalorder %s29, 0
      %p185 = por %p183, %p184
      %p186 = scmp.ne.s32.totalorder %s178, %s180
      %p187 = scmp.eq.s32.totalorder %s34, 1
      %p188 = por %p186, %p187
      %p189 = scmp.ne.s32.totalorder %s180, %s181
      %p190 = scmp.eq.s32.totalorder %s34, 0
      %p191 = por %p189, %p190
      %p192 = scmp.ne.s32.totalorder %s180, %s181
      %p193 = scmp.eq.s32.totalorder %s35, 1
      %p194 = por %p192, %p193
      %p196 = scmp.ne.s32.totalorder %s181, %s195
      %p197 = scmp.eq.s32.totalorder %s35, 0
      %p198 = por %p196, %p197
      %s200 = sadd.s32 %s199, 1
      %p203 = scmp.eq.s32.totalorder %s29, 1
      %p204 = scmp.ne.s32.totalorder %s199, %s201
      %p205 = scmp.eq.s32.totalorder %s29, 0
      %p206 = por %p204, %p205
      %p207 = scmp.ne.s32.totalorder %s199, %s201
      %p208 = scmp.eq.s32.totalorder %s34, 1
      %p209 = por %p207, %p208
      %p210 = scmp.ne.s32.totalorder %s201, %s202
      %p211 = scmp.eq.s32.totalorder %s34, 0
      %p212 = por %p210, %p211
      %p213 = scmp.ne.s32.totalorder %s201, %s202
      %p214 = scmp.eq.s32.totalorder %s35, 1
      %p215 = por %p213, %p214
      %p217 = scmp.ne.s32.totalorder %s202, %s216
      %p218 = scmp.eq.s32.totalorder %s35, 0
      %p219 = por %p217, %p218
      %s221 = sadd.s32 %s220, 1
      %p224 = scmp.eq.s32.totalorder %s29, 1
      %p225 = scmp.ne.s32.totalorder %s220, %s222
      %p226 = scmp.eq.s32.totalorder %s29, 0
      %p227 = por %p225, %p226
      %p228 = scmp.ne.s32.totalorder %s220, %s222
      %p229 = scmp.eq.s32.totalorder %s34, 1
      %p230 = por %p228, %p229
      %p231 = scmp.ne.s32.totalorder %s222, %s223
      %p232 = scmp.eq.s32.totalorder %s34, 0
      %p233 = por %p231, %p232
      %p234 = scmp.ne.s32.totalorder %s222, %s223
      %p235 = scmp.eq.s32.totalorder %s35, 1
      %p236 = por %p234, %p235
      %p238 = scmp.ne.s32.totalorder %s223, %s237
      %p239 = scmp.eq.s32.totalorder %s35, 0
      %p240 = por %p238, %p239
      %s242 = sadd.s32 %s241, 1
      %p245 = scmp.eq.s32.totalorder %s29, 1
      %p246 = scmp.ne.s32.totalorder %s241, %s243
      %p247 = scmp.eq.s32.totalorder %s29, 0
      %p248 = por %p246, %p247
      %p249 = scmp.ne.s32.totalorder %s241, %s243
      %p250 = scmp.eq.s32.totalorder %s34, 1
      %p251 = por %p249, %p250
      %p252 = scmp.ne.s32.totalorder %s243, %s244
      %p253 = scmp.eq.s32.totalorder %s34, 0
      %p254 = por %p252, %p253
      %p255 = scmp.ne.s32.totalorder %s243, %s244
      %p256 = scmp.eq.s32.totalorder %s35, 1
      %p257 = por %p255, %p256
      %p259 = scmp.ne.s32.totalorder %s244, %s258
      %p260 = scmp.eq.s32.totalorder %s35, 0
      %p261 = por %p259, %p260
      %s262 = ssub.s32 %s29, %s36
      %p263 = scmp.eq.s32.totalorder %s262, 0
      %s265 = sadd.s32 %s264, 1
      %s266 = scalar_select %p263, %s264, %s265
      %p269 = pneg %p263
      %p270 = scmp.eq.s32.totalorder %s29, 1
      %p271 = por %p269, %p270
      %p272 = scmp.ne.s32.totalorder %s264, %s267
      %p273 = scmp.eq.s32.totalorder %s29, 0
      %p274 = por %p272, %p273
      %p275 = scmp.ne.s32.totalorder %s264, %s267
      %p276 = scmp.eq.s32.totalorder %s34, 1
      %p277 = por %p275, %p276
      %p278 = scmp.ne.s32.totalorder %s267, %s268
      %p279 = scmp.eq.s32.totalorder %s34, 0
      %p280 = por %p278, %p279
      %p281 = scmp.ne.s32.totalorder %s267, %s268
      %p282 = scmp.eq.s32.totalorder %s35, 1
      %p283 = por %p281, %p282
      %p285 = scmp.ne.s32.totalorder %s268, %s284
      %p286 = scmp.eq.s32.totalorder %s35, 0
      %p287 = por %p285, %p286
      %p288 = scmp.le.s32.totalorder 1, %s29
      %p289 = scmp.lt.s32.totalorder %s29, 3
      %p290 = pnand %p288, %p289
      %p291 = pneg %p290
      // Predicated region
      $region9: #{_lambda_.22} parent=5 // pred_check
        _
      $region10: #{_lambda_.22} parent=5 // pred_check_branch
        %293 = sbr.rel (%p290) target = $region12
      $region11: #{_lambda_.22} parent=5 // pred_region
        %s294 = ssub.s32 %s29, 1
        // Predicated region
        $region13: #{_lambda_.22} parent=11 // pred_check
          %p295 = pneg %p128
        $region14: #{_lambda_.22} parent=11 // pred_check_branch
          %297 = sbr.rel (%p295) target = $region16
        $region15: #{_lambda_.22} parent=11 // pred_region
          %s299 = ssub.s32 128, 128
          %300 = vsyncadd [#allocation9], %s299
          %s301 = sshll.u32 [#allocation8], 4
          %s302 = int_to_ptr.vmem [resolvable:$true] %s301
          %307 = dma.hbm_to_vmem [thread:$0]  %s3, 128, %s302, [#allocation9], 64, 64, 4
        $region16: #{_lambda_.22} parent=11 // pred_fallthru
          _
        // Predicated region
        $region17: #{_lambda_.22} parent=11 // pred_check
          %p308 = pneg %p149
        $region18: #{_lambda_.22} parent=11 // pred_check_branch
          %310 = sbr.rel (%p308) target = $region20
        $region19: #{_lambda_.22} parent=11 // pred_region
          %s312 = ssub.s32 384, 384
          %313 = vsyncadd [#allocation9], %s312
          %s314 = sshll.u32 [#allocation10], 4
          %s315 = int_to_ptr.vmem [resolvable:$true] %s314
          %320 = dma.hbm_to_vmem [thread:$0]  %s4, 384, %s315, [#allocation9], 64, 64, 4
        $region20: #{_lambda_.22} parent=11 // pred_fallthru
          _
        // Predicated region
        $region21: #{_lambda_.22} parent=11 // pred_check
          %p321 = pneg %p170
        $region22: #{_lambda_.22} parent=11 // pred_check_branch
          %323 = sbr.rel (%p321) target = $region24
        $region23: #{_lambda_.22} parent=11 // pred_region
          %s325 = ssub.s32 16, 16
          %326 = vsyncadd [#allocation12], %s325
          %s328 = sshll.u32 [#allocation11], 4
          %s329 = int_to_ptr.vmem [resolvable:$true] %s328
          %331 = dma.hbm_to_vmem [thread:$0]  %s5, 16, %s329, [#allocation12]
        $region24: #{_lambda_.22} parent=11 // pred_fallthru
          _
        // Predicated region
        $region25: #{_lambda_.22} parent=11 // pred_check
          %p332 = pneg %p191
        $region26: #{_lambda_.22} parent=11 // pred_check_branch
          %334 = sbr.rel (%p332) target = $region28
        $region27: #{_lambda_.22} parent=11 // pred_region
          %s336 = ssub.s32 16, 16
          %337 = vsyncadd [#allocation12], %s336
          %s339 = sshll.u32 [#allocation13], 4
          %s340 = int_to_ptr.vmem [resolvable:$true] %s339
          %342 = dma.hbm_to_vmem [thread:$0]  %s6, 16, %s340, [#allocation12]
        $region28: #{_lambda_.22} parent=11 // pred_fallthru
          _
        // Predicated region
        $region29: #{_lambda_.22} parent=11 // pred_check
          %p343 = pneg %p212
        $region30: #{_lambda_.22} parent=11 // pred_check_branch
          %345 = sbr.rel (%p343) target = $region32
        $region31: #{_lambda_.22} parent=11 // pred_region
          %s347 = ssub.s32 256, 256
          %348 = vsyncadd [#allocation15], %s347
          %s349 = sshll.u32 [#allocation14], 4
          %s350 = int_to_ptr.vmem [resolvable:$true] %s349
          %355 = dma.hbm_to_vmem [thread:$0]  %s7, 256, %s350, [#allocation15], 64, 64, 4
        $region32: #{_lambda_.22} parent=11 // pred_fallthru
          _
        // Predicated region
        $region33: #{_lambda_.22} parent=11 // pred_check
          %p356 = pneg %p233
        $region34: #{_lambda_.22} parent=11 // pred_check_branch
          %358 = sbr.rel (%p356) target = $region36
        $region35: #{_lambda_.22} parent=11 // pred_region
          %s360 = ssub.s32 16, 16
          %361 = vsyncadd [#allocation15], %s360
          %s363 = sshll.u32 [#allocation16], 4
          %s364 = int_to_ptr.vmem [resolvable:$true] %s363
          %366 = dma.hbm_to_vmem [thread:$0]  %s8, 16, %s364, [#allocation15]
        $region36: #{_lambda_.22} parent=11 // pred_fallthru
          _
        // Predicated region
        $region37: #{_lambda_.22} parent=11 // pred_check
          %p367 = pneg %p254
        $region38: #{_lambda_.22} parent=11 // pred_check_branch
          %369 = sbr.rel (%p367) target = $region40
        $region39: #{_lambda_.22} parent=11 // pred_region
          %s371 = ssub.s32 16, 16
          %372 = vsyncadd [#allocation18], %s371
          %s374 = sshll.u32 [#allocation17], 4
          %s375 = int_to_ptr.vmem [resolvable:$true] %s374
          %377 = dma.hbm_to_vmem [thread:$0]  %s9, 16, %s375, [#allocation18]
        $region40: #{_lambda_.22} parent=11 // pred_fallthru
          _
      $region12: #{_lambda_.22} parent=5 // pred_fallthru
        _
      %p378 = scmp.lt.s32.totalorder %s29, 2
      // Predicated region
      $region41: #{_lambda_.22} parent=5 // pred_check
        %p379 = pneg %p378
      $region42: #{_lambda_.22} parent=5 // pred_check_branch
        %381 = sbr.rel (%p379) target = $region44
      $region43: #{_lambda_.22} parent=5 // pred_region
        // Predicated region
        $region45: #{_lambda_.22} parent=43 // pred_check
          %p382 = pneg %p49
        $region46: #{_lambda_.22} parent=43 // pred_check_branch
          %384 = sbr.rel (%p382) target = $region48
        $region47: #{_lambda_.22} parent=43 // pred_region
          %s385 = sand.u32 %s39, 1
          %s386 = scalar_lea.sflag [#allocation3], %s385
          %s387 = sand.u32 %s39, 1
          %s388 = smul.addr %s387, 8
          %s389 = scalar_lea.vmem [#allocation2], %s388
          %s391 = ssub.s32 128, 128
          %392 = vsyncadd %s386, %s391
          %s393 = smul.addr %s29, 2
          %s394 = smul.addr %s393, 64
          %s395 = scalar_lea.hbm %s0, %s394
          %s396 = sshll.u32 %s389, 4
          %s397 = int_to_ptr.vmem [resolvable:$true] %s396
          %402 = dma.hbm_to_vmem [thread:$0]  %s395, 128, %s397, %s386, 64, 64, 4
        $region48: #{_lambda_.22} parent=43 // pred_fallthru
          _
        // Predicated region
        $region49: #{_lambda_.22} parent=43 // pred_check
          %p403 = pneg %p75
        $region50: #{_lambda_.22} parent=43 // pred_check_branch
          %405 = sbr.rel (%p403) target = $region52
        $region51: #{_lambda_.22} parent=43 // pred_region
          %s406 = sand.u32 %s29, 1
          %s407 = scalar_lea.sflag [#allocation6], %s406
          %s408 = sand.u32 %s65, 1
          %s409 = scalar_lea.vmem [#allocation5], %s408
          %s411 = ssub.s32 16, 16
          %412 = vsyncadd %s407, %s411
          %s413 = smul.addr %s29, 16
          %s414 = scalar_lea.hbm %s1, %s413
          %s416 = sshll.u32 %s409, 4
          %s417 = int_to_ptr.vmem [resolvable:$true] %s416
          %419 = dma.hbm_to_vmem [thread:$0]  %s414, 16, %s417, %s407
        $region52: #{_lambda_.22} parent=43 // pred_fallthru
          _
        // Predicated region
        $region53: #{_lambda_.22} parent=43 // pred_check
          %p420 = pneg %p101
        $region54: #{_lambda_.22} parent=43 // pred_check_branch
          %422 = sbr.rel (%p420) target = $region56
        $region55: #{_lambda_.22} parent=43 // pred_region
          %s423 = sand.u32 %s29, 1
          %s424 = scalar_lea.sflag [#allocation6], %s423
          %s425 = sand.u32 %s91, 1
          %s426 = smul.addr %s425, 8
          %s427 = scalar_lea.vmem [#allocation7], %s426
          %s429 = ssub.s32 128, 128
          %430 = vsyncadd %s424, %s429
          %s431 = smul.addr %s29, 2
          %s432 = smul.addr %s431, 64
          %s433 = scalar_lea.hbm %s2, %s432
          %s434 = sshll.u32 %s427, 4
          %s435 = int_to_ptr.vmem [resolvable:$true] %s434
          %440 = dma.hbm_to_vmem [thread:$0]  %s433, 128, %s435, %s424, 64, 64, 4
        $region56: #{_lambda_.22} parent=43 // pred_fallthru
          _
      $region44: #{_lambda_.22} parent=5 // pred_fallthru
        _
      %p441 = scmp.le.s32.totalorder 1, %s29
      %p442 = scmp.lt.s32.totalorder %s29, 3
      %p443 = pnand %p441, %p442
      %p444 = pneg %p443
      // Predicated region
      $region57: #{_lambda_.22} parent=5 // pred_check
        _
      $region58: #{_lambda_.22} parent=5 // pred_check_branch
        %446 = sbr.rel (%p443) target = $region60
      $region59: #{_lambda_.22} parent=5 // pred_region
        %s447 = ssub.s32 %s29, 1
        %s448 = sand.u32 %s42, 1
        %s449 = scalar_lea.sflag [#allocation3], %s448
        %s450 = sand.u32 %s42, 1
        %s451 = smul.addr %s450, 8
        %s452 = scalar_lea.vmem [#allocation2], %s451
        // Predicated region
        $region61: #{_lambda_.22} parent=59 // pred_check
          %p453 = pneg %p55
        $region62: #{_lambda_.22} parent=59 // pred_check_branch
          %455 = sbr.rel (%p453) target = $region64
        $region63: #{_lambda_.22} parent=59 // pred_region
          %456 = dma.done %s449, 128
        $region64: #{_lambda_.22} parent=59 // pred_fallthru
          _
        %s457 = sand.u32 %s34, 1
        %s458 = scalar_lea.sflag [#allocation6], %s457
        %s459 = sand.u32 %s68, 1
        %s460 = scalar_lea.vmem [#allocation5], %s459
        // Predicated region
        $region65: #{_lambda_.22} parent=59 // pred_check
          %p461 = pneg %p81
        $region66: #{_lambda_.22} parent=59 // pred_check_branch
          %463 = sbr.rel (%p461) target = $region68
        $region67: #{_lambda_.22} parent=59 // pred_region
          %464 = dma.done %s458, 16
        $region68: #{_lambda_.22} parent=59 // pred_fallthru
          _
        %s465 = sand.u32 %s34, 1
        %s466 = scalar_lea.sflag [#allocation6], %s465
        %s467 = sand.u32 %s94, 1
        %s468 = smul.addr %s467, 8
        %s469 = scalar_lea.vmem [#allocation7], %s468
        // Predicated region
        $region69: #{_lambda_.22} parent=59 // pred_check
          %p470 = pneg %p107
        $region70: #{_lambda_.22} parent=59 // pred_check_branch
          %472 = sbr.rel (%p470) target = $region72
        $region71: #{_lambda_.22} parent=59 // pred_region
          %473 = dma.done %s466, 128
        $region72: #{_lambda_.22} parent=59 // pred_fallthru
          _
        // Predicated region
        $region73: #{_lambda_.22} parent=59 // pred_check
          %p474 = pneg %p128
        $region74: #{_lambda_.22} parent=59 // pred_check_branch
          %476 = sbr.rel (%p474) target = $region76
        $region75: #{_lambda_.22} parent=59 // pred_region
          %477 = dma.done [#allocation9], 128
        $region76: #{_lambda_.22} parent=59 // pred_fallthru
          _
        // Predicated region
        $region77: #{_lambda_.22} parent=59 // pred_check
          %p478 = pneg %p149
        $region78: #{_lambda_.22} parent=59 // pred_check_branch
          %480 = sbr.rel (%p478) target = $region80
        $region79: #{_lambda_.22} parent=59 // pred_region
          %481 = dma.done [#allocation9], 384
        $region80: #{_lambda_.22} parent=59 // pred_fallthru
          _
        // Predicated region
        $region81: #{_lambda_.22} parent=59 // pred_check
          %p482 = pneg %p170
        $region82: #{_lambda_.22} parent=59 // pred_check_branch
          %484 = sbr.rel (%p482) target = $region84
        $region83: #{_lambda_.22} parent=59 // pred_region
          %485 = dma.done [#allocation12], 16
        $region84: #{_lambda_.22} parent=59 // pred_fallthru
          _
        // Predicated region
        $region85: #{_lambda_.22} parent=59 // pred_check
          %p486 = pneg %p191
        $region86: #{_lambda_.22} parent=59 // pred_check_branch
          %488 = sbr.rel (%p486) target = $region88
        $region87: #{_lambda_.22} parent=59 // pred_region
          %489 = dma.done [#allocation12], 16
        $region88: #{_lambda_.22} parent=59 // pred_fallthru
          _
        // Predicated region
        $region89: #{_lambda_.22} parent=59 // pred_check
          %p490 = pneg %p212
        $region90: #{_lambda_.22} parent=59 // pred_check_branch
          %492 = sbr.rel (%p490) target = $region92
        $region91: #{_lambda_.22} parent=59 // pred_region
          %493 = dma.done [#allocation15], 256
        $region92: #{_lambda_.22} parent=59 // pred_fallthru
          _
        // Predicated region
        $region93: #{_lambda_.22} parent=59 // pred_check
          %p494 = pneg %p233
        $region94: #{_lambda_.22} parent=59 // pred_check_branch
          %496 = sbr.rel (%p494) target = $region96
        $region95: #{_lambda_.22} parent=59 // pred_region
          %497 = dma.done [#allocation15], 16
        $region96: #{_lambda_.22} parent=59 // pred_fallthru
          _
        // Predicated region
        $region97: #{_lambda_.22} parent=59 // pred_check
          %p498 = pneg %p254
        $region98: #{_lambda_.22} parent=59 // pred_check_branch
          %500 = sbr.rel (%p498) target = $region100
        $region99: #{_lambda_.22} parent=59 // pred_region
          %501 = dma.done [#allocation18], 16
        $region100: #{_lambda_.22} parent=59 // pred_fallthru
          _
        %s502 = sand.u32 %s42, 1
        %s503 = scalar_lea.sflag [#allocation3], %s502
        %s504 = sand.u32 %s42, 1
        %s505 = smul.addr %s504, 8
        %s506 = scalar_lea.vmem [#allocation2], %s505
        %p507 = pneg %p55
        %p508 = pneg %p52
        %s509 = sand.u32 %s34, 1
        %s510 = scalar_lea.sflag [#allocation6], %s509
        %s511 = sand.u32 %s68, 1
        %s512 = scalar_lea.vmem [#allocation5], %s511
        %p513 = pneg %p81
        %p514 = pneg %p78
        %s515 = sand.u32 %s34, 1
        %s516 = scalar_lea.sflag [#allocation6], %s515
        %s517 = sand.u32 %s94, 1
        %s518 = smul.addr %s517, 8
        %s519 = scalar_lea.vmem [#allocation7], %s518
        %p520 = pneg %p107
        %p521 = pneg %p104
        %p522 = pneg %p128
        %p523 = pneg %p125
        %p524 = pneg %p149
        %p525 = pneg %p146
        %p526 = pneg %p170
        %p527 = pneg %p167
        %p528 = pneg %p191
        %p529 = pneg %p188
        %p530 = pneg %p212
        %p531 = pneg %p209
        %p532 = pneg %p233
        %p533 = pneg %p230
        %p534 = pneg %p254
        %p535 = pneg %p251
        %p536 = pneg %p280
        %p537 = pneg %p277
        %s538 = sand.u32 %s267, 1
        %s539 = scalar_lea.sflag [#allocation4], %s538
        %s540 = sand.u32 %s267, 1
        %s541 = smul.addr %s540, 8
        %s542 = scalar_lea.vmem [#allocation19], %s541
        %v544 = vld [vmem:[%s452] sm:$0xf]
        %v545 = vld [vmem:[%s452 + $0x4] sm:$0xf]
        %v546 = vld [vmem:[%s460] sm:$0x1]
        %v548 = vpack.i.b16 %v546, %v546
        %v550 = vlaneseq
        %v551 = vshrl.u32 %v550, 7
        %v552 = vsub.s32 0, %v551
        %v553 = vrot.slane %v548, %v552
        %v555 = vunpack.c.l.b16 %v553
        %v556 = vpack.c.b16 %v555, %v555
        %v558 = vmul.bf16 %v544, %v556
        %v559 = vmul.bf16 %v545, %v556
        %v560 = vld [vmem:[#allocation10] sm:$0xf]
        %v561 = vld [vmem:[#allocation10 + $0x4] sm:$0xf]
        %v562 = vld [vmem:[#allocation10 + $0x8] sm:$0xf]
        %v563 = vld [vmem:[#allocation10 + $0xc] sm:$0xf]
        %v564 = vld [vmem:[#allocation10 + $0x10] sm:$0xf]
        %v565 = vld [vmem:[#allocation10 + $0x14] sm:$0xf]
        %v568 = vunpack.c.l.b16 %v558
        %v569 = vunpack.c.l.b16 %v559
        %v570 = vpack.c.b16 %v569, %v568
        %v577 = vunpack.c.l.b16 %v560
        %v578 = vunpack.c.l.b16 %v561
        %v579 = vunpack.c.l.b16 %v562
        %v580 = vunpack.c.l.b16 %v563
        %v581 = vunpack.c.l.b16 %v564
        %v582 = vunpack.c.l.b16 %v565
        %v583 = vpack.c.b16 %v578, %v577
        %v584 = vpack.c.b16 %v580, %v579
        %v585 = vpack.c.b16 %v582, %v581
        %vm589 = vcmask 392192
        %v591 = vsel %vm589, %v570, 0
        %593 = vmatprep.subr.bf16.mxu0 0
        %594 = vmatpush1.bf16.msra.mxu0 %v583
        %595 = vmatprep.subr.bf16.mxu0 0
        %596 = vmatpush1.bf16.msra.mxu0 %v584
        %597 = vmatprep.subr.bf16.mxu0 0
        %598 = vmatpush1.bf16.msra.mxu0 %v585
        %599 = vmatprep.subr.bf16.mxu0 0
        %600 = vmatpush1.bf16.msra.mxu0 0
        %601 = vmatprep.subr.bf16.mxu0 0
        %602 = vmatpush1.bf16.msra.mxu0 0
        %603 = vmatprep.subr.bf16.mxu0 0
        %604 = vmatpush1.bf16.msra.mxu0 0
        %605 = vmatprep.subr.bf16.mxu0 0
        %606 = vmatpush1.bf16.msra.mxu0 0
        %607 = vmatprep.subr.bf16.mxu0 0
        %608 = vmatpush1.bf16.msra.mxu0 0
        %609 = vmatprep.subr.bf16.mxu0 0
        %610 = vmatpush1.bf16.msra.mxu0 0
        %611 = vmatprep.subr.bf16.mxu0 0
        %612 = vmatpush1.bf16.msra.mxu0 0
        %613 = vmatprep.subr.bf16.mxu0 0
        %614 = vmatpush1.bf16.msra.mxu0 0
        %615 = vmatprep.subr.bf16.mxu0 0
        %616 = vmatpush1.bf16.msra.mxu0 0
        %617 = vmatprep.subr.bf16.mxu0 0
        %618 = vmatpush1.bf16.msra.mxu0 0
        %619 = vmatprep.subr.bf16.mxu0 0
        %620 = vmatpush1.bf16.msra.mxu0 0
        %621 = vmatprep.subr.bf16.mxu0 0
        %622 = vmatpush1.bf16.msra.mxu0 0
        %623 = vmatprep.subr.bf16.mxu0 0
        %624 = vmatpush1.bf16.msra.mxu0 0
        %625 = vmatprep.mubr.bf16.mxu0 0
        %626 = vmatmul.mubr.bf16.gmra.mrb[0].mxu0 %v591
        %v627 = vpop.f32.mrb[0].mxu0
        %v628 = vadd.f32 0.0, %v627
        %v629 = vpop.f32.mrb[0].mxu0
        %v630 = vpop.f32.mrb[0].mxu0
        %v631 = vadd.f32 0.0, %v630
        %v632 = vpop.f32.mrb[0].mxu0
        %633 = vdwg.mxu0
        %v634 = vld [vmem:[#allocation11] sm:$0x1]
        %v635 = vld [vmem:[#allocation13] sm:$0x1]
        %v636 = vsel %vm589, %v628, 0.0
        %637 = vadd.xlane.f32.xlu0 %v636
        %v638 = vpop.xlane.xlu0 %637
        %v639 = vsel %vm589, %v631, 0.0
        %640 = vadd.xlane.f32.xlu0 %v639
        %v641 = vpop.xlane.xlu0 %640
        %v642 = vrcp.pop 48.0
        %v643 = vmul.f32 %v638, %v642
        %v644 = vmul.f32 %v641, %v642
        %v645 = vmul.f32 %v628, %v628
        %v646 = vmul.f32 %v631, %v631
        %v647 = vsel %vm589, %v645, 0.0
        %648 = vadd.xlane.f32.xlu0 %v647
        %v649 = vpop.xlane.xlu0 %648
        %v650 = vsel %vm589, %v646, 0.0
        %651 = vadd.xlane.f32.xlu0 %v650
        %v652 = vpop.xlane.xlu0 %651
        %v653 = vmul.f32 %v649, %v642
        %v654 = vmul.f32 %v652, %v642
        %v655 = vmul.f32 %v643, %v643
        %v656 = vmul.f32 %v644, %v644
        %v657 = vsub.f32 %v653, %v655
        %v658 = vsub.f32 %v654, %v656
        %v659 = vmax.f32 %v657, 0.0
        %v660 = vmax.f32 %v658, 0.0
        %v661 = vsub.f32 %v628, %v643
        %v662 = vsub.f32 %v631, %v644
        %v663 = vadd.f32 %v659, 1e-06
        %v664 = vadd.f32 %v660, 1e-06
        %v665 = vrsqrt.pop %v663
        %v666 = vrsqrt.pop %v664
        %v667 = vmul.f32 %v661, %v665
        %v668 = vmul.f32 %v662, %v666
        %v670 = vlaneseq
        %v671 = vshrl.u32 %v670, 7
        %v672 = vsub.s32 0, %v671
        %v673 = vrot.slane %v634, %v672
        %v675 = vmul.f32 %v667, %v673
        %v676 = vmul.f32 %v668, %v673
        %v678 = vlaneseq
        %v679 = vshrl.u32 %v678, 7
        %v680 = vsub.s32 0, %v679
        %v681 = vrot.slane %v635, %v680
        %v683 = vadd.f32 %v675, %v681
        %v684 = vadd.f32 %v676, %v681
        %v685 = vld [vmem:[%s469] sm:$0xf]
        %v686 = vld [vmem:[%s469 + $0x4] sm:$0xf]
        %v687 = vld [vmem:[#allocation8] sm:$0xf]
        %v688 = vld [vmem:[#allocation8 + $0x4] sm:$0xf]
        %v689 = vadd.bf16 %v685, %v687
        %v690 = vadd.bf16 %v686, %v688
        %v691 = vld [vmem:[#allocation14] sm:$0xf]
        %v692 = vld [vmem:[#allocation14 + $0x4] sm:$0xf]
        %v693 = vld [vmem:[#allocation14 + $0x8] sm:$0xf]
        %v694 = vld [vmem:[#allocation14 + $0xc] sm:$0xf]
        %v697 = vunpack.c.l.b16 %v689
        %v698 = vunpack.c.l.b16 %v690
        %v699 = vpack.c.b16 %v698, %v697
        %v704 = vunpack.c.l.b16 %v691
        %v705 = vunpack.c.l.b16 %v692
        %v706 = vunpack.c.l.b16 %v693
        %v707 = vunpack.c.l.b16 %v694
        %v708 = vpack.c.b16 %v705, %v704
        %v709 = vpack.c.b16 %v707, %v706
        %vm712 = vcmask 261120
        %v714 = vsel %vm712, %v699, 0
        %716 = vmatprep.subr.bf16.mxu0 0
        %717 = vmatpush1.bf16.msra.mxu0 %v708
        %718 = vmatprep.subr.bf16.mxu0 0
        %719 = vmatpush1.bf16.msra.mxu0 %v709
        %720 = vmatprep.subr.bf16.mxu0 0
        %721 = vmatpush1.bf16.msra.mxu0 0
        %722 = vmatprep.subr.bf16.mxu0 0
        %723 = vmatpush1.bf16.msra.mxu0 0
        %724 = vmatprep.subr.bf16.mxu0 0
        %725 = vmatpush1.bf16.msra.mxu0 0
        %726 = vmatprep.subr.bf16.mxu0 0
        %727 = vmatpush1.bf16.msra.mxu0 0
        %728 = vmatprep.subr.bf16.mxu0 0
        %729 = vmatpush1.bf16.msra.mxu0 0
        %730 = vmatprep.subr.bf16.mxu0 0
        %731 = vmatpush1.bf16.msra.mxu0 0
        %732 = vmatprep.subr.bf16.mxu0 0
        %733 = vmatpush1.bf16.msra.mxu0 0
        %734 = vmatprep.subr.bf16.mxu0 0
        %735 = vmatpush1.bf16.msra.mxu0 0
        %736 = vmatprep.subr.bf16.mxu0 0
        %737 = vmatpush1.bf16.msra.mxu0 0
        %738 = vmatprep.subr.bf16.mxu0 0
        %739 = vmatpush1.bf16.msra.mxu0 0
        %740 = vmatprep.subr.bf16.mxu0 0
        %741 = vmatpush1.bf16.msra.mxu0 0
        %742 = vmatprep.subr.bf16.mxu0 0
        %743 = vmatpush1.bf16.msra.mxu0 0
        %744 = vmatprep.subr.bf16.mxu0 0
        %745 = vmatpush1.bf16.msra.mxu0 0
        %746 = vmatprep.subr.bf16.mxu0 0
        %747 = vmatpush1.bf16.msra.mxu0 0
        %748 = vmatprep.mubr.bf16.mxu0 0
        %749 = vmatmul.mubr.bf16.gmra.mrb[0].mxu0 %v714
        %v750 = vpop.f32.mrb[0].mxu0
        %v751 = vadd.f32 0.0, %v750
        %v752 = vpop.f32.mrb[0].mxu0
        %v753 = vpop.f32.mrb[0].mxu0
        %v754 = vadd.f32 0.0, %v753
        %v755 = vpop.f32.mrb[0].mxu0
        %756 = vdwg.mxu0
        %v757 = vld [vmem:[#allocation16] sm:$0x1]
        %v758 = vld [vmem:[#allocation17] sm:$0x1]
        %v759 = vsel %vm589, %v751, 0.0
        %760 = vadd.xlane.f32.xlu0 %v759
        %v761 = vpop.xlane.xlu0 %760
        %v762 = vsel %vm589, %v754, 0.0
        %763 = vadd.xlane.f32.xlu0 %v762
        %v764 = vpop.xlane.xlu0 %763
        %v765 = vmul.f32 %v761, %v642
        %v766 = vmul.f32 %v764, %v642
        %v767 = vmul.f32 %v751, %v751
        %v768 = vmul.f32 %v754, %v754
        %v769 = vsel %vm589, %v767, 0.0
        %770 = vadd.xlane.f32.xlu0 %v769
        %v771 = vpop.xlane.xlu0 %770
        %v772 = vsel %vm589, %v768, 0.0
        %773 = vadd.xlane.f32.xlu0 %v772
        %v774 = vpop.xlane.xlu0 %773
        %v775 = vmul.f32 %v771, %v642
        %v776 = vmul.f32 %v774, %v642
        %v777 = vmul.f32 %v765, %v765
        %v778 = vmul.f32 %v766, %v766
        %v779 = vsub.f32 %v775, %v777
        %v780 = vsub.f32 %v776, %v778
        %v781 = vmax.f32 %v779, 0.0
        %v782 = vmax.f32 %v780, 0.0
        %v783 = vsub.f32 %v751, %v765
        %v784 = vsub.f32 %v754, %v766
        %v785 = vadd.f32 %v781, 1e-06
        %v786 = vadd.f32 %v782, 1e-06
        %v787 = vrsqrt.pop %v785
        %v788 = vrsqrt.pop %v786
        %v789 = vmul.f32 %v783, %v787
        %v790 = vmul.f32 %v784, %v788
        %v792 = vlaneseq
        %v793 = vshrl.u32 %v792, 7
        %v794 = vsub.s32 0, %v793
        %v795 = vrot.slane %v757, %v794
        %v797 = vmul.f32 %v789, %v795
        %v798 = vmul.f32 %v790, %v795
        %v800 = vlaneseq
        %v801 = vshrl.u32 %v800, 7
        %v802 = vsub.s32 0, %v801
        %v803 = vrot.slane %v758, %v802
        %v805 = vadd.f32 %v797, %v803
        %v806 = vadd.f32 %v798, %v803
        %v807 = vadd.f32 %v683, %v805
        %v808 = vadd.f32 %v684, %v806
        %v809 = vxor.u32 %v807, 2147483648
        %v810 = vxor.u32 %v808, 2147483648
        %v811 = vmul.f32 %v809, 1.442695
        %v812 = vpow.pop %v811
        %v813 = vmul.f32 %v810, 1.442695
        %v814 = vpow.pop %v813
        %v815 = vadd.f32 %v812, 1.0
        %v816 = vadd.f32 %v814, 1.0
        %v817 = vrcp.pop %v815
        %v818 = vmul.f32 1.0, %v817
        %v819 = vrcp.pop %v816
        %v820 = vmul.f32 1.0, %v819
        %v821 = vmul.f32 %v807, %v818
        %v822 = vmul.f32 %v808, %v820
        %v823 = vpack.c.bf16 %v822, %v821
        %v825 = vunpack.c.l.b16 %v823
        %v826 = vunpack.c.h.b16 %v823
        %v827 = vpack.c.b16 %v825, %v825
        %v828 = vpack.c.b16 %v826, %v826
        %vm831 = vcmask 388096
        %832 = vst.msk [vmem:[%s542] sm:$0xf] %vm831, %v827
        %833 = vst.msk [vmem:[%s542 + $0x4] sm:$0xf] %vm831, %v828
        %s834 = sand.u32 %s267, 1
        %s835 = scalar_lea.sflag [#allocation4], %s834
        %s836 = sand.u32 %s267, 1
        %s837 = smul.addr %s836, 8
        %s838 = scalar_lea.vmem [#allocation19], %s837
        // Predicated region
        $region101: #{_lambda_.22} parent=59 // pred_check
          %p839 = pneg %p277
        $region102: #{_lambda_.22} parent=59 // pred_check_branch
          %841 = sbr.rel (%p839) target = $region104
        $region103: #{_lambda_.22} parent=59 // pred_region
          %s843 = ssub.s32 128, 128
          %844 = vsyncadd %s835, %s843
          %s845 = smul.addr %s34, 2
          %s846 = smul.addr %s845, 64
          %s847 = scalar_lea.hbm %s10, %s846
          %s848 = sshll.u32 %s838, 4
          %s849 = int_to_ptr.vmem [resolvable:$true] %s848
          %854 = dma.vmem_to_hbm [thread:$0]  %s849, 128, %s847, %s835, 64, 64, 4
        $region104: #{_lambda_.22} parent=59 // pred_fallthru
          _
      $region60: #{_lambda_.22} parent=5 // pred_fallthru
        _
      %p855 = scmp.le.s32.totalorder 2, %s29
      // Predicated region
      $region105: #{_lambda_.22} parent=5 // pred_check
        %p856 = pneg %p855
      $region106: #{_lambda_.22} parent=5 // pred_check_branch
        %858 = sbr.rel (%p856) target = $region108
      $region107: #{_lambda_.22} parent=5 // pred_region
        %s859 = ssub.s32 %s29, 2
        // Predicated region
        $region109: #{_lambda_.22} parent=107 // pred_check
          %p860 = pneg %p283
        $region110: #{_lambda_.22} parent=107 // pred_check_branch
          %862 = sbr.rel (%p860) target = $region112
        $region111: #{_lambda_.22} parent=107 // pred_region
          %s863 = sand.u32 %s268, 1
          %s864 = scalar_lea.sflag [#allocation4], %s863
          %s865 = sand.u32 %s268, 1
          %s866 = smul.addr %s865, 8
          %s867 = scalar_lea.vmem [#allocation19], %s866
          %868 = dma.done %s864, 128
        $region112: #{_lambda_.22} parent=107 // pred_fallthru
          _
      $region108: #{_lambda_.22} parent=5 // pred_fallthru
        _
    $region6: #{_lambda_.22} parent=1 // loop_footer
      %s33 = sadd.s32 1, %s29
    $region7: #{_lambda_.22} parent=1 // loop_footer_branch
      %28 = sbr.rel target = $region3
    $region8: #{_lambda_.22} parent=1 // loop_exit
      _
    %869 = vsyncpa [#allocation3], 1
    %s870 = scalar_lea.sflag [#allocation3], 1
    %871 = vsyncpa %s870, 1
    %872 = vsyncpa [#allocation6], 1
    %s873 = scalar_lea.sflag [#allocation6], 1
    %874 = vsyncpa %s873, 1
    %875 = vsyncpa [#allocation9], 1
    %876 = vsyncpa [#allocation12], 1
    %877 = vsyncpa [#allocation15], 1
    %878 = vsyncpa [#allocation18], 1
    %879 = vsyncpa [#allocation4], 1
    %s880 = scalar_lea.sflag [#allocation4], 1
    %881 = vsyncpa %s880, 1

// kernel: _lambda_.25
$region0: #{_lambda_.25}
  #allocation0 [shape = 'u32[]', space=smem, size = 0x4, offset = 0x4, fixed_abs, tag = 'smem constant byte address 0x4 - core index']
  #allocation1 [shape = 'u32[144,128]{1,0:T(1,128)}', space=vmem, size = 0x12000, scoped, tag = 'internal scratch']
  %s0 = inlined_call_operand.hbm [shape: bf16[2,16,48], index: 0, kind: input, shape index: {}]
  %s1 = inlined_call_operand.hbm [shape: bf16[2,1,48], index: 1, kind: input, shape index: {}]
  %s2 = inlined_call_operand.hbm [shape: bf16[2,16,48], index: 2, kind: input, shape index: {}]
  %s3 = inlined_call_operand.hbm [shape: bf16[48,48], index: 3, kind: input, shape index: {}]
  %s4 = inlined_call_operand.hbm [shape: f32[1,48], index: 4, kind: input, shape index: {}]
  %s5 = inlined_call_operand.hbm [shape: f32[1,48], index: 5, kind: input, shape index: {}]
  %s6 = inlined_call_operand.hbm [shape: bf16[2,16,48], index: 6, kind: output, shape index: {}]
  %s7 = sld [smem:[#allocation0]]
  $region81: #{_lambda_.25} parent=0
    _
  %s9 = ssub.s32 1, %s7
  %s10 = scalar_select 0, %s9, %s7
  $region1: #{_lambda_.25} parent=0
    #allocation2 [shape = 'u8[8192]{0}', space=vmem, size = 0x2000, scoped, tag = 'input window, operand 0']
    #allocation3 [shape = 's32[2]{0}', space=sflag, size = 0x8, scoped, tag = 'scoped memory for _lambda_.25']
    #allocation4 [shape = 's32[2]{0}', space=sflag, size = 0x8, scoped, tag = 'scoped memory for _lambda_.25']
    #allocation5 [shape = 'u8[1024]{0}', space=vmem, size = 0x400, scoped, tag = 'input window, operand 1']
    #allocation6 [shape = 's32[2]{0}', space=sflag, size = 0x8, scoped, tag = 'scoped memory for _lambda_.25']
    #allocation7 [shape = 'u8[8192]{0}', space=vmem, size = 0x2000, scoped, tag = 'input window, operand 2']
    #allocation8 [shape = 'u8[12288]{0}', space=vmem, size = 0x3000, scoped, tag = 'input window, operand 3, single buffered']
    #allocation9 [shape = 's32[1]{0}', space=sflag, size = 0x4, scoped, tag = 'scoped memory for _lambda_.25']
    #allocation10 [shape = 'u8[512]{0}', space=vmem, size = 0x400, scoped, tag = 'input window, operand 4, single buffered']
    #allocation11 [shape = 'u8[512]{0}', space=vmem, size = 0x400, scoped, tag = 'input window, operand 5, single buffered']
    #allocation12 [shape = 's32[1]{0}', space=sflag, size = 0x4, scoped, tag = 'scoped memory for _lambda_.25']
    #allocation13 [shape = 'u8[8192]{0}', space=vmem, size = 0x2000, scoped, tag = 'output window, operand 0']
    %11 = vsyncpa [#allocation3], 0
    %s12 = scalar_lea.sflag [#allocation3], 1
    %13 = vsyncpa %s12, 0
    %14 = vsyncpa [#allocation6], 0
    %s15 = scalar_lea.sflag [#allocation6], 1
    %16 = vsyncpa %s15, 0
    %17 = vsyncpa [#allocation9], 0
    %18 = vsyncpa [#allocation12], 0
    %19 = vsyncpa [#allocation4], 0
    %s20 = scalar_lea.sflag [#allocation4], 1
    %21 = vsyncpa %s20, 0
    loop: start=0, step=1, limit=4
    $region2: #{_lambda_.25} parent=1 // loop_pre_header
      _
    $region3: #{_lambda_.25} parent=1 // loop_header
      %s23 = sphi 0, %s27
      %p24 = scmp.ge.s32.totalorder %s23, 4
      %s33 = sphi 0, %s35
      %s36 = sphi 0, %s33
      %s37 = sphi 0, %s36
      %s53 = sphi 0, %s37
      %s59 = sphi 0, %s61
      %s62 = sphi 0, %s59
      %s63 = sphi 0, %s62
      %s79 = sphi 0, %s63
      %s85 = sphi 0, %s87
      %s88 = sphi 0, %s85
      %s89 = sphi 0, %s88
      %s105 = sphi 0, %s89
      %s109 = sphi 0, %s109
      %s111 = sphi 0, %s109
      %s112 = sphi 0, %s111
      %s126 = sphi 0, %s112
      %s130 = sphi 0, %s130
      %s132 = sphi 0, %s130
      %s133 = sphi 0, %s132
      %s147 = sphi 0, %s133
      %s151 = sphi 0, %s151
      %s153 = sphi 0, %s151
      %s154 = sphi 0, %s153
      %s168 = sphi 0, %s154
      %s174 = sphi 0, %s176
      %s177 = sphi 0, %s174
      %s178 = sphi 0, %s177
      %s194 = sphi 0, %s178
    $region4: #{_lambda_.25} parent=1 // loop_header_branch
      %26 = sbr.rel (%p24) target = $region8
    $region5: #{_lambda_.25} parent=1 // loop_body
      %s28 = ssub.s32 %s23, 1
      %s29 = ssub.s32 %s23, 2
      %s30 = sadd.s32 %s23, 1
      %s31 = ssub.s32 %s23, %s30
      %p32 = scmp.eq.s32.totalorder %s31, 0
      %s34 = sadd.s32 %s33, 1
      %s35 = scalar_select %p32, %s33, %s34
      %p38 = pneg %p32
      %p39 = scmp.eq.s32.totalorder %s23, 1
      %p40 = por %p38, %p39
      %p41 = scmp.ne.s32.totalorder %s33, %s36
      %p42 = scmp.eq.s32.totalorder %s23, 0
      %p43 = por %p41, %p42
      %p44 = scmp.ne.s32.totalorder %s33, %s36
      %p45 = scmp.eq.s32.totalorder %s28, 1
      %p46 = por %p44, %p45
      %p47 = scmp.ne.s32.totalorder %s36, %s37
      %p48 = scmp.eq.s32.totalorder %s28, 0
      %p49 = por %p47, %p48
      %p50 = scmp.ne.s32.totalorder %s36, %s37
      %p51 = scmp.eq.s32.totalorder %s29, 1
      %p52 = por %p50, %p51
      %p54 = scmp.ne.s32.totalorder %s37, %s53
      %p55 = scmp.eq.s32.totalorder %s29, 0
      %p56 = por %p54, %p55
      %s57 = ssub.s32 %s23, %s30
      %p58 = scmp.eq.s32.totalorder %s57, 0
      %s60 = sadd.s32 %s59, 1
      %s61 = scalar_select %p58, %s59, %s60
      %p64 = pneg %p58
      %p65 = scmp.eq.s32.totalorder %s23, 1
      %p66 = por %p64, %p65
      %p67 = scmp.ne.s32.totalorder %s59, %s62
      %p68 = scmp.eq.s32.totalorder %s23, 0
      %p69 = por %p67, %p68
      %p70 = scmp.ne.s32.totalorder %s59, %s62
      %p71 = scmp.eq.s32.totalorder %s28, 1
      %p72 = por %p70, %p71
      %p73 = scmp.ne.s32.totalorder %s62, %s63
      %p74 = scmp.eq.s32.totalorder %s28, 0
      %p75 = por %p73, %p74
      %p76 = scmp.ne.s32.totalorder %s62, %s63
      %p77 = scmp.eq.s32.totalorder %s29, 1
      %p78 = por %p76, %p77
      %p80 = scmp.ne.s32.totalorder %s63, %s79
      %p81 = scmp.eq.s32.totalorder %s29, 0
      %p82 = por %p80, %p81
      %s83 = ssub.s32 %s23, %s30
      %p84 = scmp.eq.s32.totalorder %s83, 0
      %s86 = sadd.s32 %s85, 1
      %s87 = scalar_select %p84, %s85, %s86
      %p90 = pneg %p84
      %p91 = scmp.eq.s32.totalorder %s23, 1
      %p92 = por %p90, %p91
      %p93 = scmp.ne.s32.totalorder %s85, %s88
      %p94 = scmp.eq.s32.totalorder %s23, 0
      %p95 = por %p93, %p94
      %p96 = scmp.ne.s32.totalorder %s85, %s88
      %p97 = scmp.eq.s32.totalorder %s28, 1
      %p98 = por %p96, %p97
      %p99 = scmp.ne.s32.totalorder %s88, %s89
      %p100 = scmp.eq.s32.totalorder %s28, 0
      %p101 = por %p99, %p100
      %p102 = scmp.ne.s32.totalorder %s88, %s89
      %p103 = scmp.eq.s32.totalorder %s29, 1
      %p104 = por %p102, %p103
      %p106 = scmp.ne.s32.totalorder %s89, %s105
      %p107 = scmp.eq.s32.totalorder %s29, 0
      %p108 = por %p106, %p107
      %s110 = sadd.s32 %s109, 1
      %p113 = scmp.eq.s32.totalorder %s23, 1
      %p114 = scmp.ne.s32.totalorder %s109, %s111
      %p115 = scmp.eq.s32.totalorder %s23, 0
      %p116 = por %p114, %p115
      %p117 = scmp.ne.s32.totalorder %s109, %s111
      %p118 = scmp.eq.s32.totalorder %s28, 1
      %p119 = por %p117, %p118
      %p120 = scmp.ne.s32.totalorder %s111, %s112
      %p121 = scmp.eq.s32.totalorder %s28, 0
      %p122 = por %p120, %p121
      %p123 = scmp.ne.s32.totalorder %s111, %s112
      %p124 = scmp.eq.s32.totalorder %s29, 1
      %p125 = por %p123, %p124
      %p127 = scmp.ne.s32.totalorder %s112, %s126
      %p128 = scmp.eq.s32.totalorder %s29, 0
      %p129 = por %p127, %p128
      %s131 = sadd.s32 %s130, 1
      %p134 = scmp.eq.s32.totalorder %s23, 1
      %p135 = scmp.ne.s32.totalorder %s130, %s132
      %p136 = scmp.eq.s32.totalorder %s23, 0
      %p137 = por %p135, %p136
      %p138 = scmp.ne.s32.totalorder %s130, %s132
      %p139 = scmp.eq.s32.totalorder %s28, 1
      %p140 = por %p138, %p139
      %p141 = scmp.ne.s32.totalorder %s132, %s133
      %p142 = scmp.eq.s32.totalorder %s28, 0
      %p143 = por %p141, %p142
      %p144 = scmp.ne.s32.totalorder %s132, %s133
      %p145 = scmp.eq.s32.totalorder %s29, 1
      %p146 = por %p144, %p145
      %p148 = scmp.ne.s32.totalorder %s133, %s147
      %p149 = scmp.eq.s32.totalorder %s29, 0
      %p150 = por %p148, %p149
      %s152 = sadd.s32 %s151, 1
      %p155 = scmp.eq.s32.totalorder %s23, 1
      %p156 = scmp.ne.s32.totalorder %s151, %s153
      %p157 = scmp.eq.s32.totalorder %s23, 0
      %p158 = por %p156, %p157
      %p159 = scmp.ne.s32.totalorder %s151, %s153
      %p160 = scmp.eq.s32.totalorder %s28, 1
      %p161 = por %p159, %p160
      %p162 = scmp.ne.s32.totalorder %s153, %s154
      %p163 = scmp.eq.s32.totalorder %s28, 0
      %p164 = por %p162, %p163
      %p165 = scmp.ne.s32.totalorder %s153, %s154
      %p166 = scmp.eq.s32.totalorder %s29, 1
      %p167 = por %p165, %p166
      %p169 = scmp.ne.s32.totalorder %s154, %s168
      %p170 = scmp.eq.s32.totalorder %s29, 0
      %p171 = por %p169, %p170
      %s172 = ssub.s32 %s23, %s30
      %p173 = scmp.eq.s32.totalorder %s172, 0
      %s175 = sadd.s32 %s174, 1
      %s176 = scalar_select %p173, %s174, %s175
      %p179 = pneg %p173
      %p180 = scmp.eq.s32.totalorder %s23, 1
      %p181 = por %p179, %p180
      %p182 = scmp.ne.s32.totalorder %s174, %s177
      %p183 = scmp.eq.s32.totalorder %s23, 0
      %p184 = por %p182, %p183
      %p185 = scmp.ne.s32.totalorder %s174, %s177
      %p186 = scmp.eq.s32.totalorder %s28, 1
      %p187 = por %p185, %p186
      %p188 = scmp.ne.s32.totalorder %s177, %s178
      %p189 = scmp.eq.s32.totalorder %s28, 0
      %p190 = por %p188, %p189
      %p191 = scmp.ne.s32.totalorder %s177, %s178
      %p192 = scmp.eq.s32.totalorder %s29, 1
      %p193 = por %p191, %p192
      %p195 = scmp.ne.s32.totalorder %s178, %s194
      %p196 = scmp.eq.s32.totalorder %s29, 0
      %p197 = por %p195, %p196
      %p198 = scmp.le.s32.totalorder 1, %s23
      %p199 = scmp.lt.s32.totalorder %s23, 3
      %p200 = pnand %p198, %p199
      %p201 = pneg %p200
      // Predicated region
      $region9: #{_lambda_.25} parent=5 // pred_check
        _
      $region10: #{_lambda_.25} parent=5 // pred_check_branch
        %203 = sbr.rel (%p200) target = $region12
      $region11: #{_lambda_.25} parent=5 // pred_region
        %s204 = ssub.s32 %s23, 1
        // Predicated region
        $region13: #{_lambda_.25} parent=11 // pred_check
          %p205 = pneg %p122
        $region14: #{_lambda_.25} parent=11 // pred_check_branch
          %207 = sbr.rel (%p205) target = $region16
        $region15: #{_lambda_.25} parent=11 // pred_region
          %s209 = ssub.s32 384, 384
          %210 = vsyncadd [#allocation9], %s209
          %s211 = sshll.u32 [#allocation8], 4
          %s212 = int_to_ptr.vmem [resolvable:$true] %s211
          %217 = dma.hbm_to_vmem [thread:$0]  %s3, 384, %s212, [#allocation9], 64, 64, 4
        $region16: #{_lambda_.25} parent=11 // pred_fallthru
          _
        // Predicated region
        $region17: #{_lambda_.25} parent=11 // pred_check
          %p218 = pneg %p143
        $region18: #{_lambda_.25} parent=11 // pred_check_branch
          %220 = sbr.rel (%p218) target = $region20
        $region19: #{_lambda_.25} parent=11 // pred_region
          %s222 = ssub.s32 16, 16
          %223 = vsyncadd [#allocation9], %s222
          %s225 = sshll.u32 [#allocation10], 4
          %s226 = int_to_ptr.vmem [resolvable:$true] %s225
          %228 = dma.hbm_to_vmem [thread:$0]  %s4, 16, %s226, [#allocation9]
        $region20: #{_lambda_.25} parent=11 // pred_fallthru
          _
        // Predicated region
        $region21: #{_lambda_.25} parent=11 // pred_check
          %p229 = pneg %p164
        $region22: #{_lambda_.25} parent=11 // pred_check_branch
          %231 = sbr.rel (%p229) target = $region24
        $region23: #{_lambda_.25} parent=11 // pred_region
          %s233 = ssub.s32 16, 16
          %234 = vsyncadd [#allocation12], %s233
          %s236 = sshll.u32 [#allocation11], 4
          %s237 = int_to_ptr.vmem [resolvable:$true] %s236
          %239 = dma.hbm_to_vmem [thread:$0]  %s5, 16, %s237, [#allocation12]
        $region24: #{_lambda_.25} parent=11 // pred_fallthru
          _
      $region12: #{_lambda_.25} parent=5 // pred_fallthru
        _
      %p240 = scmp.lt.s32.totalorder %s23, 2
      // Predicated region
      $region25: #{_lambda_.25} parent=5 // pred_check
        %p241 = pneg %p240
      $region26: #{_lambda_.25} parent=5 // pred_check_branch
        %243 = sbr.rel (%p241) target = $region28
      $region27: #{_lambda_.25} parent=5 // pred_region
        // Predicated region
        $region29: #{_lambda_.25} parent=27 // pred_check
          %p244 = pneg %p43
        $region30: #{_lambda_.25} parent=27 // pred_check_branch
          %246 = sbr.rel (%p244) target = $region32
        $region31: #{_lambda_.25} parent=27 // pred_region
          %s247 = sand.u32 %s33, 1
          %s248 = scalar_lea.sflag [#allocation3], %s247
          %s249 = sand.u32 %s33, 1
          %s250 = smul.addr %s249, 8
          %s251 = scalar_lea.vmem [#allocation2], %s250
          %s253 = ssub.s32 128, 128
          %254 = vsyncadd %s248, %s253
          %s255 = smul.addr %s23, 2
          %s256 = smul.addr %s255, 64
          %s257 = scalar_lea.hbm %s0, %s256
          %s258 = sshll.u32 %s251, 4
          %s259 = int_to_ptr.vmem [resolvable:$true] %s258
          %264 = dma.hbm_to_vmem [thread:$0]  %s257, 128, %s259, %s248, 64, 64, 4
        $region32: #{_lambda_.25} parent=27 // pred_fallthru
          _
        // Predicated region
        $region33: #{_lambda_.25} parent=27 // pred_check
          %p265 = pneg %p69
        $region34: #{_lambda_.25} parent=27 // pred_check_branch
          %267 = sbr.rel (%p265) target = $region36
        $region35: #{_lambda_.25} parent=27 // pred_region
          %s268 = sand.u32 %s23, 1
          %s269 = scalar_lea.sflag [#allocation6], %s268
          %s270 = sand.u32 %s59, 1
          %s271 = scalar_lea.vmem [#allocation5], %s270
          %s273 = ssub.s32 16, 16
          %274 = vsyncadd %s269, %s273
          %s275 = smul.addr %s23, 16
          %s276 = scalar_lea.hbm %s1, %s275
          %s278 = sshll.u32 %s271, 4
          %s279 = int_to_ptr.vmem [resolvable:$true] %s278
          %281 = dma.hbm_to_vmem [thread:$0]  %s276, 16, %s279, %s269
        $region36: #{_lambda_.25} parent=27 // pred_fallthru
          _
        // Predicated region
        $region37: #{_lambda_.25} parent=27 // pred_check
          %p282 = pneg %p95
        $region38: #{_lambda_.25} parent=27 // pred_check_branch
          %284 = sbr.rel (%p282) target = $region40
        $region39: #{_lambda_.25} parent=27 // pred_region
          %s285 = sand.u32 %s23, 1
          %s286 = scalar_lea.sflag [#allocation6], %s285
          %s287 = sand.u32 %s85, 1
          %s288 = smul.addr %s287, 8
          %s289 = scalar_lea.vmem [#allocation7], %s288
          %s291 = ssub.s32 128, 128
          %292 = vsyncadd %s286, %s291
          %s293 = smul.addr %s23, 2
          %s294 = smul.addr %s293, 64
          %s295 = scalar_lea.hbm %s2, %s294
          %s296 = sshll.u32 %s289, 4
          %s297 = int_to_ptr.vmem [resolvable:$true] %s296
          %302 = dma.hbm_to_vmem [thread:$0]  %s295, 128, %s297, %s286, 64, 64, 4
        $region40: #{_lambda_.25} parent=27 // pred_fallthru
          _
      $region28: #{_lambda_.25} parent=5 // pred_fallthru
        _
      %p303 = scmp.le.s32.totalorder 1, %s23
      %p304 = scmp.lt.s32.totalorder %s23, 3
      %p305 = pnand %p303, %p304
      %p306 = pneg %p305
      // Predicated region
      $region41: #{_lambda_.25} parent=5 // pred_check
        _
      $region42: #{_lambda_.25} parent=5 // pred_check_branch
        %308 = sbr.rel (%p305) target = $region44
      $region43: #{_lambda_.25} parent=5 // pred_region
        %s309 = ssub.s32 %s23, 1
        %s310 = sand.u32 %s36, 1
        %s311 = scalar_lea.sflag [#allocation3], %s310
        %s312 = sand.u32 %s36, 1
        %s313 = smul.addr %s312, 8
        %s314 = scalar_lea.vmem [#allocation2], %s313
        // Predicated region
        $region45: #{_lambda_.25} parent=43 // pred_check
          %p315 = pneg %p49
        $region46: #{_lambda_.25} parent=43 // pred_check_branch
          %317 = sbr.rel (%p315) target = $region48
        $region47: #{_lambda_.25} parent=43 // pred_region
          %318 = dma.done %s311, 128
        $region48: #{_lambda_.25} parent=43 // pred_fallthru
          _
        %s319 = sand.u32 %s28, 1
        %s320 = scalar_lea.sflag [#allocation6], %s319
        %s321 = sand.u32 %s62, 1
        %s322 = scalar_lea.vmem [#allocation5], %s321
        // Predicated region
        $region49: #{_lambda_.25} parent=43 // pred_check
          %p323 = pneg %p75
        $region50: #{_lambda_.25} parent=43 // pred_check_branch
          %325 = sbr.rel (%p323) target = $region52
        $region51: #{_lambda_.25} parent=43 // pred_region
          %326 = dma.done %s320, 16
        $region52: #{_lambda_.25} parent=43 // pred_fallthru
          _
        %s327 = sand.u32 %s28, 1
        %s328 = scalar_lea.sflag [#allocation6], %s327
        %s329 = sand.u32 %s88, 1
        %s330 = smul.addr %s329, 8
        %s331 = scalar_lea.vmem [#allocation7], %s330
        // Predicated region
        $region53: #{_lambda_.25} parent=43 // pred_check
          %p332 = pneg %p101
        $region54: #{_lambda_.25} parent=43 // pred_check_branch
          %334 = sbr.rel (%p332) target = $region56
        $region55: #{_lambda_.25} parent=43 // pred_region
          %335 = dma.done %s328, 128
        $region56: #{_lambda_.25} parent=43 // pred_fallthru
          _
        // Predicated region
        $region57: #{_lambda_.25} parent=43 // pred_check
          %p336 = pneg %p122
        $region58: #{_lambda_.25} parent=43 // pred_check_branch
          %338 = sbr.rel (%p336) target = $region60
        $region59: #{_lambda_.25} parent=43 // pred_region
          %339 = dma.done [#allocation9], 384
        $region60: #{_lambda_.25} parent=43 // pred_fallthru
          _
        // Predicated region
        $region61: #{_lambda_.25} parent=43 // pred_check
          %p340 = pneg %p143
        $region62: #{_lambda_.25} parent=43 // pred_check_branch
          %342 = sbr.rel (%p340) target = $region64
        $region63: #{_lambda_.25} parent=43 // pred_region
          %343 = dma.done [#allocation9], 16
        $region64: #{_lambda_.25} parent=43 // pred_fallthru
          _
        // Predicated region
        $region65: #{_lambda_.25} parent=43 // pred_check
          %p344 = pneg %p164
        $region66: #{_lambda_.25} parent=43 // pred_check_branch
          %346 = sbr.rel (%p344) target = $region68
        $region67: #{_lambda_.25} parent=43 // pred_region
          %347 = dma.done [#allocation12], 16
        $region68: #{_lambda_.25} parent=43 // pred_fallthru
          _
        %s348 = sand.u32 %s36, 1
        %s349 = scalar_lea.sflag [#allocation3], %s348
        %s350 = sand.u32 %s36, 1
        %s351 = smul.addr %s350, 8
        %s352 = scalar_lea.vmem [#allocation2], %s351
        %p353 = pneg %p49
        %p354 = pneg %p46
        %s355 = sand.u32 %s28, 1
        %s356 = scalar_lea.sflag [#allocation6], %s355
        %s357 = sand.u32 %s62, 1
        %s358 = scalar_lea.vmem [#allocation5], %s357
        %p359 = pneg %p75
        %p360 = pneg %p72
        %s361 = sand.u32 %s28, 1
        %s362 = scalar_lea.sflag [#allocation6], %s361
        %s363 = sand.u32 %s88, 1
        %s364 = smul.addr %s363, 8
        %s365 = scalar_lea.vmem [#allocation7], %s364
        %p366 = pneg %p101
        %p367 = pneg %p98
        %p368 = pneg %p122
        %p369 = pneg %p119
        %p370 = pneg %p143
        %p371 = pneg %p140
        %p372 = pneg %p164
        %p373 = pneg %p161
        %p374 = pneg %p190
        %p375 = pneg %p187
        %s376 = sand.u32 %s177, 1
        %s377 = scalar_lea.sflag [#allocation4], %s376
        %s378 = sand.u32 %s177, 1
        %s379 = smul.addr %s378, 8
        %s380 = scalar_lea.vmem [#allocation13], %s379
        %v382 = vld [vmem:[%s314] sm:$0xf]
        %v383 = vld [vmem:[%s314 + $0x4] sm:$0xf]
        %v384 = vld [vmem:[%s322] sm:$0x1]
        %v386 = vpack.i.b16 %v384, %v384
        %v388 = vlaneseq
        %v389 = vshrl.u32 %v388, 7
        %v390 = vsub.s32 0, %v389
        %v391 = vrot.slane %v386, %v390
        %v393 = vunpack.c.l.b16 %v391
        %v394 = vpack.c.b16 %v393, %v393
        %v396 = vmul.bf16 %v382, %v394
        %v397 = vmul.bf16 %v383, %v394
        %v398 = vld [vmem:[#allocation8] sm:$0xf]
        %v399 = vld [vmem:[#allocation8 + $0x4] sm:$0xf]
        %v400 = vld [vmem:[#allocation8 + $0x8] sm:$0xf]
        %v401 = vld [vmem:[#allocation8 + $0xc] sm:$0xf]
        %v402 = vld [vmem:[#allocation8 + $0x10] sm:$0xf]
        %v403 = vld [vmem:[#allocation8 + $0x14] sm:$0xf]
        %v406 = vunpack.c.l.b16 %v396
        %v407 = vunpack.c.l.b16 %v397
        %v408 = vpack.c.b16 %v407, %v406
        %v415 = vunpack.c.l.b16 %v398
        %v416 = vunpack.c.l.b16 %v399
        %v417 = vunpack.c.l.b16 %v400
        %v418 = vunpack.c.l.b16 %v401
        %v419 = vunpack.c.l.b16 %v402
        %v420 = vunpack.c.l.b16 %v403
        %v421 = vpack.c.b16 %v416, %v415
        %v422 = vpack.c.b16 %v418, %v417
        %v423 = vpack.c.b16 %v420, %v419
        %vm427 = vcmask 392192
        %v429 = vsel %vm427, %v408, 0
        %431 = vmatprep.subr.bf16.mxu0 0
        %432 = vmatpush1.bf16.msra.mxu0 %v421
        %433 = vmatprep.subr.bf16.mxu0 0
        %434 = vmatpush1.bf16.msra.mxu0 %v422
        %435 = vmatprep.subr.bf16.mxu0 0
        %436 = vmatpush1.bf16.msra.mxu0 %v423
        %437 = vmatprep.subr.bf16.mxu0 0
        %438 = vmatpush1.bf16.msra.mxu0 0
        %439 = vmatprep.subr.bf16.mxu0 0
        %440 = vmatpush1.bf16.msra.mxu0 0
        %441 = vmatprep.subr.bf16.mxu0 0
        %442 = vmatpush1.bf16.msra.mxu0 0
        %443 = vmatprep.subr.bf16.mxu0 0
        %444 = vmatpush1.bf16.msra.mxu0 0
        %445 = vmatprep.subr.bf16.mxu0 0
        %446 = vmatpush1.bf16.msra.mxu0 0
        %447 = vmatprep.subr.bf16.mxu0 0
        %448 = vmatpush1.bf16.msra.mxu0 0
        %449 = vmatprep.subr.bf16.mxu0 0
        %450 = vmatpush1.bf16.msra.mxu0 0
        %451 = vmatprep.subr.bf16.mxu0 0
        %452 = vmatpush1.bf16.msra.mxu0 0
        %453 = vmatprep.subr.bf16.mxu0 0
        %454 = vmatpush1.bf16.msra.mxu0 0
        %455 = vmatprep.subr.bf16.mxu0 0
        %456 = vmatpush1.bf16.msra.mxu0 0
        %457 = vmatprep.subr.bf16.mxu0 0
        %458 = vmatpush1.bf16.msra.mxu0 0
        %459 = vmatprep.subr.bf16.mxu0 0
        %460 = vmatpush1.bf16.msra.mxu0 0
        %461 = vmatprep.subr.bf16.mxu0 0
        %462 = vmatpush1.bf16.msra.mxu0 0
        %463 = vmatprep.mubr.bf16.mxu0 0
        %464 = vmatmul.mubr.bf16.gmra.mrb[0].mxu0 %v429
        %v465 = vpop.f32.mrb[0].mxu0
        %v466 = vadd.f32 0.0, %v465
        %v467 = vpop.f32.mrb[0].mxu0
        %v468 = vpop.f32.mrb[0].mxu0
        %v469 = vadd.f32 0.0, %v468
        %v470 = vpop.f32.mrb[0].mxu0
        %471 = vdwg.mxu0
        %v472 = vld [vmem:[#allocation10] sm:$0x1]
        %v473 = vld [vmem:[#allocation11] sm:$0x1]
        %v474 = vsel %vm427, %v466, 0.0
        %475 = vadd.xlane.f32.xlu0 %v474
        %v476 = vpop.xlane.xlu0 %475
        %v477 = vsel %vm427, %v469, 0.0
        %478 = vadd.xlane.f32.xlu0 %v477
        %v479 = vpop.xlane.xlu0 %478
        %v480 = vrcp.pop 48.0
        %v481 = vmul.f32 %v476, %v480
        %v482 = vmul.f32 %v479, %v480
        %v483 = vmul.f32 %v466, %v466
        %v484 = vmul.f32 %v469, %v469
        %v485 = vsel %vm427, %v483, 0.0
        %486 = vadd.xlane.f32.xlu0 %v485
        %v487 = vpop.xlane.xlu0 %486
        %v488 = vsel %vm427, %v484, 0.0
        %489 = vadd.xlane.f32.xlu0 %v488
        %v490 = vpop.xlane.xlu0 %489
        %v491 = vmul.f32 %v487, %v480
        %v492 = vmul.f32 %v490, %v480
        %v493 = vmul.f32 %v481, %v481
        %v494 = vmul.f32 %v482, %v482
        %v495 = vsub.f32 %v491, %v493
        %v496 = vsub.f32 %v492, %v494
        %v497 = vmax.f32 %v495, 0.0
        %v498 = vmax.f32 %v496, 0.0
        %v499 = vsub.f32 %v466, %v481
        %v500 = vsub.f32 %v469, %v482
        %v501 = vadd.f32 %v497, 1e-06
        %v502 = vadd.f32 %v498, 1e-06
        %v503 = vrsqrt.pop %v501
        %v504 = vrsqrt.pop %v502
        %v505 = vmul.f32 %v499, %v503
        %v506 = vmul.f32 %v500, %v504
        %v508 = vlaneseq
        %v509 = vshrl.u32 %v508, 7
        %v510 = vsub.s32 0, %v509
        %v511 = vrot.slane %v472, %v510
        %v513 = vmul.f32 %v505, %v511
        %v514 = vmul.f32 %v506, %v511
        %v516 = vlaneseq
        %v517 = vshrl.u32 %v516, 7
        %v518 = vsub.s32 0, %v517
        %v519 = vrot.slane %v473, %v518
        %v521 = vadd.f32 %v513, %v519
        %v522 = vadd.f32 %v514, %v519
        %v523 = vld [vmem:[%s331] sm:$0xf]
        %v524 = vld [vmem:[%s331 + $0x4] sm:$0xf]
        %v525 = vunpack.c.l.bf16 %v523
        %v526 = vunpack.c.l.bf16 %v524
        %v527 = vadd.f32 %v521, %v525
        %v528 = vadd.f32 %v522, %v526
        %v529 = vxor.u32 %v527, 2147483648
        %v530 = vxor.u32 %v528, 2147483648
        %v531 = vmul.f32 %v529, 1.442695
        %v532 = vpow.pop %v531
        %v533 = vmul.f32 %v530, 1.442695
        %v534 = vpow.pop %v533
        %v535 = vadd.f32 %v532, 1.0
        %v536 = vadd.f32 %v534, 1.0
        %v537 = vrcp.pop %v535
        %v538 = vmul.f32 1.0, %v537
        %v539 = vrcp.pop %v536
        %v540 = vmul.f32 1.0, %v539
        %v541 = vmul.f32 %v527, %v538
        %v542 = vmul.f32 %v528, %v540
        %v543 = vpack.c.bf16 %v542, %v541
        %v545 = vunpack.c.l.b16 %v543
        %v546 = vunpack.c.h.b16 %v543
        %v547 = vpack.c.b16 %v545, %v545
        %v548 = vpack.c.b16 %v546, %v546
        %vm551 = vcmask 388096
        %552 = vst.msk [vmem:[%s380] sm:$0xf] %vm551, %v547
        %553 = vst.msk [vmem:[%s380 + $0x4] sm:$0xf] %vm551, %v548
        %s554 = sand.u32 %s177, 1
        %s555 = scalar_lea.sflag [#allocation4], %s554
        %s556 = sand.u32 %s177, 1
        %s557 = smul.addr %s556, 8
        %s558 = scalar_lea.vmem [#allocation13], %s557
        // Predicated region
        $region69: #{_lambda_.25} parent=43 // pred_check
          %p559 = pneg %p187
        $region70: #{_lambda_.25} parent=43 // pred_check_branch
          %561 = sbr.rel (%p559) target = $region72
        $region71: #{_lambda_.25} parent=43 // pred_region
          %s563 = ssub.s32 128, 128
          %564 = vsyncadd %s555, %s563
          %s565 = smul.addr %s28, 2
          %s566 = smul.addr %s565, 64
          %s567 = scalar_lea.hbm %s6, %s566
          %s568 = sshll.u32 %s558, 4
          %s569 = int_to_ptr.vmem [resolvable:$true] %s568
          %574 = dma.vmem_to_hbm [thread:$0]  %s569, 128, %s567, %s555, 64, 64, 4
        $region72: #{_lambda_.25} parent=43 // pred_fallthru
          _
      $region44: #{_lambda_.25} parent=5 // pred_fallthru
        _
      %p575 = scmp.le.s32.totalorder 2, %s23
      // Predicated region
      $region73: #{_lambda_.25} parent=5 // pred_check
        %p576 = pneg %p575
      $region74: #{_lambda_.25} parent=5 // pred_check_branch
        %578 = sbr.rel (%p576) target = $region76
      $region75: #{_lambda_.25} parent=5 // pred_region
        %s579 = ssub.s32 %s23, 2
        // Predicated region
        $region77: #{_lambda_.25} parent=75 // pred_check
          %p580 = pneg %p193
        $region78: #{_lambda_.25} parent=75 // pred_check_branch
          %582 = sbr.rel (%p580) target = $region80
        $region79: #{_lambda_.25} parent=75 // pred_region
          %s583 = sand.u32 %s178, 1
          %s584 = scalar_lea.sflag [#allocation4], %s583
          %s585 = sand.u32 %s178, 1
          %s586 = smul.addr %s585, 8
          %s587 = scalar_lea.vmem [#allocation13], %s586
          %588 = dma.done %s584, 128
        $region80: #{_lambda_.25} parent=75 // pred_fallthru
          _
      $region76: #{_lambda_.25} parent=5 // pred_fallthru
        _
    $region6: #{_lambda_.25} parent=1 // loop_footer
      %s27 = sadd.s32 1, %s23
    $region7: #{_lambda_.25} parent=1 // loop_footer_branch
      %22 = sbr.rel target = $region3
    $region8: #{_lambda_.25} parent=1 // loop_exit
      _
    %589 = vsyncpa [#allocation3], 1
    %s590 = scalar_lea.sflag [#allocation3], 1
    %591 = vsyncpa %s590, 1
    %592 = vsyncpa [#allocation6], 1
    %s593 = scalar_lea.sflag [#allocation6], 1
    %594 = vsyncpa %s593, 1
    %595 = vsyncpa [#allocation9], 1
    %596 = vsyncpa [#allocation12], 1
    %597 = vsyncpa [#allocation4], 1
    %s598 = scalar_lea.sflag [#allocation4], 1
    %599 = vsyncpa %s598, 1

// kernel: _lambda_.30
$region0: #{_lambda_.30}
  #allocation0 [shape = 'u32[]', space=smem, size = 0x4, offset = 0x4, fixed_abs, tag = 'smem constant byte address 0x4 - core index']
  #allocation1 [shape = 'u32[144,128]{1,0:T(1,128)}', space=vmem, size = 0x12000, scoped, tag = 'internal scratch']
  #allocation2 [shape = 'bf16[4,4,48]{2,1,0:T(4,128)(2,1)}', space=vmem, size = 0x1000, scoped, tag = 'scratch operand']
  %s0 = inlined_call_operand.hbm [shape: bf16[2,2,2,48], index: 0, kind: input, shape index: {}]
  %s1 = inlined_call_operand.hbm [shape: bf16[3,3,48], index: 1, kind: input, shape index: {}]
  %s2 = inlined_call_operand.hbm [shape: f32[1,48], index: 2, kind: input, shape index: {}]
  %s3 = inlined_call_operand.hbm [shape: f32[1,48], index: 3, kind: input, shape index: {}]
  %s4 = inlined_call_operand.hbm [shape: bf16[2,2,2,48], index: 4, kind: output, shape index: {}]
  %s5 = sld [smem:[#allocation0]]
  $region65: #{_lambda_.30} parent=0
    _
  %s7 = ssub.s32 1, %s5
  %s8 = scalar_select 0, %s7, %s5
  $region1: #{_lambda_.30} parent=0
    #allocation3 [shape = 'u8[2048]{0}', space=vmem, size = 0x800, scoped, tag = 'input window, operand 0']
    #allocation4 [shape = 's32[2]{0}', space=sflag, size = 0x8, scoped, tag = 'scoped memory for _lambda_.30']
    #allocation5 [shape = 's32[2]{0}', space=sflag, size = 0x8, scoped, tag = 'scoped memory for _lambda_.30']
    #allocation6 [shape = 'u8[3072]{0}', space=vmem, size = 0xc00, scoped, tag = 'input window, operand 1, single buffered']
    #allocation7 [shape = 's32[1]{0}', space=sflag, size = 0x4, scoped, tag = 'scoped memory for _lambda_.30']
    #allocation8 [shape = 'u8[512]{0}', space=vmem, size = 0x400, scoped, tag = 'input window, operand 2, single buffered']
    #allocation9 [shape = 'u8[512]{0}', space=vmem, size = 0x400, scoped, tag = 'input window, operand 3, single buffered']
    #allocation10 [shape = 's32[1]{0}', space=sflag, size = 0x4, scoped, tag = 'scoped memory for _lambda_.30']
    #allocation11 [shape = 'u8[2048]{0}', space=vmem, size = 0x800, scoped, tag = 'output window, operand 0']
    %9 = vsyncpa [#allocation4], 0
    %s10 = scalar_lea.sflag [#allocation4], 1
    %11 = vsyncpa %s10, 0
    %12 = vsyncpa [#allocation7], 0
    %13 = vsyncpa [#allocation10], 0
    %14 = vsyncpa [#allocation5], 0
    %s15 = scalar_lea.sflag [#allocation5], 1
    %16 = vsyncpa %s15, 0
    loop: start=0, step=1, limit=4
    $region2: #{_lambda_.30} parent=1 // loop_pre_header
      _
    $region3: #{_lambda_.30} parent=1 // loop_header
      %s18 = sphi 0, %s22
      %p19 = scmp.ge.s32.totalorder %s18, 4
      %s28 = sphi 0, %s30
      %s31 = sphi 0, %s28
      %s32 = sphi 0, %s31
      %s48 = sphi 0, %s32
      %s52 = sphi 0, %s52
      %s54 = sphi 0, %s52
      %s55 = sphi 0, %s54
      %s69 = sphi 0, %s55
      %s73 = sphi 0, %s73
      %s75 = sphi 0, %s73
      %s76 = sphi 0, %s75
      %s90 = sphi 0, %s76
      %s94 = sphi 0, %s94
      %s96 = sphi 0, %s94
      %s97 = sphi 0, %s96
      %s111 = sphi 0, %s97
      %s117 = sphi 0, %s119
      %s120 = sphi 0, %s117
      %s121 = sphi 0, %s120
      %s137 = sphi 0, %s121
    $region4: #{_lambda_.30} parent=1 // loop_header_branch
      %21 = sbr.rel (%p19) target = $region8
    $region5: #{_lambda_.30} parent=1 // loop_body
      %s23 = ssub.s32 %s18, 1
      %s24 = ssub.s32 %s18, 2
      %s25 = sadd.s32 %s18, 1
      %s26 = ssub.s32 %s18, %s25
      %p27 = scmp.eq.s32.totalorder %s26, 0
      %s29 = sadd.s32 %s28, 1
      %s30 = scalar_select %p27, %s28, %s29
      %p33 = pneg %p27
      %p34 = scmp.eq.s32.totalorder %s18, 1
      %p35 = por %p33, %p34
      %p36 = scmp.ne.s32.totalorder %s28, %s31
      %p37 = scmp.eq.s32.totalorder %s18, 0
      %p38 = por %p36, %p37
      %p39 = scmp.ne.s32.totalorder %s28, %s31
      %p40 = scmp.eq.s32.totalorder %s23, 1
      %p41 = por %p39, %p40
      %p42 = scmp.ne.s32.totalorder %s31, %s32
      %p43 = scmp.eq.s32.totalorder %s23, 0
      %p44 = por %p42, %p43
      %p45 = scmp.ne.s32.totalorder %s31, %s32
      %p46 = scmp.eq.s32.totalorder %s24, 1
      %p47 = por %p45, %p46
      %p49 = scmp.ne.s32.totalorder %s32, %s48
      %p50 = scmp.eq.s32.totalorder %s24, 0
      %p51 = por %p49, %p50
      %s53 = sadd.s32 %s52, 1
      %p56 = scmp.eq.s32.totalorder %s18, 1
      %p57 = scmp.ne.s32.totalorder %s52, %s54
      %p58 = scmp.eq.s32.totalorder %s18, 0
      %p59 = por %p57, %p58
      %p60 = scmp.ne.s32.totalorder %s52, %s54
      %p61 = scmp.eq.s32.totalorder %s23, 1
      %p62 = por %p60, %p61
      %p63 = scmp.ne.s32.totalorder %s54, %s55
      %p64 = scmp.eq.s32.totalorder %s23, 0
      %p65 = por %p63, %p64
      %p66 = scmp.ne.s32.totalorder %s54, %s55
      %p67 = scmp.eq.s32.totalorder %s24, 1
      %p68 = por %p66, %p67
      %p70 = scmp.ne.s32.totalorder %s55, %s69
      %p71 = scmp.eq.s32.totalorder %s24, 0
      %p72 = por %p70, %p71
      %s74 = sadd.s32 %s73, 1
      %p77 = scmp.eq.s32.totalorder %s18, 1
      %p78 = scmp.ne.s32.totalorder %s73, %s75
      %p79 = scmp.eq.s32.totalorder %s18, 0
      %p80 = por %p78, %p79
      %p81 = scmp.ne.s32.totalorder %s73, %s75
      %p82 = scmp.eq.s32.totalorder %s23, 1
      %p83 = por %p81, %p82
      %p84 = scmp.ne.s32.totalorder %s75, %s76
      %p85 = scmp.eq.s32.totalorder %s23, 0
      %p86 = por %p84, %p85
      %p87 = scmp.ne.s32.totalorder %s75, %s76
      %p88 = scmp.eq.s32.totalorder %s24, 1
      %p89 = por %p87, %p88
      %p91 = scmp.ne.s32.totalorder %s76, %s90
      %p92 = scmp.eq.s32.totalorder %s24, 0
      %p93 = por %p91, %p92
      %s95 = sadd.s32 %s94, 1
      %p98 = scmp.eq.s32.totalorder %s18, 1
      %p99 = scmp.ne.s32.totalorder %s94, %s96
      %p100 = scmp.eq.s32.totalorder %s18, 0
      %p101 = por %p99, %p100
      %p102 = scmp.ne.s32.totalorder %s94, %s96
      %p103 = scmp.eq.s32.totalorder %s23, 1
      %p104 = por %p102, %p103
      %p105 = scmp.ne.s32.totalorder %s96, %s97
      %p106 = scmp.eq.s32.totalorder %s23, 0
      %p107 = por %p105, %p106
      %p108 = scmp.ne.s32.totalorder %s96, %s97
      %p109 = scmp.eq.s32.totalorder %s24, 1
      %p110 = por %p108, %p109
      %p112 = scmp.ne.s32.totalorder %s97, %s111
      %p113 = scmp.eq.s32.totalorder %s24, 0
      %p114 = por %p112, %p113
      %s115 = ssub.s32 %s18, %s25
      %p116 = scmp.eq.s32.totalorder %s115, 0
      %s118 = sadd.s32 %s117, 1
      %s119 = scalar_select %p116, %s117, %s118
      %p122 = pneg %p116
      %p123 = scmp.eq.s32.totalorder %s18, 1
      %p124 = por %p122, %p123
      %p125 = scmp.ne.s32.totalorder %s117, %s120
      %p126 = scmp.eq.s32.totalorder %s18, 0
      %p127 = por %p125, %p126
      %p128 = scmp.ne.s32.totalorder %s117, %s120
      %p129 = scmp.eq.s32.totalorder %s23, 1
      %p130 = por %p128, %p129
      %p131 = scmp.ne.s32.totalorder %s120, %s121
      %p132 = scmp.eq.s32.totalorder %s23, 0
      %p133 = por %p131, %p132
      %p134 = scmp.ne.s32.totalorder %s120, %s121
      %p135 = scmp.eq.s32.totalorder %s24, 1
      %p136 = por %p134, %p135
      %p138 = scmp.ne.s32.totalorder %s121, %s137
      %p139 = scmp.eq.s32.totalorder %s24, 0
      %p140 = por %p138, %p139
      %p141 = scmp.le.s32.totalorder 1, %s18
      %p142 = scmp.lt.s32.totalorder %s18, 3
      %p143 = pnand %p141, %p142
      %p144 = pneg %p143
      // Predicated region
      $region9: #{_lambda_.30} parent=5 // pred_check
        _
      $region10: #{_lambda_.30} parent=5 // pred_check_branch
        %146 = sbr.rel (%p143) target = $region12
      $region11: #{_lambda_.30} parent=5 // pred_region
        %s147 = ssub.s32 %s18, 1
        // Predicated region
        $region13: #{_lambda_.30} parent=11 // pred_check
          %p148 = pneg %p65
        $region14: #{_lambda_.30} parent=11 // pred_check_branch
          %150 = sbr.rel (%p148) target = $region16
        $region15: #{_lambda_.30} parent=11 // pred_region
          %s152 = ssub.s32 96, 96
          %153 = vsyncadd [#allocation7], %s152
          %s154 = sshll.u32 [#allocation6], 4
          %s155 = int_to_ptr.vmem [resolvable:$true] %s154
          %160 = dma.hbm_to_vmem [thread:$0]  %s1, 96, %s155, [#allocation7], 32, 32, 2
        $region16: #{_lambda_.30} parent=11 // pred_fallthru
          _
        // Predicated region
        $region17: #{_lambda_.30} parent=11 // pred_check
          %p161 = pneg %p86
        $region18: #{_lambda_.30} parent=11 // pred_check_branch
          %163 = sbr.rel (%p161) target = $region20
        $region19: #{_lambda_.30} parent=11 // pred_region
          %s165 = ssub.s32 16, 16
          %166 = vsyncadd [#allocation7], %s165
          %s168 = sshll.u32 [#allocation8], 4
          %s169 = int_to_ptr.vmem [resolvable:$true] %s168
          %171 = dma.hbm_to_vmem [thread:$0]  %s2, 16, %s169, [#allocation7]
        $region20: #{_lambda_.30} parent=11 // pred_fallthru
          _
        // Predicated region
        $region21: #{_lambda_.30} parent=11 // pred_check
          %p172 = pneg %p107
        $region22: #{_lambda_.30} parent=11 // pred_check_branch
          %174 = sbr.rel (%p172) target = $region24
        $region23: #{_lambda_.30} parent=11 // pred_region
          %s176 = ssub.s32 16, 16
          %177 = vsyncadd [#allocation10], %s176
          %s179 = sshll.u32 [#allocation9], 4
          %s180 = int_to_ptr.vmem [resolvable:$true] %s179
          %182 = dma.hbm_to_vmem [thread:$0]  %s3, 16, %s180, [#allocation10]
        $region24: #{_lambda_.30} parent=11 // pred_fallthru
          _
      $region12: #{_lambda_.30} parent=5 // pred_fallthru
        _
      %p183 = scmp.lt.s32.totalorder %s18, 2
      // Predicated region
      $region25: #{_lambda_.30} parent=5 // pred_check
        %p184 = pneg %p183
      $region26: #{_lambda_.30} parent=5 // pred_check_branch
        %186 = sbr.rel (%p184) target = $region28
      $region27: #{_lambda_.30} parent=5 // pred_region
        // Predicated region
        $region29: #{_lambda_.30} parent=27 // pred_check
          %p187 = pneg %p38
        $region30: #{_lambda_.30} parent=27 // pred_check_branch
          %189 = sbr.rel (%p187) target = $region32
        $region31: #{_lambda_.30} parent=27 // pred_region
          %s190 = sand.u32 %s28, 1
          %s191 = scalar_lea.sflag [#allocation4], %s190
          %s192 = sand.u32 %s28, 1
          %s193 = smul.addr %s192, 2
          %s194 = scalar_lea.vmem [#allocation3], %s193
          %s196 = ssub.s32 32, 32
          %197 = vsyncadd %s191, %s196
          %s198 = smul.addr %s18, 2
          %s199 = smul.addr %s198, 16
          %s200 = scalar_lea.hbm %s0, %s199
          %s201 = sshll.u32 %s194, 4
          %s202 = int_to_ptr.vmem [resolvable:$true] %s201
          %207 = dma.hbm_to_vmem [thread:$0]  %s200, 32, %s202, %s191, 16, 16, 1
        $region32: #{_lambda_.30} parent=27 // pred_fallthru
          _
      $region28: #{_lambda_.30} parent=5 // pred_fallthru
        _
      %p208 = scmp.le.s32.totalorder 1, %s18
      %p209 = scmp.lt.s32.totalorder %s18, 3
      %p210 = pnand %p208, %p209
      %p211 = pneg %p210
      // Predicated region
      $region33: #{_lambda_.30} parent=5 // pred_check
        _
      $region34: #{_lambda_.30} parent=5 // pred_check_branch
        %213 = sbr.rel (%p210) target = $region36
      $region35: #{_lambda_.30} parent=5 // pred_region
        %s214 = ssub.s32 %s18, 1
        %s215 = sand.u32 %s31, 1
        %s216 = scalar_lea.sflag [#allocation4], %s215
        %s217 = sand.u32 %s31, 1
        %s218 = smul.addr %s217, 2
        %s219 = scalar_lea.vmem [#allocation3], %s218
        // Predicated region
        $region37: #{_lambda_.30} parent=35 // pred_check
          %p220 = pneg %p44
        $region38: #{_lambda_.30} parent=35 // pred_check_branch
          %222 = sbr.rel (%p220) target = $region40
        $region39: #{_lambda_.30} parent=35 // pred_region
          %223 = dma.done %s216, 32
        $region40: #{_lambda_.30} parent=35 // pred_fallthru
          _
        // Predicated region
        $region41: #{_lambda_.30} parent=35 // pred_check
          %p224 = pneg %p65
        $region42: #{_lambda_.30} parent=35 // pred_check_branch
          %226 = sbr.rel (%p224) target = $region44
        $region43: #{_lambda_.30} parent=35 // pred_region
          %227 = dma.done [#allocation7], 96
        $region44: #{_lambda_.30} parent=35 // pred_fallthru
          _
        // Predicated region
        $region45: #{_lambda_.30} parent=35 // pred_check
          %p228 = pneg %p86
        $region46: #{_lambda_.30} parent=35 // pred_check_branch
          %230 = sbr.rel (%p228) target = $region48
        $region47: #{_lambda_.30} parent=35 // pred_region
          %231 = dma.done [#allocation7], 16
        $region48: #{_lambda_.30} parent=35 // pred_fallthru
          _
        // Predicated region
        $region49: #{_lambda_.30} parent=35 // pred_check
          %p232 = pneg %p107
        $region50: #{_lambda_.30} parent=35 // pred_check_branch
          %234 = sbr.rel (%p232) target = $region52
        $region51: #{_lambda_.30} parent=35 // pred_region
          %235 = dma.done [#allocation10], 16
        $region52: #{_lambda_.30} parent=35 // pred_fallthru
          _
        %s236 = sand.u32 %s31, 1
        %s237 = scalar_lea.sflag [#allocation4], %s236
        %s238 = sand.u32 %s31, 1
        %s239 = smul.addr %s238, 2
        %s240 = scalar_lea.vmem [#allocation3], %s239
        %p241 = pneg %p44
        %p242 = pneg %p41
        %p243 = pneg %p65
        %p244 = pneg %p62
        %p245 = pneg %p86
        %p246 = pneg %p83
        %p247 = pneg %p107
        %p248 = pneg %p104
        %p249 = pneg %p133
        %p250 = pneg %p130
        %s251 = sand.u32 %s120, 1
        %s252 = scalar_lea.sflag [#allocation5], %s251
        %s253 = sand.u32 %s120, 1
        %s254 = smul.addr %s253, 2
        %s255 = scalar_lea.vmem [#allocation11], %s254
        %vm257 = vcmask 386048
        %258 = vst.msk [vmem:[#allocation2] sm:$0x3] %vm257, 0
        %s259 = scalar_lea.vmem [#allocation2], 6
        %260 = vst.msk [vmem:[%s259] sm:$0x3] %vm257, 0
        %vm261 = vcmask 385024
        %vm262 = vsmask.f32 256
        %vm263 = vmand %vm261, %vm262
        %v264 = vld [vmem:[#allocation2] sm:$0x1]
        %v265 = vsel %vm263, 0, %v264
        %266 = vst [vmem:[#allocation2] sm:$0x1] %v265
        %v267 = vld [vmem:[#allocation2 + $0x2] sm:$0x1]
        %v268 = vsel %vm263, 0, %v267
        %269 = vst [vmem:[#allocation2 + $0x2] sm:$0x1] %v268
        %v270 = vld [vmem:[#allocation2 + $0x4] sm:$0x1]
        %v271 = vsel %vm263, 0, %v270
        %272 = vst [vmem:[#allocation2 + $0x4] sm:$0x1] %v271
        %v273 = vld [vmem:[#allocation2 + $0x6] sm:$0x1]
        %v274 = vsel %vm263, 0, %v273
        %275 = vst [vmem:[#allocation2 + $0x6] sm:$0x1] %v274
        %vm276 = vcmask 386049
        %vm277 = vsmask.f32 7942
        %vm278 = vmand %vm276, %vm277
        %v279 = vld [vmem:[#allocation2] sm:$0x2]
        %v280 = vsel %vm278, 0, %v279
        %281 = vst [vmem:[#allocation2] sm:$0x2] %v280
        %v282 = vld [vmem:[#allocation2 + $0x2] sm:$0x2]
        %v283 = vsel %vm278, 0, %v282
        %284 = vst [vmem:[#allocation2 + $0x2] sm:$0x2] %v283
        %v285 = vld [vmem:[#allocation2 + $0x4] sm:$0x2]
        %v286 = vsel %vm278, 0, %v285
        %287 = vst [vmem:[#allocation2 + $0x4] sm:$0x2] %v286
        %v288 = vld [vmem:[#allocation2 + $0x6] sm:$0x2]
        %v289 = vsel %vm278, 0, %v288
        %290 = vst [vmem:[#allocation2 + $0x6] sm:$0x2] %v289
        %v291 = vld [vmem:[%s219] sm:$0x1]
        %v292 = vld [vmem:[%s219 + $0x1] sm:$0x1]
        %v296 = vunpack.c.l.s4 1935823168
        %v297 = vunpack.c.0.s8 %v296
        %v298 = vlaneseq
        %v299 = vshrl.u32 %v298, 7
        %v300 = vsub.s32 %v297, %v299
        %v301 = vrot.slane %v291, %v300
        %v303 = vunpack.c.l.s4 1935823168
        %v304 = vunpack.c.0.s8 %v303
        %v305 = vlaneseq
        %v306 = vshrl.u32 %v305, 7
        %v307 = vsub.s32 %v304, %v306
        %v308 = vrot.slane %v292, %v307
        %v310 = vshrl.u32 %v301, 16
        %v312 = vrot.slane %v310, 7
        %v313 = vshll.u32 %v301, 16
        %v315 = vor.u32 %v312, %v313
        %v317 = vshrl.u32 %v308, 16
        %v319 = vrot.slane %v317, 7
        %v320 = vshll.u32 %v308, 16
        %v322 = vor.u32 %v319, %v320
        %s325 = scalar_lea.vmem [#allocation2], 2
        %vm326 = vcmask 386048
        %vm327 = vsmask.f32 1282
        %vm328 = vmand %vm326, %vm327
        %v329 = vld [vmem:[%s325] sm:$0x3]
        %v330 = vsel %vm328, %v315, %v329
        %331 = vst [vmem:[%s325] sm:$0x3] %v330
        %v332 = vld [vmem:[%s325 + $0x2] sm:$0x3]
        %v333 = vsel %vm328, %v322, %v332
        %334 = vst [vmem:[%s325 + $0x2] sm:$0x3] %v333
        %v335 = vld [vmem:[#allocation6] sm:$0x3]
        %v336 = vld [vmem:[#allocation6 + $0x2] sm:$0x3]
        %v337 = vld [vmem:[#allocation6 + $0x4] sm:$0x3]
        %v338 = vunpack.c.l.bf16 %v335
        %v339 = vunpack.c.l.bf16 %v336
        %v340 = vunpack.c.l.bf16 %v337
        %v341 = vld [vmem:[#allocation2] sm:$0x1]
        %v342 = vld [vmem:[#allocation2 + $0x2] sm:$0x1]
        %v343 = vunpack.c.l.bf16 %v341
        %v344 = vunpack.c.l.bf16 %v342
        %v345 = vlaneseq
        %v346 = vshrl.u32 %v345, 7
        %v347 = vsub.s32 0, %v346
        %v348 = vrot.slane %v338, %v347
        %v349 = vmul.f32 %v343, %v348
        %v350 = vmul.f32 %v344, %v348
        %v351 = vadd.f32 %v349, 0.0
        %v352 = vadd.f32 %v350, 0.0
        %v353 = vld [vmem:[#allocation2] sm:$0x3]
        %v354 = vld [vmem:[#allocation2 + $0x2] sm:$0x3]
        %v355 = vunpack.c.l.bf16 %v353
        %v356 = vunpack.c.l.bf16 %v354
        %v357 = vlaneseq
        %v358 = vshrl.u32 %v357, 7
        %v359 = vsub.s32 1, %v358
        %v360 = vrot.slane %v338, %v359
        %v361 = vmul.f32 %v355, %v360
        %v362 = vmul.f32 %v356, %v360
        %v365 = vrot.slane %v361, 5
        %v366 = vrot.slane %v365, 4
        %v367 = vrot.slane %v362, 5
        %v368 = vrot.slane %v367, 4
        %v371 = vadd.f32 %v351, %v366
        %v372 = vadd.f32 %v352, %v368
        %v373 = vld [vmem:[#allocation2] sm:$0x2]
        %v374 = vld [vmem:[#allocation2 + $0x2] sm:$0x2]
        %v375 = vunpack.c.l.bf16 %v373
        %v376 = vunpack.c.l.bf16 %v374
        %v377 = vlaneseq
        %v378 = vshrl.u32 %v377, 7
        %v379 = vsub.s32 2, %v378
        %v380 = vrot.slane %v338, %v379
        %v381 = vmul.f32 %v375, %v380
        %v382 = vmul.f32 %v376, %v380
        %v385 = vrot.slane %v381, 6
        %v386 = vrot.slane %v385, 4
        %v387 = vrot.slane %v382, 6
        %v388 = vrot.slane %v387, 4
        %v391 = vadd.f32 %v371, %v386
        %v392 = vadd.f32 %v372, %v388
        %v393 = vld [vmem:[%s325] sm:$0x1]
        %v394 = vld [vmem:[%s325 + $0x2] sm:$0x1]
        %v395 = vunpack.c.l.bf16 %v393
        %v396 = vunpack.c.l.bf16 %v394
        %v397 = vlaneseq
        %v398 = vshrl.u32 %v397, 7
        %v399 = vsub.s32 0, %v398
        %v400 = vrot.slane %v339, %v399
        %v401 = vmul.f32 %v395, %v400
        %v402 = vmul.f32 %v396, %v400
        %v403 = vadd.f32 %v391, %v401
        %v404 = vadd.f32 %v392, %v402
        %v405 = vld [vmem:[%s325] sm:$0x3]
        %v406 = vld [vmem:[%s325 + $0x2] sm:$0x3]
        %v407 = vunpack.c.l.bf16 %v405
        %v408 = vunpack.c.l.bf16 %v406
        %v409 = vlaneseq
        %v410 = vshrl.u32 %v409, 7
        %v411 = vsub.s32 1, %v410
        %v412 = vrot.slane %v339, %v411
        %v413 = vmul.f32 %v407, %v412
        %v414 = vmul.f32 %v408, %v412
        %v417 = vrot.slane %v413, 5
        %v418 = vrot.slane %v417, 4
        %v419 = vrot.slane %v414, 5
        %v420 = vrot.slane %v419, 4
        %v423 = vadd.f32 %v403, %v418
        %v424 = vadd.f32 %v404, %v420
        %v425 = vld [vmem:[%s325] sm:$0x2]
        %v426 = vld [vmem:[%s325 + $0x2] sm:$0x2]
        %v427 = vunpack.c.l.bf16 %v425
        %v428 = vunpack.c.l.bf16 %v426
        %v429 = vlaneseq
        %v430 = vshrl.u32 %v429, 7
        %v431 = vsub.s32 2, %v430
        %v432 = vrot.slane %v339, %v431
        %v433 = vmul.f32 %v427, %v432
        %v434 = vmul.f32 %v428, %v432
        %v437 = vrot.slane %v433, 6
        %v438 = vrot.slane %v437, 4
        %v439 = vrot.slane %v434, 6
        %v440 = vrot.slane %v439, 4
        %v443 = vadd.f32 %v423, %v438
        %v444 = vadd.f32 %v424, %v440
        %s445 = scalar_lea.vmem [#allocation2], 4
        %v446 = vld [vmem:[%s445] sm:$0x1]
        %v447 = vld [vmem:[%s445 + $0x2] sm:$0x1]
        %v448 = vunpack.c.l.bf16 %v446
        %v449 = vunpack.c.l.bf16 %v447
        %v450 = vlaneseq
        %v451 = vshrl.u32 %v450, 7
        %v452 = vsub.s32 0, %v451
        %v453 = vrot.slane %v340, %v452
        %v454 = vmul.f32 %v448, %v453
        %v455 = vmul.f32 %v449, %v453
        %v456 = vadd.f32 %v443, %v454
        %v457 = vadd.f32 %v444, %v455
        %v458 = vld [vmem:[%s445] sm:$0x3]
        %v459 = vld [vmem:[%s445 + $0x2] sm:$0x3]
        %v460 = vunpack.c.l.bf16 %v458
        %v461 = vunpack.c.l.bf16 %v459
        %v462 = vlaneseq
        %v463 = vshrl.u32 %v462, 7
        %v464 = vsub.s32 1, %v463
        %v465 = vrot.slane %v340, %v464
        %v466 = vmul.f32 %v460, %v465
        %v467 = vmul.f32 %v461, %v465
        %v470 = vrot.slane %v466, 5
        %v471 = vrot.slane %v470, 4
        %v472 = vrot.slane %v467, 5
        %v473 = vrot.slane %v472, 4
        %v476 = vadd.f32 %v456, %v471
        %v477 = vadd.f32 %v457, %v473
        %v478 = vld [vmem:[%s445] sm:$0x2]
        %v479 = vld [vmem:[%s445 + $0x2] sm:$0x2]
        %v480 = vunpack.c.l.bf16 %v478
        %v481 = vunpack.c.l.bf16 %v479
        %v482 = vlaneseq
        %v483 = vshrl.u32 %v482, 7
        %v484 = vsub.s32 2, %v483
        %v485 = vrot.slane %v340, %v484
        %v486 = vmul.f32 %v480, %v485
        %v487 = vmul.f32 %v481, %v485
        %v490 = vrot.slane %v486, 6
        %v491 = vrot.slane %v490, 4
        %v492 = vrot.slane %v487, 6
        %v493 = vrot.slane %v492, 4
        %v496 = vadd.f32 %v476, %v491
        %v497 = vadd.f32 %v477, %v493
        %v498 = vld [vmem:[#allocation8] sm:$0x1]
        %v499 = vld [vmem:[#allocation9] sm:$0x1]
        %v500 = vsel %vm257, %v496, 0.0
        %501 = vadd.xlane.f32.xlu0 %v500
        %v502 = vpop.xlane.xlu0 %501
        %v503 = vsel %vm257, %v497, 0.0
        %504 = vadd.xlane.f32.xlu0 %v503
        %v505 = vpop.xlane.xlu0 %504
        %v506 = vrcp.pop 48.0
        %v507 = vmul.f32 %v502, %v506
        %v508 = vmul.f32 %v505, %v506
        %v509 = vmul.f32 %v496, %v496
        %v510 = vmul.f32 %v497, %v497
        %v511 = vsel %vm257, %v509, 0.0
        %512 = vadd.xlane.f32.xlu0 %v511
        %v513 = vpop.xlane.xlu0 %512
        %v514 = vsel %vm257, %v510, 0.0
        %515 = vadd.xlane.f32.xlu0 %v514
        %v516 = vpop.xlane.xlu0 %515
        %v517 = vmul.f32 %v513, %v506
        %v518 = vmul.f32 %v516, %v506
        %v519 = vmul.f32 %v507, %v507
        %v520 = vmul.f32 %v508, %v508
        %v521 = vsub.f32 %v517, %v519
        %v522 = vsub.f32 %v518, %v520
        %v523 = vmax.f32 %v521, 0.0
        %v524 = vmax.f32 %v522, 0.0
        %v525 = vsub.f32 %v496, %v507
        %v526 = vsub.f32 %v497, %v508
        %v527 = vadd.f32 %v523, 1e-06
        %v528 = vadd.f32 %v524, 1e-06
        %v529 = vrsqrt.pop %v527
        %v530 = vrsqrt.pop %v528
        %v531 = vmul.f32 %v525, %v529
        %v532 = vmul.f32 %v526, %v530
        %v534 = vlaneseq
        %v535 = vshrl.u32 %v534, 7
        %v536 = vsub.s32 0, %v535
        %v537 = vrot.slane %v498, %v536
        %v539 = vmul.f32 %v531, %v537
        %v540 = vmul.f32 %v532, %v537
        %v542 = vlaneseq
        %v543 = vshrl.u32 %v542, 7
        %v544 = vsub.s32 0, %v543
        %v545 = vrot.slane %v499, %v544
        %v547 = vadd.f32 %v539, %v545
        %v548 = vadd.f32 %v540, %v545
        %v549 = vxor.u32 %v547, 2147483648
        %v550 = vxor.u32 %v548, 2147483648
        %v551 = vmul.f32 %v549, 1.442695
        %v552 = vpow.pop %v551
        %v553 = vmul.f32 %v550, 1.442695
        %v554 = vpow.pop %v553
        %v555 = vadd.f32 %v552, 1.0
        %v556 = vadd.f32 %v554, 1.0
        %v557 = vrcp.pop %v555
        %v558 = vmul.f32 1.0, %v557
        %v559 = vrcp.pop %v556
        %v560 = vmul.f32 1.0, %v559
        %v561 = vmul.f32 %v547, %v558
        %v562 = vmul.f32 %v548, %v560
        %v563 = vpack.c.bf16 %v561, %v561
        %v564 = vpack.c.bf16 %v562, %v562
        %vm565 = vcmask 385024
        %566 = vst.msk [vmem:[%s255] sm:$0x1] %vm565, %v563
        %567 = vst.msk [vmem:[%s255 + $0x1] sm:$0x1] %vm565, %v564
        %s568 = sand.u32 %s120, 1
        %s569 = scalar_lea.sflag [#allocation5], %s568
        %s570 = sand.u32 %s120, 1
        %s571 = smul.addr %s570, 2
        %s572 = scalar_lea.vmem [#allocation11], %s571
        // Predicated region
        $region53: #{_lambda_.30} parent=35 // pred_check
          %p573 = pneg %p130
        $region54: #{_lambda_.30} parent=35 // pred_check_branch
          %575 = sbr.rel (%p573) target = $region56
        $region55: #{_lambda_.30} parent=35 // pred_region
          %s577 = ssub.s32 32, 32
          %578 = vsyncadd %s569, %s577
          %s579 = smul.addr %s23, 2
          %s580 = smul.addr %s579, 16
          %s581 = scalar_lea.hbm %s4, %s580
          %s582 = sshll.u32 %s572, 4
          %s583 = int_to_ptr.vmem [resolvable:$true] %s582
          %588 = dma.vmem_to_hbm [thread:$0]  %s583, 32, %s581, %s569, 16, 16, 1
        $region56: #{_lambda_.30} parent=35 // pred_fallthru
          _
      $region36: #{_lambda_.30} parent=5 // pred_fallthru
        _
      %p589 = scmp.le.s32.totalorder 2, %s18
      // Predicated region
      $region57: #{_lambda_.30} parent=5 // pred_check
        %p590 = pneg %p589
      $region58: #{_lambda_.30} parent=5 // pred_check_branch
        %592 = sbr.rel (%p590) target = $region60
      $region59: #{_lambda_.30} parent=5 // pred_region
        %s593 = ssub.s32 %s18, 2
        // Predicated region
        $region61: #{_lambda_.30} parent=59 // pred_check
          %p594 = pneg %p136
        $region62: #{_lambda_.30} parent=59 // pred_check_branch
          %596 = sbr.rel (%p594) target = $region64
        $region63: #{_lambda_.30} parent=59 // pred_region
          %s597 = sand.u32 %s121, 1
          %s598 = scalar_lea.sflag [#allocation5], %s597
          %s599 = sand.u32 %s121, 1
          %s600 = smul.addr %s599, 2
          %s601 = scalar_lea.vmem [#allocation11], %s600
          %602 = dma.done %s598, 32
        $region64: #{_lambda_.30} parent=59 // pred_fallthru
          _
      $region60: #{_lambda_.30} parent=5 // pred_fallthru
        _
    $region6: #{_lambda_.30} parent=1 // loop_footer
      %s22 = sadd.s32 1, %s18
    $region7: #{_lambda_.30} parent=1 // loop_footer_branch
      %17 = sbr.rel target = $region3
    $region8: #{_lambda_.30} parent=1 // loop_exit
      _
    %603 = vsyncpa [#allocation4], 1
    %s604 = scalar_lea.sflag [#allocation4], 1
    %605 = vsyncpa %s604, 1
    %606 = vsyncpa [#allocation7], 1
    %607 = vsyncpa [#allocation10], 1
    %608 = vsyncpa [#allocation5], 1
    %s609 = scalar_lea.sflag [#allocation5], 1
    %610 = vsyncpa %s609, 1

// kernel: _lambda_.29
$region0: #{_lambda_.29}
  #allocation0 [shape = 'u32[]', space=smem, size = 0x4, offset = 0x4, fixed_abs, tag = 'smem constant byte address 0x4 - core index']
  #allocation1 [shape = 'u32[144,128]{1,0:T(1,128)}', space=vmem, size = 0x12000, scoped, tag = 'internal scratch']
  %s0 = inlined_call_operand.hbm [shape: bf16[8,48], index: 0, kind: input, shape index: {}]
  %s1 = inlined_call_operand.hbm [shape: bf16[48,48], index: 1, kind: input, shape index: {}]
  %s2 = inlined_call_operand.hbm [shape: f32[1,48], index: 2, kind: input, shape index: {}]
  %s3 = inlined_call_operand.hbm [shape: f32[1,48], index: 3, kind: input, shape index: {}]
  %s4 = inlined_call_operand.hbm [shape: bf16[8,48], index: 4, kind: output, shape index: {}]
  %s5 = sld [smem:[#allocation0]]
  $region42: #{_lambda_.29} parent=0
    _
  %s7 = ssub.s32 1, %s5
  %s8 = scalar_select 0, %s7, %s5
  $region1: #{_lambda_.29} parent=0
    #allocation2 [shape = 'u8[2048]{0}', space=vmem, size = 0x800, scoped, tag = 'input window, operand 0, single buffered']
    #allocation3 [shape = 's32[1]{0}', space=sflag, size = 0x4, scoped, tag = 'scoped memory for _lambda_.29']
    #allocation4 [shape = 's32[1]{0}', space=sflag, size = 0x4, scoped, tag = 'scoped memory for _lambda_.29']
    #allocation5 [shape = 'u8[12288]{0}', space=vmem, size = 0x3000, scoped, tag = 'input window, operand 1, single buffered']
    #allocation6 [shape = 's32[1]{0}', space=sflag, size = 0x4, scoped, tag = 'scoped memory for _lambda_.29']
    #allocation7 [shape = 'u8[512]{0}', space=vmem, size = 0x400, scoped, tag = 'input window, operand 2, single buffered']
    #allocation8 [shape = 'u8[512]{0}', space=vmem, size = 0x400, scoped, tag = 'input window, operand 3, single buffered']
    #allocation9 [shape = 's32[1]{0}', space=sflag, size = 0x4, scoped, tag = 'scoped memory for _lambda_.29']
    #allocation10 [shape = 'u8[2048]{0}', space=vmem, size = 0x800, scoped, tag = 'output window, operand 0, single buffered']
    %9 = vsyncpa [#allocation3], 0
    %10 = vsyncpa [#allocation6], 0
    %11 = vsyncpa [#allocation9], 0
    %12 = vsyncpa [#allocation4], 0
    // Predicated region
    $region2: #{_lambda_.29} parent=1 // pred_check
      _
    $region3: #{_lambda_.29} parent=1 // pred_check_branch
      %14 = sbr.rel (0) target = $region5
    $region4: #{_lambda_.29} parent=1 // pred_region
      %s16 = ssub.s32 64, 64
      %17 = vsyncadd [#allocation3], %s16
      %s19 = sshll.u32 [#allocation2], 4
      %s20 = int_to_ptr.vmem [resolvable:$true] %s19
      %22 = dma.hbm_to_vmem [thread:$0]  %s0, 64, %s20, [#allocation3]
    $region5: #{_lambda_.29} parent=1 // pred_fallthru
      _
    // Predicated region
    $region6: #{_lambda_.29} parent=1 // pred_check
      _
    $region7: #{_lambda_.29} parent=1 // pred_check_branch
      %24 = sbr.rel (0) target = $region9
    $region8: #{_lambda_.29} parent=1 // pred_region
      %s26 = ssub.s32 384, 384
      %27 = vsyncadd [#allocation6], %s26
      %s28 = sshll.u32 [#allocation5], 4
      %s29 = int_to_ptr.vmem [resolvable:$true] %s28
      %34 = dma.hbm_to_vmem [thread:$0]  %s1, 384, %s29, [#allocation6], 64, 64, 4
    $region9: #{_lambda_.29} parent=1 // pred_fallthru
      _
    // Predicated region
    $region10: #{_lambda_.29} parent=1 // pred_check
      _
    $region11: #{_lambda_.29} parent=1 // pred_check_branch
      %36 = sbr.rel (0) target = $region13
    $region12: #{_lambda_.29} parent=1 // pred_region
      %s38 = ssub.s32 16, 16
      %39 = vsyncadd [#allocation6], %s38
      %s41 = sshll.u32 [#allocation7], 4
      %s42 = int_to_ptr.vmem [resolvable:$true] %s41
      %44 = dma.hbm_to_vmem [thread:$0]  %s2, 16, %s42, [#allocation6]
    $region13: #{_lambda_.29} parent=1 // pred_fallthru
      _
    // Predicated region
    $region14: #{_lambda_.29} parent=1 // pred_check
      _
    $region15: #{_lambda_.29} parent=1 // pred_check_branch
      %46 = sbr.rel (0) target = $region17
    $region16: #{_lambda_.29} parent=1 // pred_region
      %s48 = ssub.s32 16, 16
      %49 = vsyncadd [#allocation9], %s48
      %s51 = sshll.u32 [#allocation8], 4
      %s52 = int_to_ptr.vmem [resolvable:$true] %s51
      %54 = dma.hbm_to_vmem [thread:$0]  %s3, 16, %s52, [#allocation9]
    $region17: #{_lambda_.29} parent=1 // pred_fallthru
      _
    // Predicated region
    $region18: #{_lambda_.29} parent=1 // pred_check
      _
    $region19: #{_lambda_.29} parent=1 // pred_check_branch
      %56 = sbr.rel (0) target = $region21
    $region20: #{_lambda_.29} parent=1 // pred_region
      %57 = dma.done [#allocation3], 64
    $region21: #{_lambda_.29} parent=1 // pred_fallthru
      _
    // Predicated region
    $region22: #{_lambda_.29} parent=1 // pred_check
      _
    $region23: #{_lambda_.29} parent=1 // pred_check_branch
      %59 = sbr.rel (0) target = $region25
    $region24: #{_lambda_.29} parent=1 // pred_region
      %60 = dma.done [#allocation6], 384
    $region25: #{_lambda_.29} parent=1 // pred_fallthru
      _
    // Predicated region
    $region26: #{_lambda_.29} parent=1 // pred_check
      _
    $region27: #{_lambda_.29} parent=1 // pred_check_branch
      %62 = sbr.rel (0) target = $region29
    $region28: #{_lambda_.29} parent=1 // pred_region
      %63 = dma.done [#allocation6], 16
    $region29: #{_lambda_.29} parent=1 // pred_fallthru
      _
    // Predicated region
    $region30: #{_lambda_.29} parent=1 // pred_check
      _
    $region31: #{_lambda_.29} parent=1 // pred_check_branch
      %65 = sbr.rel (0) target = $region33
    $region32: #{_lambda_.29} parent=1 // pred_region
      %66 = dma.done [#allocation9], 16
    $region33: #{_lambda_.29} parent=1 // pred_fallthru
      _
    %v68 = vld [vmem:[#allocation2] sm:$0xf]
    %v69 = vld [vmem:[#allocation5] sm:$0xf]
    %v70 = vld [vmem:[#allocation5 + $0x4] sm:$0xf]
    %v71 = vld [vmem:[#allocation5 + $0x8] sm:$0xf]
    %v72 = vld [vmem:[#allocation5 + $0xc] sm:$0xf]
    %v73 = vld [vmem:[#allocation5 + $0x10] sm:$0xf]
    %v74 = vld [vmem:[#allocation5 + $0x14] sm:$0xf]
    %v81 = vunpack.c.l.b16 %v69
    %v82 = vunpack.c.l.b16 %v70
    %v83 = vunpack.c.l.b16 %v71
    %v84 = vunpack.c.l.b16 %v72
    %v85 = vunpack.c.l.b16 %v73
    %v86 = vunpack.c.l.b16 %v74
    %v87 = vpack.c.b16 %v82, %v81
    %v88 = vpack.c.b16 %v84, %v83
    %v89 = vpack.c.b16 %v86, %v85
    %vm93 = vcmask 392192
    %v95 = vsel %vm93, %v68, 0
    %97 = vmatprep.subr.bf16.mxu0 0
    %98 = vmatpush1.bf16.msra.mxu0 %v87
    %99 = vmatprep.subr.bf16.mxu0 0
    %100 = vmatpush1.bf16.msra.mxu0 %v88
    %101 = vmatprep.subr.bf16.mxu0 0
    %102 = vmatpush1.bf16.msra.mxu0 %v89
    %103 = vmatprep.subr.bf16.mxu0 0
    %104 = vmatpush1.bf16.msra.mxu0 0
    %105 = vmatprep.subr.bf16.mxu0 0
    %106 = vmatpush1.bf16.msra.mxu0 0
    %107 = vmatprep.subr.bf16.mxu0 0
    %108 = vmatpush1.bf16.msra.mxu0 0
    %109 = vmatprep.subr.bf16.mxu0 0
    %110 = vmatpush1.bf16.msra.mxu0 0
    %111 = vmatprep.subr.bf16.mxu0 0
    %112 = vmatpush1.bf16.msra.mxu0 0
    %113 = vmatprep.subr.bf16.mxu0 0
    %114 = vmatpush1.bf16.msra.mxu0 0
    %115 = vmatprep.subr.bf16.mxu0 0
    %116 = vmatpush1.bf16.msra.mxu0 0
    %117 = vmatprep.subr.bf16.mxu0 0
    %118 = vmatpush1.bf16.msra.mxu0 0
    %119 = vmatprep.subr.bf16.mxu0 0
    %120 = vmatpush1.bf16.msra.mxu0 0
    %121 = vmatprep.subr.bf16.mxu0 0
    %122 = vmatpush1.bf16.msra.mxu0 0
    %123 = vmatprep.subr.bf16.mxu0 0
    %124 = vmatpush1.bf16.msra.mxu0 0
    %125 = vmatprep.subr.bf16.mxu0 0
    %126 = vmatpush1.bf16.msra.mxu0 0
    %127 = vmatprep.subr.bf16.mxu0 0
    %128 = vmatpush1.bf16.msra.mxu0 0
    %129 = vmatprep.mubr.bf16.mxu0 0
    %130 = vmatmul.mubr.bf16.gmra.mrb[0].mxu0 %v95
    %v131 = vpop.f32.mrb[0].mxu0
    %v132 = vadd.f32 0.0, %v131
    %v133 = vpop.f32.mrb[0].mxu0
    %v134 = vpop.f32.mrb[0].mxu0
    %v135 = vpop.f32.mrb[0].mxu0
    %136 = vdwg.mxu0
    %v137 = vld [vmem:[#allocation7] sm:$0x1]
    %v138 = vld [vmem:[#allocation8] sm:$0x1]
    %v139 = vsel %vm93, %v132, 0.0
    %140 = vadd.xlane.f32.xlu0 %v139
    %v141 = vpop.xlane.xlu0 %140
    %v142 = vrcp.pop 48.0
    %v143 = vmul.f32 %v141, %v142
    %v144 = vmul.f32 %v132, %v132
    %v145 = vsel %vm93, %v144, 0.0
    %146 = vadd.xlane.f32.xlu0 %v145
    %v147 = vpop.xlane.xlu0 %146
    %v148 = vmul.f32 %v147, %v142
    %v149 = vmul.f32 %v143, %v143
    %v150 = vsub.f32 %v148, %v149
    %v151 = vmax.f32 %v150, 0.0
    %v152 = vsub.f32 %v132, %v143
    %v153 = vadd.f32 %v151, 1e-06
    %v154 = vrsqrt.pop %v153
    %v155 = vmul.f32 %v152, %v154
    %v157 = vlaneseq
    %v158 = vshrl.u32 %v157, 7
    %v159 = vsub.s32 0, %v158
    %v160 = vrot.slane %v137, %v159
    %v162 = vmul.f32 %v155, %v160
    %v164 = vlaneseq
    %v165 = vshrl.u32 %v164, 7
    %v166 = vsub.s32 0, %v165
    %v167 = vrot.slane %v138, %v166
    %v169 = vadd.f32 %v162, %v167
    %v170 = vxor.u32 %v169, 2147483648
    %v171 = vmul.f32 %v170, 1.442695
    %v172 = vpow.pop %v171
    %v173 = vadd.f32 %v172, 1.0
    %v174 = vrcp.pop %v173
    %v175 = vmul.f32 1.0, %v174
    %v176 = vmul.f32 %v169, %v175
    %v177 = vpack.c.bf16 %v176, %v176
    %vm178 = vcmask 388096
    %179 = vst.msk [vmem:[#allocation10] sm:$0xf] %vm178, %v177
    // Predicated region
    $region34: #{_lambda_.29} parent=1 // pred_check
      _
    $region35: #{_lambda_.29} parent=1 // pred_check_branch
      %181 = sbr.rel (0) target = $region37
    $region36: #{_lambda_.29} parent=1 // pred_region
      %s183 = ssub.s32 64, 64
      %184 = vsyncadd [#allocation4], %s183
      %s186 = sshll.u32 [#allocation10], 4
      %s187 = int_to_ptr.vmem [resolvable:$true] %s186
      %189 = dma.vmem_to_hbm [thread:$0]  %s187, 64, %s4, [#allocation4]
    $region37: #{_lambda_.29} parent=1 // pred_fallthru
      _
    // Predicated region
    $region38: #{_lambda_.29} parent=1 // pred_check
      _
    $region39: #{_lambda_.29} parent=1 // pred_check_branch
      %191 = sbr.rel (0) target = $region41
    $region40: #{_lambda_.29} parent=1 // pred_region
      %192 = dma.done [#allocation4], 64
    $region41: #{_lambda_.29} parent=1 // pred_fallthru
      _
    %193 = vsyncpa [#allocation3], 1
    %194 = vsyncpa [#allocation6], 1
    %195 = vsyncpa [#allocation9], 1
    %196 = vsyncpa [#allocation4], 1

// kernel: _lambda_.31
$region0: #{_lambda_.31}
  #allocation0 [shape = 'u32[]', space=smem, size = 0x4, offset = 0x4, fixed_abs, tag = 'smem constant byte address 0x4 - core index']
  #allocation1 [shape = 'u32[144,128]{1,0:T(1,128)}', space=vmem, size = 0x12000, scoped, tag = 'internal scratch']
  %s0 = inlined_call_operand.hbm [shape: bf16[2,4,48], index: 0, kind: input, shape index: {}]
  %s1 = inlined_call_operand.hbm [shape: bf16[2,1,48], index: 1, kind: input, shape index: {}]
  %s2 = inlined_call_operand.hbm [shape: bf16[2,4,48], index: 2, kind: input, shape index: {}]
  %s3 = inlined_call_operand.hbm [shape: bf16[48,48], index: 3, kind: input, shape index: {}]
  %s4 = inlined_call_operand.hbm [shape: f32[1,48], index: 4, kind: input, shape index: {}]
  %s5 = inlined_call_operand.hbm [shape: f32[1,48], index: 5, kind: input, shape index: {}]
  %s6 = inlined_call_operand.hbm [shape: bf16[2,4,48], index: 6, kind: output, shape index: {}]
  %s7 = sld [smem:[#allocation0]]
  $region81: #{_lambda_.31} parent=0
    _
  %s9 = ssub.s32 1, %s7
  %s10 = scalar_select 0, %s9, %s7
  $region1: #{_lambda_.31} parent=0
    #allocation2 [shape = 'u8[2048]{0}', space=vmem, size = 0x800, scoped, tag = 'input window, operand 0']
    #allocation3 [shape = 's32[2]{0}', space=sflag, size = 0x8, scoped, tag = 'scoped memory for _lambda_.31']
    #allocation4 [shape = 's32[2]{0}', space=sflag, size = 0x8, scoped, tag = 'scoped memory for _lambda_.31']
    #allocation5 [shape = 'u8[1024]{0}', space=vmem, size = 0x400, scoped, tag = 'input window, operand 1']
    #allocation6 [shape = 's32[2]{0}', space=sflag, size = 0x8, scoped, tag = 'scoped memory for _lambda_.31']
    #allocation7 [shape = 'u8[2048]{0}', space=vmem, size = 0x800, scoped, tag = 'input window, operand 2']
    #allocation8 [shape = 'u8[12288]{0}', space=vmem, size = 0x3000, scoped, tag = 'input window, operand 3, single buffered']
    #allocation9 [shape = 's32[1]{0}', space=sflag, size = 0x4, scoped, tag = 'scoped memory for _lambda_.31']
    #allocation10 [shape = 'u8[512]{0}', space=vmem, size = 0x400, scoped, tag = 'input window, operand 4, single buffered']
    #allocation11 [shape = 'u8[512]{0}', space=vmem, size = 0x400, scoped, tag = 'input window, operand 5, single buffered']
    #allocation12 [shape = 's32[1]{0}', space=sflag, size = 0x4, scoped, tag = 'scoped memory for _lambda_.31']
    #allocation13 [shape = 'u8[2048]{0}', space=vmem, size = 0x800, scoped, tag = 'output window, operand 0']
    %11 = vsyncpa [#allocation3], 0
    %s12 = scalar_lea.sflag [#allocation3], 1
    %13 = vsyncpa %s12, 0
    %14 = vsyncpa [#allocation6], 0
    %s15 = scalar_lea.sflag [#allocation6], 1
    %16 = vsyncpa %s15, 0
    %17 = vsyncpa [#allocation9], 0
    %18 = vsyncpa [#allocation12], 0
    %19 = vsyncpa [#allocation4], 0
    %s20 = scalar_lea.sflag [#allocation4], 1
    %21 = vsyncpa %s20, 0
    loop: start=0, step=1, limit=4
    $region2: #{_lambda_.31} parent=1 // loop_pre_header
      _
    $region3: #{_lambda_.31} parent=1 // loop_header
      %s23 = sphi 0, %s27
      %p24 = scmp.ge.s32.totalorder %s23, 4
      %s33 = sphi 0, %s35
      %s36 = sphi 0, %s33
      %s37 = sphi 0, %s36
      %s53 = sphi 0, %s37
      %s59 = sphi 0, %s61
      %s62 = sphi 0, %s59
      %s63 = sphi 0, %s62
      %s79 = sphi 0, %s63
      %s85 = sphi 0, %s87
      %s88 = sphi 0, %s85
      %s89 = sphi 0, %s88
      %s105 = sphi 0, %s89
      %s109 = sphi 0, %s109
      %s111 = sphi 0, %s109
      %s112 = sphi 0, %s111
      %s126 = sphi 0, %s112
      %s130 = sphi 0, %s130
      %s132 = sphi 0, %s130
      %s133 = sphi 0, %s132
      %s147 = sphi 0, %s133
      %s151 = sphi 0, %s151
      %s153 = sphi 0, %s151
      %s154 = sphi 0, %s153
      %s168 = sphi 0, %s154
      %s174 = sphi 0, %s176
      %s177 = sphi 0, %s174
      %s178 = sphi 0, %s177
      %s194 = sphi 0, %s178
    $region4: #{_lambda_.31} parent=1 // loop_header_branch
      %26 = sbr.rel (%p24) target = $region8
    $region5: #{_lambda_.31} parent=1 // loop_body
      %s28 = ssub.s32 %s23, 1
      %s29 = ssub.s32 %s23, 2
      %s30 = sadd.s32 %s23, 1
      %s31 = ssub.s32 %s23, %s30
      %p32 = scmp.eq.s32.totalorder %s31, 0
      %s34 = sadd.s32 %s33, 1
      %s35 = scalar_select %p32, %s33, %s34
      %p38 = pneg %p32
      %p39 = scmp.eq.s32.totalorder %s23, 1
      %p40 = por %p38, %p39
      %p41 = scmp.ne.s32.totalorder %s33, %s36
      %p42 = scmp.eq.s32.totalorder %s23, 0
      %p43 = por %p41, %p42
      %p44 = scmp.ne.s32.totalorder %s33, %s36
      %p45 = scmp.eq.s32.totalorder %s28, 1
      %p46 = por %p44, %p45
      %p47 = scmp.ne.s32.totalorder %s36, %s37
      %p48 = scmp.eq.s32.totalorder %s28, 0
      %p49 = por %p47, %p48
      %p50 = scmp.ne.s32.totalorder %s36, %s37
      %p51 = scmp.eq.s32.totalorder %s29, 1
      %p52 = por %p50, %p51
      %p54 = scmp.ne.s32.totalorder %s37, %s53
      %p55 = scmp.eq.s32.totalorder %s29, 0
      %p56 = por %p54, %p55
      %s57 = ssub.s32 %s23, %s30
      %p58 = scmp.eq.s32.totalorder %s57, 0
      %s60 = sadd.s32 %s59, 1
      %s61 = scalar_select %p58, %s59, %s60
      %p64 = pneg %p58
      %p65 = scmp.eq.s32.totalorder %s23, 1
      %p66 = por %p64, %p65
      %p67 = scmp.ne.s32.totalorder %s59, %s62
      %p68 = scmp.eq.s32.totalorder %s23, 0
      %p69 = por %p67, %p68
      %p70 = scmp.ne.s32.totalorder %s59, %s62
      %p71 = scmp.eq.s32.totalorder %s28, 1
      %p72 = por %p70, %p71
      %p73 = scmp.ne.s32.totalorder %s62, %s63
      %p74 = scmp.eq.s32.totalorder %s28, 0
      %p75 = por %p73, %p74
      %p76 = scmp.ne.s32.totalorder %s62, %s63
      %p77 = scmp.eq.s32.totalorder %s29, 1
      %p78 = por %p76, %p77
      %p80 = scmp.ne.s32.totalorder %s63, %s79
      %p81 = scmp.eq.s32.totalorder %s29, 0
      %p82 = por %p80, %p81
      %s83 = ssub.s32 %s23, %s30
      %p84 = scmp.eq.s32.totalorder %s83, 0
      %s86 = sadd.s32 %s85, 1
      %s87 = scalar_select %p84, %s85, %s86
      %p90 = pneg %p84
      %p91 = scmp.eq.s32.totalorder %s23, 1
      %p92 = por %p90, %p91
      %p93 = scmp.ne.s32.totalorder %s85, %s88
      %p94 = scmp.eq.s32.totalorder %s23, 0
      %p95 = por %p93, %p94
      %p96 = scmp.ne.s32.totalorder %s85, %s88
      %p97 = scmp.eq.s32.totalorder %s28, 1
      %p98 = por %p96, %p97
      %p99 = scmp.ne.s32.totalorder %s88, %s89
      %p100 = scmp.eq.s32.totalorder %s28, 0
      %p101 = por %p99, %p100
      %p102 = scmp.ne.s32.totalorder %s88, %s89
      %p103 = scmp.eq.s32.totalorder %s29, 1
      %p104 = por %p102, %p103
      %p106 = scmp.ne.s32.totalorder %s89, %s105
      %p107 = scmp.eq.s32.totalorder %s29, 0
      %p108 = por %p106, %p107
      %s110 = sadd.s32 %s109, 1
      %p113 = scmp.eq.s32.totalorder %s23, 1
      %p114 = scmp.ne.s32.totalorder %s109, %s111
      %p115 = scmp.eq.s32.totalorder %s23, 0
      %p116 = por %p114, %p115
      %p117 = scmp.ne.s32.totalorder %s109, %s111
      %p118 = scmp.eq.s32.totalorder %s28, 1
      %p119 = por %p117, %p118
      %p120 = scmp.ne.s32.totalorder %s111, %s112
      %p121 = scmp.eq.s32.totalorder %s28, 0
      %p122 = por %p120, %p121
      %p123 = scmp.ne.s32.totalorder %s111, %s112
      %p124 = scmp.eq.s32.totalorder %s29, 1
      %p125 = por %p123, %p124
      %p127 = scmp.ne.s32.totalorder %s112, %s126
      %p128 = scmp.eq.s32.totalorder %s29, 0
      %p129 = por %p127, %p128
      %s131 = sadd.s32 %s130, 1
      %p134 = scmp.eq.s32.totalorder %s23, 1
      %p135 = scmp.ne.s32.totalorder %s130, %s132
      %p136 = scmp.eq.s32.totalorder %s23, 0
      %p137 = por %p135, %p136
      %p138 = scmp.ne.s32.totalorder %s130, %s132
      %p139 = scmp.eq.s32.totalorder %s28, 1
      %p140 = por %p138, %p139
      %p141 = scmp.ne.s32.totalorder %s132, %s133
      %p142 = scmp.eq.s32.totalorder %s28, 0
      %p143 = por %p141, %p142
      %p144 = scmp.ne.s32.totalorder %s132, %s133
      %p145 = scmp.eq.s32.totalorder %s29, 1
      %p146 = por %p144, %p145
      %p148 = scmp.ne.s32.totalorder %s133, %s147
      %p149 = scmp.eq.s32.totalorder %s29, 0
      %p150 = por %p148, %p149
      %s152 = sadd.s32 %s151, 1
      %p155 = scmp.eq.s32.totalorder %s23, 1
      %p156 = scmp.ne.s32.totalorder %s151, %s153
      %p157 = scmp.eq.s32.totalorder %s23, 0
      %p158 = por %p156, %p157
      %p159 = scmp.ne.s32.totalorder %s151, %s153
      %p160 = scmp.eq.s32.totalorder %s28, 1
      %p161 = por %p159, %p160
      %p162 = scmp.ne.s32.totalorder %s153, %s154
      %p163 = scmp.eq.s32.totalorder %s28, 0
      %p164 = por %p162, %p163
      %p165 = scmp.ne.s32.totalorder %s153, %s154
      %p166 = scmp.eq.s32.totalorder %s29, 1
      %p167 = por %p165, %p166
      %p169 = scmp.ne.s32.totalorder %s154, %s168
      %p170 = scmp.eq.s32.totalorder %s29, 0
      %p171 = por %p169, %p170
      %s172 = ssub.s32 %s23, %s30
      %p173 = scmp.eq.s32.totalorder %s172, 0
      %s175 = sadd.s32 %s174, 1
      %s176 = scalar_select %p173, %s174, %s175
      %p179 = pneg %p173
      %p180 = scmp.eq.s32.totalorder %s23, 1
      %p181 = por %p179, %p180
      %p182 = scmp.ne.s32.totalorder %s174, %s177
      %p183 = scmp.eq.s32.totalorder %s23, 0
      %p184 = por %p182, %p183
      %p185 = scmp.ne.s32.totalorder %s174, %s177
      %p186 = scmp.eq.s32.totalorder %s28, 1
      %p187 = por %p185, %p186
      %p188 = scmp.ne.s32.totalorder %s177, %s178
      %p189 = scmp.eq.s32.totalorder %s28, 0
      %p190 = por %p188, %p189
      %p191 = scmp.ne.s32.totalorder %s177, %s178
      %p192 = scmp.eq.s32.totalorder %s29, 1
      %p193 = por %p191, %p192
      %p195 = scmp.ne.s32.totalorder %s178, %s194
      %p196 = scmp.eq.s32.totalorder %s29, 0
      %p197 = por %p195, %p196
      %p198 = scmp.le.s32.totalorder 1, %s23
      %p199 = scmp.lt.s32.totalorder %s23, 3
      %p200 = pnand %p198, %p199
      %p201 = pneg %p200
      // Predicated region
      $region9: #{_lambda_.31} parent=5 // pred_check
        _
      $region10: #{_lambda_.31} parent=5 // pred_check_branch
        %203 = sbr.rel (%p200) target = $region12
      $region11: #{_lambda_.31} parent=5 // pred_region
        %s204 = ssub.s32 %s23, 1
        // Predicated region
        $region13: #{_lambda_.31} parent=11 // pred_check
          %p205 = pneg %p122
        $region14: #{_lambda_.31} parent=11 // pred_check_branch
          %207 = sbr.rel (%p205) target = $region16
        $region15: #{_lambda_.31} parent=11 // pred_region
          %s209 = ssub.s32 384, 384
          %210 = vsyncadd [#allocation9], %s209
          %s211 = sshll.u32 [#allocation8], 4
          %s212 = int_to_ptr.vmem [resolvable:$true] %s211
          %217 = dma.hbm_to_vmem [thread:$0]  %s3, 384, %s212, [#allocation9], 64, 64, 4
        $region16: #{_lambda_.31} parent=11 // pred_fallthru
          _
        // Predicated region
        $region17: #{_lambda_.31} parent=11 // pred_check
          %p218 = pneg %p143
        $region18: #{_lambda_.31} parent=11 // pred_check_branch
          %220 = sbr.rel (%p218) target = $region20
        $region19: #{_lambda_.31} parent=11 // pred_region
          %s222 = ssub.s32 16, 16
          %223 = vsyncadd [#allocation9], %s222
          %s225 = sshll.u32 [#allocation10], 4
          %s226 = int_to_ptr.vmem [resolvable:$true] %s225
          %228 = dma.hbm_to_vmem [thread:$0]  %s4, 16, %s226, [#allocation9]
        $region20: #{_lambda_.31} parent=11 // pred_fallthru
          _
        // Predicated region
        $region21: #{_lambda_.31} parent=11 // pred_check
          %p229 = pneg %p164
        $region22: #{_lambda_.31} parent=11 // pred_check_branch
          %231 = sbr.rel (%p229) target = $region24
        $region23: #{_lambda_.31} parent=11 // pred_region
          %s233 = ssub.s32 16, 16
          %234 = vsyncadd [#allocation12], %s233
          %s236 = sshll.u32 [#allocation11], 4
          %s237 = int_to_ptr.vmem [resolvable:$true] %s236
          %239 = dma.hbm_to_vmem [thread:$0]  %s5, 16, %s237, [#allocation12]
        $region24: #{_lambda_.31} parent=11 // pred_fallthru
          _
      $region12: #{_lambda_.31} parent=5 // pred_fallthru
        _
      %p240 = scmp.lt.s32.totalorder %s23, 2
      // Predicated region
      $region25: #{_lambda_.31} parent=5 // pred_check
        %p241 = pneg %p240
      $region26: #{_lambda_.31} parent=5 // pred_check_branch
        %243 = sbr.rel (%p241) target = $region28
      $region27: #{_lambda_.31} parent=5 // pred_region
        // Predicated region
        $region29: #{_lambda_.31} parent=27 // pred_check
          %p244 = pneg %p43
        $region30: #{_lambda_.31} parent=27 // pred_check_branch
          %246 = sbr.rel (%p244) target = $region32
        $region31: #{_lambda_.31} parent=27 // pred_region
          %s247 = sand.u32 %s33, 1
          %s248 = scalar_lea.sflag [#allocation3], %s247
          %s249 = sand.u32 %s33, 1
          %s250 = smul.addr %s249, 2
          %s251 = scalar_lea.vmem [#allocation2], %s250
          %s253 = ssub.s32 32, 32
          %254 = vsyncadd %s248, %s253
          %s255 = smul.addr %s23, 32
          %s256 = scalar_lea.hbm %s0, %s255
          %s258 = sshll.u32 %s251, 4
          %s259 = int_to_ptr.vmem [resolvable:$true] %s258
          %261 = dma.hbm_to_vmem [thread:$0]  %s256, 32, %s259, %s248
        $region32: #{_lambda_.31} parent=27 // pred_fallthru
          _
        // Predicated region
        $region33: #{_lambda_.31} parent=27 // pred_check
          %p262 = pneg %p69
        $region34: #{_lambda_.31} parent=27 // pred_check_branch
          %264 = sbr.rel (%p262) target = $region36
        $region35: #{_lambda_.31} parent=27 // pred_region
          %s265 = sand.u32 %s23, 1
          %s266 = scalar_lea.sflag [#allocation6], %s265
          %s267 = sand.u32 %s59, 1
          %s268 = scalar_lea.vmem [#allocation5], %s267
          %s270 = ssub.s32 16, 16
          %271 = vsyncadd %s266, %s270
          %s272 = smul.addr %s23, 16
          %s273 = scalar_lea.hbm %s1, %s272
          %s275 = sshll.u32 %s268, 4
          %s276 = int_to_ptr.vmem [resolvable:$true] %s275
          %278 = dma.hbm_to_vmem [thread:$0]  %s273, 16, %s276, %s266
        $region36: #{_lambda_.31} parent=27 // pred_fallthru
          _
        // Predicated region
        $region37: #{_lambda_.31} parent=27 // pred_check
          %p279 = pneg %p95
        $region38: #{_lambda_.31} parent=27 // pred_check_branch
          %281 = sbr.rel (%p279) target = $region40
        $region39: #{_lambda_.31} parent=27 // pred_region
          %s282 = sand.u32 %s23, 1
          %s283 = scalar_lea.sflag [#allocation6], %s282
          %s284 = sand.u32 %s85, 1
          %s285 = smul.addr %s284, 2
          %s286 = scalar_lea.vmem [#allocation7], %s285
          %s288 = ssub.s32 32, 32
          %289 = vsyncadd %s283, %s288
          %s290 = smul.addr %s23, 32
          %s291 = scalar_lea.hbm %s2, %s290
          %s293 = sshll.u32 %s286, 4
          %s294 = int_to_ptr.vmem [resolvable:$true] %s293
          %296 = dma.hbm_to_vmem [thread:$0]  %s291, 32, %s294, %s283
        $region40: #{_lambda_.31} parent=27 // pred_fallthru
          _
      $region28: #{_lambda_.31} parent=5 // pred_fallthru
        _
      %p297 = scmp.le.s32.totalorder 1, %s23
      %p298 = scmp.lt.s32.totalorder %s23, 3
      %p299 = pnand %p297, %p298
      %p300 = pneg %p299
      // Predicated region
      $region41: #{_lambda_.31} parent=5 // pred_check
        _
      $region42: #{_lambda_.31} parent=5 // pred_check_branch
        %302 = sbr.rel (%p299) target = $region44
      $region43: #{_lambda_.31} parent=5 // pred_region
        %s303 = ssub.s32 %s23, 1
        %s304 = sand.u32 %s36, 1
        %s305 = scalar_lea.sflag [#allocation3], %s304
        %s306 = sand.u32 %s36, 1
        %s307 = smul.addr %s306, 2
        %s308 = scalar_lea.vmem [#allocation2], %s307
        // Predicated region
        $region45: #{_lambda_.31} parent=43 // pred_check
          %p309 = pneg %p49
        $region46: #{_lambda_.31} parent=43 // pred_check_branch
          %311 = sbr.rel (%p309) target = $region48
        $region47: #{_lambda_.31} parent=43 // pred_region
          %312 = dma.done %s305, 32
        $region48: #{_lambda_.31} parent=43 // pred_fallthru
          _
        %s313 = sand.u32 %s28, 1
        %s314 = scalar_lea.sflag [#allocation6], %s313
        %s315 = sand.u32 %s62, 1
        %s316 = scalar_lea.vmem [#allocation5], %s315
        // Predicated region
        $region49: #{_lambda_.31} parent=43 // pred_check
          %p317 = pneg %p75
        $region50: #{_lambda_.31} parent=43 // pred_check_branch
          %319 = sbr.rel (%p317) target = $region52
        $region51: #{_lambda_.31} parent=43 // pred_region
          %320 = dma.done %s314, 16
        $region52: #{_lambda_.31} parent=43 // pred_fallthru
          _
        %s321 = sand.u32 %s28, 1
        %s322 = scalar_lea.sflag [#allocation6], %s321
        %s323 = sand.u32 %s88, 1
        %s324 = smul.addr %s323, 2
        %s325 = scalar_lea.vmem [#allocation7], %s324
        // Predicated region
        $region53: #{_lambda_.31} parent=43 // pred_check
          %p326 = pneg %p101
        $region54: #{_lambda_.31} parent=43 // pred_check_branch
          %328 = sbr.rel (%p326) target = $region56
        $region55: #{_lambda_.31} parent=43 // pred_region
          %329 = dma.done %s322, 32
        $region56: #{_lambda_.31} parent=43 // pred_fallthru
          _
        // Predicated region
        $region57: #{_lambda_.31} parent=43 // pred_check
          %p330 = pneg %p122
        $region58: #{_lambda_.31} parent=43 // pred_check_branch
          %332 = sbr.rel (%p330) target = $region60
        $region59: #{_lambda_.31} parent=43 // pred_region
          %333 = dma.done [#allocation9], 384
        $region60: #{_lambda_.31} parent=43 // pred_fallthru
          _
        // Predicated region
        $region61: #{_lambda_.31} parent=43 // pred_check
          %p334 = pneg %p143
        $region62: #{_lambda_.31} parent=43 // pred_check_branch
          %336 = sbr.rel (%p334) target = $region64
        $region63: #{_lambda_.31} parent=43 // pred_region
          %337 = dma.done [#allocation9], 16
        $region64: #{_lambda_.31} parent=43 // pred_fallthru
          _
        // Predicated region
        $region65: #{_lambda_.31} parent=43 // pred_check
          %p338 = pneg %p164
        $region66: #{_lambda_.31} parent=43 // pred_check_branch
          %340 = sbr.rel (%p338) target = $region68
        $region67: #{_lambda_.31} parent=43 // pred_region
          %341 = dma.done [#allocation12], 16
        $region68: #{_lambda_.31} parent=43 // pred_fallthru
          _
        %s342 = sand.u32 %s36, 1
        %s343 = scalar_lea.sflag [#allocation3], %s342
        %s344 = sand.u32 %s36, 1
        %s345 = smul.addr %s344, 2
        %s346 = scalar_lea.vmem [#allocation2], %s345
        %p347 = pneg %p49
        %p348 = pneg %p46
        %s349 = sand.u32 %s28, 1
        %s350 = scalar_lea.sflag [#allocation6], %s349
        %s351 = sand.u32 %s62, 1
        %s352 = scalar_lea.vmem [#allocation5], %s351
        %p353 = pneg %p75
        %p354 = pneg %p72
        %s355 = sand.u32 %s28, 1
        %s356 = scalar_lea.sflag [#allocation6], %s355
        %s357 = sand.u32 %s88, 1
        %s358 = smul.addr %s357, 2
        %s359 = scalar_lea.vmem [#allocation7], %s358
        %p360 = pneg %p101
        %p361 = pneg %p98
        %p362 = pneg %p122
        %p363 = pneg %p119
        %p364 = pneg %p143
        %p365 = pneg %p140
        %p366 = pneg %p164
        %p367 = pneg %p161
        %p368 = pneg %p190
        %p369 = pneg %p187
        %s370 = sand.u32 %s177, 1
        %s371 = scalar_lea.sflag [#allocation4], %s370
        %s372 = sand.u32 %s177, 1
        %s373 = smul.addr %s372, 2
        %s374 = scalar_lea.vmem [#allocation13], %s373
        %v376 = vld [vmem:[%s308] sm:$0x3]
        %v377 = vld [vmem:[%s316] sm:$0x1]
        %v379 = vpack.i.b16 %v377, %v377
        %v381 = vlaneseq
        %v382 = vshrl.u32 %v381, 7
        %v383 = vsub.s32 0, %v382
        %v384 = vrot.slane %v379, %v383
        %v385 = vmul.bf16 %v376, %v384
        %v386 = vld [vmem:[#allocation8] sm:$0xf]
        %v387 = vld [vmem:[#allocation8 + $0x4] sm:$0xf]
        %v388 = vld [vmem:[#allocation8 + $0x8] sm:$0xf]
        %v389 = vld [vmem:[#allocation8 + $0xc] sm:$0xf]
        %v390 = vld [vmem:[#allocation8 + $0x10] sm:$0xf]
        %v391 = vld [vmem:[#allocation8 + $0x14] sm:$0xf]
        %v398 = vunpack.c.l.b16 %v386
        %v399 = vunpack.c.l.b16 %v387
        %v400 = vunpack.c.l.b16 %v388
        %v401 = vunpack.c.l.b16 %v389
        %v402 = vunpack.c.l.b16 %v390
        %v403 = vunpack.c.l.b16 %v391
        %v404 = vpack.c.b16 %v399, %v398
        %v405 = vpack.c.b16 %v401, %v400
        %v406 = vpack.c.b16 %v403, %v402
        %vm410 = vcmask 392192
        %v412 = vsel %vm410, %v385, 0
        %414 = vmatprep.subr.bf16.mxu0 0
        %415 = vmatpush1.bf16.msra.mxu0 %v404
        %416 = vmatprep.subr.bf16.mxu0 0
        %417 = vmatpush1.bf16.msra.mxu0 %v405
        %418 = vmatprep.subr.bf16.mxu0 0
        %419 = vmatpush1.bf16.msra.mxu0 %v406
        %420 = vmatprep.subr.bf16.mxu0 0
        %421 = vmatpush1.bf16.msra.mxu0 0
        %422 = vmatprep.subr.bf16.mxu0 0
        %423 = vmatpush1.bf16.msra.mxu0 0
        %424 = vmatprep.subr.bf16.mxu0 0
        %425 = vmatpush1.bf16.msra.mxu0 0
        %426 = vmatprep.subr.bf16.mxu0 0
        %427 = vmatpush1.bf16.msra.mxu0 0
        %428 = vmatprep.subr.bf16.mxu0 0
        %429 = vmatpush1.bf16.msra.mxu0 0
        %430 = vmatprep.subr.bf16.mxu0 0
        %431 = vmatpush1.bf16.msra.mxu0 0
        %432 = vmatprep.subr.bf16.mxu0 0
        %433 = vmatpush1.bf16.msra.mxu0 0
        %434 = vmatprep.subr.bf16.mxu0 0
        %435 = vmatpush1.bf16.msra.mxu0 0
        %436 = vmatprep.subr.bf16.mxu0 0
        %437 = vmatpush1.bf16.msra.mxu0 0
        %438 = vmatprep.subr.bf16.mxu0 0
        %439 = vmatpush1.bf16.msra.mxu0 0
        %440 = vmatprep.subr.bf16.mxu0 0
        %441 = vmatpush1.bf16.msra.mxu0 0
        %442 = vmatprep.subr.bf16.mxu0 0
        %443 = vmatpush1.bf16.msra.mxu0 0
        %444 = vmatprep.subr.bf16.mxu0 0
        %445 = vmatpush1.bf16.msra.mxu0 0
        %446 = vmatprep.mubr.bf16.mxu0 0
        %447 = vmatmul.mubr.bf16.gmra.mrb[0].mxu0 %v412
        %v448 = vpop.f32.mrb[0].mxu0
        %v449 = vadd.f32 0.0, %v448
        %v450 = vpop.f32.mrb[0].mxu0
        %v451 = vpop.f32.mrb[0].mxu0
        %v452 = vpop.f32.mrb[0].mxu0
        %453 = vdwg.mxu0
        %v454 = vld [vmem:[#allocation10] sm:$0x1]
        %v455 = vld [vmem:[#allocation11] sm:$0x1]
        %vm456 = vcmask 388096
        %v457 = vsel %vm456, %v449, 0.0
        %458 = vadd.xlane.f32.xlu0 %v457
        %v459 = vpop.xlane.xlu0 %458
        %v460 = vrcp.pop 48.0
        %v461 = vmul.f32 %v459, %v460
        %v462 = vmul.f32 %v449, %v449
        %v463 = vsel %vm456, %v462, 0.0
        %464 = vadd.xlane.f32.xlu0 %v463
        %v465 = vpop.xlane.xlu0 %464
        %v466 = vmul.f32 %v465, %v460
        %v467 = vmul.f32 %v461, %v461
        %v468 = vsub.f32 %v466, %v467
        %v469 = vmax.f32 %v468, 0.0
        %v470 = vsub.f32 %v449, %v461
        %v471 = vadd.f32 %v469, 1e-06
        %v472 = vrsqrt.pop %v471
        %v473 = vmul.f32 %v470, %v472
        %v475 = vlaneseq
        %v476 = vshrl.u32 %v475, 7
        %v477 = vsub.s32 0, %v476
        %v478 = vrot.slane %v454, %v477
        %v480 = vmul.f32 %v473, %v478
        %v482 = vlaneseq
        %v483 = vshrl.u32 %v482, 7
        %v484 = vsub.s32 0, %v483
        %v485 = vrot.slane %v455, %v484
        %v487 = vadd.f32 %v480, %v485
        %v488 = vld [vmem:[%s325] sm:$0x3]
        %v489 = vunpack.c.l.bf16 %v488
        %v490 = vadd.f32 %v487, %v489
        %v491 = vxor.u32 %v490, 2147483648
        %v492 = vmul.f32 %v491, 1.442695
        %v493 = vpow.pop %v492
        %v494 = vadd.f32 %v493, 1.0
        %v495 = vrcp.pop %v494
        %v496 = vmul.f32 1.0, %v495
        %v497 = vmul.f32 %v490, %v496
        %v498 = vpack.c.bf16 %v497, %v497
        %vm499 = vcmask 386048
        %500 = vst.msk [vmem:[%s374] sm:$0x3] %vm499, %v498
        %s501 = sand.u32 %s177, 1
        %s502 = scalar_lea.sflag [#allocation4], %s501
        %s503 = sand.u32 %s177, 1
        %s504 = smul.addr %s503, 2
        %s505 = scalar_lea.vmem [#allocation13], %s504
        // Predicated region
        $region69: #{_lambda_.31} parent=43 // pred_check
          %p506 = pneg %p187
        $region70: #{_lambda_.31} parent=43 // pred_check_branch
          %508 = sbr.rel (%p506) target = $region72
        $region71: #{_lambda_.31} parent=43 // pred_region
          %s510 = ssub.s32 32, 32
          %511 = vsyncadd %s502, %s510
          %s512 = smul.addr %s28, 32
          %s513 = scalar_lea.hbm %s6, %s512
          %s515 = sshll.u32 %s505, 4
          %s516 = int_to_ptr.vmem [resolvable:$true] %s515
          %518 = dma.vmem_to_hbm [thread:$0]  %s516, 32, %s513, %s502
        $region72: #{_lambda_.31} parent=43 // pred_fallthru
          _
      $region44: #{_lambda_.31} parent=5 // pred_fallthru
        _
      %p519 = scmp.le.s32.totalorder 2, %s23
      // Predicated region
      $region73: #{_lambda_.31} parent=5 // pred_check
        %p520 = pneg %p519
      $region74: #{_lambda_.31} parent=5 // pred_check_branch
        %522 = sbr.rel (%p520) target = $region76
      $region75: #{_lambda_.31} parent=5 // pred_region
        %s523 = ssub.s32 %s23, 2
        // Predicated region
        $region77: #{_lambda_.31} parent=75 // pred_check
          %p524 = pneg %p193
        $region78: #{_lambda_.31} parent=75 // pred_check_branch
          %526 = sbr.rel (%p524) target = $region80
        $region79: #{_lambda_.31} parent=75 // pred_region
          %s527 = sand.u32 %s178, 1
          %s528 = scalar_lea.sflag [#allocation4], %s527
          %s529 = sand.u32 %s178, 1
          %s530 = smul.addr %s529, 2
          %s531 = scalar_lea.vmem [#allocation13], %s530
          %532 = dma.done %s528, 32
        $region80: #{_lambda_.31} parent=75 // pred_fallthru
          _
      $region76: #{_lambda_.31} parent=5 // pred_fallthru
        _
    $region6: #{_lambda_.31} parent=1 // loop_footer
      %s27 = sadd.s32 1, %s23
    $region7: #{_lambda_.31} parent=1 // loop_footer_branch
      %22 = sbr.rel target = $region3
    $region8: #{_lambda_.31} parent=1 // loop_exit
      _
    %533 = vsyncpa [#allocation3], 1
    %s534 = scalar_lea.sflag [#allocation3], 1
    %535 = vsyncpa %s534, 1
    %536 = vsyncpa [#allocation6], 1
    %s537 = scalar_lea.sflag [#allocation6], 1
    %538 = vsyncpa %s537, 1
    %539 = vsyncpa [#allocation9], 1
    %540 = vsyncpa [#allocation12], 1
    %541 = vsyncpa [#allocation4], 1
    %s542 = scalar_lea.sflag [#allocation4], 1
    %543 = vsyncpa %s542, 1

// kernel: _lambda_.38
$region0: #{_lambda_.38}
  #allocation0 [shape = 'u32[]', space=smem, size = 0x4, offset = 0x4, fixed_abs, tag = 'smem constant byte address 0x4 - core index']
  #allocation1 [shape = 'u32[144,128]{1,0:T(1,128)}', space=vmem, size = 0x12000, scoped, tag = 'internal scratch']
  %s0 = inlined_call_operand.hbm [shape: bf16[8,48], index: 0, kind: input, shape index: {}]
  %s1 = inlined_call_operand.hbm [shape: bf16[48,64], index: 1, kind: input, shape index: {}]
  %s2 = inlined_call_operand.hbm [shape: f32[1,64], index: 2, kind: input, shape index: {}]
  %s3 = inlined_call_operand.hbm [shape: bf16[8,64], index: 3, kind: output, shape index: {}]
  %s4 = sld [smem:[#allocation0]]
  $region34: #{_lambda_.38} parent=0
    _
  %s6 = ssub.s32 1, %s4
  %s7 = scalar_select 0, %s6, %s4
  $region1: #{_lambda_.38} parent=0
    #allocation2 [shape = 'u8[2048]{0}', space=vmem, size = 0x800, scoped, tag = 'input window, operand 0, single buffered']
    #allocation3 [shape = 's32[1]{0}', space=sflag, size = 0x4, scoped, tag = 'scoped memory for _lambda_.38']
    #allocation4 [shape = 's32[1]{0}', space=sflag, size = 0x4, scoped, tag = 'scoped memory for _lambda_.38']
    #allocation5 [shape = 'u8[12288]{0}', space=vmem, size = 0x3000, scoped, tag = 'input window, operand 1, single buffered']
    #allocation6 [shape = 's32[1]{0}', space=sflag, size = 0x4, scoped, tag = 'scoped memory for _lambda_.38']
    #allocation7 [shape = 'u8[512]{0}', space=vmem, size = 0x400, scoped, tag = 'input window, operand 2, single buffered']
    #allocation8 [shape = 'u8[2048]{0}', space=vmem, size = 0x800, scoped, tag = 'output window, operand 0, single buffered']
    %8 = vsyncpa [#allocation3], 0
    %9 = vsyncpa [#allocation6], 0
    %10 = vsyncpa [#allocation4], 0
    // Predicated region
    $region2: #{_lambda_.38} parent=1 // pred_check
      _
    $region3: #{_lambda_.38} parent=1 // pred_check_branch
      %12 = sbr.rel (0) target = $region5
    $region4: #{_lambda_.38} parent=1 // pred_region
      %s14 = ssub.s32 64, 64
      %15 = vsyncadd [#allocation3], %s14
      %s17 = sshll.u32 [#allocation2], 4
      %s18 = int_to_ptr.vmem [resolvable:$true] %s17
      %20 = dma.hbm_to_vmem [thread:$0]  %s0, 64, %s18, [#allocation3]
    $region5: #{_lambda_.38} parent=1 // pred_fallthru
      _
    // Predicated region
    $region6: #{_lambda_.38} parent=1 // pred_check
      _
    $region7: #{_lambda_.38} parent=1 // pred_check_branch
      %22 = sbr.rel (0) target = $region9
    $region8: #{_lambda_.38} parent=1 // pred_region
      %s24 = ssub.s32 384, 384
      %25 = vsyncadd [#allocation6], %s24
      %s26 = sshll.u32 [#allocation5], 4
      %s27 = int_to_ptr.vmem [resolvable:$true] %s26
      %32 = dma.hbm_to_vmem [thread:$0]  %s1, 384, %s27, [#allocation6], 64, 64, 4
    $region9: #{_lambda_.38} parent=1 // pred_fallthru
      _
    // Predicated region
    $region10: #{_lambda_.38} parent=1 // pred_check
      _
    $region11: #{_lambda_.38} parent=1 // pred_check_branch
      %34 = sbr.rel (0) target = $region13
    $region12: #{_lambda_.38} parent=1 // pred_region
      %s36 = ssub.s32 16, 16
      %37 = vsyncadd [#allocation6], %s36
      %s39 = sshll.u32 [#allocation7], 4
      %s40 = int_to_ptr.vmem [resolvable:$true] %s39
      %42 = dma.hbm_to_vmem [thread:$0]  %s2, 16, %s40, [#allocation6]
    $region13: #{_lambda_.38} parent=1 // pred_fallthru
      _
    // Predicated region
    $region14: #{_lambda_.38} parent=1 // pred_check
      _
    $region15: #{_lambda_.38} parent=1 // pred_check_branch
      %44 = sbr.rel (0) target = $region17
    $region16: #{_lambda_.38} parent=1 // pred_region
      %45 = dma.done [#allocation3], 64
    $region17: #{_lambda_.38} parent=1 // pred_fallthru
      _
    // Predicated region
    $region18: #{_lambda_.38} parent=1 // pred_check
      _
    $region19: #{_lambda_.38} parent=1 // pred_check_branch
      %47 = sbr.rel (0) target = $region21
    $region20: #{_lambda_.38} parent=1 // pred_region
      %48 = dma.done [#allocation6], 384
    $region21: #{_lambda_.38} parent=1 // pred_fallthru
      _
    // Predicated region
    $region22: #{_lambda_.38} parent=1 // pred_check
      _
    $region23: #{_lambda_.38} parent=1 // pred_check_branch
      %50 = sbr.rel (0) target = $region25
    $region24: #{_lambda_.38} parent=1 // pred_region
      %51 = dma.done [#allocation6], 16
    $region25: #{_lambda_.38} parent=1 // pred_fallthru
      _
    %v53 = vld [vmem:[#allocation2] sm:$0xf]
    %v54 = vld [vmem:[#allocation5] sm:$0xf]
    %v55 = vld [vmem:[#allocation5 + $0x4] sm:$0xf]
    %v56 = vld [vmem:[#allocation5 + $0x8] sm:$0xf]
    %v57 = vld [vmem:[#allocation5 + $0xc] sm:$0xf]
    %v58 = vld [vmem:[#allocation5 + $0x10] sm:$0xf]
    %v59 = vld [vmem:[#allocation5 + $0x14] sm:$0xf]
    %v60 = vld [vmem:[#allocation7] sm:$0x1]
    %v62 = vlaneseq
    %v63 = vshrl.u32 %v62, 7
    %v64 = vsub.s32 0, %v63
    %v65 = vrot.slane %v60, %v64
    %v73 = vunpack.c.l.b16 %v54
    %v74 = vunpack.c.l.b16 %v55
    %v75 = vunpack.c.l.b16 %v56
    %v76 = vunpack.c.l.b16 %v57
    %v77 = vunpack.c.l.b16 %v58
    %v78 = vunpack.c.l.b16 %v59
    %v79 = vpack.c.b16 %v74, %v73
    %v80 = vpack.c.b16 %v76, %v75
    %v81 = vpack.c.b16 %v78, %v77
    %vm85 = vcmask 392192
    %v87 = vsel %vm85, %v53, 0
    %89 = vmatprep.subr.bf16.mxu0 0
    %90 = vmatpush1.bf16.msra.mxu0 %v79
    %91 = vmatprep.subr.bf16.mxu0 0
    %92 = vmatpush1.bf16.msra.mxu0 %v80
    %93 = vmatprep.subr.bf16.mxu0 0
    %94 = vmatpush1.bf16.msra.mxu0 %v81
    %95 = vmatprep.subr.bf16.mxu0 0
    %96 = vmatpush1.bf16.msra.mxu0 0
    %97 = vmatprep.subr.bf16.mxu0 0
    %98 = vmatpush1.bf16.msra.mxu0 0
    %99 = vmatprep.subr.bf16.mxu0 0
    %100 = vmatpush1.bf16.msra.mxu0 0
    %101 = vmatprep.subr.bf16.mxu0 0
    %102 = vmatpush1.bf16.msra.mxu0 0
    %103 = vmatprep.subr.bf16.mxu0 0
    %104 = vmatpush1.bf16.msra.mxu0 0
    %105 = vmatprep.subr.bf16.mxu0 0
    %106 = vmatpush1.bf16.msra.mxu0 0
    %107 = vmatprep.subr.bf16.mxu0 0
    %108 = vmatpush1.bf16.msra.mxu0 0
    %109 = vmatprep.subr.bf16.mxu0 0
    %110 = vmatpush1.bf16.msra.mxu0 0
    %111 = vmatprep.subr.bf16.mxu0 0
    %112 = vmatpush1.bf16.msra.mxu0 0
    %113 = vmatprep.subr.bf16.mxu0 0
    %114 = vmatpush1.bf16.msra.mxu0 0
    %115 = vmatprep.subr.bf16.mxu0 0
    %116 = vmatpush1.bf16.msra.mxu0 0
    %117 = vmatprep.subr.bf16.mxu0 0
    %118 = vmatpush1.bf16.msra.mxu0 0
    %119 = vmatprep.subr.bf16.mxu0 0
    %120 = vmatpush1.bf16.msra.mxu0 0
    %121 = vmatprep.mubr.bf16.mxu0 0
    %122 = vmatmul.mubr.bf16.gmra.mrb[0].mxu0 %v87
    %v123 = vpop.f32.mrb[0].mxu0
    %v124 = vadd.f32 %v65, %v123
    %v125 = vpop.f32.mrb[0].mxu0
    %v126 = vpop.f32.mrb[0].mxu0
    %v127 = vpop.f32.mrb[0].mxu0
    %128 = vdwg.mxu0
    %v129 = vxor.u32 %v124, 2147483648
    %v130 = vmul.f32 %v129, 1.442695
    %v131 = vpow.pop %v130
    %v132 = vadd.f32 %v131, 1.0
    %v133 = vrcp.pop %v132
    %v134 = vmul.f32 1.0, %v133
    %v135 = vmul.f32 %v124, %v134
    %v136 = vpack.c.bf16 %v135, %v135
    %vm137 = vcmask 519168
    %138 = vst.msk [vmem:[#allocation8] sm:$0xf] %vm137, %v136
    // Predicated region
    $region26: #{_lambda_.38} parent=1 // pred_check
      _
    $region27: #{_lambda_.38} parent=1 // pred_check_branch
      %140 = sbr.rel (0) target = $region29
    $region28: #{_lambda_.38} parent=1 // pred_region
      %s142 = ssub.s32 64, 64
      %143 = vsyncadd [#allocation4], %s142
      %s145 = sshll.u32 [#allocation8], 4
      %s146 = int_to_ptr.vmem [resolvable:$true] %s145
      %148 = dma.vmem_to_hbm [thread:$0]  %s146, 64, %s3, [#allocation4]
    $region29: #{_lambda_.38} parent=1 // pred_fallthru
      _
    // Predicated region
    $region30: #{_lambda_.38} parent=1 // pred_check
      _
    $region31: #{_lambda_.38} parent=1 // pred_check_branch
      %150 = sbr.rel (0) target = $region33
    $region32: #{_lambda_.38} parent=1 // pred_region
      %151 = dma.done [#allocation4], 64
    $region33: #{_lambda_.38} parent=1 // pred_fallthru
      _
    %152 = vsyncpa [#allocation3], 1
    %153 = vsyncpa [#allocation6], 1
    %154 = vsyncpa [#allocation4], 1

// kernel: _lambda_.39
$region0: #{_lambda_.39}
  #allocation0 [shape = 'u32[]', space=smem, size = 0x4, offset = 0x4, fixed_abs, tag = 'smem constant byte address 0x4 - core index']
  #allocation1 [shape = 'u32[144,128]{1,0:T(1,128)}', space=vmem, size = 0x12000, scoped, tag = 'internal scratch']
  %s0 = inlined_call_operand.hbm [shape: bf16[8,64], index: 0, kind: input, shape index: {}]
  %s1 = inlined_call_operand.hbm [shape: bf16[64,64], index: 1, kind: input, shape index: {}]
  %s2 = inlined_call_operand.hbm [shape: f32[1,64], index: 2, kind: input, shape index: {}]
  %s3 = inlined_call_operand.hbm [shape: bf16[8,64], index: 3, kind: output, shape index: {}]
  %s4 = sld [smem:[#allocation0]]
  $region34: #{_lambda_.39} parent=0
    _
  %s6 = ssub.s32 1, %s4
  %s7 = scalar_select 0, %s6, %s4
  $region1: #{_lambda_.39} parent=0
    #allocation2 [shape = 'u8[2048]{0}', space=vmem, size = 0x800, scoped, tag = 'input window, operand 0, single buffered']
    #allocation3 [shape = 's32[1]{0}', space=sflag, size = 0x4, scoped, tag = 'scoped memory for _lambda_.39']
    #allocation4 [shape = 's32[1]{0}', space=sflag, size = 0x4, scoped, tag = 'scoped memory for _lambda_.39']
    #allocation5 [shape = 'u8[16384]{0}', space=vmem, size = 0x4000, scoped, tag = 'input window, operand 1, single buffered']
    #allocation6 [shape = 's32[1]{0}', space=sflag, size = 0x4, scoped, tag = 'scoped memory for _lambda_.39']
    #allocation7 [shape = 'u8[512]{0}', space=vmem, size = 0x400, scoped, tag = 'input window, operand 2, single buffered']
    #allocation8 [shape = 'u8[2048]{0}', space=vmem, size = 0x800, scoped, tag = 'output window, operand 0, single buffered']
    %8 = vsyncpa [#allocation3], 0
    %9 = vsyncpa [#allocation6], 0
    %10 = vsyncpa [#allocation4], 0
    // Predicated region
    $region2: #{_lambda_.39} parent=1 // pred_check
      _
    $region3: #{_lambda_.39} parent=1 // pred_check_branch
      %12 = sbr.rel (0) target = $region5
    $region4: #{_lambda_.39} parent=1 // pred_region
      %s14 = ssub.s32 64, 64
      %15 = vsyncadd [#allocation3], %s14
      %s17 = sshll.u32 [#allocation2], 4
      %s18 = int_to_ptr.vmem [resolvable:$true] %s17
      %20 = dma.hbm_to_vmem [thread:$0]  %s0, 64, %s18, [#allocation3]
    $region5: #{_lambda_.39} parent=1 // pred_fallthru
      _
    // Predicated region
    $region6: #{_lambda_.39} parent=1 // pred_check
      _
    $region7: #{_lambda_.39} parent=1 // pred_check_branch
      %22 = sbr.rel (0) target = $region9
    $region8: #{_lambda_.39} parent=1 // pred_region
      %s24 = ssub.s32 512, 512
      %25 = vsyncadd [#allocation6], %s24
      %s26 = sshll.u32 [#allocation5], 4
      %s27 = int_to_ptr.vmem [resolvable:$true] %s26
      %32 = dma.hbm_to_vmem [thread:$0]  %s1, 512, %s27, [#allocation6], 64, 64, 4
    $region9: #{_lambda_.39} parent=1 // pred_fallthru
      _
    // Predicated region
    $region10: #{_lambda_.39} parent=1 // pred_check
      _
    $region11: #{_lambda_.39} parent=1 // pred_check_branch
      %34 = sbr.rel (0) target = $region13
    $region12: #{_lambda_.39} parent=1 // pred_region
      %s36 = ssub.s32 16, 16
      %37 = vsyncadd [#allocation6], %s36
      %s39 = sshll.u32 [#allocation7], 4
      %s40 = int_to_ptr.vmem [resolvable:$true] %s39
      %42 = dma.hbm_to_vmem [thread:$0]  %s2, 16, %s40, [#allocation6]
    $region13: #{_lambda_.39} parent=1 // pred_fallthru
      _
    // Predicated region
    $region14: #{_lambda_.39} parent=1 // pred_check
      _
    $region15: #{_lambda_.39} parent=1 // pred_check_branch
      %44 = sbr.rel (0) target = $region17
    $region16: #{_lambda_.39} parent=1 // pred_region
      %45 = dma.done [#allocation3], 64
    $region17: #{_lambda_.39} parent=1 // pred_fallthru
      _
    // Predicated region
    $region18: #{_lambda_.39} parent=1 // pred_check
      _
    $region19: #{_lambda_.39} parent=1 // pred_check_branch
      %47 = sbr.rel (0) target = $region21
    $region20: #{_lambda_.39} parent=1 // pred_region
      %48 = dma.done [#allocation6], 512
    $region21: #{_lambda_.39} parent=1 // pred_fallthru
      _
    // Predicated region
    $region22: #{_lambda_.39} parent=1 // pred_check
      _
    $region23: #{_lambda_.39} parent=1 // pred_check_branch
      %50 = sbr.rel (0) target = $region25
    $region24: #{_lambda_.39} parent=1 // pred_region
      %51 = dma.done [#allocation6], 16
    $region25: #{_lambda_.39} parent=1 // pred_fallthru
      _
    %v53 = vld [vmem:[#allocation2] sm:$0xf]
    %v54 = vld [vmem:[#allocation5] sm:$0xf]
    %v55 = vld [vmem:[#allocation5 + $0x4] sm:$0xf]
    %v56 = vld [vmem:[#allocation5 + $0x8] sm:$0xf]
    %v57 = vld [vmem:[#allocation5 + $0xc] sm:$0xf]
    %v58 = vld [vmem:[#allocation5 + $0x10] sm:$0xf]
    %v59 = vld [vmem:[#allocation5 + $0x14] sm:$0xf]
    %v60 = vld [vmem:[#allocation5 + $0x18] sm:$0xf]
    %v61 = vld [vmem:[#allocation5 + $0x1c] sm:$0xf]
    %v62 = vld [vmem:[#allocation7] sm:$0x1]
    %v64 = vlaneseq
    %v65 = vshrl.u32 %v64, 7
    %v66 = vsub.s32 0, %v65
    %v67 = vrot.slane %v62, %v66
    %v77 = vunpack.c.l.b16 %v54
    %v78 = vunpack.c.l.b16 %v55
    %v79 = vunpack.c.l.b16 %v56
    %v80 = vunpack.c.l.b16 %v57
    %v81 = vunpack.c.l.b16 %v58
    %v82 = vunpack.c.l.b16 %v59
    %v83 = vunpack.c.l.b16 %v60
    %v84 = vunpack.c.l.b16 %v61
    %v85 = vpack.c.b16 %v78, %v77
    %v86 = vpack.c.b16 %v80, %v79
    %v87 = vpack.c.b16 %v82, %v81
    %v88 = vpack.c.b16 %v84, %v83
    %vm93 = vcmask 523264
    %v95 = vsel %vm93, %v53, 0
    %97 = vmatprep.subr.bf16.mxu0 0
    %98 = vmatpush1.bf16.msra.mxu0 %v85
    %99 = vmatprep.subr.bf16.mxu0 0
    %100 = vmatpush1.bf16.msra.mxu0 %v86
    %101 = vmatprep.subr.bf16.mxu0 0
    %102 = vmatpush1.bf16.msra.mxu0 %v87
    %103 = vmatprep.subr.bf16.mxu0 0
    %104 = vmatpush1.bf16.msra.mxu0 %v88
    %105 = vmatprep.subr.bf16.mxu0 0
    %106 = vmatpush1.bf16.msra.mxu0 0
    %107 = vmatprep.subr.bf16.mxu0 0
    %108 = vmatpush1.bf16.msra.mxu0 0
    %109 = vmatprep.subr.bf16.mxu0 0
    %110 = vmatpush1.bf16.msra.mxu0 0
    %111 = vmatprep.subr.bf16.mxu0 0
    %112 = vmatpush1.bf16.msra.mxu0 0
    %113 = vmatprep.subr.bf16.mxu0 0
    %114 = vmatpush1.bf16.msra.mxu0 0
    %115 = vmatprep.subr.bf16.mxu0 0
    %116 = vmatpush1.bf16.msra.mxu0 0
    %117 = vmatprep.subr.bf16.mxu0 0
    %118 = vmatpush1.bf16.msra.mxu0 0
    %119 = vmatprep.subr.bf16.mxu0 0
    %120 = vmatpush1.bf16.msra.mxu0 0
    %121 = vmatprep.subr.bf16.mxu0 0
    %122 = vmatpush1.bf16.msra.mxu0 0
    %123 = vmatprep.subr.bf16.mxu0 0
    %124 = vmatpush1.bf16.msra.mxu0 0
    %125 = vmatprep.subr.bf16.mxu0 0
    %126 = vmatpush1.bf16.msra.mxu0 0
    %127 = vmatprep.subr.bf16.mxu0 0
    %128 = vmatpush1.bf16.msra.mxu0 0
    %129 = vmatprep.mubr.bf16.mxu0 0
    %130 = vmatmul.mubr.bf16.gmra.mrb[0].mxu0 %v95
    %v131 = vpop.f32.mrb[0].mxu0
    %v132 = vadd.f32 %v67, %v131
    %v133 = vpop.f32.mrb[0].mxu0
    %v134 = vpop.f32.mrb[0].mxu0
    %v135 = vpop.f32.mrb[0].mxu0
    %136 = vdwg.mxu0
    %v137 = vpack.c.bf16 %v132, %v132
    %vm138 = vcmask 519168
    %139 = vst.msk [vmem:[#allocation8] sm:$0xf] %vm138, %v137
    // Predicated region
    $region26: #{_lambda_.39} parent=1 // pred_check
      _
    $region27: #{_lambda_.39} parent=1 // pred_check_branch
      %141 = sbr.rel (0) target = $region29
    $region28: #{_lambda_.39} parent=1 // pred_region
      %s143 = ssub.s32 64, 64
      %144 = vsyncadd [#allocation4], %s143
      %s146 = sshll.u32 [#allocation8], 4
      %s147 = int_to_ptr.vmem [resolvable:$true] %s146
      %149 = dma.vmem_to_hbm [thread:$0]  %s147, 64, %s3, [#allocation4]
    $region29: #{_lambda_.39} parent=1 // pred_fallthru
      _
    // Predicated region
    $region30: #{_lambda_.39} parent=1 // pred_check
      _
    $region31: #{_lambda_.39} parent=1 // pred_check_branch
      %151 = sbr.rel (0) target = $region33
    $region32: #{_lambda_.39} parent=1 // pred_region
      %152 = dma.done [#allocation4], 64
    $region33: #{_lambda_.39} parent=1 // pred_fallthru
      _
    %153 = vsyncpa [#allocation3], 1
    %154 = vsyncpa [#allocation6], 1
    %155 = vsyncpa [#allocation4], 1

</llo_original>
